<compile_context>
chip_gen: v7x
topology: tpu7x:2x2x1
jax: 0.10.0
libtpu: 0.0.40
codegen_flags: <defaults>
</compile_context>

<pallas_src>
import functools
import math

import jax
import jax.numpy as jnp
from jax.experimental import pallas as pl
from jax.experimental.pallas import tpu as pltpu


# ----------------------------- in-kernel helpers ----------------------------

def _silu(x):
    return x * jax.nn.sigmoid(x)


def _erf(x):
    # Abramowitz & Stegun 7.1.26, |err| < 1.5e-7 -> matches torch nn.GELU() (exact-erf form).
    # The 1/(1+p*|x|) rides the EUP reciprocal slot instead of adding VALU divides.
    a1, a2, a3, a4, a5 = 0.254829592, -0.284496736, 1.421413741, -1.453152027, 1.061405429
    ax = jnp.abs(x)
    t = pl.reciprocal(1.0 + 0.3275911 * ax, approx=True)
    poly = t * (a1 + t * (a2 + t * (a3 + t * (a4 + t * a5))))
    y = 1.0 - poly * jnp.exp(-ax * ax)
    return jnp.where(x >= 0, y, -y)


def _gelu(x):
    return 0.5 * x * (1.0 + _erf(x * 0.7071067811865476))


def _make_shifter(x, boundary="zero"):
    """Returns shift(s) with shift(s)[i,:] = x[i+s,:]; out-of-range rows zeroed / replicated.

    The row-index iota and the replicate-boundary broadcasts are built ONCE per conv
    (JAX does not CSE broadcast_in_dim); each tap adds only an XLU roll + one select."""
    L = x.shape[0]
    idx = jax.lax.broadcasted_iota(jnp.int32, x.shape, 0)
    if boundary == "replicate":
        lo = jnp.broadcast_to(x[0:1, :], x.shape)
        hi = jnp.broadcast_to(x[L - 1:L, :], x.shape)

    def shift(s):
        if s == 0:
            return x
        rolled = pltpu.roll(x, (-s) % L, axis=0)
        if boundary == "replicate":
            return jnp.where(idx < -s, lo, jnp.where(idx >= L - s, hi, rolled))
        return jnp.where((idx >= -s) & (idx < L - s), rolled, 0.0)

    return shift


def _conv1d(x, w_flat, b, *, ksize, dilation=1, boundary="zero"):
    """'same' 1D conv, stride 1, as ONE im2col MXU matmul.

    x: (L, Cin) f32; w_flat: (ksize*Cin, Cout) bf16 with row k*Cin+c == torch weight[o,c,k];
    b: (1, Cout) f32.  The K shifted copies are concatenated along lanes so the contraction
    depth is K*Cin instead of K shallow Cin-deep dots."""
    assert ksize % 2 == 1, "same-padding helper expects odd kernel sizes"
    pad = dilation * (ksize - 1) // 2
    shift = _make_shifter(x, boundary)
    cols = [shift(k * dilation - pad) for k in range(ksize)]
    xin = cols[0] if ksize == 1 else jnp.concatenate(cols, axis=-1)
    return jnp.dot(xin.astype(jnp.bfloat16), w_flat,
                   preferred_element_type=jnp.float32) + b


def _dwconv1d(x, w, b):
    """'same' depthwise conv (pure VPU). x: (L, C) f32; w: (K, C) f32; b: (1, C) f32."""
    K = w.shape[0]
    pad = (K - 1) // 2
    shift = _make_shifter(x)
    acc = x * w[pad:pad + 1, :]
    for k in range(K):
        if k == pad:
            continue
        acc = acc + shift(k - pad) * w[k:k + 1, :]
    return acc + b


def _layernorm(x, g, b, eps):
    """LayerNorm over channels (last axis) - covers both torch data_formats in NLC layout."""
    u = jnp.mean(x, axis=-1, keepdims=True)
    xc = x - u
    s = jnp.mean(xc * xc, axis=-1, keepdims=True)
    return xc * jax.lax.rsqrt(s + eps) * g + b


def _upsample(x, w_flat, b, shifts):
    """Polyphase ConvTranspose1d as ONE im2col matmul (no zero-stuffed input).

    x: (L, Cin) f32; w_flat: (len(shifts)*Cin, stride*Cout) bf16; b: (1, stride*Cout) f32.
    Output (L, stride*Cout): phase r of output step m lives in columns [r*Cout,(r+1)*Cout);
    the wrapper's free row-major reshape de-interleaves it to (stride*L, Cout)."""
    shift = _make_shifter(x)
    cols = [shift(s) for s in shifts]
    xin = cols[0] if len(cols) == 1 else jnp.concatenate(cols, axis=-1)
    return jnp.dot(xin.astype(jnp.bfloat16), w_flat,
                   preferred_element_type=jnp.float32) + b


def _convnext_block(x, dw_w, dw_b, ln_w, ln_b, w1, b1, w2, b2, gamma, *, eps):
    """dwconv -> LN -> Linear -> exact GELU -> Linear -> gamma -> +residual (all in-register)."""
    h = _dwconv1d(x, dw_w, dw_b)
    h = _layernorm(h, ln_w, ln_b, eps)
    h = jnp.dot(h.astype(jnp.bfloat16), w1, preferred_element_type=jnp.float32) + b1
    h = _gelu(h)
    h = jnp.dot(h.astype(jnp.bfloat16), w2, preferred_element_type=jnp.float32) + b2
    return x + h * gamma


# ------------------------------ fused kernels --------------------------------

def _stage0_kernel(*refs, n_blocks, eps):
    """Fused: replicate-padded stem conv7 -> channels_first LN -> all stage-0 ConvNeXt blocks."""
    x_ref = refs[0]
    sw, sb, sg, sbeta = refs[1:5]
    blk = refs[5:5 + 9 * n_blocks]
    o_ref = refs[-1]
    x = x_ref[0].astype(jnp.float32)
    h = _conv1d(x, sw[...], sb[...], ksize=7, boundary="replicate")
    h = _layernorm(h, sg[...], sbeta[...], eps)
    for i in range(n_blocks):
        h = _convnext_block(h, *(r[...] for r in blk[9 * i:9 * i + 9]), eps=eps)
    o_ref[0] = h.astype(o_ref.dtype)


def _stage_mid_kernel(*refs, n_blocks, eps):
    """Fused: channels_first LN -> 1x1 conv -> all ConvNeXt blocks of this stage."""
    x_ref = refs[0]
    lnw, lnb, mw, mb = refs[1:5]
    blk = refs[5:5 + 9 * n_blocks]
    o_ref = refs[-1]
    x = x_ref[0].astype(jnp.float32)
    h = _layernorm(x, lnw[...], lnb[...], eps)
    h = jnp.dot(h.astype(jnp.bfloat16), mw[...], preferred_element_type=jnp.float32) + mb[...]
    for i in range(n_blocks):
        h = _convnext_block(h, *(r[...] for r in blk[9 * i:9 * i + 9]), eps=eps)
    o_ref[0] = h.astype(o_ref.dtype)


def _head_pre_kernel(x_ref, lnw_ref, lnb_ref, pw_ref, pb_ref, uw_ref, ub_ref, o_ref,
                     *, eps, pre_ksize, shifts):
    """Fused: backbone final LN -> conv_pre -> SiLU -> polyphase upsample[0]."""
    x = x_ref[0].astype(jnp.float32)
    h = _layernorm(x, lnw_ref[...], lnb_ref[...], eps)
    h = _conv1d(h, pw_ref[...], pb_ref[...], ksize=pre_ksize)
    h = _silu(h)
    o_ref[0] = _upsample(h, uw_ref[...], ub_ref[...], shifts).astype(o_ref.dtype)


def _head_stage_kernel(*refs, num_kernels, rb_cfg, last, up_shifts, post_ksize):
    """Fused per upsample stage: all ResBlock1s -> average -> SiLU ->
       (next polyphase upsample)  or  (post conv + tanh) on the last stage."""
    x_ref = refs[0]
    tail = refs[1 + 4 * num_kernels:-1]
    o_ref = refs[-1]
    x = x_ref[0].astype(jnp.float32)
    xs = None
    for j in range(num_kernels):
        c1w, c1b, c2w, c2b = refs[1 + 4 * j:1 + 4 * j + 4]
        ksize, dils = rb_cfg[j]
        r = x
        for m, d in enumerate(dils):
            xt = _silu(r)
            xt = _conv1d(xt, c1w[m], c1b[m], ksize=ksize, dilation=d)
            xt = _silu(xt)
            xt = _conv1d(xt, c2w[m], c2b[m], ksize=ksize, dilation=1)
            r = xt + r
        xs = r if xs is None else xs + r
    x = xs if num_kernels == 1 else xs * (1.0 / num_kernels)
    h = _silu(x)
    if last:
        pw, pb = tail
        h = _conv1d(h, pw[...], pb[...], ksize=post_ksize)
        # TODO(synk): emit this Cout=1 tail lane-dense (time-on-lanes) instead of (L, 1).
        o_ref[0] = jnp.tanh(h).astype(o_ref.dtype)
    else:
        uw, ub = tail
        o_ref[0] = _upsample(h, uw[...], ub[...], up_shifts).astype(o_ref.dtype)


# ------------------------------ call wrapper --------------------------------

def _call(kernel, x, consts, out_lc):
    """Run `kernel` over grid=(N,): per-sample activation block + whole-array weight blocks."""
    N = x.shape[0]
    L_out, C_out = out_lc

    def const_spec(a):
        nd = a.ndim
        return pl.BlockSpec(tuple(a.shape), lambda n, _nd=nd: (0,) * _nd)

    return pl.pallas_call(
        kernel,
        grid=(N,),
        in_specs=[pl.BlockSpec((1,) + tuple(x.shape[1:]), lambda n: (n, 0, 0))]
                 + [const_spec(a) for a in consts],
        out_specs=pl.BlockSpec((1, L_out, C_out), lambda n: (n, 0, 0)),
        out_shape=jax.ShapeDtypeStruct((N, L_out, C_out), jnp.float32),
        # TODO(synk): add an L-tile "parallel" grid axis with halos for long sequences
        #             (pipelining depth + both v7x TCs at N=1) and per-generation VMEM
        #             sizing (~48 MiB usable on v7x vs ~100 MiB on v5e/v6e).
        compiler_params=pltpu.CompilerParams(dimension_semantics=("parallel",)),
    )(x, *consts)


# ------------------------- polyphase ConvTranspose ---------------------------

def _polyphase_shifts(K, stride, padding):
    """Static row-shift set of the polyphase-folded ConvTranspose1d."""
    return tuple(sorted({(r + padding - q) // stride
                         for r in range(stride) for q in range(K)
                         if (r + padding - q) % stride == 0}))


def _polyphase_weights(w_kio, b_row, stride, padding):
    """Fold ConvTranspose1d (w_kio[k,i,o] == torch weight[i,o,k]) into an im2col matrix so
       y[stride*m + r] = concat_s(x[m+s]) @ W[:, r*Cout:(r+1)*Cout] + b.  Runs ONCE at init."""
    K, Cin, Cout = w_kio.shape
    shifts = _polyphase_shifts(K, stride, padding)
    W = jnp.zeros((len(shifts), Cin, stride * Cout), jnp.float32)
    for si, s in enumerate(shifts):
        for r in range(stride):
            q = r + padding - stride * s
            if 0 <= q < K:
                W = W.at[si, :, r * Cout:(r + 1) * Cout].set(w_kio[q])
    W = W.reshape(len(shifts) * Cin, stride * Cout).astype(jnp.bfloat16)
    return W, jnp.tile(b_row, (1, stride))


# --------------------------- model configuration ---------------------------

CFG = dict(
    input_channels=16,
    depths=[1, 1],
    dims=[32, 48],
    kernel_sizes=(7,),
    mlp_ratio=4.0,
    num_mels=48,                      # must equal dims[-1]
    upsample_initial_channel=32,
    upsample_rates=(2, 2),
    upsample_kernel_sizes=(4, 4),
    resblock_kernel_sizes=(3,),
    resblock_dilation_sizes=((1, 3, 5),),
    pre_conv_kernel_size=7,
    post_conv_kernel_size=7,
)

_BLOCK_KEYS = ("dw_w", "dw_b", "ln_w", "ln_b", "w1", "b1", "w2", "b2", "gamma")


def init_params(key, cfg):
    keys = iter(jax.random.split(key, 512))

    def nrm(shape, fan_in):
        return jax.random.normal(next(keys), shape, jnp.float32) / math.sqrt(fan_in)

    def conv_flat(K, cin, cout):
        # plain Conv1d weight (weight_norm folded), im2col-flattened to (K*cin, cout), bf16
        return nrm((K, cin, cout), cin * K).reshape(K * cin, cout).astype(jnp.bfloat16)

    dims = cfg["dims"]
    cmel = cfg["input_channels"]
    P = {}
    # ------------------------------ backbone -------------------------------
    P["stem_w"] = conv_flat(7, cmel, dims[0])
    P["stem_b"] = nrm((1, dims[0]), cmel * 7)
    P["stem_ln_w"] = jnp.ones((1, dims[0]), jnp.float32)
    P["stem_ln_b"] = jnp.zeros((1, dims[0]), jnp.float32)
    P["mid"] = []
    for i in range(len(dims) - 1):
        P["mid"].append(dict(
            ln_w=jnp.ones((1, dims[i]), jnp.float32),
            ln_b=jnp.zeros((1, dims[i]), jnp.float32),
            w=conv_flat(1, dims[i], dims[i + 1]),
            b=nrm((1, dims[i + 1]), dims[i]),
        ))

    def convnext_params(C, K):
        H = int(cfg["mlp_ratio"] * C)
        return dict(
            dw_w=nrm((K, C), K), dw_b=nrm((1, C), K),
            ln_w=jnp.ones((1, C), jnp.float32), ln_b=jnp.zeros((1, C), jnp.float32),
            w1=nrm((C, H), C).astype(jnp.bfloat16), b1=nrm((1, H), C),
            w2=nrm((H, C), H).astype(jnp.bfloat16), b2=nrm((1, C), H),
            gamma=0.1 * jax.random.normal(next(keys), (1, C), jnp.float32),
        )

    K7 = cfg["kernel_sizes"][0]
    P["blocks"] = [[convnext_params(dims[i], K7) for _ in range(cfg["depths"][i])]
                   for i in range(len(dims))]
    P["final_ln_w"] = jnp.ones((1, dims[-1]), jnp.float32)
    P["final_ln_b"] = jnp.zeros((1, dims[-1]), jnp.float32)
    # -------------------------------- head ---------------------------------
    uic = cfg["upsample_initial_channel"]
    P["pre_w"] = conv_flat(cfg["pre_conv_kernel_size"], cfg["num_mels"], uic)
    P["pre_b"] = nrm((1, uic), cfg["num_mels"] * cfg["pre_conv_kernel_size"])
    P["ups"], P["res"] = [], []
    ch = uic
    for i, (u, k) in enumerate(zip(cfg["upsample_rates"], cfg["upsample_kernel_sizes"])):
        cin, cout = uic // 2 ** i, uic // 2 ** (i + 1)
        w_kio = nrm((k, cin, cout), cin * k)       # [k,i,o] == torch ConvT weight[i,o,k]
        b_row = nrm((1, cout), cin * k)
        W, bt = _polyphase_weights(w_kio, b_row, u, (k - u) // 2)   # folded ONCE at init
        P["ups"].append(dict(w=W, b=bt))
        stage = []
        for rk, rd in zip(cfg["resblock_kernel_sizes"], cfg["resblock_dilation_sizes"]):
            D = len(rd)
            c1 = nrm((D, rk, cout, cout), cout * rk).reshape(D, rk * cout, cout)
            c2 = nrm((D, rk, cout, cout), cout * rk).reshape(D, rk * cout, cout)
            stage.append(dict(c1w=c1.astype(jnp.bfloat16), c1b=nrm((D, 1, cout), cout * rk),
                              c2w=c2.astype(jnp.bfloat16), c2b=nrm((D, 1, cout), cout * rk)))
        P["res"].append(stage)
        ch = cout
    P["post_w"] = conv_flat(cfg["post_conv_kernel_size"], ch, 1)
    P["post_b"] = nrm((1, 1), ch * cfg["post_conv_kernel_size"])
    return P


# ------------------------------ forward pass --------------------------------

def backbone_forward(x, P, cfg):
    dims = cfg["dims"]
    L = x.shape[1]
    consts = [P["stem_w"], P["stem_b"], P["stem_ln_w"], P["stem_ln_b"]]
    for blk in P["blocks"][0]:
        consts += [blk[key] for key in _BLOCK_KEYS]
    x = _call(functools.partial(_stage0_kernel, n_blocks=len(P["blocks"][0]), eps=1e-6),
              x, consts, (L, dims[0]))
    for i in range(1, len(dims)):
        consts = [P["mid"][i - 1]["ln_w"], P["mid"][i - 1]["ln_b"],
                  P["mid"][i - 1]["w"], P["mid"][i - 1]["b"]]
        for blk in P["blocks"][i]:
            consts += [blk[key] for key in _BLOCK_KEYS]
        x = _call(functools.partial(_stage_mid_kernel, n_blocks=len(P["blocks"][i]), eps=1e-6),
                  x, consts, (L, dims[i]))
    return x           # final channels_first LayerNorm is fused into the head's first kernel


def head_forward(x, P, cfg):
    rates, ksizes = cfg["upsample_rates"], cfg["upsample_kernel_sizes"]
    uic = cfg["upsample_initial_channel"]
    num_kernels = len(cfg["resblock_kernel_sizes"])
    rb_cfg = tuple((k, tuple(d)) for k, d in
                   zip(cfg["resblock_kernel_sizes"], cfg["resblock_dilation_sizes"]))
    nup = len(rates)
    N, L, _ = x.shape

    # backbone final LN + conv_pre + SiLU + polyphase upsample 0 (one fused kernel)
    cout = uic // 2
    shifts0 = _polyphase_shifts(ksizes[0], rates[0], (ksizes[0] - rates[0]) // 2)
    x = _call(functools.partial(_head_pre_kernel, eps=1e-6,
                                pre_ksize=cfg["pre_conv_kernel_size"], shifts=shifts0),
              x,
              [P["final_ln_w"], P["final_ln_b"], P["pre_w"], P["pre_b"],
               P["ups"][0]["w"], P["ups"][0]["b"]],
              (L, rates[0] * cout))
    x = x.reshape(N, L * rates[0], cout)          # free row-major phase de-interleave
    L = L * rates[0]

    for i in range(nup):
        last = i == nup - 1
        consts = []
        for j in range(num_kernels):
            rb = P["res"][i][j]
            consts += [rb["c1w"], rb["c1b"], rb["c2w"], rb["c2b"]]
        if last:
            consts += [P["post_w"], P["post_b"]]
            out_c, up_shifts, cout_next = 1, (), None
        else:
            u, k = rates[i + 1], ksizes[i + 1]
            cout_next = uic // 2 ** (i + 2)
            up_shifts = _polyphase_shifts(k, u, (k - u) // 2)
            consts += [P["ups"][i + 1]["w"], P["ups"][i + 1]["b"]]
            out_c = u * cout_next
        x = _call(functools.partial(_head_stage_kernel, num_kernels=num_kernels,
                                    rb_cfg=rb_cfg, last=last, up_shifts=up_shifts,
                                    post_ksize=cfg["post_conv_kernel_size"]),
                  x, consts, (L, out_c))
        if not last:
            x = x.reshape(N, L * rates[i + 1], cout_next)
            L = L * rates[i + 1]
    return x              # (N, T_out, 1)


def adamos_hifigan_v1(mel_ncl, P, cfg):
    """mel_ncl: (N, C_mel, T) like torch; returns (N, 1, T_out) audio."""
    x = jnp.transpose(mel_ncl, (0, 2, 1))        # NCL -> NLC (one-off pass over smallest tensor)
    y = backbone_forward(x, P, cfg)
    y = head_forward(y, P, cfg)                  # (N, T_out, 1)
    return jnp.transpose(y, (0, 2, 1))           # size-1 dim -> free


# ---------------------------------- main ------------------------------------

if __name__ == "__main__":
    assert CFG["num_mels"] == CFG["dims"][-1]
    key = jax.random.PRNGKey(0)
    pkey, xkey = jax.random.split(key)
    params = init_params(pkey, CFG)

    N, C_mel, T = 2, CFG["input_channels"], 8
    mel = jax.random.normal(xkey, (N, C_mel, T), jnp.float32)

    @jax.jit
    def fwd(m, P):
        return adamos_hifigan_v1(m, P, CFG)

    audio = fwd(mel, params)
    jax.block_until_ready(audio)
    hop = math.prod(CFG["upsample_rates"])
    assert audio.shape == (N, 1, T * hop), audio.shape
    assert bool(jnp.all(jnp.isfinite(audio)))
    print("KERNEL_OK")
</pallas_src>

<mosaic_0001>
module attributes {stable_mosaic.version = 11 : i64} {
  func.func @_stage0_kernel(%arg0: i32, %arg1: memref<1x8x16xf32, #tpu.memory_space<vmem>>, %arg2: memref<112x32xbf16, #tpu.memory_space<vmem>>, %arg3: memref<1x32xf32, #tpu.memory_space<vmem>>, %arg4: memref<1x32xf32, #tpu.memory_space<vmem>>, %arg5: memref<1x32xf32, #tpu.memory_space<vmem>>, %arg6: memref<7x32xf32, #tpu.memory_space<vmem>>, %arg7: memref<1x32xf32, #tpu.memory_space<vmem>>, %arg8: memref<1x32xf32, #tpu.memory_space<vmem>>, %arg9: memref<1x32xf32, #tpu.memory_space<vmem>>, %arg10: memref<32x128xbf16, #tpu.memory_space<vmem>>, %arg11: memref<1x128xf32, #tpu.memory_space<vmem>>, %arg12: memref<128x32xbf16, #tpu.memory_space<vmem>>, %arg13: memref<1x32xf32, #tpu.memory_space<vmem>>, %arg14: memref<1x32xf32, #tpu.memory_space<vmem>>, %arg15: memref<1x8x32xf32, #tpu.memory_space<vmem>>) attributes {dimension_semantics = [#tpu.dimension_semantics<parallel>], iteration_bounds = array<i64: 2>, scalar_prefetch = 0 : i64, scratch_operands = 0 : i64, tpu.core_type = #tpu.core_type<tc>, window_params = [{transform_indices = @transform_0, window_bounds = array<i64: 1, 8, 16>}, {pipeline_mode = #tpu.pipeline_mode<synchronous>, transform_indices = @transform_1, window_bounds = array<i64: 112, 32>}, {pipeline_mode = #tpu.pipeline_mode<synchronous>, transform_indices = @transform_2, window_bounds = array<i64: 1, 32>}, {pipeline_mode = #tpu.pipeline_mode<synchronous>, transform_indices = @transform_3, window_bounds = array<i64: 1, 32>}, {pipeline_mode = #tpu.pipeline_mode<synchronous>, transform_indices = @transform_4, window_bounds = array<i64: 1, 32>}, {pipeline_mode = #tpu.pipeline_mode<synchronous>, transform_indices = @transform_5, window_bounds = array<i64: 7, 32>}, {pipeline_mode = #tpu.pipeline_mode<synchronous>, transform_indices = @transform_6, window_bounds = array<i64: 1, 32>}, {pipeline_mode = #tpu.pipeline_mode<synchronous>, transform_indices = @transform_7, window_bounds = array<i64: 1, 32>}, {pipeline_mode = #tpu.pipeline_mode<synchronous>, transform_indices = @transform_8, window_bounds = array<i64: 1, 32>}, {pipeline_mode = #tpu.pipeline_mode<synchronous>, transform_indices = @transform_9, window_bounds = array<i64: 32, 128>}, {pipeline_mode = #tpu.pipeline_mode<synchronous>, transform_indices = @transform_10, window_bounds = array<i64: 1, 128>}, {pipeline_mode = #tpu.pipeline_mode<synchronous>, transform_indices = @transform_11, window_bounds = array<i64: 128, 32>}, {pipeline_mode = #tpu.pipeline_mode<synchronous>, transform_indices = @transform_12, window_bounds = array<i64: 1, 32>}, {pipeline_mode = #tpu.pipeline_mode<synchronous>, transform_indices = @transform_13, window_bounds = array<i64: 1, 32>}, {transform_indices = @transform_14, window_bounds = array<i64: 1, 8, 32>}]} {
    %c0 = arith.constant 0 : index
    %c0_0 = arith.constant 0 : index
    %c0_1 = arith.constant 0 : index
    %0 = vector.load %arg1[%c0, %c0_0, %c0_1] : memref<1x8x16xf32, #tpu.memory_space<vmem>>, vector<1x8x16xf32>
    %1 = vector.shape_cast %0 : vector<1x8x16xf32> to vector<8x16xf32>
    %c0_2 = arith.constant 0 : index
    %c0_3 = arith.constant 0 : index
    %2 = vector.load %arg2[%c0_2, %c0_3] : memref<112x32xbf16, #tpu.memory_space<vmem>>, vector<112x32xbf16>
    %c0_4 = arith.constant 0 : index
    %c0_5 = arith.constant 0 : index
    %3 = vector.load %arg3[%c0_4, %c0_5] : memref<1x32xf32, #tpu.memory_space<vmem>>, vector<1x32xf32>
    %4 = tpu.iota {dimensions = array<i32: 0>} : vector<8x16xi32>
    %5 = vector.extract_strided_slice %1 {offsets = [0, 0], sizes = [1, 16], strides = [1, 1]} : vector<8x16xf32> to vector<1x16xf32>
    %6 = vector.shape_cast %5 : vector<1x16xf32> to vector<1x16xf32>
    %7 = vector.broadcast %6 : vector<1x16xf32> to vector<8x16xf32>
    %8 = vector.extract_strided_slice %1 {offsets = [7, 0], sizes = [1, 16], strides = [1, 1]} : vector<8x16xf32> to vector<1x16xf32>
    %9 = vector.shape_cast %8 : vector<1x16xf32> to vector<1x16xf32>
    %10 = vector.broadcast %9 : vector<1x16xf32> to vector<8x16xf32>
    %c3_i32 = arith.constant 3 : i32
    %11 = tpu.dynamic_rotate %1 by %c3_i32 dim 0 : vector<8x16xf32>, i32 -> vector<8x16xf32>
    %c3_i32_6 = arith.constant 3 : i32
    %12 = vector.broadcast %c3_i32_6 : i32 to vector<8x16xi32>
    %13 = arith.cmpi slt, %4, %12 : vector<8x16xi32>
    %c11_i32 = arith.constant 11 : i32
    %14 = vector.broadcast %c11_i32 : i32 to vector<8x16xi32>
    %15 = arith.cmpi sge, %4, %14 : vector<8x16xi32>
    %16 = arith.select %15, %10, %11 : vector<8x16xi1>, vector<8x16xf32>
    %17 = arith.select %13, %7, %16 : vector<8x16xi1>, vector<8x16xf32>
    %c2_i32 = arith.constant 2 : i32
    %18 = tpu.dynamic_rotate %1 by %c2_i32 dim 0 : vector<8x16xf32>, i32 -> vector<8x16xf32>
    %c2_i32_7 = arith.constant 2 : i32
    %19 = vector.broadcast %c2_i32_7 : i32 to vector<8x16xi32>
    %20 = arith.cmpi slt, %4, %19 : vector<8x16xi32>
    %c10_i32 = arith.constant 10 : i32
    %21 = vector.broadcast %c10_i32 : i32 to vector<8x16xi32>
    %22 = arith.cmpi sge, %4, %21 : vector<8x16xi32>
    %23 = arith.select %22, %10, %18 : vector<8x16xi1>, vector<8x16xf32>
    %24 = arith.select %20, %7, %23 : vector<8x16xi1>, vector<8x16xf32>
    %c1_i32 = arith.constant 1 : i32
    %25 = tpu.dynamic_rotate %1 by %c1_i32 dim 0 : vector<8x16xf32>, i32 -> vector<8x16xf32>
    %c1_i32_8 = arith.constant 1 : i32
    %26 = vector.broadcast %c1_i32_8 : i32 to vector<8x16xi32>
    %27 = arith.cmpi slt, %4, %26 : vector<8x16xi32>
    %c9_i32 = arith.constant 9 : i32
    %28 = vector.broadcast %c9_i32 : i32 to vector<8x16xi32>
    %29 = arith.cmpi sge, %4, %28 : vector<8x16xi32>
    %30 = arith.select %29, %10, %25 : vector<8x16xi1>, vector<8x16xf32>
    %31 = arith.select %27, %7, %30 : vector<8x16xi1>, vector<8x16xf32>
    %c7_i32 = arith.constant 7 : i32
    %32 = tpu.dynamic_rotate %1 by %c7_i32 dim 0 : vector<8x16xf32>, i32 -> vector<8x16xf32>
    %c-1_i32 = arith.constant -1 : i32
    %33 = vector.broadcast %c-1_i32 : i32 to vector<8x16xi32>
    %34 = arith.cmpi slt, %4, %33 : vector<8x16xi32>
    %c7_i32_9 = arith.constant 7 : i32
    %35 = vector.broadcast %c7_i32_9 : i32 to vector<8x16xi32>
    %36 = arith.cmpi sge, %4, %35 : vector<8x16xi32>
    %37 = arith.select %36, %10, %32 : vector<8x16xi1>, vector<8x16xf32>
    %38 = arith.select %34, %7, %37 : vector<8x16xi1>, vector<8x16xf32>
    %c6_i32 = arith.constant 6 : i32
    %39 = tpu.dynamic_rotate %1 by %c6_i32 dim 0 : vector<8x16xf32>, i32 -> vector<8x16xf32>
    %c-2_i32 = arith.constant -2 : i32
    %40 = vector.broadcast %c-2_i32 : i32 to vector<8x16xi32>
    %41 = arith.cmpi slt, %4, %40 : vector<8x16xi32>
    %c6_i32_10 = arith.constant 6 : i32
    %42 = vector.broadcast %c6_i32_10 : i32 to vector<8x16xi32>
    %43 = arith.cmpi sge, %4, %42 : vector<8x16xi32>
    %44 = arith.select %43, %10, %39 : vector<8x16xi1>, vector<8x16xf32>
    %45 = arith.select %41, %7, %44 : vector<8x16xi1>, vector<8x16xf32>
    %c5_i32 = arith.constant 5 : i32
    %46 = tpu.dynamic_rotate %1 by %c5_i32 dim 0 : vector<8x16xf32>, i32 -> vector<8x16xf32>
    %c-3_i32 = arith.constant -3 : i32
    %47 = vector.broadcast %c-3_i32 : i32 to vector<8x16xi32>
    %48 = arith.cmpi slt, %4, %47 : vector<8x16xi32>
    %c5_i32_11 = arith.constant 5 : i32
    %49 = vector.broadcast %c5_i32_11 : i32 to vector<8x16xi32>
    %50 = arith.cmpi sge, %4, %49 : vector<8x16xi32>
    %51 = arith.select %50, %10, %46 : vector<8x16xi1>, vector<8x16xf32>
    %52 = arith.select %48, %7, %51 : vector<8x16xi1>, vector<8x16xf32>
    %53 = tpu.concatenate %17, %24, %31, %1, %38, %45, %52 in 1 : vector<8x16xf32>, vector<8x16xf32>, vector<8x16xf32>, vector<8x16xf32>, vector<8x16xf32>, vector<8x16xf32>, vector<8x16xf32> -> vector<8x112xf32>
    %54 = arith.truncf %53 : vector<8x112xf32> to vector<8x112xbf16>
    %cst = arith.constant dense<0.000000e+00> : vector<8x32xf32>
    %55 = tpu.matmul %54, %2, %cst {dimension_numbers = #tpu.dot_dimension_numbers<[1], [0], [0], [1], [0, 0, 1, 1], [], []>} : vector<8x112xbf16>, vector<112x32xbf16>, vector<8x32xf32> -> vector<8x32xf32>
    %56 = vector.broadcast %3 : vector<1x32xf32> to vector<8x32xf32>
    %57 = arith.addf %55, %56 : vector<8x32xf32>
    %c0_12 = arith.constant 0 : index
    %c0_13 = arith.constant 0 : index
    %58 = vector.load %arg4[%c0_12, %c0_13] : memref<1x32xf32, #tpu.memory_space<vmem>>, vector<1x32xf32>
    %c0_14 = arith.constant 0 : index
    %c0_15 = arith.constant 0 : index
    %59 = vector.load %arg5[%c0_14, %c0_15] : memref<1x32xf32, #tpu.memory_space<vmem>>, vector<1x32xf32>
    %cst_16 = arith.constant dense<0.000000e+00> : vector<8xf32>
    %60 = vector.multi_reduction <add>, %57, %cst_16 [1] : vector<8x32xf32> to vector<8xf32>
    %61 = vector.shape_cast %60 : vector<8xf32> to vector<8x1xf32>
    %cst_17 = arith.constant 3.200000e+01 : f32
    %62 = vector.broadcast %cst_17 : f32 to vector<8x1xf32>
    %63 = arith.divf %61, %62 : vector<8x1xf32>
    %64 = vector.broadcast %63 : vector<8x1xf32> to vector<8x32xf32>
    %65 = arith.subf %57, %64 : vector<8x32xf32>
    %66 = arith.mulf %65, %65 : vector<8x32xf32>
    %cst_18 = arith.constant dense<0.000000e+00> : vector<8xf32>
    %67 = vector.multi_reduction <add>, %66, %cst_18 [1] : vector<8x32xf32> to vector<8xf32>
    %68 = vector.shape_cast %67 : vector<8xf32> to vector<8x1xf32>
    %cst_19 = arith.constant 3.200000e+01 : f32
    %69 = vector.broadcast %cst_19 : f32 to vector<8x1xf32>
    %70 = arith.divf %68, %69 : vector<8x1xf32>
    %cst_20 = arith.constant 9.99999997E-7 : f32
    %71 = vector.broadcast %cst_20 : f32 to vector<8x1xf32>
    %72 = arith.addf %70, %71 : vector<8x1xf32>
    %73 = math.rsqrt %72 : vector<8x1xf32>
    %74 = vector.broadcast %73 : vector<8x1xf32> to vector<8x32xf32>
    %75 = arith.mulf %65, %74 : vector<8x32xf32>
    %76 = vector.broadcast %58 : vector<1x32xf32> to vector<8x32xf32>
    %77 = arith.mulf %75, %76 : vector<8x32xf32>
    %78 = vector.broadcast %59 : vector<1x32xf32> to vector<8x32xf32>
    %79 = arith.addf %77, %78 : vector<8x32xf32>
    %c0_21 = arith.constant 0 : index
    %c0_22 = arith.constant 0 : index
    %80 = vector.load %arg6[%c0_21, %c0_22] : memref<7x32xf32, #tpu.memory_space<vmem>>, vector<7x32xf32>
    %c0_23 = arith.constant 0 : index
    %c0_24 = arith.constant 0 : index
    %81 = vector.load %arg7[%c0_23, %c0_24] : memref<1x32xf32, #tpu.memory_space<vmem>>, vector<1x32xf32>
    %c0_25 = arith.constant 0 : index
    %c0_26 = arith.constant 0 : index
    %82 = vector.load %arg8[%c0_25, %c0_26] : memref<1x32xf32, #tpu.memory_space<vmem>>, vector<1x32xf32>
    %c0_27 = arith.constant 0 : index
    %c0_28 = arith.constant 0 : index
    %83 = vector.load %arg9[%c0_27, %c0_28] : memref<1x32xf32, #tpu.memory_space<vmem>>, vector<1x32xf32>
    %c0_29 = arith.constant 0 : index
    %c0_30 = arith.constant 0 : index
    %84 = vector.load %arg10[%c0_29, %c0_30] : memref<32x128xbf16, #tpu.memory_space<vmem>>, vector<32x128xbf16>
    %c0_31 = arith.constant 0 : index
    %c0_32 = arith.constant 0 : index
    %85 = vector.load %arg11[%c0_31, %c0_32] : memref<1x128xf32, #tpu.memory_space<vmem>>, vector<1x128xf32>
    %c0_33 = arith.constant 0 : index
    %c0_34 = arith.constant 0 : index
    %86 = vector.load %arg12[%c0_33, %c0_34] : memref<128x32xbf16, #tpu.memory_space<vmem>>, vector<128x32xbf16>
    %c0_35 = arith.constant 0 : index
    %c0_36 = arith.constant 0 : index
    %87 = vector.load %arg13[%c0_35, %c0_36] : memref<1x32xf32, #tpu.memory_space<vmem>>, vector<1x32xf32>
    %c0_37 = arith.constant 0 : index
    %c0_38 = arith.constant 0 : index
    %88 = vector.load %arg14[%c0_37, %c0_38] : memref<1x32xf32, #tpu.memory_space<vmem>>, vector<1x32xf32>
    %89 = tpu.iota {dimensions = array<i32: 0>} : vector<8x32xi32>
    %90 = vector.extract_strided_slice %80 {offsets = [3, 0], sizes = [1, 32], strides = [1, 1]} : vector<7x32xf32> to vector<1x32xf32>
    %91 = vector.broadcast %90 : vector<1x32xf32> to vector<8x32xf32>
    %92 = arith.mulf %79, %91 : vector<8x32xf32>
    %c3_i32_39 = arith.constant 3 : i32
    %93 = tpu.dynamic_rotate %79 by %c3_i32_39 dim 0 : vector<8x32xf32>, i32 -> vector<8x32xf32>
    %c3_i32_40 = arith.constant 3 : i32
    %94 = vector.broadcast %c3_i32_40 : i32 to vector<8x32xi32>
    %95 = arith.cmpi sge, %89, %94 : vector<8x32xi32>
    %c11_i32_41 = arith.constant 11 : i32
    %96 = vector.broadcast %c11_i32_41 : i32 to vector<8x32xi32>
    %97 = arith.cmpi slt, %89, %96 : vector<8x32xi32>
    %98 = arith.andi %95, %97 : vector<8x32xi1>
    %cst_42 = arith.constant 0.000000e+00 : f32
    %99 = vector.broadcast %cst_42 : f32 to vector<8x32xf32>
    %100 = arith.select %98, %93, %99 : vector<8x32xi1>, vector<8x32xf32>
    %101 = vector.extract_strided_slice %80 {offsets = [0, 0], sizes = [1, 32], strides = [1, 1]} : vector<7x32xf32> to vector<1x32xf32>
    %102 = vector.broadcast %101 : vector<1x32xf32> to vector<8x32xf32>
    %103 = arith.mulf %100, %102 : vector<8x32xf32>
    %104 = arith.addf %92, %103 : vector<8x32xf32>
    %c2_i32_43 = arith.constant 2 : i32
    %105 = tpu.dynamic_rotate %79 by %c2_i32_43 dim 0 : vector<8x32xf32>, i32 -> vector<8x32xf32>
    %c2_i32_44 = arith.constant 2 : i32
    %106 = vector.broadcast %c2_i32_44 : i32 to vector<8x32xi32>
    %107 = arith.cmpi sge, %89, %106 : vector<8x32xi32>
    %c10_i32_45 = arith.constant 10 : i32
    %108 = vector.broadcast %c10_i32_45 : i32 to vector<8x32xi32>
    %109 = arith.cmpi slt, %89, %108 : vector<8x32xi32>
    %110 = arith.andi %107, %109 : vector<8x32xi1>
    %cst_46 = arith.constant 0.000000e+00 : f32
    %111 = vector.broadcast %cst_46 : f32 to vector<8x32xf32>
    %112 = arith.select %110, %105, %111 : vector<8x32xi1>, vector<8x32xf32>
    %113 = vector.extract_strided_slice %80 {offsets = [1, 0], sizes = [1, 32], strides = [1, 1]} : vector<7x32xf32> to vector<1x32xf32>
    %114 = vector.broadcast %113 : vector<1x32xf32> to vector<8x32xf32>
    %115 = arith.mulf %112, %114 : vector<8x32xf32>
    %116 = arith.addf %104, %115 : vector<8x32xf32>
    %c1_i32_47 = arith.constant 1 : i32
    %117 = tpu.dynamic_rotate %79 by %c1_i32_47 dim 0 : vector<8x32xf32>, i32 -> vector<8x32xf32>
    %c1_i32_48 = arith.constant 1 : i32
    %118 = vector.broadcast %c1_i32_48 : i32 to vector<8x32xi32>
    %119 = arith.cmpi sge, %89, %118 : vector<8x32xi32>
    %c9_i32_49 = arith.constant 9 : i32
    %120 = vector.broadcast %c9_i32_49 : i32 to vector<8x32xi32>
    %121 = arith.cmpi slt, %89, %120 : vector<8x32xi32>
    %122 = arith.andi %119, %121 : vector<8x32xi1>
    %cst_50 = arith.constant 0.000000e+00 : f32
    %123 = vector.broadcast %cst_50 : f32 to vector<8x32xf32>
    %124 = arith.select %122, %117, %123 : vector<8x32xi1>, vector<8x32xf32>
    %125 = vector.extract_strided_slice %80 {offsets = [2, 0], sizes = [1, 32], strides = [1, 1]} : vector<7x32xf32> to vector<1x32xf32>
    %126 = vector.broadcast %125 : vector<1x32xf32> to vector<8x32xf32>
    %127 = arith.mulf %124, %126 : vector<8x32xf32>
    %128 = arith.addf %116, %127 : vector<8x32xf32>
    %c7_i32_51 = arith.constant 7 : i32
    %129 = tpu.dynamic_rotate %79 by %c7_i32_51 dim 0 : vector<8x32xf32>, i32 -> vector<8x32xf32>
    %c-1_i32_52 = arith.constant -1 : i32
    %130 = vector.broadcast %c-1_i32_52 : i32 to vector<8x32xi32>
    %131 = arith.cmpi sge, %89, %130 : vector<8x32xi32>
    %c7_i32_53 = arith.constant 7 : i32
    %132 = vector.broadcast %c7_i32_53 : i32 to vector<8x32xi32>
    %133 = arith.cmpi slt, %89, %132 : vector<8x32xi32>
    %134 = arith.andi %131, %133 : vector<8x32xi1>
    %cst_54 = arith.constant 0.000000e+00 : f32
    %135 = vector.broadcast %cst_54 : f32 to vector<8x32xf32>
    %136 = arith.select %134, %129, %135 : vector<8x32xi1>, vector<8x32xf32>
    %137 = vector.extract_strided_slice %80 {offsets = [4, 0], sizes = [1, 32], strides = [1, 1]} : vector<7x32xf32> to vector<1x32xf32>
    %138 = vector.broadcast %137 : vector<1x32xf32> to vector<8x32xf32>
    %139 = arith.mulf %136, %138 : vector<8x32xf32>
    %140 = arith.addf %128, %139 : vector<8x32xf32>
    %c6_i32_55 = arith.constant 6 : i32
    %141 = tpu.dynamic_rotate %79 by %c6_i32_55 dim 0 : vector<8x32xf32>, i32 -> vector<8x32xf32>
    %c-2_i32_56 = arith.constant -2 : i32
    %142 = vector.broadcast %c-2_i32_56 : i32 to vector<8x32xi32>
    %143 = arith.cmpi sge, %89, %142 : vector<8x32xi32>
    %c6_i32_57 = arith.constant 6 : i32
    %144 = vector.broadcast %c6_i32_57 : i32 to vector<8x32xi32>
    %145 = arith.cmpi slt, %89, %144 : vector<8x32xi32>
    %146 = arith.andi %143, %145 : vector<8x32xi1>
    %cst_58 = arith.constant 0.000000e+00 : f32
    %147 = vector.broadcast %cst_58 : f32 to vector<8x32xf32>
    %148 = arith.select %146, %141, %147 : vector<8x32xi1>, vector<8x32xf32>
    %149 = vector.extract_strided_slice %80 {offsets = [5, 0], sizes = [1, 32], strides = [1, 1]} : vector<7x32xf32> to vector<1x32xf32>
    %150 = vector.broadcast %149 : vector<1x32xf32> to vector<8x32xf32>
    %151 = arith.mulf %148, %150 : vector<8x32xf32>
    %152 = arith.addf %140, %151 : vector<8x32xf32>
    %c5_i32_59 = arith.constant 5 : i32
    %153 = tpu.dynamic_rotate %79 by %c5_i32_59 dim 0 : vector<8x32xf32>, i32 -> vector<8x32xf32>
    %c-3_i32_60 = arith.constant -3 : i32
    %154 = vector.broadcast %c-3_i32_60 : i32 to vector<8x32xi32>
    %155 = arith.cmpi sge, %89, %154 : vector<8x32xi32>
    %c5_i32_61 = arith.constant 5 : i32
    %156 = vector.broadcast %c5_i32_61 : i32 to vector<8x32xi32>
    %157 = arith.cmpi slt, %89, %156 : vector<8x32xi32>
    %158 = arith.andi %155, %157 : vector<8x32xi1>
    %cst_62 = arith.constant 0.000000e+00 : f32
    %159 = vector.broadcast %cst_62 : f32 to vector<8x32xf32>
    %160 = arith.select %158, %153, %159 : vector<8x32xi1>, vector<8x32xf32>
    %161 = vector.extract_strided_slice %80 {offsets = [6, 0], sizes = [1, 32], strides = [1, 1]} : vector<7x32xf32> to vector<1x32xf32>
    %162 = vector.broadcast %161 : vector<1x32xf32> to vector<8x32xf32>
    %163 = arith.mulf %160, %162 : vector<8x32xf32>
    %164 = arith.addf %152, %163 : vector<8x32xf32>
    %165 = vector.broadcast %81 : vector<1x32xf32> to vector<8x32xf32>
    %166 = arith.addf %164, %165 : vector<8x32xf32>
    %cst_63 = arith.constant dense<0.000000e+00> : vector<8xf32>
    %167 = vector.multi_reduction <add>, %166, %cst_63 [1] : vector<8x32xf32> to vector<8xf32>
    %168 = vector.shape_cast %167 : vector<8xf32> to vector<8x1xf32>
    %cst_64 = arith.constant 3.200000e+01 : f32
    %169 = vector.broadcast %cst_64 : f32 to vector<8x1xf32>
    %170 = arith.divf %168, %169 : vector<8x1xf32>
    %171 = vector.broadcast %170 : vector<8x1xf32> to vector<8x32xf32>
    %172 = arith.subf %166, %171 : vector<8x32xf32>
    %173 = arith.mulf %172, %172 : vector<8x32xf32>
    %cst_65 = arith.constant dense<0.000000e+00> : vector<8xf32>
    %174 = vector.multi_reduction <add>, %173, %cst_65 [1] : vector<8x32xf32> to vector<8xf32>
    %175 = vector.shape_cast %174 : vector<8xf32> to vector<8x1xf32>
    %cst_66 = arith.constant 3.200000e+01 : f32
    %176 = vector.broadcast %cst_66 : f32 to vector<8x1xf32>
    %177 = arith.divf %175, %176 : vector<8x1xf32>
    %cst_67 = arith.constant 9.99999997E-7 : f32
    %178 = vector.broadcast %cst_67 : f32 to vector<8x1xf32>
    %179 = arith.addf %177, %178 : vector<8x1xf32>
    %180 = math.rsqrt %179 : vector<8x1xf32>
    %181 = vector.broadcast %180 : vector<8x1xf32> to vector<8x32xf32>
    %182 = arith.mulf %172, %181 : vector<8x32xf32>
    %183 = vector.broadcast %82 : vector<1x32xf32> to vector<8x32xf32>
    %184 = arith.mulf %182, %183 : vector<8x32xf32>
    %185 = vector.broadcast %83 : vector<1x32xf32> to vector<8x32xf32>
    %186 = arith.addf %184, %185 : vector<8x32xf32>
    %187 = arith.truncf %186 : vector<8x32xf32> to vector<8x32xbf16>
    %cst_68 = arith.constant dense<0.000000e+00> : vector<8x128xf32>
    %188 = tpu.matmul %187, %84, %cst_68 {dimension_numbers = #tpu.dot_dimension_numbers<[1], [0], [0], [1], [0, 0, 1, 1], [], []>} : vector<8x32xbf16>, vector<32x128xbf16>, vector<8x128xf32> -> vector<8x128xf32>
    %189 = vector.broadcast %85 : vector<1x128xf32> to vector<8x128xf32>
    %190 = arith.addf %188, %189 : vector<8x128xf32>
    %cst_69 = arith.constant 5.000000e-01 : f32
    %191 = vector.broadcast %cst_69 : f32 to vector<8x128xf32>
    %192 = arith.mulf %191, %190 : vector<8x128xf32>
    %cst_70 = arith.constant 0.707106769 : f32
    %193 = vector.broadcast %cst_70 : f32 to vector<8x128xf32>
    %194 = arith.mulf %190, %193 : vector<8x128xf32>
    %195 = math.absf %194 : vector<8x128xf32>
    %cst_71 = arith.constant 0.327591091 : f32
    %196 = vector.broadcast %cst_71 : f32 to vector<8x128xf32>
    %197 = arith.mulf %196, %195 : vector<8x128xf32>
    %cst_72 = arith.constant 1.000000e+00 : f32
    %198 = vector.broadcast %cst_72 : f32 to vector<8x128xf32>
    %199 = arith.addf %198, %197 : vector<8x128xf32>
    %200 = tpu.reciprocal %199 {approx = true} : vector<8x128xf32> -> vector<8x128xf32>
    %cst_73 = arith.constant 1.06140542 : f32
    %201 = vector.broadcast %cst_73 : f32 to vector<8x128xf32>
    %202 = arith.mulf %200, %201 : vector<8x128xf32>
    %cst_74 = arith.constant -1.45315206 : f32
    %203 = vector.broadcast %cst_74 : f32 to vector<8x128xf32>
    %204 = arith.addf %203, %202 : vector<8x128xf32>
    %205 = arith.mulf %200, %204 : vector<8x128xf32>
    %cst_75 = arith.constant 1.42141378 : f32
    %206 = vector.broadcast %cst_75 : f32 to vector<8x128xf32>
    %207 = arith.addf %206, %205 : vector<8x128xf32>
    %208 = arith.mulf %200, %207 : vector<8x128xf32>
    %cst_76 = arith.constant -0.284496725 : f32
    %209 = vector.broadcast %cst_76 : f32 to vector<8x128xf32>
    %210 = arith.addf %209, %208 : vector<8x128xf32>
    %211 = arith.mulf %200, %210 : vector<8x128xf32>
    %cst_77 = arith.constant 0.254829586 : f32
    %212 = vector.broadcast %cst_77 : f32 to vector<8x128xf32>
    %213 = arith.addf %212, %211 : vector<8x128xf32>
    %214 = arith.mulf %200, %213 : vector<8x128xf32>
    %cst_78 = arith.constant 0.000000e+00 : f32
    %215 = vector.broadcast %cst_78 : f32 to vector<8x128xf32>
    %216 = arith.subf %215, %195 : vector<8x128xf32>
    %217 = arith.mulf %216, %195 : vector<8x128xf32>
    %218 = math.exp %217 : vector<8x128xf32>
    %219 = arith.mulf %214, %218 : vector<8x128xf32>
    %cst_79 = arith.constant 1.000000e+00 : f32
    %220 = vector.broadcast %cst_79 : f32 to vector<8x128xf32>
    %221 = arith.subf %220, %219 : vector<8x128xf32>
    %cst_80 = arith.constant 0.000000e+00 : f32
    %222 = vector.broadcast %cst_80 : f32 to vector<8x128xf32>
    %223 = arith.cmpf oge, %194, %222 : vector<8x128xf32>
    %cst_81 = arith.constant 0.000000e+00 : f32
    %224 = vector.broadcast %cst_81 : f32 to vector<8x128xf32>
    %225 = arith.subf %224, %221 : vector<8x128xf32>
    %226 = arith.select %223, %221, %225 : vector<8x128xi1>, vector<8x128xf32>
    %cst_82 = arith.constant 1.000000e+00 : f32
    %227 = vector.broadcast %cst_82 : f32 to vector<8x128xf32>
    %228 = arith.addf %227, %226 : vector<8x128xf32>
    %229 = arith.mulf %192, %228 : vector<8x128xf32>
    %230 = arith.truncf %229 : vector<8x128xf32> to vector<8x128xbf16>
    %cst_83 = arith.constant dense<0.000000e+00> : vector<8x32xf32>
    %231 = tpu.matmul %230, %86, %cst_83 {dimension_numbers = #tpu.dot_dimension_numbers<[1], [0], [0], [1], [0, 0, 1, 1], [], []>} : vector<8x128xbf16>, vector<128x32xbf16>, vector<8x32xf32> -> vector<8x32xf32>
    %232 = vector.broadcast %87 : vector<1x32xf32> to vector<8x32xf32>
    %233 = arith.addf %231, %232 : vector<8x32xf32>
    %234 = vector.broadcast %88 : vector<1x32xf32> to vector<8x32xf32>
    %235 = arith.mulf %233, %234 : vector<8x32xf32>
    %236 = arith.addf %79, %235 : vector<8x32xf32>
    %c0_84 = arith.constant 0 : index
    %c0_85 = arith.constant 0 : index
    %c0_86 = arith.constant 0 : index
    %237 = vector.load %arg15[%c0_84, %c0_85, %c0_86] : memref<1x8x32xf32, #tpu.memory_space<vmem>>, vector<1x8x32xf32>
    %238 = vector.shape_cast %237 : vector<1x8x32xf32> to vector<8x32xf32>
    %239 = vector.shape_cast %236 : vector<8x32xf32> to vector<1x8x32xf32>
    tpu.vector_store %arg15[%c0_84, %c0_85, %c0_86], %239 {strides = array<i32>} : memref<1x8x32xf32, #tpu.memory_space<vmem>>, vector<1x8x32xf32>,
    return
  }
  func.func @transform_0(%arg0: i32) -> (i32, i32, i32) {
    %c0_i32 = arith.constant 0 : i32
    %c0_i32_0 = arith.constant 0 : i32
    %c0_i32_1 = arith.constant 0 : i32
    return %arg0, %c0_i32, %c0_i32_0 : i32, i32, i32
  }
  func.func @transform_1(%arg0: i32) -> (i32, i32) {
    %c0_i32 = arith.constant 0 : i32
    %c0_i32_0 = arith.constant 0 : i32
    %c0_i32_1 = arith.constant 0 : i32
    return %c0_i32, %c0_i32_0 : i32, i32
  }
  func.func @transform_2(%arg0: i32) -> (i32, i32) {
    %c0_i32 = arith.constant 0 : i32
    %c0_i32_0 = arith.constant 0 : i32
    %c0_i32_1 = arith.constant 0 : i32
    return %c0_i32, %c0_i32_0 : i32, i32
  }
  func.func @transform_3(%arg0: i32) -> (i32, i32) {
    %c0_i32 = arith.constant 0 : i32
    %c0_i32_0 = arith.constant 0 : i32
    %c0_i32_1 = arith.constant 0 : i32
    return %c0_i32, %c0_i32_0 : i32, i32
  }
  func.func @transform_4(%arg0: i32) -> (i32, i32) {
    %c0_i32 = arith.constant 0 : i32
    %c0_i32_0 = arith.constant 0 : i32
    %c0_i32_1 = arith.constant 0 : i32
    return %c0_i32, %c0_i32_0 : i32, i32
  }
  func.func @transform_5(%arg0: i32) -> (i32, i32) {
    %c0_i32 = arith.constant 0 : i32
    %c0_i32_0 = arith.constant 0 : i32
    %c0_i32_1 = arith.constant 0 : i32
    return %c0_i32, %c0_i32_0 : i32, i32
  }
  func.func @transform_6(%arg0: i32) -> (i32, i32) {
    %c0_i32 = arith.constant 0 : i32
    %c0_i32_0 = arith.constant 0 : i32
    %c0_i32_1 = arith.constant 0 : i32
    return %c0_i32, %c0_i32_0 : i32, i32
  }
  func.func @transform_7(%arg0: i32) -> (i32, i32) {
    %c0_i32 = arith.constant 0 : i32
    %c0_i32_0 = arith.constant 0 : i32
    %c0_i32_1 = arith.constant 0 : i32
    return %c0_i32, %c0_i32_0 : i32, i32
  }
  func.func @transform_8(%arg0: i32) -> (i32, i32) {
    %c0_i32 = arith.constant 0 : i32
    %c0_i32_0 = arith.constant 0 : i32
    %c0_i32_1 = arith.constant 0 : i32
    return %c0_i32, %c0_i32_0 : i32, i32
  }
  func.func @transform_9(%arg0: i32) -> (i32, i32) {
    %c0_i32 = arith.constant 0 : i32
    %c0_i32_0 = arith.constant 0 : i32
    %c0_i32_1 = arith.constant 0 : i32
    return %c0_i32, %c0_i32_0 : i32, i32
  }
  func.func @transform_10(%arg0: i32) -> (i32, i32) {
    %c0_i32 = arith.constant 0 : i32
    %c0_i32_0 = arith.constant 0 : i32
    %c0_i32_1 = arith.constant 0 : i32
    return %c0_i32, %c0_i32_0 : i32, i32
  }
  func.func @transform_11(%arg0: i32) -> (i32, i32) {
    %c0_i32 = arith.constant 0 : i32
    %c0_i32_0 = arith.constant 0 : i32
    %c0_i32_1 = arith.constant 0 : i32
    return %c0_i32, %c0_i32_0 : i32, i32
  }
  func.func @transform_12(%arg0: i32) -> (i32, i32) {
    %c0_i32 = arith.constant 0 : i32
    %c0_i32_0 = arith.constant 0 : i32
    %c0_i32_1 = arith.constant 0 : i32
    return %c0_i32, %c0_i32_0 : i32, i32
  }
  func.func @transform_13(%arg0: i32) -> (i32, i32) {
    %c0_i32 = arith.constant 0 : i32
    %c0_i32_0 = arith.constant 0 : i32
    %c0_i32_1 = arith.constant 0 : i32
    return %c0_i32, %c0_i32_0 : i32, i32
  }
  func.func @transform_14(%arg0: i32) -> (i32, i32, i32) {
    %c0_i32 = arith.constant 0 : i32
    %c0_i32_0 = arith.constant 0 : i32
    %c0_i32_1 = arith.constant 0 : i32
    return %arg0, %c0_i32, %c0_i32_0 : i32, i32, i32
  }
}

module attributes {stable_mosaic.version = 11 : i64} {
  func.func @_stage_mid_kernel(%arg0: i32, %arg1: memref<1x8x32xf32, #tpu.memory_space<vmem>>, %arg2: memref<1x32xf32, #tpu.memory_space<vmem>>, %arg3: memref<1x32xf32, #tpu.memory_space<vmem>>, %arg4: memref<32x48xbf16, #tpu.memory_space<vmem>>, %arg5: memref<1x48xf32, #tpu.memory_space<vmem>>, %arg6: memref<7x48xf32, #tpu.memory_space<vmem>>, %arg7: memref<1x48xf32, #tpu.memory_space<vmem>>, %arg8: memref<1x48xf32, #tpu.memory_space<vmem>>, %arg9: memref<1x48xf32, #tpu.memory_space<vmem>>, %arg10: memref<48x192xbf16, #tpu.memory_space<vmem>>, %arg11: memref<1x192xf32, #tpu.memory_space<vmem>>, %arg12: memref<192x48xbf16, #tpu.memory_space<vmem>>, %arg13: memref<1x48xf32, #tpu.memory_space<vmem>>, %arg14: memref<1x48xf32, #tpu.memory_space<vmem>>, %arg15: memref<1x8x48xf32, #tpu.memory_space<vmem>>) attributes {dimension_semantics = [#tpu.dimension_semantics<parallel>], iteration_bounds = array<i64: 2>, scalar_prefetch = 0 : i64, scratch_operands = 0 : i64, tpu.core_type = #tpu.core_type<tc>, window_params = [{transform_indices = @transform_0, window_bounds = array<i64: 1, 8, 32>}, {pipeline_mode = #tpu.pipeline_mode<synchronous>, transform_indices = @transform_1, window_bounds = array<i64: 1, 32>}, {pipeline_mode = #tpu.pipeline_mode<synchronous>, transform_indices = @transform_2, window_bounds = array<i64: 1, 32>}, {pipeline_mode = #tpu.pipeline_mode<synchronous>, transform_indices = @transform_3, window_bounds = array<i64: 32, 48>}, {pipeline_mode = #tpu.pipeline_mode<synchronous>, transform_indices = @transform_4, window_bounds = array<i64: 1, 48>}, {pipeline_mode = #tpu.pipeline_mode<synchronous>, transform_indices = @transform_5, window_bounds = array<i64: 7, 48>}, {pipeline_mode = #tpu.pipeline_mode<synchronous>, transform_indices = @transform_6, window_bounds = array<i64: 1, 48>}, {pipeline_mode = #tpu.pipeline_mode<synchronous>, transform_indices = @transform_7, window_bounds = array<i64: 1, 48>}, {pipeline_mode = #tpu.pipeline_mode<synchronous>, transform_indices = @transform_8, window_bounds = array<i64: 1, 48>}, {pipeline_mode = #tpu.pipeline_mode<synchronous>, transform_indices = @transform_9, window_bounds = array<i64: 48, 192>}, {pipeline_mode = #tpu.pipeline_mode<synchronous>, transform_indices = @transform_10, window_bounds = array<i64: 1, 192>}, {pipeline_mode = #tpu.pipeline_mode<synchronous>, transform_indices = @transform_11, window_bounds = array<i64: 192, 48>}, {pipeline_mode = #tpu.pipeline_mode<synchronous>, transform_indices = @transform_12, window_bounds = array<i64: 1, 48>}, {pipeline_mode = #tpu.pipeline_mode<synchronous>, transform_indices = @transform_13, window_bounds = array<i64: 1, 48>}, {transform_indices = @transform_14, window_bounds = array<i64: 1, 8, 48>}]} {
    %c0 = arith.constant 0 : index
    %c0_0 = arith.constant 0 : index
    %c0_1 = arith.constant 0 : index
    %0 = vector.load %arg1[%c0, %c0_0, %c0_1] : memref<1x8x32xf32, #tpu.memory_space<vmem>>, vector<1x8x32xf32>
    %1 = vector.shape_cast %0 : vector<1x8x32xf32> to vector<8x32xf32>
    %c0_2 = arith.constant 0 : index
    %c0_3 = arith.constant 0 : index
    %2 = vector.load %arg2[%c0_2, %c0_3] : memref<1x32xf32, #tpu.memory_space<vmem>>, vector<1x32xf32>
    %c0_4 = arith.constant 0 : index
    %c0_5 = arith.constant 0 : index
    %3 = vector.load %arg3[%c0_4, %c0_5] : memref<1x32xf32, #tpu.memory_space<vmem>>, vector<1x32xf32>
    %cst = arith.constant dense<0.000000e+00> : vector<8xf32>
    %4 = vector.multi_reduction <add>, %1, %cst [1] : vector<8x32xf32> to vector<8xf32>
    %5 = vector.shape_cast %4 : vector<8xf32> to vector<8x1xf32>
    %cst_6 = arith.constant 3.200000e+01 : f32
    %6 = vector.broadcast %cst_6 : f32 to vector<8x1xf32>
    %7 = arith.divf %5, %6 : vector<8x1xf32>
    %8 = vector.broadcast %7 : vector<8x1xf32> to vector<8x32xf32>
    %9 = arith.subf %1, %8 : vector<8x32xf32>
    %10 = arith.mulf %9, %9 : vector<8x32xf32>
    %cst_7 = arith.constant dense<0.000000e+00> : vector<8xf32>
    %11 = vector.multi_reduction <add>, %10, %cst_7 [1] : vector<8x32xf32> to vector<8xf32>
    %12 = vector.shape_cast %11 : vector<8xf32> to vector<8x1xf32>
    %cst_8 = arith.constant 3.200000e+01 : f32
    %13 = vector.broadcast %cst_8 : f32 to vector<8x1xf32>
    %14 = arith.divf %12, %13 : vector<8x1xf32>
    %cst_9 = arith.constant 9.99999997E-7 : f32
    %15 = vector.broadcast %cst_9 : f32 to vector<8x1xf32>
    %16 = arith.addf %14, %15 : vector<8x1xf32>
    %17 = math.rsqrt %16 : vector<8x1xf32>
    %18 = vector.broadcast %17 : vector<8x1xf32> to vector<8x32xf32>
    %19 = arith.mulf %9, %18 : vector<8x32xf32>
    %20 = vector.broadcast %2 : vector<1x32xf32> to vector<8x32xf32>
    %21 = arith.mulf %19, %20 : vector<8x32xf32>
    %22 = vector.broadcast %3 : vector<1x32xf32> to vector<8x32xf32>
    %23 = arith.addf %21, %22 : vector<8x32xf32>
    %24 = arith.truncf %23 : vector<8x32xf32> to vector<8x32xbf16>
    %c0_10 = arith.constant 0 : index
    %c0_11 = arith.constant 0 : index
    %25 = vector.load %arg4[%c0_10, %c0_11] : memref<32x48xbf16, #tpu.memory_space<vmem>>, vector<32x48xbf16>
    %cst_12 = arith.constant dense<0.000000e+00> : vector<8x48xf32>
    %26 = tpu.matmul %24, %25, %cst_12 {dimension_numbers = #tpu.dot_dimension_numbers<[1], [0], [0], [1], [0, 0, 1, 1], [], []>} : vector<8x32xbf16>, vector<32x48xbf16>, vector<8x48xf32> -> vector<8x48xf32>
    %c0_13 = arith.constant 0 : index
    %c0_14 = arith.constant 0 : index
    %27 = vector.load %arg5[%c0_13, %c0_14] : memref<1x48xf32, #tpu.memory_space<vmem>>, vector<1x48xf32>
    %28 = vector.broadcast %27 : vector<1x48xf32> to vector<8x48xf32>
    %29 = arith.addf %26, %28 : vector<8x48xf32>
    %c0_15 = arith.constant 0 : index
    %c0_16 = arith.constant 0 : index
    %30 = vector.load %arg6[%c0_15, %c0_16] : memref<7x48xf32, #tpu.memory_space<vmem>>, vector<7x48xf32>
    %c0_17 = arith.constant 0 : index
    %c0_18 = arith.constant 0 : index
    %31 = vector.load %arg7[%c0_17, %c0_18] : memref<1x48xf32, #tpu.memory_space<vmem>>, vector<1x48xf32>
    %c0_19 = arith.constant 0 : index
    %c0_20 = arith.constant 0 : index
    %32 = vector.load %arg8[%c0_19, %c0_20] : memref<1x48xf32, #tpu.memory_space<vmem>>, vector<1x48xf32>
    %c0_21 = arith.constant 0 : index
    %c0_22 = arith.constant 0 : index
    %33 = vector.load %arg9[%c0_21, %c0_22] : memref<1x48xf32, #tpu.memory_space<vmem>>, vector<1x48xf32>
    %c0_23 = arith.constant 0 : index
    %c0_24 = arith.constant 0 : index
    %34 = vector.load %arg10[%c0_23, %c0_24] : memref<48x192xbf16, #tpu.memory_space<vmem>>, vector<48x192xbf16>
    %c0_25 = arith.constant 0 : index
    %c0_26 = arith.constant 0 : index
    %35 = vector.load %arg11[%c0_25, %c0_26] : memref<1x192xf32, #tpu.memory_space<vmem>>, vector<1x192xf32>
    %c0_27 = arith.constant 0 : index
    %c0_28 = arith.constant 0 : index
    %36 = vector.load %arg12[%c0_27, %c0_28] : memref<192x48xbf16, #tpu.memory_space<vmem>>, vector<192x48xbf16>
    %c0_29 = arith.constant 0 : index
    %c0_30 = arith.constant 0 : index
    %37 = vector.load %arg13[%c0_29, %c0_30] : memref<1x48xf32, #tpu.memory_space<vmem>>, vector<1x48xf32>
    %c0_31 = arith.constant 0 : index
    %c0_32 = arith.constant 0 : index
    %38 = vector.load %arg14[%c0_31, %c0_32] : memref<1x48xf32, #tpu.memory_space<vmem>>, vector<1x48xf32>
    %39 = tpu.iota {dimensions = array<i32: 0>} : vector<8x48xi32>
    %40 = vector.extract_strided_slice %30 {offsets = [3, 0], sizes = [1, 48], strides = [1, 1]} : vector<7x48xf32> to vector<1x48xf32>
    %41 = vector.broadcast %40 : vector<1x48xf32> to vector<8x48xf32>
    %42 = arith.mulf %29, %41 : vector<8x48xf32>
    %c3_i32 = arith.constant 3 : i32
    %43 = tpu.dynamic_rotate %29 by %c3_i32 dim 0 : vector<8x48xf32>, i32 -> vector<8x48xf32>
    %c3_i32_33 = arith.constant 3 : i32
    %44 = vector.broadcast %c3_i32_33 : i32 to vector<8x48xi32>
    %45 = arith.cmpi sge, %39, %44 : vector<8x48xi32>
    %c11_i32 = arith.constant 11 : i32
    %46 = vector.broadcast %c11_i32 : i32 to vector<8x48xi32>
    %47 = arith.cmpi slt, %39, %46 : vector<8x48xi32>
    %48 = arith.andi %45, %47 : vector<8x48xi1>
    %cst_34 = arith.constant 0.000000e+00 : f32
    %49 = vector.broadcast %cst_34 : f32 to vector<8x48xf32>
    %50 = arith.select %48, %43, %49 : vector<8x48xi1>, vector<8x48xf32>
    %51 = vector.extract_strided_slice %30 {offsets = [0, 0], sizes = [1, 48], strides = [1, 1]} : vector<7x48xf32> to vector<1x48xf32>
    %52 = vector.broadcast %51 : vector<1x48xf32> to vector<8x48xf32>
    %53 = arith.mulf %50, %52 : vector<8x48xf32>
    %54 = arith.addf %42, %53 : vector<8x48xf32>
    %c2_i32 = arith.constant 2 : i32
    %55 = tpu.dynamic_rotate %29 by %c2_i32 dim 0 : vector<8x48xf32>, i32 -> vector<8x48xf32>
    %c2_i32_35 = arith.constant 2 : i32
    %56 = vector.broadcast %c2_i32_35 : i32 to vector<8x48xi32>
    %57 = arith.cmpi sge, %39, %56 : vector<8x48xi32>
    %c10_i32 = arith.constant 10 : i32
    %58 = vector.broadcast %c10_i32 : i32 to vector<8x48xi32>
    %59 = arith.cmpi slt, %39, %58 : vector<8x48xi32>
    %60 = arith.andi %57, %59 : vector<8x48xi1>
    %cst_36 = arith.constant 0.000000e+00 : f32
    %61 = vector.broadcast %cst_36 : f32 to vector<8x48xf32>
    %62 = arith.select %60, %55, %61 : vector<8x48xi1>, vector<8x48xf32>
    %63 = vector.extract_strided_slice %30 {offsets = [1, 0], sizes = [1, 48], strides = [1, 1]} : vector<7x48xf32> to vector<1x48xf32>
    %64 = vector.broadcast %63 : vector<1x48xf32> to vector<8x48xf32>
    %65 = arith.mulf %62, %64 : vector<8x48xf32>
    %66 = arith.addf %54, %65 : vector<8x48xf32>
    %c1_i32 = arith.constant 1 : i32
    %67 = tpu.dynamic_rotate %29 by %c1_i32 dim 0 : vector<8x48xf32>, i32 -> vector<8x48xf32>
    %c1_i32_37 = arith.constant 1 : i32
    %68 = vector.broadcast %c1_i32_37 : i32 to vector<8x48xi32>
    %69 = arith.cmpi sge, %39, %68 : vector<8x48xi32>
    %c9_i32 = arith.constant 9 : i32
    %70 = vector.broadcast %c9_i32 : i32 to vector<8x48xi32>
    %71 = arith.cmpi slt, %39, %70 : vector<8x48xi32>
    %72 = arith.andi %69, %71 : vector<8x48xi1>
    %cst_38 = arith.constant 0.000000e+00 : f32
    %73 = vector.broadcast %cst_38 : f32 to vector<8x48xf32>
    %74 = arith.select %72, %67, %73 : vector<8x48xi1>, vector<8x48xf32>
    %75 = vector.extract_strided_slice %30 {offsets = [2, 0], sizes = [1, 48], strides = [1, 1]} : vector<7x48xf32> to vector<1x48xf32>
    %76 = vector.broadcast %75 : vector<1x48xf32> to vector<8x48xf32>
    %77 = arith.mulf %74, %76 : vector<8x48xf32>
    %78 = arith.addf %66, %77 : vector<8x48xf32>
    %c7_i32 = arith.constant 7 : i32
    %79 = tpu.dynamic_rotate %29 by %c7_i32 dim 0 : vector<8x48xf32>, i32 -> vector<8x48xf32>
    %c-1_i32 = arith.constant -1 : i32
    %80 = vector.broadcast %c-1_i32 : i32 to vector<8x48xi32>
    %81 = arith.cmpi sge, %39, %80 : vector<8x48xi32>
    %c7_i32_39 = arith.constant 7 : i32
    %82 = vector.broadcast %c7_i32_39 : i32 to vector<8x48xi32>
    %83 = arith.cmpi slt, %39, %82 : vector<8x48xi32>
    %84 = arith.andi %81, %83 : vector<8x48xi1>
    %cst_40 = arith.constant 0.000000e+00 : f32
    %85 = vector.broadcast %cst_40 : f32 to vector<8x48xf32>
    %86 = arith.select %84, %79, %85 : vector<8x48xi1>, vector<8x48xf32>
    %87 = vector.extract_strided_slice %30 {offsets = [4, 0], sizes = [1, 48], strides = [1, 1]} : vector<7x48xf32> to vector<1x48xf32>
    %88 = vector.broadcast %87 : vector<1x48xf32> to vector<8x48xf32>
    %89 = arith.mulf %86, %88 : vector<8x48xf32>
    %90 = arith.addf %78, %89 : vector<8x48xf32>
    %c6_i32 = arith.constant 6 : i32
    %91 = tpu.dynamic_rotate %29 by %c6_i32 dim 0 : vector<8x48xf32>, i32 -> vector<8x48xf32>
    %c-2_i32 = arith.constant -2 : i32
    %92 = vector.broadcast %c-2_i32 : i32 to vector<8x48xi32>
    %93 = arith.cmpi sge, %39, %92 : vector<8x48xi32>
    %c6_i32_41 = arith.constant 6 : i32
    %94 = vector.broadcast %c6_i32_41 : i32 to vector<8x48xi32>
    %95 = arith.cmpi slt, %39, %94 : vector<8x48xi32>
    %96 = arith.andi %93, %95 : vector<8x48xi1>
    %cst_42 = arith.constant 0.000000e+00 : f32
    %97 = vector.broadcast %cst_42 : f32 to vector<8x48xf32>
    %98 = arith.select %96, %91, %97 : vector<8x48xi1>, vector<8x48xf32>
    %99 = vector.extract_strided_slice %30 {offsets = [5, 0], sizes = [1, 48], strides = [1, 1]} : vector<7x48xf32> to vector<1x48xf32>
    %100 = vector.broadcast %99 : vector<1x48xf32> to vector<8x48xf32>
    %101 = arith.mulf %98, %100 : vector<8x48xf32>
    %102 = arith.addf %90, %101 : vector<8x48xf32>
    %c5_i32 = arith.constant 5 : i32
    %103 = tpu.dynamic_rotate %29 by %c5_i32 dim 0 : vector<8x48xf32>, i32 -> vector<8x48xf32>
    %c-3_i32 = arith.constant -3 : i32
    %104 = vector.broadcast %c-3_i32 : i32 to vector<8x48xi32>
    %105 = arith.cmpi sge, %39, %104 : vector<8x48xi32>
    %c5_i32_43 = arith.constant 5 : i32
    %106 = vector.broadcast %c5_i32_43 : i32 to vector<8x48xi32>
    %107 = arith.cmpi slt, %39, %106 : vector<8x48xi32>
    %108 = arith.andi %105, %107 : vector<8x48xi1>
    %cst_44 = arith.constant 0.000000e+00 : f32
    %109 = vector.broadcast %cst_44 : f32 to vector<8x48xf32>
    %110 = arith.select %108, %103, %109 : vector<8x48xi1>, vector<8x48xf32>
    %111 = vector.extract_strided_slice %30 {offsets = [6, 0], sizes = [1, 48], strides = [1, 1]} : vector<7x48xf32> to vector<1x48xf32>
    %112 = vector.broadcast %111 : vector<1x48xf32> to vector<8x48xf32>
    %113 = arith.mulf %110, %112 : vector<8x48xf32>
    %114 = arith.addf %102, %113 : vector<8x48xf32>
    %115 = vector.broadcast %31 : vector<1x48xf32> to vector<8x48xf32>
    %116 = arith.addf %114, %115 : vector<8x48xf32>
    %cst_45 = arith.constant dense<0.000000e+00> : vector<8xf32>
    %117 = vector.multi_reduction <add>, %116, %cst_45 [1] : vector<8x48xf32> to vector<8xf32>
    %118 = vector.shape_cast %117 : vector<8xf32> to vector<8x1xf32>
    %cst_46 = arith.constant 4.800000e+01 : f32
    %119 = vector.broadcast %cst_46 : f32 to vector<8x1xf32>
    %120 = arith.divf %118, %119 : vector<8x1xf32>
    %121 = vector.broadcast %120 : vector<8x1xf32> to vector<8x48xf32>
    %122 = arith.subf %116, %121 : vector<8x48xf32>
    %123 = arith.mulf %122, %122 : vector<8x48xf32>
    %cst_47 = arith.constant dense<0.000000e+00> : vector<8xf32>
    %124 = vector.multi_reduction <add>, %123, %cst_47 [1] : vector<8x48xf32> to vector<8xf32>
    %125 = vector.shape_cast %124 : vector<8xf32> to vector<8x1xf32>
    %cst_48 = arith.constant 4.800000e+01 : f32
    %126 = vector.broadcast %cst_48 : f32 to vector<8x1xf32>
    %127 = arith.divf %125, %126 : vector<8x1xf32>
    %cst_49 = arith.constant 9.99999997E-7 : f32
    %128 = vector.broadcast %cst_49 : f32 to vector<8x1xf32>
    %129 = arith.addf %127, %128 : vector<8x1xf32>
    %130 = math.rsqrt %129 : vector<8x1xf32>
    %131 = vector.broadcast %130 : vector<8x1xf32> to vector<8x48xf32>
    %132 = arith.mulf %122, %131 : vector<8x48xf32>
    %133 = vector.broadcast %32 : vector<1x48xf32> to vector<8x48xf32>
    %134 = arith.mulf %132, %133 : vector<8x48xf32>
    %135 = vector.broadcast %33 : vector<1x48xf32> to vector<8x48xf32>
    %136 = arith.addf %134, %135 : vector<8x48xf32>
    %137 = arith.truncf %136 : vector<8x48xf32> to vector<8x48xbf16>
    %cst_50 = arith.constant dense<0.000000e+00> : vector<8x192xf32>
    %138 = tpu.matmul %137, %34, %cst_50 {dimension_numbers = #tpu.dot_dimension_numbers<[1], [0], [0], [1], [0, 0, 1, 1], [], []>} : vector<8x48xbf16>, vector<48x192xbf16>, vector<8x192xf32> -> vector<8x192xf32>
    %139 = vector.broadcast %35 : vector<1x192xf32> to vector<8x192xf32>
    %140 = arith.addf %138, %139 : vector<8x192xf32>
    %cst_51 = arith.constant 5.000000e-01 : f32
    %141 = vector.broadcast %cst_51 : f32 to vector<8x192xf32>
    %142 = arith.mulf %141, %140 : vector<8x192xf32>
    %cst_52 = arith.constant 0.707106769 : f32
    %143 = vector.broadcast %cst_52 : f32 to vector<8x192xf32>
    %144 = arith.mulf %140, %143 : vector<8x192xf32>
    %145 = math.absf %144 : vector<8x192xf32>
    %cst_53 = arith.constant 0.327591091 : f32
    %146 = vector.broadcast %cst_53 : f32 to vector<8x192xf32>
    %147 = arith.mulf %146, %145 : vector<8x192xf32>
    %cst_54 = arith.constant 1.000000e+00 : f32
    %148 = vector.broadcast %cst_54 : f32 to vector<8x192xf32>
    %149 = arith.addf %148, %147 : vector<8x192xf32>
    %150 = tpu.reciprocal %149 {approx = true} : vector<8x192xf32> -> vector<8x192xf32>
    %cst_55 = arith.constant 1.06140542 : f32
    %151 = vector.broadcast %cst_55 : f32 to vector<8x192xf32>
    %152 = arith.mulf %150, %151 : vector<8x192xf32>
    %cst_56 = arith.constant -1.45315206 : f32
    %153 = vector.broadcast %cst_56 : f32 to vector<8x192xf32>
    %154 = arith.addf %153, %152 : vector<8x192xf32>
    %155 = arith.mulf %150, %154 : vector<8x192xf32>
    %cst_57 = arith.constant 1.42141378 : f32
    %156 = vector.broadcast %cst_57 : f32 to vector<8x192xf32>
    %157 = arith.addf %156, %155 : vector<8x192xf32>
    %158 = arith.mulf %150, %157 : vector<8x192xf32>
    %cst_58 = arith.constant -0.284496725 : f32
    %159 = vector.broadcast %cst_58 : f32 to vector<8x192xf32>
    %160 = arith.addf %159, %158 : vector<8x192xf32>
    %161 = arith.mulf %150, %160 : vector<8x192xf32>
    %cst_59 = arith.constant 0.254829586 : f32
    %162 = vector.broadcast %cst_59 : f32 to vector<8x192xf32>
    %163 = arith.addf %162, %161 : vector<8x192xf32>
    %164 = arith.mulf %150, %163 : vector<8x192xf32>
    %cst_60 = arith.constant 0.000000e+00 : f32
    %165 = vector.broadcast %cst_60 : f32 to vector<8x192xf32>
    %166 = arith.subf %165, %145 : vector<8x192xf32>
    %167 = arith.mulf %166, %145 : vector<8x192xf32>
    %168 = math.exp %167 : vector<8x192xf32>
    %169 = arith.mulf %164, %168 : vector<8x192xf32>
    %cst_61 = arith.constant 1.000000e+00 : f32
    %170 = vector.broadcast %cst_61 : f32 to vector<8x192xf32>
    %171 = arith.subf %170, %169 : vector<8x192xf32>
    %cst_62 = arith.constant 0.000000e+00 : f32
    %172 = vector.broadcast %cst_62 : f32 to vector<8x192xf32>
    %173 = arith.cmpf oge, %144, %172 : vector<8x192xf32>
    %cst_63 = arith.constant 0.000000e+00 : f32
    %174 = vector.broadcast %cst_63 : f32 to vector<8x192xf32>
    %175 = arith.subf %174, %171 : vector<8x192xf32>
    %176 = arith.select %173, %171, %175 : vector<8x192xi1>, vector<8x192xf32>
    %cst_64 = arith.constant 1.000000e+00 : f32
    %177 = vector.broadcast %cst_64 : f32 to vector<8x192xf32>
    %178 = arith.addf %177, %176 : vector<8x192xf32>
    %179 = arith.mulf %142, %178 : vector<8x192xf32>
    %180 = arith.truncf %179 : vector<8x192xf32> to vector<8x192xbf16>
    %cst_65 = arith.constant dense<0.000000e+00> : vector<8x48xf32>
    %181 = tpu.matmul %180, %36, %cst_65 {dimension_numbers = #tpu.dot_dimension_numbers<[1], [0], [0], [1], [0, 0, 1, 1], [], []>} : vector<8x192xbf16>, vector<192x48xbf16>, vector<8x48xf32> -> vector<8x48xf32>
    %182 = vector.broadcast %37 : vector<1x48xf32> to vector<8x48xf32>
    %183 = arith.addf %181, %182 : vector<8x48xf32>
    %184 = vector.broadcast %38 : vector<1x48xf32> to vector<8x48xf32>
    %185 = arith.mulf %183, %184 : vector<8x48xf32>
    %186 = arith.addf %29, %185 : vector<8x48xf32>
    %c0_66 = arith.constant 0 : index
    %c0_67 = arith.constant 0 : index
    %c0_68 = arith.constant 0 : index
    %187 = vector.load %arg15[%c0_66, %c0_67, %c0_68] : memref<1x8x48xf32, #tpu.memory_space<vmem>>, vector<1x8x48xf32>
    %188 = vector.shape_cast %187 : vector<1x8x48xf32> to vector<8x48xf32>
    %189 = vector.shape_cast %186 : vector<8x48xf32> to vector<1x8x48xf32>
    tpu.vector_store %arg15[%c0_66, %c0_67, %c0_68], %189 {strides = array<i32>} : memref<1x8x48xf32, #tpu.memory_space<vmem>>, vector<1x8x48xf32>,
    return
  }
  func.func @transform_0(%arg0: i32) -> (i32, i32, i32) {
    %c0_i32 = arith.constant 0 : i32
    %c0_i32_0 = arith.constant 0 : i32
    %c0_i32_1 = arith.constant 0 : i32
    return %arg0, %c0_i32, %c0_i32_0 : i32, i32, i32
  }
  func.func @transform_1(%arg0: i32) -> (i32, i32) {
    %c0_i32 = arith.constant 0 : i32
    %c0_i32_0 = arith.constant 0 : i32
    %c0_i32_1 = arith.constant 0 : i32
    return %c0_i32, %c0_i32_0 : i32, i32
  }
  func.func @transform_2(%arg0: i32) -> (i32, i32) {
    %c0_i32 = arith.constant 0 : i32
    %c0_i32_0 = arith.constant 0 : i32
    %c0_i32_1 = arith.constant 0 : i32
    return %c0_i32, %c0_i32_0 : i32, i32
  }
  func.func @transform_3(%arg0: i32) -> (i32, i32) {
    %c0_i32 = arith.constant 0 : i32
    %c0_i32_0 = arith.constant 0 : i32
    %c0_i32_1 = arith.constant 0 : i32
    return %c0_i32, %c0_i32_0 : i32, i32
  }
  func.func @transform_4(%arg0: i32) -> (i32, i32) {
    %c0_i32 = arith.constant 0 : i32
    %c0_i32_0 = arith.constant 0 : i32
    %c0_i32_1 = arith.constant 0 : i32
    return %c0_i32, %c0_i32_0 : i32, i32
  }
  func.func @transform_5(%arg0: i32) -> (i32, i32) {
    %c0_i32 = arith.constant 0 : i32
    %c0_i32_0 = arith.constant 0 : i32
    %c0_i32_1 = arith.constant 0 : i32
    return %c0_i32, %c0_i32_0 : i32, i32
  }
  func.func @transform_6(%arg0: i32) -> (i32, i32) {
    %c0_i32 = arith.constant 0 : i32
    %c0_i32_0 = arith.constant 0 : i32
    %c0_i32_1 = arith.constant 0 : i32
    return %c0_i32, %c0_i32_0 : i32, i32
  }
  func.func @transform_7(%arg0: i32) -> (i32, i32) {
    %c0_i32 = arith.constant 0 : i32
    %c0_i32_0 = arith.constant 0 : i32
    %c0_i32_1 = arith.constant 0 : i32
    return %c0_i32, %c0_i32_0 : i32, i32
  }
  func.func @transform_8(%arg0: i32) -> (i32, i32) {
    %c0_i32 = arith.constant 0 : i32
    %c0_i32_0 = arith.constant 0 : i32
    %c0_i32_1 = arith.constant 0 : i32
    return %c0_i32, %c0_i32_0 : i32, i32
  }
  func.func @transform_9(%arg0: i32) -> (i32, i32) {
    %c0_i32 = arith.constant 0 : i32
    %c0_i32_0 = arith.constant 0 : i32
    %c0_i32_1 = arith.constant 0 : i32
    return %c0_i32, %c0_i32_0 : i32, i32
  }
  func.func @transform_10(%arg0: i32) -> (i32, i32) {
    %c0_i32 = arith.constant 0 : i32
    %c0_i32_0 = arith.constant 0 : i32
    %c0_i32_1 = arith.constant 0 : i32
    return %c0_i32, %c0_i32_0 : i32, i32
  }
  func.func @transform_11(%arg0: i32) -> (i32, i32) {
    %c0_i32 = arith.constant 0 : i32
    %c0_i32_0 = arith.constant 0 : i32
    %c0_i32_1 = arith.constant 0 : i32
    return %c0_i32, %c0_i32_0 : i32, i32
  }
  func.func @transform_12(%arg0: i32) -> (i32, i32) {
    %c0_i32 = arith.constant 0 : i32
    %c0_i32_0 = arith.constant 0 : i32
    %c0_i32_1 = arith.constant 0 : i32
    return %c0_i32, %c0_i32_0 : i32, i32
  }
  func.func @transform_13(%arg0: i32) -> (i32, i32) {
    %c0_i32 = arith.constant 0 : i32
    %c0_i32_0 = arith.constant 0 : i32
    %c0_i32_1 = arith.constant 0 : i32
    return %c0_i32, %c0_i32_0 : i32, i32
  }
  func.func @transform_14(%arg0: i32) -> (i32, i32, i32) {
    %c0_i32 = arith.constant 0 : i32
    %c0_i32_0 = arith.constant 0 : i32
    %c0_i32_1 = arith.constant 0 : i32
    return %arg0, %c0_i32, %c0_i32_0 : i32, i32, i32
  }
}

module attributes {stable_mosaic.version = 11 : i64} {
  func.func @_head_pre_kernel(%arg0: i32, %arg1: memref<1x8x48xf32, #tpu.memory_space<vmem>>, %arg2: memref<1x48xf32, #tpu.memory_space<vmem>>, %arg3: memref<1x48xf32, #tpu.memory_space<vmem>>, %arg4: memref<336x32xbf16, #tpu.memory_space<vmem>>, %arg5: memref<1x32xf32, #tpu.memory_space<vmem>>, %arg6: memref<96x32xbf16, #tpu.memory_space<vmem>>, %arg7: memref<1x32xf32, #tpu.memory_space<vmem>>, %arg8: memref<1x8x32xf32, #tpu.memory_space<vmem>>) attributes {dimension_semantics = [#tpu.dimension_semantics<parallel>], iteration_bounds = array<i64: 2>, scalar_prefetch = 0 : i64, scratch_operands = 0 : i64, tpu.core_type = #tpu.core_type<tc>, window_params = [{transform_indices = @transform_0, window_bounds = array<i64: 1, 8, 48>}, {pipeline_mode = #tpu.pipeline_mode<synchronous>, transform_indices = @transform_1, window_bounds = array<i64: 1, 48>}, {pipeline_mode = #tpu.pipeline_mode<synchronous>, transform_indices = @transform_2, window_bounds = array<i64: 1, 48>}, {pipeline_mode = #tpu.pipeline_mode<synchronous>, transform_indices = @transform_3, window_bounds = array<i64: 336, 32>}, {pipeline_mode = #tpu.pipeline_mode<synchronous>, transform_indices = @transform_4, window_bounds = array<i64: 1, 32>}, {pipeline_mode = #tpu.pipeline_mode<synchronous>, transform_indices = @transform_5, window_bounds = array<i64: 96, 32>}, {pipeline_mode = #tpu.pipeline_mode<synchronous>, transform_indices = @transform_6, window_bounds = array<i64: 1, 32>}, {transform_indices = @transform_7, window_bounds = array<i64: 1, 8, 32>}]} {
    %c0 = arith.constant 0 : index
    %c0_0 = arith.constant 0 : index
    %c0_1 = arith.constant 0 : index
    %0 = vector.load %arg1[%c0, %c0_0, %c0_1] : memref<1x8x48xf32, #tpu.memory_space<vmem>>, vector<1x8x48xf32>
    %1 = vector.shape_cast %0 : vector<1x8x48xf32> to vector<8x48xf32>
    %c0_2 = arith.constant 0 : index
    %c0_3 = arith.constant 0 : index
    %2 = vector.load %arg2[%c0_2, %c0_3] : memref<1x48xf32, #tpu.memory_space<vmem>>, vector<1x48xf32>
    %c0_4 = arith.constant 0 : index
    %c0_5 = arith.constant 0 : index
    %3 = vector.load %arg3[%c0_4, %c0_5] : memref<1x48xf32, #tpu.memory_space<vmem>>, vector<1x48xf32>
    %cst = arith.constant dense<0.000000e+00> : vector<8xf32>
    %4 = vector.multi_reduction <add>, %1, %cst [1] : vector<8x48xf32> to vector<8xf32>
    %5 = vector.shape_cast %4 : vector<8xf32> to vector<8x1xf32>
    %cst_6 = arith.constant 4.800000e+01 : f32
    %6 = vector.broadcast %cst_6 : f32 to vector<8x1xf32>
    %7 = arith.divf %5, %6 : vector<8x1xf32>
    %8 = vector.broadcast %7 : vector<8x1xf32> to vector<8x48xf32>
    %9 = arith.subf %1, %8 : vector<8x48xf32>
    %10 = arith.mulf %9, %9 : vector<8x48xf32>
    %cst_7 = arith.constant dense<0.000000e+00> : vector<8xf32>
    %11 = vector.multi_reduction <add>, %10, %cst_7 [1] : vector<8x48xf32> to vector<8xf32>
    %12 = vector.shape_cast %11 : vector<8xf32> to vector<8x1xf32>
    %cst_8 = arith.constant 4.800000e+01 : f32
    %13 = vector.broadcast %cst_8 : f32 to vector<8x1xf32>
    %14 = arith.divf %12, %13 : vector<8x1xf32>
    %cst_9 = arith.constant 9.99999997E-7 : f32
    %15 = vector.broadcast %cst_9 : f32 to vector<8x1xf32>
    %16 = arith.addf %14, %15 : vector<8x1xf32>
    %17 = math.rsqrt %16 : vector<8x1xf32>
    %18 = vector.broadcast %17 : vector<8x1xf32> to vector<8x48xf32>
    %19 = arith.mulf %9, %18 : vector<8x48xf32>
    %20 = vector.broadcast %2 : vector<1x48xf32> to vector<8x48xf32>
    %21 = arith.mulf %19, %20 : vector<8x48xf32>
    %22 = vector.broadcast %3 : vector<1x48xf32> to vector<8x48xf32>
    %23 = arith.addf %21, %22 : vector<8x48xf32>
    %c0_10 = arith.constant 0 : index
    %c0_11 = arith.constant 0 : index
    %24 = vector.load %arg4[%c0_10, %c0_11] : memref<336x32xbf16, #tpu.memory_space<vmem>>, vector<336x32xbf16>
    %c0_12 = arith.constant 0 : index
    %c0_13 = arith.constant 0 : index
    %25 = vector.load %arg5[%c0_12, %c0_13] : memref<1x32xf32, #tpu.memory_space<vmem>>, vector<1x32xf32>
    %26 = tpu.iota {dimensions = array<i32: 0>} : vector<8x48xi32>
    %c3_i32 = arith.constant 3 : i32
    %27 = tpu.dynamic_rotate %23 by %c3_i32 dim 0 : vector<8x48xf32>, i32 -> vector<8x48xf32>
    %c3_i32_14 = arith.constant 3 : i32
    %28 = vector.broadcast %c3_i32_14 : i32 to vector<8x48xi32>
    %29 = arith.cmpi sge, %26, %28 : vector<8x48xi32>
    %c11_i32 = arith.constant 11 : i32
    %30 = vector.broadcast %c11_i32 : i32 to vector<8x48xi32>
    %31 = arith.cmpi slt, %26, %30 : vector<8x48xi32>
    %32 = arith.andi %29, %31 : vector<8x48xi1>
    %cst_15 = arith.constant 0.000000e+00 : f32
    %33 = vector.broadcast %cst_15 : f32 to vector<8x48xf32>
    %34 = arith.select %32, %27, %33 : vector<8x48xi1>, vector<8x48xf32>
    %c2_i32 = arith.constant 2 : i32
    %35 = tpu.dynamic_rotate %23 by %c2_i32 dim 0 : vector<8x48xf32>, i32 -> vector<8x48xf32>
    %c2_i32_16 = arith.constant 2 : i32
    %36 = vector.broadcast %c2_i32_16 : i32 to vector<8x48xi32>
    %37 = arith.cmpi sge, %26, %36 : vector<8x48xi32>
    %c10_i32 = arith.constant 10 : i32
    %38 = vector.broadcast %c10_i32 : i32 to vector<8x48xi32>
    %39 = arith.cmpi slt, %26, %38 : vector<8x48xi32>
    %40 = arith.andi %37, %39 : vector<8x48xi1>
    %cst_17 = arith.constant 0.000000e+00 : f32
    %41 = vector.broadcast %cst_17 : f32 to vector<8x48xf32>
    %42 = arith.select %40, %35, %41 : vector<8x48xi1>, vector<8x48xf32>
    %c1_i32 = arith.constant 1 : i32
    %43 = tpu.dynamic_rotate %23 by %c1_i32 dim 0 : vector<8x48xf32>, i32 -> vector<8x48xf32>
    %c1_i32_18 = arith.constant 1 : i32
    %44 = vector.broadcast %c1_i32_18 : i32 to vector<8x48xi32>
    %45 = arith.cmpi sge, %26, %44 : vector<8x48xi32>
    %c9_i32 = arith.constant 9 : i32
    %46 = vector.broadcast %c9_i32 : i32 to vector<8x48xi32>
    %47 = arith.cmpi slt, %26, %46 : vector<8x48xi32>
    %48 = arith.andi %45, %47 : vector<8x48xi1>
    %cst_19 = arith.constant 0.000000e+00 : f32
    %49 = vector.broadcast %cst_19 : f32 to vector<8x48xf32>
    %50 = arith.select %48, %43, %49 : vector<8x48xi1>, vector<8x48xf32>
    %c7_i32 = arith.constant 7 : i32
    %51 = tpu.dynamic_rotate %23 by %c7_i32 dim 0 : vector<8x48xf32>, i32 -> vector<8x48xf32>
    %c-1_i32 = arith.constant -1 : i32
    %52 = vector.broadcast %c-1_i32 : i32 to vector<8x48xi32>
    %53 = arith.cmpi sge, %26, %52 : vector<8x48xi32>
    %c7_i32_20 = arith.constant 7 : i32
    %54 = vector.broadcast %c7_i32_20 : i32 to vector<8x48xi32>
    %55 = arith.cmpi slt, %26, %54 : vector<8x48xi32>
    %56 = arith.andi %53, %55 : vector<8x48xi1>
    %cst_21 = arith.constant 0.000000e+00 : f32
    %57 = vector.broadcast %cst_21 : f32 to vector<8x48xf32>
    %58 = arith.select %56, %51, %57 : vector<8x48xi1>, vector<8x48xf32>
    %c6_i32 = arith.constant 6 : i32
    %59 = tpu.dynamic_rotate %23 by %c6_i32 dim 0 : vector<8x48xf32>, i32 -> vector<8x48xf32>
    %c-2_i32 = arith.constant -2 : i32
    %60 = vector.broadcast %c-2_i32 : i32 to vector<8x48xi32>
    %61 = arith.cmpi sge, %26, %60 : vector<8x48xi32>
    %c6_i32_22 = arith.constant 6 : i32
    %62 = vector.broadcast %c6_i32_22 : i32 to vector<8x48xi32>
    %63 = arith.cmpi slt, %26, %62 : vector<8x48xi32>
    %64 = arith.andi %61, %63 : vector<8x48xi1>
    %cst_23 = arith.constant 0.000000e+00 : f32
    %65 = vector.broadcast %cst_23 : f32 to vector<8x48xf32>
    %66 = arith.select %64, %59, %65 : vector<8x48xi1>, vector<8x48xf32>
    %c5_i32 = arith.constant 5 : i32
    %67 = tpu.dynamic_rotate %23 by %c5_i32 dim 0 : vector<8x48xf32>, i32 -> vector<8x48xf32>
    %c-3_i32 = arith.constant -3 : i32
    %68 = vector.broadcast %c-3_i32 : i32 to vector<8x48xi32>
    %69 = arith.cmpi sge, %26, %68 : vector<8x48xi32>
    %c5_i32_24 = arith.constant 5 : i32
    %70 = vector.broadcast %c5_i32_24 : i32 to vector<8x48xi32>
    %71 = arith.cmpi slt, %26, %70 : vector<8x48xi32>
    %72 = arith.andi %69, %71 : vector<8x48xi1>
    %cst_25 = arith.constant 0.000000e+00 : f32
    %73 = vector.broadcast %cst_25 : f32 to vector<8x48xf32>
    %74 = arith.select %72, %67, %73 : vector<8x48xi1>, vector<8x48xf32>
    %75 = tpu.concatenate %34, %42, %50, %23, %58, %66, %74 in 1 : vector<8x48xf32>, vector<8x48xf32>, vector<8x48xf32>, vector<8x48xf32>, vector<8x48xf32>, vector<8x48xf32>, vector<8x48xf32> -> vector<8x336xf32>
    %76 = arith.truncf %75 : vector<8x336xf32> to vector<8x336xbf16>
    %cst_26 = arith.constant dense<0.000000e+00> : vector<8x32xf32>
    %77 = tpu.matmul %76, %24, %cst_26 {dimension_numbers = #tpu.dot_dimension_numbers<[1], [0], [0], [1], [0, 0, 1, 1], [], []>} : vector<8x336xbf16>, vector<336x32xbf16>, vector<8x32xf32> -> vector<8x32xf32>
    %78 = vector.broadcast %25 : vector<1x32xf32> to vector<8x32xf32>
    %79 = arith.addf %77, %78 : vector<8x32xf32>
    %80 = arith.negf %79 : vector<8x32xf32>
    %81 = math.exp %80 : vector<8x32xf32>
    %cst_27 = arith.constant 1.000000e+00 : f32
    %82 = vector.broadcast %cst_27 : f32 to vector<8x32xf32>
    %83 = arith.addf %82, %81 : vector<8x32xf32>
    %84 = arith.divf %82, %83 : vector<8x32xf32>
    %85 = arith.mulf %79, %84 : vector<8x32xf32>
    %c0_28 = arith.constant 0 : index
    %c0_29 = arith.constant 0 : index
    %86 = vector.load %arg6[%c0_28, %c0_29] : memref<96x32xbf16, #tpu.memory_space<vmem>>, vector<96x32xbf16>
    %c0_30 = arith.constant 0 : index
    %c0_31 = arith.constant 0 : index
    %87 = vector.load %arg7[%c0_30, %c0_31] : memref<1x32xf32, #tpu.memory_space<vmem>>, vector<1x32xf32>
    %88 = tpu.iota {dimensions = array<i32: 0>} : vector<8x32xi32>
    %c1_i32_32 = arith.constant 1 : i32
    %89 = tpu.dynamic_rotate %85 by %c1_i32_32 dim 0 : vector<8x32xf32>, i32 -> vector<8x32xf32>
    %c1_i32_33 = arith.constant 1 : i32
    %90 = vector.broadcast %c1_i32_33 : i32 to vector<8x32xi32>
    %91 = arith.cmpi sge, %88, %90 : vector<8x32xi32>
    %c9_i32_34 = arith.constant 9 : i32
    %92 = vector.broadcast %c9_i32_34 : i32 to vector<8x32xi32>
    %93 = arith.cmpi slt, %88, %92 : vector<8x32xi32>
    %94 = arith.andi %91, %93 : vector<8x32xi1>
    %cst_35 = arith.constant 0.000000e+00 : f32
    %95 = vector.broadcast %cst_35 : f32 to vector<8x32xf32>
    %96 = arith.select %94, %89, %95 : vector<8x32xi1>, vector<8x32xf32>
    %c7_i32_36 = arith.constant 7 : i32
    %97 = tpu.dynamic_rotate %85 by %c7_i32_36 dim 0 : vector<8x32xf32>, i32 -> vector<8x32xf32>
    %c-1_i32_37 = arith.constant -1 : i32
    %98 = vector.broadcast %c-1_i32_37 : i32 to vector<8x32xi32>
    %99 = arith.cmpi sge, %88, %98 : vector<8x32xi32>
    %c7_i32_38 = arith.constant 7 : i32
    %100 = vector.broadcast %c7_i32_38 : i32 to vector<8x32xi32>
    %101 = arith.cmpi slt, %88, %100 : vector<8x32xi32>
    %102 = arith.andi %99, %101 : vector<8x32xi1>
    %cst_39 = arith.constant 0.000000e+00 : f32
    %103 = vector.broadcast %cst_39 : f32 to vector<8x32xf32>
    %104 = arith.select %102, %97, %103 : vector<8x32xi1>, vector<8x32xf32>
    %105 = tpu.concatenate %96, %85, %104 in 1 : vector<8x32xf32>, vector<8x32xf32>, vector<8x32xf32> -> vector<8x96xf32>
    %106 = arith.truncf %105 : vector<8x96xf32> to vector<8x96xbf16>
    %cst_40 = arith.constant dense<0.000000e+00> : vector<8x32xf32>
    %107 = tpu.matmul %106, %86, %cst_40 {dimension_numbers = #tpu.dot_dimension_numbers<[1], [0], [0], [1], [0, 0, 1, 1], [], []>} : vector<8x96xbf16>, vector<96x32xbf16>, vector<8x32xf32> -> vector<8x32xf32>
    %108 = vector.broadcast %87 : vector<1x32xf32> to vector<8x32xf32>
    %109 = arith.addf %107, %108 : vector<8x32xf32>
    %c0_41 = arith.constant 0 : index
    %c0_42 = arith.constant 0 : index
    %c0_43 = arith.constant 0 : index
    %110 = vector.load %arg8[%c0_41, %c0_42, %c0_43] : memref<1x8x32xf32, #tpu.memory_space<vmem>>, vector<1x8x32xf32>
    %111 = vector.shape_cast %110 : vector<1x8x32xf32> to vector<8x32xf32>
    %112 = vector.shape_cast %109 : vector<8x32xf32> to vector<1x8x32xf32>
    tpu.vector_store %arg8[%c0_41, %c0_42, %c0_43], %112 {strides = array<i32>} : memref<1x8x32xf32, #tpu.memory_space<vmem>>, vector<1x8x32xf32>,
    return
  }
  func.func @transform_0(%arg0: i32) -> (i32, i32, i32) {
    %c0_i32 = arith.constant 0 : i32
    %c0_i32_0 = arith.constant 0 : i32
    %c0_i32_1 = arith.constant 0 : i32
    return %arg0, %c0_i32, %c0_i32_0 : i32, i32, i32
  }
  func.func @transform_1(%arg0: i32) -> (i32, i32) {
    %c0_i32 = arith.constant 0 : i32
    %c0_i32_0 = arith.constant 0 : i32
    %c0_i32_1 = arith.constant 0 : i32
    return %c0_i32, %c0_i32_0 : i32, i32
  }
  func.func @transform_2(%arg0: i32) -> (i32, i32) {
    %c0_i32 = arith.constant 0 : i32
    %c0_i32_0 = arith.constant 0 : i32
    %c0_i32_1 = arith.constant 0 : i32
    return %c0_i32, %c0_i32_0 : i32, i32
  }
  func.func @transform_3(%arg0: i32) -> (i32, i32) {
    %c0_i32 = arith.constant 0 : i32
    %c0_i32_0 = arith.constant 0 : i32
    %c0_i32_1 = arith.constant 0 : i32
    return %c0_i32, %c0_i32_0 : i32, i32
  }
  func.func @transform_4(%arg0: i32) -> (i32, i32) {
    %c0_i32 = arith.constant 0 : i32
    %c0_i32_0 = arith.constant 0 : i32
    %c0_i32_1 = arith.constant 0 : i32
    return %c0_i32, %c0_i32_0 : i32, i32
  }
  func.func @transform_5(%arg0: i32) -> (i32, i32) {
    %c0_i32 = arith.constant 0 : i32
    %c0_i32_0 = arith.constant 0 : i32
    %c0_i32_1 = arith.constant 0 : i32
    return %c0_i32, %c0_i32_0 : i32, i32
  }
  func.func @transform_6(%arg0: i32) -> (i32, i32) {
    %c0_i32 = arith.constant 0 : i32
    %c0_i32_0 = arith.constant 0 : i32
    %c0_i32_1 = arith.constant 0 : i32
    return %c0_i32, %c0_i32_0 : i32, i32
  }
  func.func @transform_7(%arg0: i32) -> (i32, i32, i32) {
    %c0_i32 = arith.constant 0 : i32
    %c0_i32_0 = arith.constant 0 : i32
    %c0_i32_1 = arith.constant 0 : i32
    return %arg0, %c0_i32, %c0_i32_0 : i32, i32, i32
  }
}

module attributes {stable_mosaic.version = 11 : i64} {
  func.func @_head_stage_kernel(%arg0: i32, %arg1: memref<1x16x16xf32, #tpu.memory_space<vmem>>, %arg2: memref<3x48x16xbf16, #tpu.memory_space<vmem>>, %arg3: memref<3x1x16xf32, #tpu.memory_space<vmem>>, %arg4: memref<3x48x16xbf16, #tpu.memory_space<vmem>>, %arg5: memref<3x1x16xf32, #tpu.memory_space<vmem>>, %arg6: memref<48x16xbf16, #tpu.memory_space<vmem>>, %arg7: memref<1x16xf32, #tpu.memory_space<vmem>>, %arg8: memref<1x16x16xf32, #tpu.memory_space<vmem>>) attributes {dimension_semantics = [#tpu.dimension_semantics<parallel>], iteration_bounds = array<i64: 2>, scalar_prefetch = 0 : i64, scratch_operands = 0 : i64, tpu.core_type = #tpu.core_type<tc>, window_params = [{transform_indices = @transform_0, window_bounds = array<i64: 1, 16, 16>}, {pipeline_mode = #tpu.pipeline_mode<synchronous>, transform_indices = @transform_1, window_bounds = array<i64: 3, 48, 16>}, {pipeline_mode = #tpu.pipeline_mode<synchronous>, transform_indices = @transform_2, window_bounds = array<i64: 3, 1, 16>}, {pipeline_mode = #tpu.pipeline_mode<synchronous>, transform_indices = @transform_3, window_bounds = array<i64: 3, 48, 16>}, {pipeline_mode = #tpu.pipeline_mode<synchronous>, transform_indices = @transform_4, window_bounds = array<i64: 3, 1, 16>}, {pipeline_mode = #tpu.pipeline_mode<synchronous>, transform_indices = @transform_5, window_bounds = array<i64: 48, 16>}, {pipeline_mode = #tpu.pipeline_mode<synchronous>, transform_indices = @transform_6, window_bounds = array<i64: 1, 16>}, {transform_indices = @transform_7, window_bounds = array<i64: 1, 16, 16>}]} {
    %c0 = arith.constant 0 : index
    %c0_0 = arith.constant 0 : index
    %c0_1 = arith.constant 0 : index
    %0 = vector.load %arg1[%c0, %c0_0, %c0_1] : memref<1x16x16xf32, #tpu.memory_space<vmem>>, vector<1x16x16xf32>
    %1 = vector.shape_cast %0 : vector<1x16x16xf32> to vector<16x16xf32>
    %2 = arith.negf %1 : vector<16x16xf32>
    %3 = math.exp %2 : vector<16x16xf32>
    %cst = arith.constant 1.000000e+00 : f32
    %4 = vector.broadcast %cst : f32 to vector<16x16xf32>
    %5 = arith.addf %4, %3 : vector<16x16xf32>
    %6 = arith.divf %4, %5 : vector<16x16xf32>
    %7 = arith.mulf %1, %6 : vector<16x16xf32>
    %c0_2 = arith.constant 0 : index
    %c0_3 = arith.constant 0 : index
    %c0_4 = arith.constant 0 : index
    %8 = vector.load %arg2[%c0_2, %c0_3, %c0_4] : memref<3x48x16xbf16, #tpu.memory_space<vmem>>, vector<1x48x16xbf16>
    %9 = vector.shape_cast %8 : vector<1x48x16xbf16> to vector<48x16xbf16>
    %c0_5 = arith.constant 0 : index
    %c0_6 = arith.constant 0 : index
    %c0_7 = arith.constant 0 : index
    %10 = vector.load %arg3[%c0_5, %c0_6, %c0_7] : memref<3x1x16xf32, #tpu.memory_space<vmem>>, vector<1x1x16xf32>
    %11 = vector.shape_cast %10 : vector<1x1x16xf32> to vector<1x16xf32>
    %12 = tpu.iota {dimensions = array<i32: 0>} : vector<16x16xi32>
    %c1_i32 = arith.constant 1 : i32
    %13 = tpu.dynamic_rotate %7 by %c1_i32 dim 0 : vector<16x16xf32>, i32 -> vector<16x16xf32>
    %c1_i32_8 = arith.constant 1 : i32
    %14 = vector.broadcast %c1_i32_8 : i32 to vector<16x16xi32>
    %15 = arith.cmpi sge, %12, %14 : vector<16x16xi32>
    %c17_i32 = arith.constant 17 : i32
    %16 = vector.broadcast %c17_i32 : i32 to vector<16x16xi32>
    %17 = arith.cmpi slt, %12, %16 : vector<16x16xi32>
    %18 = arith.andi %15, %17 : vector<16x16xi1>
    %cst_9 = arith.constant 0.000000e+00 : f32
    %19 = vector.broadcast %cst_9 : f32 to vector<16x16xf32>
    %20 = arith.select %18, %13, %19 : vector<16x16xi1>, vector<16x16xf32>
    %c15_i32 = arith.constant 15 : i32
    %21 = tpu.dynamic_rotate %7 by %c15_i32 dim 0 : vector<16x16xf32>, i32 -> vector<16x16xf32>
    %c-1_i32 = arith.constant -1 : i32
    %22 = vector.broadcast %c-1_i32 : i32 to vector<16x16xi32>
    %23 = arith.cmpi sge, %12, %22 : vector<16x16xi32>
    %c15_i32_10 = arith.constant 15 : i32
    %24 = vector.broadcast %c15_i32_10 : i32 to vector<16x16xi32>
    %25 = arith.cmpi slt, %12, %24 : vector<16x16xi32>
    %26 = arith.andi %23, %25 : vector<16x16xi1>
    %cst_11 = arith.constant 0.000000e+00 : f32
    %27 = vector.broadcast %cst_11 : f32 to vector<16x16xf32>
    %28 = arith.select %26, %21, %27 : vector<16x16xi1>, vector<16x16xf32>
    %29 = tpu.concatenate %20, %7, %28 in 1 : vector<16x16xf32>, vector<16x16xf32>, vector<16x16xf32> -> vector<16x48xf32>
    %30 = arith.truncf %29 : vector<16x48xf32> to vector<16x48xbf16>
    %cst_12 = arith.constant dense<0.000000e+00> : vector<16x16xf32>
    %31 = tpu.matmul %30, %9, %cst_12 {dimension_numbers = #tpu.dot_dimension_numbers<[1], [0], [0], [1], [0, 0, 1, 1], [], []>} : vector<16x48xbf16>, vector<48x16xbf16>, vector<16x16xf32> -> vector<16x16xf32>
    %32 = vector.broadcast %11 : vector<1x16xf32> to vector<16x16xf32>
    %33 = arith.addf %31, %32 : vector<16x16xf32>
    %34 = arith.negf %33 : vector<16x16xf32>
    %35 = math.exp %34 : vector<16x16xf32>
    %cst_13 = arith.constant 1.000000e+00 : f32
    %36 = vector.broadcast %cst_13 : f32 to vector<16x16xf32>
    %37 = arith.addf %36, %35 : vector<16x16xf32>
    %38 = arith.divf %36, %37 : vector<16x16xf32>
    %39 = arith.mulf %33, %38 : vector<16x16xf32>
    %c0_14 = arith.constant 0 : index
    %c0_15 = arith.constant 0 : index
    %c0_16 = arith.constant 0 : index
    %40 = vector.load %arg4[%c0_14, %c0_15, %c0_16] : memref<3x48x16xbf16, #tpu.memory_space<vmem>>, vector<1x48x16xbf16>
    %41 = vector.shape_cast %40 : vector<1x48x16xbf16> to vector<48x16xbf16>
    %c0_17 = arith.constant 0 : index
    %c0_18 = arith.constant 0 : index
    %c0_19 = arith.constant 0 : index
    %42 = vector.load %arg5[%c0_17, %c0_18, %c0_19] : memref<3x1x16xf32, #tpu.memory_space<vmem>>, vector<1x1x16xf32>
    %43 = vector.shape_cast %42 : vector<1x1x16xf32> to vector<1x16xf32>
    %44 = tpu.iota {dimensions = array<i32: 0>} : vector<16x16xi32>
    %c1_i32_20 = arith.constant 1 : i32
    %45 = tpu.dynamic_rotate %39 by %c1_i32_20 dim 0 : vector<16x16xf32>, i32 -> vector<16x16xf32>
    %c1_i32_21 = arith.constant 1 : i32
    %46 = vector.broadcast %c1_i32_21 : i32 to vector<16x16xi32>
    %47 = arith.cmpi sge, %44, %46 : vector<16x16xi32>
    %c17_i32_22 = arith.constant 17 : i32
    %48 = vector.broadcast %c17_i32_22 : i32 to vector<16x16xi32>
    %49 = arith.cmpi slt, %44, %48 : vector<16x16xi32>
    %50 = arith.andi %47, %49 : vector<16x16xi1>
    %cst_23 = arith.constant 0.000000e+00 : f32
    %51 = vector.broadcast %cst_23 : f32 to vector<16x16xf32>
    %52 = arith.select %50, %45, %51 : vector<16x16xi1>, vector<16x16xf32>
    %c15_i32_24 = arith.constant 15 : i32
    %53 = tpu.dynamic_rotate %39 by %c15_i32_24 dim 0 : vector<16x16xf32>, i32 -> vector<16x16xf32>
    %c-1_i32_25 = arith.constant -1 : i32
    %54 = vector.broadcast %c-1_i32_25 : i32 to vector<16x16xi32>
    %55 = arith.cmpi sge, %44, %54 : vector<16x16xi32>
    %c15_i32_26 = arith.constant 15 : i32
    %56 = vector.broadcast %c15_i32_26 : i32 to vector<16x16xi32>
    %57 = arith.cmpi slt, %44, %56 : vector<16x16xi32>
    %58 = arith.andi %55, %57 : vector<16x16xi1>
    %cst_27 = arith.constant 0.000000e+00 : f32
    %59 = vector.broadcast %cst_27 : f32 to vector<16x16xf32>
    %60 = arith.select %58, %53, %59 : vector<16x16xi1>, vector<16x16xf32>
    %61 = tpu.concatenate %52, %39, %60 in 1 : vector<16x16xf32>, vector<16x16xf32>, vector<16x16xf32> -> vector<16x48xf32>
    %62 = arith.truncf %61 : vector<16x48xf32> to vector<16x48xbf16>
    %cst_28 = arith.constant dense<0.000000e+00> : vector<16x16xf32>
    %63 = tpu.matmul %62, %41, %cst_28 {dimension_numbers = #tpu.dot_dimension_numbers<[1], [0], [0], [1], [0, 0, 1, 1], [], []>} : vector<16x48xbf16>, vector<48x16xbf16>, vector<16x16xf32> -> vector<16x16xf32>
    %64 = vector.broadcast %43 : vector<1x16xf32> to vector<16x16xf32>
    %65 = arith.addf %63, %64 : vector<16x16xf32>
    %66 = arith.addf %65, %1 : vector<16x16xf32>
    %67 = arith.negf %66 : vector<16x16xf32>
    %68 = math.exp %67 : vector<16x16xf32>
    %cst_29 = arith.constant 1.000000e+00 : f32
    %69 = vector.broadcast %cst_29 : f32 to vector<16x16xf32>
    %70 = arith.addf %69, %68 : vector<16x16xf32>
    %71 = arith.divf %69, %70 : vector<16x16xf32>
    %72 = arith.mulf %66, %71 : vector<16x16xf32>
    %c1 = arith.constant 1 : index
    %c0_30 = arith.constant 0 : index
    %c0_31 = arith.constant 0 : index
    %73 = vector.load %arg2[%c1, %c0_30, %c0_31] : memref<3x48x16xbf16, #tpu.memory_space<vmem>>, vector<1x48x16xbf16>
    %74 = vector.shape_cast %73 : vector<1x48x16xbf16> to vector<48x16xbf16>
    %c1_32 = arith.constant 1 : index
    %c0_33 = arith.constant 0 : index
    %c0_34 = arith.constant 0 : index
    %75 = vector.load %arg3[%c1_32, %c0_33, %c0_34] : memref<3x1x16xf32, #tpu.memory_space<vmem>>, vector<1x1x16xf32>
    %76 = vector.shape_cast %75 : vector<1x1x16xf32> to vector<1x16xf32>
    %77 = tpu.iota {dimensions = array<i32: 0>} : vector<16x16xi32>
    %c3_i32 = arith.constant 3 : i32
    %78 = tpu.dynamic_rotate %72 by %c3_i32 dim 0 : vector<16x16xf32>, i32 -> vector<16x16xf32>
    %c3_i32_35 = arith.constant 3 : i32
    %79 = vector.broadcast %c3_i32_35 : i32 to vector<16x16xi32>
    %80 = arith.cmpi sge, %77, %79 : vector<16x16xi32>
    %c19_i32 = arith.constant 19 : i32
    %81 = vector.broadcast %c19_i32 : i32 to vector<16x16xi32>
    %82 = arith.cmpi slt, %77, %81 : vector<16x16xi32>
    %83 = arith.andi %80, %82 : vector<16x16xi1>
    %cst_36 = arith.constant 0.000000e+00 : f32
    %84 = vector.broadcast %cst_36 : f32 to vector<16x16xf32>
    %85 = arith.select %83, %78, %84 : vector<16x16xi1>, vector<16x16xf32>
    %c13_i32 = arith.constant 13 : i32
    %86 = tpu.dynamic_rotate %72 by %c13_i32 dim 0 : vector<16x16xf32>, i32 -> vector<16x16xf32>
    %c-3_i32 = arith.constant -3 : i32
    %87 = vector.broadcast %c-3_i32 : i32 to vector<16x16xi32>
    %88 = arith.cmpi sge, %77, %87 : vector<16x16xi32>
    %c13_i32_37 = arith.constant 13 : i32
    %89 = vector.broadcast %c13_i32_37 : i32 to vector<16x16xi32>
    %90 = arith.cmpi slt, %77, %89 : vector<16x16xi32>
    %91 = arith.andi %88, %90 : vector<16x16xi1>
    %cst_38 = arith.constant 0.000000e+00 : f32
    %92 = vector.broadcast %cst_38 : f32 to vector<16x16xf32>
    %93 = arith.select %91, %86, %92 : vector<16x16xi1>, vector<16x16xf32>
    %94 = tpu.concatenate %85, %72, %93 in 1 : vector<16x16xf32>, vector<16x16xf32>, vector<16x16xf32> -> vector<16x48xf32>
    %95 = arith.truncf %94 : vector<16x48xf32> to vector<16x48xbf16>
    %cst_39 = arith.constant dense<0.000000e+00> : vector<16x16xf32>
    %96 = tpu.matmul %95, %74, %cst_39 {dimension_numbers = #tpu.dot_dimension_numbers<[1], [0], [0], [1], [0, 0, 1, 1], [], []>} : vector<16x48xbf16>, vector<48x16xbf16>, vector<16x16xf32> -> vector<16x16xf32>
    %97 = vector.broadcast %76 : vector<1x16xf32> to vector<16x16xf32>
    %98 = arith.addf %96, %97 : vector<16x16xf32>
    %99 = arith.negf %98 : vector<16x16xf32>
    %100 = math.exp %99 : vector<16x16xf32>
    %cst_40 = arith.constant 1.000000e+00 : f32
    %101 = vector.broadcast %cst_40 : f32 to vector<16x16xf32>
    %102 = arith.addf %101, %100 : vector<16x16xf32>
    %103 = arith.divf %101, %102 : vector<16x16xf32>
    %104 = arith.mulf %98, %103 : vector<16x16xf32>
    %c1_41 = arith.constant 1 : index
    %c0_42 = arith.constant 0 : index
    %c0_43 = arith.constant 0 : index
    %105 = vector.load %arg4[%c1_41, %c0_42, %c0_43] : memref<3x48x16xbf16, #tpu.memory_space<vmem>>, vector<1x48x16xbf16>
    %106 = vector.shape_cast %105 : vector<1x48x16xbf16> to vector<48x16xbf16>
    %c1_44 = arith.constant 1 : index
    %c0_45 = arith.constant 0 : index
    %c0_46 = arith.constant 0 : index
    %107 = vector.load %arg5[%c1_44, %c0_45, %c0_46] : memref<3x1x16xf32, #tpu.memory_space<vmem>>, vector<1x1x16xf32>
    %108 = vector.shape_cast %107 : vector<1x1x16xf32> to vector<1x16xf32>
    %109 = tpu.iota {dimensions = array<i32: 0>} : vector<16x16xi32>
    %c1_i32_47 = arith.constant 1 : i32
    %110 = tpu.dynamic_rotate %104 by %c1_i32_47 dim 0 : vector<16x16xf32>, i32 -> vector<16x16xf32>
    %c1_i32_48 = arith.constant 1 : i32
    %111 = vector.broadcast %c1_i32_48 : i32 to vector<16x16xi32>
    %112 = arith.cmpi sge, %109, %111 : vector<16x16xi32>
    %c17_i32_49 = arith.constant 17 : i32
    %113 = vector.broadcast %c17_i32_49 : i32 to vector<16x16xi32>
    %114 = arith.cmpi slt, %109, %113 : vector<16x16xi32>
    %115 = arith.andi %112, %114 : vector<16x16xi1>
    %cst_50 = arith.constant 0.000000e+00 : f32
    %116 = vector.broadcast %cst_50 : f32 to vector<16x16xf32>
    %117 = arith.select %115, %110, %116 : vector<16x16xi1>, vector<16x16xf32>
    %c15_i32_51 = arith.constant 15 : i32
    %118 = tpu.dynamic_rotate %104 by %c15_i32_51 dim 0 : vector<16x16xf32>, i32 -> vector<16x16xf32>
    %c-1_i32_52 = arith.constant -1 : i32
    %119 = vector.broadcast %c-1_i32_52 : i32 to vector<16x16xi32>
    %120 = arith.cmpi sge, %109, %119 : vector<16x16xi32>
    %c15_i32_53 = arith.constant 15 : i32
    %121 = vector.broadcast %c15_i32_53 : i32 to vector<16x16xi32>
    %122 = arith.cmpi slt, %109, %121 : vector<16x16xi32>
    %123 = arith.andi %120, %122 : vector<16x16xi1>
    %cst_54 = arith.constant 0.000000e+00 : f32
    %124 = vector.broadcast %cst_54 : f32 to vector<16x16xf32>
    %125 = arith.select %123, %118, %124 : vector<16x16xi1>, vector<16x16xf32>
    %126 = tpu.concatenate %117, %104, %125 in 1 : vector<16x16xf32>, vector<16x16xf32>, vector<16x16xf32> -> vector<16x48xf32>
    %127 = arith.truncf %126 : vector<16x48xf32> to vector<16x48xbf16>
    %cst_55 = arith.constant dense<0.000000e+00> : vector<16x16xf32>
    %128 = tpu.matmul %127, %106, %cst_55 {dimension_numbers = #tpu.dot_dimension_numbers<[1], [0], [0], [1], [0, 0, 1, 1], [], []>} : vector<16x48xbf16>, vector<48x16xbf16>, vector<16x16xf32> -> vector<16x16xf32>
    %129 = vector.broadcast %108 : vector<1x16xf32> to vector<16x16xf32>
    %130 = arith.addf %128, %129 : vector<16x16xf32>
    %131 = arith.addf %130, %66 : vector<16x16xf32>
    %132 = arith.negf %131 : vector<16x16xf32>
    %133 = math.exp %132 : vector<16x16xf32>
    %cst_56 = arith.constant 1.000000e+00 : f32
    %134 = vector.broadcast %cst_56 : f32 to vector<16x16xf32>
    %135 = arith.addf %134, %133 : vector<16x16xf32>
    %136 = arith.divf %134, %135 : vector<16x16xf32>
    %137 = arith.mulf %131, %136 : vector<16x16xf32>
    %c2 = arith.constant 2 : index
    %c0_57 = arith.constant 0 : index
    %c0_58 = arith.constant 0 : index
    %138 = vector.load %arg2[%c2, %c0_57, %c0_58] : memref<3x48x16xbf16, #tpu.memory_space<vmem>>, vector<1x48x16xbf16>
    %139 = vector.shape_cast %138 : vector<1x48x16xbf16> to vector<48x16xbf16>
    %c2_59 = arith.constant 2 : index
    %c0_60 = arith.constant 0 : index
    %c0_61 = arith.constant 0 : index
    %140 = vector.load %arg3[%c2_59, %c0_60, %c0_61] : memref<3x1x16xf32, #tpu.memory_space<vmem>>, vector<1x1x16xf32>
    %141 = vector.shape_cast %140 : vector<1x1x16xf32> to vector<1x16xf32>
    %142 = tpu.iota {dimensions = array<i32: 0>} : vector<16x16xi32>
    %c5_i32 = arith.constant 5 : i32
    %143 = tpu.dynamic_rotate %137 by %c5_i32 dim 0 : vector<16x16xf32>, i32 -> vector<16x16xf32>
    %c5_i32_62 = arith.constant 5 : i32
    %144 = vector.broadcast %c5_i32_62 : i32 to vector<16x16xi32>
    %145 = arith.cmpi sge, %142, %144 : vector<16x16xi32>
    %c21_i32 = arith.constant 21 : i32
    %146 = vector.broadcast %c21_i32 : i32 to vector<16x16xi32>
    %147 = arith.cmpi slt, %142, %146 : vector<16x16xi32>
    %148 = arith.andi %145, %147 : vector<16x16xi1>
    %cst_63 = arith.constant 0.000000e+00 : f32
    %149 = vector.broadcast %cst_63 : f32 to vector<16x16xf32>
    %150 = arith.select %148, %143, %149 : vector<16x16xi1>, vector<16x16xf32>
    %c11_i32 = arith.constant 11 : i32
    %151 = tpu.dynamic_rotate %137 by %c11_i32 dim 0 : vector<16x16xf32>, i32 -> vector<16x16xf32>
    %c-5_i32 = arith.constant -5 : i32
    %152 = vector.broadcast %c-5_i32 : i32 to vector<16x16xi32>
    %153 = arith.cmpi sge, %142, %152 : vector<16x16xi32>
    %c11_i32_64 = arith.constant 11 : i32
    %154 = vector.broadcast %c11_i32_64 : i32 to vector<16x16xi32>
    %155 = arith.cmpi slt, %142, %154 : vector<16x16xi32>
    %156 = arith.andi %153, %155 : vector<16x16xi1>
    %cst_65 = arith.constant 0.000000e+00 : f32
    %157 = vector.broadcast %cst_65 : f32 to vector<16x16xf32>
    %158 = arith.select %156, %151, %157 : vector<16x16xi1>, vector<16x16xf32>
    %159 = tpu.concatenate %150, %137, %158 in 1 : vector<16x16xf32>, vector<16x16xf32>, vector<16x16xf32> -> vector<16x48xf32>
    %160 = arith.truncf %159 : vector<16x48xf32> to vector<16x48xbf16>
    %cst_66 = arith.constant dense<0.000000e+00> : vector<16x16xf32>
    %161 = tpu.matmul %160, %139, %cst_66 {dimension_numbers = #tpu.dot_dimension_numbers<[1], [0], [0], [1], [0, 0, 1, 1], [], []>} : vector<16x48xbf16>, vector<48x16xbf16>, vector<16x16xf32> -> vector<16x16xf32>
    %162 = vector.broadcast %141 : vector<1x16xf32> to vector<16x16xf32>
    %163 = arith.addf %161, %162 : vector<16x16xf32>
    %164 = arith.negf %163 : vector<16x16xf32>
    %165 = math.exp %164 : vector<16x16xf32>
    %cst_67 = arith.constant 1.000000e+00 : f32
    %166 = vector.broadcast %cst_67 : f32 to vector<16x16xf32>
    %167 = arith.addf %166, %165 : vector<16x16xf32>
    %168 = arith.divf %166, %167 : vector<16x16xf32>
    %169 = arith.mulf %163, %168 : vector<16x16xf32>
    %c2_68 = arith.constant 2 : index
    %c0_69 = arith.constant 0 : index
    %c0_70 = arith.constant 0 : index
    %170 = vector.load %arg4[%c2_68, %c0_69, %c0_70] : memref<3x48x16xbf16, #tpu.memory_space<vmem>>, vector<1x48x16xbf16>
    %171 = vector.shape_cast %170 : vector<1x48x16xbf16> to vector<48x16xbf16>
    %c2_71 = arith.constant 2 : index
    %c0_72 = arith.constant 0 : index
    %c0_73 = arith.constant 0 : index
    %172 = vector.load %arg5[%c2_71, %c0_72, %c0_73] : memref<3x1x16xf32, #tpu.memory_space<vmem>>, vector<1x1x16xf32>
    %173 = vector.shape_cast %172 : vector<1x1x16xf32> to vector<1x16xf32>
    %174 = tpu.iota {dimensions = array<i32: 0>} : vector<16x16xi32>
    %c1_i32_74 = arith.constant 1 : i32
    %175 = tpu.dynamic_rotate %169 by %c1_i32_74 dim 0 : vector<16x16xf32>, i32 -> vector<16x16xf32>
    %c1_i32_75 = arith.constant 1 : i32
    %176 = vector.broadcast %c1_i32_75 : i32 to vector<16x16xi32>
    %177 = arith.cmpi sge, %174, %176 : vector<16x16xi32>
    %c17_i32_76 = arith.constant 17 : i32
    %178 = vector.broadcast %c17_i32_76 : i32 to vector<16x16xi32>
    %179 = arith.cmpi slt, %174, %178 : vector<16x16xi32>
    %180 = arith.andi %177, %179 : vector<16x16xi1>
    %cst_77 = arith.constant 0.000000e+00 : f32
    %181 = vector.broadcast %cst_77 : f32 to vector<16x16xf32>
    %182 = arith.select %180, %175, %181 : vector<16x16xi1>, vector<16x16xf32>
    %c15_i32_78 = arith.constant 15 : i32
    %183 = tpu.dynamic_rotate %169 by %c15_i32_78 dim 0 : vector<16x16xf32>, i32 -> vector<16x16xf32>
    %c-1_i32_79 = arith.constant -1 : i32
    %184 = vector.broadcast %c-1_i32_79 : i32 to vector<16x16xi32>
    %185 = arith.cmpi sge, %174, %184 : vector<16x16xi32>
    %c15_i32_80 = arith.constant 15 : i32
    %186 = vector.broadcast %c15_i32_80 : i32 to vector<16x16xi32>
    %187 = arith.cmpi slt, %174, %186 : vector<16x16xi32>
    %188 = arith.andi %185, %187 : vector<16x16xi1>
    %cst_81 = arith.constant 0.000000e+00 : f32
    %189 = vector.broadcast %cst_81 : f32 to vector<16x16xf32>
    %190 = arith.select %188, %183, %189 : vector<16x16xi1>, vector<16x16xf32>
    %191 = tpu.concatenate %182, %169, %190 in 1 : vector<16x16xf32>, vector<16x16xf32>, vector<16x16xf32> -> vector<16x48xf32>
    %192 = arith.truncf %191 : vector<16x48xf32> to vector<16x48xbf16>
    %cst_82 = arith.constant dense<0.000000e+00> : vector<16x16xf32>
    %193 = tpu.matmul %192, %171, %cst_82 {dimension_numbers = #tpu.dot_dimension_numbers<[1], [0], [0], [1], [0, 0, 1, 1], [], []>} : vector<16x48xbf16>, vector<48x16xbf16>, vector<16x16xf32> -> vector<16x16xf32>
    %194 = vector.broadcast %173 : vector<1x16xf32> to vector<16x16xf32>
    %195 = arith.addf %193, %194 : vector<16x16xf32>
    %196 = arith.addf %195, %131 : vector<16x16xf32>
    %197 = arith.negf %196 : vector<16x16xf32>
    %198 = math.exp %197 : vector<16x16xf32>
    %cst_83 = arith.constant 1.000000e+00 : f32
    %199 = vector.broadcast %cst_83 : f32 to vector<16x16xf32>
    %200 = arith.addf %199, %198 : vector<16x16xf32>
    %201 = arith.divf %199, %200 : vector<16x16xf32>
    %202 = arith.mulf %196, %201 : vector<16x16xf32>
    %c0_84 = arith.constant 0 : index
    %c0_85 = arith.constant 0 : index
    %203 = vector.load %arg6[%c0_84, %c0_85] : memref<48x16xbf16, #tpu.memory_space<vmem>>, vector<48x16xbf16>
    %c0_86 = arith.constant 0 : index
    %c0_87 = arith.constant 0 : index
    %204 = vector.load %arg7[%c0_86, %c0_87] : memref<1x16xf32, #tpu.memory_space<vmem>>, vector<1x16xf32>
    %205 = tpu.iota {dimensions = array<i32: 0>} : vector<16x16xi32>
    %c1_i32_88 = arith.constant 1 : i32
    %206 = tpu.dynamic_rotate %202 by %c1_i32_88 dim 0 : vector<16x16xf32>, i32 -> vector<16x16xf32>
    %c1_i32_89 = arith.constant 1 : i32
    %207 = vector.broadcast %c1_i32_89 : i32 to vector<16x16xi32>
    %208 = arith.cmpi sge, %205, %207 : vector<16x16xi32>
    %c17_i32_90 = arith.constant 17 : i32
    %209 = vector.broadcast %c17_i32_90 : i32 to vector<16x16xi32>
    %210 = arith.cmpi slt, %205, %209 : vector<16x16xi32>
    %211 = arith.andi %208, %210 : vector<16x16xi1>
    %cst_91 = arith.constant 0.000000e+00 : f32
    %212 = vector.broadcast %cst_91 : f32 to vector<16x16xf32>
    %213 = arith.select %211, %206, %212 : vector<16x16xi1>, vector<16x16xf32>
    %c15_i32_92 = arith.constant 15 : i32
    %214 = tpu.dynamic_rotate %202 by %c15_i32_92 dim 0 : vector<16x16xf32>, i32 -> vector<16x16xf32>
    %c-1_i32_93 = arith.constant -1 : i32
    %215 = vector.broadcast %c-1_i32_93 : i32 to vector<16x16xi32>
    %216 = arith.cmpi sge, %205, %215 : vector<16x16xi32>
    %c15_i32_94 = arith.constant 15 : i32
    %217 = vector.broadcast %c15_i32_94 : i32 to vector<16x16xi32>
    %218 = arith.cmpi slt, %205, %217 : vector<16x16xi32>
    %219 = arith.andi %216, %218 : vector<16x16xi1>
    %cst_95 = arith.constant 0.000000e+00 : f32
    %220 = vector.broadcast %cst_95 : f32 to vector<16x16xf32>
    %221 = arith.select %219, %214, %220 : vector<16x16xi1>, vector<16x16xf32>
    %222 = tpu.concatenate %213, %202, %221 in 1 : vector<16x16xf32>, vector<16x16xf32>, vector<16x16xf32> -> vector<16x48xf32>
    %223 = arith.truncf %222 : vector<16x48xf32> to vector<16x48xbf16>
    %cst_96 = arith.constant dense<0.000000e+00> : vector<16x16xf32>
    %224 = tpu.matmul %223, %203, %cst_96 {dimension_numbers = #tpu.dot_dimension_numbers<[1], [0], [0], [1], [0, 0, 1, 1], [], []>} : vector<16x48xbf16>, vector<48x16xbf16>, vector<16x16xf32> -> vector<16x16xf32>
    %225 = vector.broadcast %204 : vector<1x16xf32> to vector<16x16xf32>
    %226 = arith.addf %224, %225 : vector<16x16xf32>
    %c0_97 = arith.constant 0 : index
    %c0_98 = arith.constant 0 : index
    %c0_99 = arith.constant 0 : index
    %227 = vector.load %arg8[%c0_97, %c0_98, %c0_99] : memref<1x16x16xf32, #tpu.memory_space<vmem>>, vector<1x16x16xf32>
    %228 = vector.shape_cast %227 : vector<1x16x16xf32> to vector<16x16xf32>
    %229 = vector.shape_cast %226 : vector<16x16xf32> to vector<1x16x16xf32>
    tpu.vector_store %arg8[%c0_97, %c0_98, %c0_99], %229 {strides = array<i32>} : memref<1x16x16xf32, #tpu.memory_space<vmem>>, vector<1x16x16xf32>,
    return
  }
  func.func @transform_0(%arg0: i32) -> (i32, i32, i32) {
    %c0_i32 = arith.constant 0 : i32
    %c0_i32_0 = arith.constant 0 : i32
    %c0_i32_1 = arith.constant 0 : i32
    return %arg0, %c0_i32, %c0_i32_0 : i32, i32, i32
  }
  func.func @transform_1(%arg0: i32) -> (i32, i32, i32) {
    %c0_i32 = arith.constant 0 : i32
    %c0_i32_0 = arith.constant 0 : i32
    %c0_i32_1 = arith.constant 0 : i32
    %c0_i32_2 = arith.constant 0 : i32
    return %c0_i32, %c0_i32_0, %c0_i32_1 : i32, i32, i32
  }
  func.func @transform_2(%arg0: i32) -> (i32, i32, i32) {
    %c0_i32 = arith.constant 0 : i32
    %c0_i32_0 = arith.constant 0 : i32
    %c0_i32_1 = arith.constant 0 : i32
    %c0_i32_2 = arith.constant 0 : i32
    return %c0_i32, %c0_i32_0, %c0_i32_1 : i32, i32, i32
  }
  func.func @transform_3(%arg0: i32) -> (i32, i32, i32) {
    %c0_i32 = arith.constant 0 : i32
    %c0_i32_0 = arith.constant 0 : i32
    %c0_i32_1 = arith.constant 0 : i32
    %c0_i32_2 = arith.constant 0 : i32
    return %c0_i32, %c0_i32_0, %c0_i32_1 : i32, i32, i32
  }
  func.func @transform_4(%arg0: i32) -> (i32, i32, i32) {
    %c0_i32 = arith.constant 0 : i32
    %c0_i32_0 = arith.constant 0 : i32
    %c0_i32_1 = arith.constant 0 : i32
    %c0_i32_2 = arith.constant 0 : i32
    return %c0_i32, %c0_i32_0, %c0_i32_1 : i32, i32, i32
  }
  func.func @transform_5(%arg0: i32) -> (i32, i32) {
    %c0_i32 = arith.constant 0 : i32
    %c0_i32_0 = arith.constant 0 : i32
    %c0_i32_1 = arith.constant 0 : i32
    return %c0_i32, %c0_i32_0 : i32, i32
  }
  func.func @transform_6(%arg0: i32) -> (i32, i32) {
    %c0_i32 = arith.constant 0 : i32
    %c0_i32_0 = arith.constant 0 : i32
    %c0_i32_1 = arith.constant 0 : i32
    return %c0_i32, %c0_i32_0 : i32, i32
  }
  func.func @transform_7(%arg0: i32) -> (i32, i32, i32) {
    %c0_i32 = arith.constant 0 : i32
    %c0_i32_0 = arith.constant 0 : i32
    %c0_i32_1 = arith.constant 0 : i32
    return %arg0, %c0_i32, %c0_i32_0 : i32, i32, i32
  }
}

module attributes {stable_mosaic.version = 11 : i64} {
  func.func @_head_stage_kernel(%arg0: i32, %arg1: memref<1x32x8xf32, #tpu.memory_space<vmem>>, %arg2: memref<3x24x8xbf16, #tpu.memory_space<vmem>>, %arg3: memref<3x1x8xf32, #tpu.memory_space<vmem>>, %arg4: memref<3x24x8xbf16, #tpu.memory_space<vmem>>, %arg5: memref<3x1x8xf32, #tpu.memory_space<vmem>>, %arg6: memref<56x1xbf16, #tpu.memory_space<vmem>>, %arg7: memref<1x1xf32, #tpu.memory_space<vmem>>, %arg8: memref<1x32x1xf32, #tpu.memory_space<vmem>>) attributes {dimension_semantics = [#tpu.dimension_semantics<parallel>], iteration_bounds = array<i64: 2>, scalar_prefetch = 0 : i64, scratch_operands = 0 : i64, tpu.core_type = #tpu.core_type<tc>, window_params = [{transform_indices = @transform_0, window_bounds = array<i64: 1, 32, 8>}, {pipeline_mode = #tpu.pipeline_mode<synchronous>, transform_indices = @transform_1, window_bounds = array<i64: 3, 24, 8>}, {pipeline_mode = #tpu.pipeline_mode<synchronous>, transform_indices = @transform_2, window_bounds = array<i64: 3, 1, 8>}, {pipeline_mode = #tpu.pipeline_mode<synchronous>, transform_indices = @transform_3, window_bounds = array<i64: 3, 24, 8>}, {pipeline_mode = #tpu.pipeline_mode<synchronous>, transform_indices = @transform_4, window_bounds = array<i64: 3, 1, 8>}, {pipeline_mode = #tpu.pipeline_mode<synchronous>, transform_indices = @transform_5, window_bounds = array<i64: 56, 1>}, {pipeline_mode = #tpu.pipeline_mode<synchronous>, transform_indices = @transform_6, window_bounds = array<i64: 1, 1>}, {transform_indices = @transform_7, window_bounds = array<i64: 1, 32, 1>}]} {
    %c0 = arith.constant 0 : index
    %c0_0 = arith.constant 0 : index
    %c0_1 = arith.constant 0 : index
    %0 = vector.load %arg1[%c0, %c0_0, %c0_1] : memref<1x32x8xf32, #tpu.memory_space<vmem>>, vector<1x32x8xf32>
    %1 = vector.shape_cast %0 : vector<1x32x8xf32> to vector<32x8xf32>
    %2 = arith.negf %1 : vector<32x8xf32>
    %3 = math.exp %2 : vector<32x8xf32>
    %cst = arith.constant 1.000000e+00 : f32
    %4 = vector.broadcast %cst : f32 to vector<32x8xf32>
    %5 = arith.addf %4, %3 : vector<32x8xf32>
    %6 = arith.divf %4, %5 : vector<32x8xf32>
    %7 = arith.mulf %1, %6 : vector<32x8xf32>
    %c0_2 = arith.constant 0 : index
    %c0_3 = arith.constant 0 : index
    %c0_4 = arith.constant 0 : index
    %8 = vector.load %arg2[%c0_2, %c0_3, %c0_4] : memref<3x24x8xbf16, #tpu.memory_space<vmem>>, vector<1x24x8xbf16>
    %9 = vector.shape_cast %8 : vector<1x24x8xbf16> to vector<24x8xbf16>
    %c0_5 = arith.constant 0 : index
    %c0_6 = arith.constant 0 : index
    %c0_7 = arith.constant 0 : index
    %10 = vector.load %arg3[%c0_5, %c0_6, %c0_7] : memref<3x1x8xf32, #tpu.memory_space<vmem>>, vector<1x1x8xf32>
    %11 = vector.shape_cast %10 : vector<1x1x8xf32> to vector<1x8xf32>
    %12 = tpu.iota {dimensions = array<i32: 0>} : vector<32x8xi32>
    %c1_i32 = arith.constant 1 : i32
    %13 = tpu.dynamic_rotate %7 by %c1_i32 dim 0 : vector<32x8xf32>, i32 -> vector<32x8xf32>
    %c1_i32_8 = arith.constant 1 : i32
    %14 = vector.broadcast %c1_i32_8 : i32 to vector<32x8xi32>
    %15 = arith.cmpi sge, %12, %14 : vector<32x8xi32>
    %c33_i32 = arith.constant 33 : i32
    %16 = vector.broadcast %c33_i32 : i32 to vector<32x8xi32>
    %17 = arith.cmpi slt, %12, %16 : vector<32x8xi32>
    %18 = arith.andi %15, %17 : vector<32x8xi1>
    %cst_9 = arith.constant 0.000000e+00 : f32
    %19 = vector.broadcast %cst_9 : f32 to vector<32x8xf32>
    %20 = arith.select %18, %13, %19 : vector<32x8xi1>, vector<32x8xf32>
    %c31_i32 = arith.constant 31 : i32
    %21 = tpu.dynamic_rotate %7 by %c31_i32 dim 0 : vector<32x8xf32>, i32 -> vector<32x8xf32>
    %c-1_i32 = arith.constant -1 : i32
    %22 = vector.broadcast %c-1_i32 : i32 to vector<32x8xi32>
    %23 = arith.cmpi sge, %12, %22 : vector<32x8xi32>
    %c31_i32_10 = arith.constant 31 : i32
    %24 = vector.broadcast %c31_i32_10 : i32 to vector<32x8xi32>
    %25 = arith.cmpi slt, %12, %24 : vector<32x8xi32>
    %26 = arith.andi %23, %25 : vector<32x8xi1>
    %cst_11 = arith.constant 0.000000e+00 : f32
    %27 = vector.broadcast %cst_11 : f32 to vector<32x8xf32>
    %28 = arith.select %26, %21, %27 : vector<32x8xi1>, vector<32x8xf32>
    %29 = tpu.concatenate %20, %7, %28 in 1 : vector<32x8xf32>, vector<32x8xf32>, vector<32x8xf32> -> vector<32x24xf32>
    %30 = arith.truncf %29 : vector<32x24xf32> to vector<32x24xbf16>
    %cst_12 = arith.constant dense<0.000000e+00> : vector<32x8xf32>
    %31 = tpu.matmul %30, %9, %cst_12 {dimension_numbers = #tpu.dot_dimension_numbers<[1], [0], [0], [1], [0, 0, 1, 1], [], []>} : vector<32x24xbf16>, vector<24x8xbf16>, vector<32x8xf32> -> vector<32x8xf32>
    %32 = vector.broadcast %11 : vector<1x8xf32> to vector<32x8xf32>
    %33 = arith.addf %31, %32 : vector<32x8xf32>
    %34 = arith.negf %33 : vector<32x8xf32>
    %35 = math.exp %34 : vector<32x8xf32>
    %cst_13 = arith.constant 1.000000e+00 : f32
    %36 = vector.broadcast %cst_13 : f32 to vector<32x8xf32>
    %37 = arith.addf %36, %35 : vector<32x8xf32>
    %38 = arith.divf %36, %37 : vector<32x8xf32>
    %39 = arith.mulf %33, %38 : vector<32x8xf32>
    %c0_14 = arith.constant 0 : index
    %c0_15 = arith.constant 0 : index
    %c0_16 = arith.constant 0 : index
    %40 = vector.load %arg4[%c0_14, %c0_15, %c0_16] : memref<3x24x8xbf16, #tpu.memory_space<vmem>>, vector<1x24x8xbf16>
    %41 = vector.shape_cast %40 : vector<1x24x8xbf16> to vector<24x8xbf16>
    %c0_17 = arith.constant 0 : index
    %c0_18 = arith.constant 0 : index
    %c0_19 = arith.constant 0 : index
    %42 = vector.load %arg5[%c0_17, %c0_18, %c0_19] : memref<3x1x8xf32, #tpu.memory_space<vmem>>, vector<1x1x8xf32>
    %43 = vector.shape_cast %42 : vector<1x1x8xf32> to vector<1x8xf32>
    %44 = tpu.iota {dimensions = array<i32: 0>} : vector<32x8xi32>
    %c1_i32_20 = arith.constant 1 : i32
    %45 = tpu.dynamic_rotate %39 by %c1_i32_20 dim 0 : vector<32x8xf32>, i32 -> vector<32x8xf32>
    %c1_i32_21 = arith.constant 1 : i32
    %46 = vector.broadcast %c1_i32_21 : i32 to vector<32x8xi32>
    %47 = arith.cmpi sge, %44, %46 : vector<32x8xi32>
    %c33_i32_22 = arith.constant 33 : i32
    %48 = vector.broadcast %c33_i32_22 : i32 to vector<32x8xi32>
    %49 = arith.cmpi slt, %44, %48 : vector<32x8xi32>
    %50 = arith.andi %47, %49 : vector<32x8xi1>
    %cst_23 = arith.constant 0.000000e+00 : f32
    %51 = vector.broadcast %cst_23 : f32 to vector<32x8xf32>
    %52 = arith.select %50, %45, %51 : vector<32x8xi1>, vector<32x8xf32>
    %c31_i32_24 = arith.constant 31 : i32
    %53 = tpu.dynamic_rotate %39 by %c31_i32_24 dim 0 : vector<32x8xf32>, i32 -> vector<32x8xf32>
    %c-1_i32_25 = arith.constant -1 : i32
    %54 = vector.broadcast %c-1_i32_25 : i32 to vector<32x8xi32>
    %55 = arith.cmpi sge, %44, %54 : vector<32x8xi32>
    %c31_i32_26 = arith.constant 31 : i32
    %56 = vector.broadcast %c31_i32_26 : i32 to vector<32x8xi32>
    %57 = arith.cmpi slt, %44, %56 : vector<32x8xi32>
    %58 = arith.andi %55, %57 : vector<32x8xi1>
    %cst_27 = arith.constant 0.000000e+00 : f32
    %59 = vector.broadcast %cst_27 : f32 to vector<32x8xf32>
    %60 = arith.select %58, %53, %59 : vector<32x8xi1>, vector<32x8xf32>
    %61 = tpu.concatenate %52, %39, %60 in 1 : vector<32x8xf32>, vector<32x8xf32>, vector<32x8xf32> -> vector<32x24xf32>
    %62 = arith.truncf %61 : vector<32x24xf32> to vector<32x24xbf16>
    %cst_28 = arith.constant dense<0.000000e+00> : vector<32x8xf32>
    %63 = tpu.matmul %62, %41, %cst_28 {dimension_numbers = #tpu.dot_dimension_numbers<[1], [0], [0], [1], [0, 0, 1, 1], [], []>} : vector<32x24xbf16>, vector<24x8xbf16>, vector<32x8xf32> -> vector<32x8xf32>
    %64 = vector.broadcast %43 : vector<1x8xf32> to vector<32x8xf32>
    %65 = arith.addf %63, %64 : vector<32x8xf32>
    %66 = arith.addf %65, %1 : vector<32x8xf32>
    %67 = arith.negf %66 : vector<32x8xf32>
    %68 = math.exp %67 : vector<32x8xf32>
    %cst_29 = arith.constant 1.000000e+00 : f32
    %69 = vector.broadcast %cst_29 : f32 to vector<32x8xf32>
    %70 = arith.addf %69, %68 : vector<32x8xf32>
    %71 = arith.divf %69, %70 : vector<32x8xf32>
    %72 = arith.mulf %66, %71 : vector<32x8xf32>
    %c1 = arith.constant 1 : index
    %c0_30 = arith.constant 0 : index
    %c0_31 = arith.constant 0 : index
    %73 = vector.load %arg2[%c1, %c0_30, %c0_31] : memref<3x24x8xbf16, #tpu.memory_space<vmem>>, vector<1x24x8xbf16>
    %74 = vector.shape_cast %73 : vector<1x24x8xbf16> to vector<24x8xbf16>
    %c1_32 = arith.constant 1 : index
    %c0_33 = arith.constant 0 : index
    %c0_34 = arith.constant 0 : index
    %75 = vector.load %arg3[%c1_32, %c0_33, %c0_34] : memref<3x1x8xf32, #tpu.memory_space<vmem>>, vector<1x1x8xf32>
    %76 = vector.shape_cast %75 : vector<1x1x8xf32> to vector<1x8xf32>
    %77 = tpu.iota {dimensions = array<i32: 0>} : vector<32x8xi32>
    %c3_i32 = arith.constant 3 : i32
    %78 = tpu.dynamic_rotate %72 by %c3_i32 dim 0 : vector<32x8xf32>, i32 -> vector<32x8xf32>
    %c3_i32_35 = arith.constant 3 : i32
    %79 = vector.broadcast %c3_i32_35 : i32 to vector<32x8xi32>
    %80 = arith.cmpi sge, %77, %79 : vector<32x8xi32>
    %c35_i32 = arith.constant 35 : i32
    %81 = vector.broadcast %c35_i32 : i32 to vector<32x8xi32>
    %82 = arith.cmpi slt, %77, %81 : vector<32x8xi32>
    %83 = arith.andi %80, %82 : vector<32x8xi1>
    %cst_36 = arith.constant 0.000000e+00 : f32
    %84 = vector.broadcast %cst_36 : f32 to vector<32x8xf32>
    %85 = arith.select %83, %78, %84 : vector<32x8xi1>, vector<32x8xf32>
    %c29_i32 = arith.constant 29 : i32
    %86 = tpu.dynamic_rotate %72 by %c29_i32 dim 0 : vector<32x8xf32>, i32 -> vector<32x8xf32>
    %c-3_i32 = arith.constant -3 : i32
    %87 = vector.broadcast %c-3_i32 : i32 to vector<32x8xi32>
    %88 = arith.cmpi sge, %77, %87 : vector<32x8xi32>
    %c29_i32_37 = arith.constant 29 : i32
    %89 = vector.broadcast %c29_i32_37 : i32 to vector<32x8xi32>
    %90 = arith.cmpi slt, %77, %89 : vector<32x8xi32>
    %91 = arith.andi %88, %90 : vector<32x8xi1>
    %cst_38 = arith.constant 0.000000e+00 : f32
    %92 = vector.broadcast %cst_38 : f32 to vector<32x8xf32>
    %93 = arith.select %91, %86, %92 : vector<32x8xi1>, vector<32x8xf32>
    %94 = tpu.concatenate %85, %72, %93 in 1 : vector<32x8xf32>, vector<32x8xf32>, vector<32x8xf32> -> vector<32x24xf32>
    %95 = arith.truncf %94 : vector<32x24xf32> to vector<32x24xbf16>
    %cst_39 = arith.constant dense<0.000000e+00> : vector<32x8xf32>
    %96 = tpu.matmul %95, %74, %cst_39 {dimension_numbers = #tpu.dot_dimension_numbers<[1], [0], [0], [1], [0, 0, 1, 1], [], []>} : vector<32x24xbf16>, vector<24x8xbf16>, vector<32x8xf32> -> vector<32x8xf32>
    %97 = vector.broadcast %76 : vector<1x8xf32> to vector<32x8xf32>
    %98 = arith.addf %96, %97 : vector<32x8xf32>
    %99 = arith.negf %98 : vector<32x8xf32>
    %100 = math.exp %99 : vector<32x8xf32>
    %cst_40 = arith.constant 1.000000e+00 : f32
    %101 = vector.broadcast %cst_40 : f32 to vector<32x8xf32>
    %102 = arith.addf %101, %100 : vector<32x8xf32>
    %103 = arith.divf %101, %102 : vector<32x8xf32>
    %104 = arith.mulf %98, %103 : vector<32x8xf32>
    %c1_41 = arith.constant 1 : index
    %c0_42 = arith.constant 0 : index
    %c0_43 = arith.constant 0 : index
    %105 = vector.load %arg4[%c1_41, %c0_42, %c0_43] : memref<3x24x8xbf16, #tpu.memory_space<vmem>>, vector<1x24x8xbf16>
    %106 = vector.shape_cast %105 : vector<1x24x8xbf16> to vector<24x8xbf16>
    %c1_44 = arith.constant 1 : index
    %c0_45 = arith.constant 0 : index
    %c0_46 = arith.constant 0 : index
    %107 = vector.load %arg5[%c1_44, %c0_45, %c0_46] : memref<3x1x8xf32, #tpu.memory_space<vmem>>, vector<1x1x8xf32>
    %108 = vector.shape_cast %107 : vector<1x1x8xf32> to vector<1x8xf32>
    %109 = tpu.iota {dimensions = array<i32: 0>} : vector<32x8xi32>
    %c1_i32_47 = arith.constant 1 : i32
    %110 = tpu.dynamic_rotate %104 by %c1_i32_47 dim 0 : vector<32x8xf32>, i32 -> vector<32x8xf32>
    %c1_i32_48 = arith.constant 1 : i32
    %111 = vector.broadcast %c1_i32_48 : i32 to vector<32x8xi32>
    %112 = arith.cmpi sge, %109, %111 : vector<32x8xi32>
    %c33_i32_49 = arith.constant 33 : i32
    %113 = vector.broadcast %c33_i32_49 : i32 to vector<32x8xi32>
    %114 = arith.cmpi slt, %109, %113 : vector<32x8xi32>
    %115 = arith.andi %112, %114 : vector<32x8xi1>
    %cst_50 = arith.constant 0.000000e+00 : f32
    %116 = vector.broadcast %cst_50 : f32 to vector<32x8xf32>
    %117 = arith.select %115, %110, %116 : vector<32x8xi1>, vector<32x8xf32>
    %c31_i32_51 = arith.constant 31 : i32
    %118 = tpu.dynamic_rotate %104 by %c31_i32_51 dim 0 : vector<32x8xf32>, i32 -> vector<32x8xf32>
    %c-1_i32_52 = arith.constant -1 : i32
    %119 = vector.broadcast %c-1_i32_52 : i32 to vector<32x8xi32>
    %120 = arith.cmpi sge, %109, %119 : vector<32x8xi32>
    %c31_i32_53 = arith.constant 31 : i32
    %121 = vector.broadcast %c31_i32_53 : i32 to vector<32x8xi32>
    %122 = arith.cmpi slt, %109, %121 : vector<32x8xi32>
    %123 = arith.andi %120, %122 : vector<32x8xi1>
    %cst_54 = arith.constant 0.000000e+00 : f32
    %124 = vector.broadcast %cst_54 : f32 to vector<32x8xf32>
    %125 = arith.select %123, %118, %124 : vector<32x8xi1>, vector<32x8xf32>
    %126 = tpu.concatenate %117, %104, %125 in 1 : vector<32x8xf32>, vector<32x8xf32>, vector<32x8xf32> -> vector<32x24xf32>
    %127 = arith.truncf %126 : vector<32x24xf32> to vector<32x24xbf16>
    %cst_55 = arith.constant dense<0.000000e+00> : vector<32x8xf32>
    %128 = tpu.matmul %127, %106, %cst_55 {dimension_numbers = #tpu.dot_dimension_numbers<[1], [0], [0], [1], [0, 0, 1, 1], [], []>} : vector<32x24xbf16>, vector<24x8xbf16>, vector<32x8xf32> -> vector<32x8xf32>
    %129 = vector.broadcast %108 : vector<1x8xf32> to vector<32x8xf32>
    %130 = arith.addf %128, %129 : vector<32x8xf32>
    %131 = arith.addf %130, %66 : vector<32x8xf32>
    %132 = arith.negf %131 : vector<32x8xf32>
    %133 = math.exp %132 : vector<32x8xf32>
    %cst_56 = arith.constant 1.000000e+00 : f32
    %134 = vector.broadcast %cst_56 : f32 to vector<32x8xf32>
    %135 = arith.addf %134, %133 : vector<32x8xf32>
    %136 = arith.divf %134, %135 : vector<32x8xf32>
    %137 = arith.mulf %131, %136 : vector<32x8xf32>
    %c2 = arith.constant 2 : index
    %c0_57 = arith.constant 0 : index
    %c0_58 = arith.constant 0 : index
    %138 = vector.load %arg2[%c2, %c0_57, %c0_58] : memref<3x24x8xbf16, #tpu.memory_space<vmem>>, vector<1x24x8xbf16>
    %139 = vector.shape_cast %138 : vector<1x24x8xbf16> to vector<24x8xbf16>
    %c2_59 = arith.constant 2 : index
    %c0_60 = arith.constant 0 : index
    %c0_61 = arith.constant 0 : index
    %140 = vector.load %arg3[%c2_59, %c0_60, %c0_61] : memref<3x1x8xf32, #tpu.memory_space<vmem>>, vector<1x1x8xf32>
    %141 = vector.shape_cast %140 : vector<1x1x8xf32> to vector<1x8xf32>
    %142 = tpu.iota {dimensions = array<i32: 0>} : vector<32x8xi32>
    %c5_i32 = arith.constant 5 : i32
    %143 = tpu.dynamic_rotate %137 by %c5_i32 dim 0 : vector<32x8xf32>, i32 -> vector<32x8xf32>
    %c5_i32_62 = arith.constant 5 : i32
    %144 = vector.broadcast %c5_i32_62 : i32 to vector<32x8xi32>
    %145 = arith.cmpi sge, %142, %144 : vector<32x8xi32>
    %c37_i32 = arith.constant 37 : i32
    %146 = vector.broadcast %c37_i32 : i32 to vector<32x8xi32>
    %147 = arith.cmpi slt, %142, %146 : vector<32x8xi32>
    %148 = arith.andi %145, %147 : vector<32x8xi1>
    %cst_63 = arith.constant 0.000000e+00 : f32
    %149 = vector.broadcast %cst_63 : f32 to vector<32x8xf32>
    %150 = arith.select %148, %143, %149 : vector<32x8xi1>, vector<32x8xf32>
    %c27_i32 = arith.constant 27 : i32
    %151 = tpu.dynamic_rotate %137 by %c27_i32 dim 0 : vector<32x8xf32>, i32 -> vector<32x8xf32>
    %c-5_i32 = arith.constant -5 : i32
    %152 = vector.broadcast %c-5_i32 : i32 to vector<32x8xi32>
    %153 = arith.cmpi sge, %142, %152 : vector<32x8xi32>
    %c27_i32_64 = arith.constant 27 : i32
    %154 = vector.broadcast %c27_i32_64 : i32 to vector<32x8xi32>
    %155 = arith.cmpi slt, %142, %154 : vector<32x8xi32>
    %156 = arith.andi %153, %155 : vector<32x8xi1>
    %cst_65 = arith.constant 0.000000e+00 : f32
    %157 = vector.broadcast %cst_65 : f32 to vector<32x8xf32>
    %158 = arith.select %156, %151, %157 : vector<32x8xi1>, vector<32x8xf32>
    %159 = tpu.concatenate %150, %137, %158 in 1 : vector<32x8xf32>, vector<32x8xf32>, vector<32x8xf32> -> vector<32x24xf32>
    %160 = arith.truncf %159 : vector<32x24xf32> to vector<32x24xbf16>
    %cst_66 = arith.constant dense<0.000000e+00> : vector<32x8xf32>
    %161 = tpu.matmul %160, %139, %cst_66 {dimension_numbers = #tpu.dot_dimension_numbers<[1], [0], [0], [1], [0, 0, 1, 1], [], []>} : vector<32x24xbf16>, vector<24x8xbf16>, vector<32x8xf32> -> vector<32x8xf32>
    %162 = vector.broadcast %141 : vector<1x8xf32> to vector<32x8xf32>
    %163 = arith.addf %161, %162 : vector<32x8xf32>
    %164 = arith.negf %163 : vector<32x8xf32>
    %165 = math.exp %164 : vector<32x8xf32>
    %cst_67 = arith.constant 1.000000e+00 : f32
    %166 = vector.broadcast %cst_67 : f32 to vector<32x8xf32>
    %167 = arith.addf %166, %165 : vector<32x8xf32>
    %168 = arith.divf %166, %167 : vector<32x8xf32>
    %169 = arith.mulf %163, %168 : vector<32x8xf32>
    %c2_68 = arith.constant 2 : index
    %c0_69 = arith.constant 0 : index
    %c0_70 = arith.constant 0 : index
    %170 = vector.load %arg4[%c2_68, %c0_69, %c0_70] : memref<3x24x8xbf16, #tpu.memory_space<vmem>>, vector<1x24x8xbf16>
    %171 = vector.shape_cast %170 : vector<1x24x8xbf16> to vector<24x8xbf16>
    %c2_71 = arith.constant 2 : index
    %c0_72 = arith.constant 0 : index
    %c0_73 = arith.constant 0 : index
    %172 = vector.load %arg5[%c2_71, %c0_72, %c0_73] : memref<3x1x8xf32, #tpu.memory_space<vmem>>, vector<1x1x8xf32>
    %173 = vector.shape_cast %172 : vector<1x1x8xf32> to vector<1x8xf32>
    %174 = tpu.iota {dimensions = array<i32: 0>} : vector<32x8xi32>
    %c1_i32_74 = arith.constant 1 : i32
    %175 = tpu.dynamic_rotate %169 by %c1_i32_74 dim 0 : vector<32x8xf32>, i32 -> vector<32x8xf32>
    %c1_i32_75 = arith.constant 1 : i32
    %176 = vector.broadcast %c1_i32_75 : i32 to vector<32x8xi32>
    %177 = arith.cmpi sge, %174, %176 : vector<32x8xi32>
    %c33_i32_76 = arith.constant 33 : i32
    %178 = vector.broadcast %c33_i32_76 : i32 to vector<32x8xi32>
    %179 = arith.cmpi slt, %174, %178 : vector<32x8xi32>
    %180 = arith.andi %177, %179 : vector<32x8xi1>
    %cst_77 = arith.constant 0.000000e+00 : f32
    %181 = vector.broadcast %cst_77 : f32 to vector<32x8xf32>
    %182 = arith.select %180, %175, %181 : vector<32x8xi1>, vector<32x8xf32>
    %c31_i32_78 = arith.constant 31 : i32
    %183 = tpu.dynamic_rotate %169 by %c31_i32_78 dim 0 : vector<32x8xf32>, i32 -> vector<32x8xf32>
    %c-1_i32_79 = arith.constant -1 : i32
    %184 = vector.broadcast %c-1_i32_79 : i32 to vector<32x8xi32>
    %185 = arith.cmpi sge, %174, %184 : vector<32x8xi32>
    %c31_i32_80 = arith.constant 31 : i32
    %186 = vector.broadcast %c31_i32_80 : i32 to vector<32x8xi32>
    %187 = arith.cmpi slt, %174, %186 : vector<32x8xi32>
    %188 = arith.andi %185, %187 : vector<32x8xi1>
    %cst_81 = arith.constant 0.000000e+00 : f32
    %189 = vector.broadcast %cst_81 : f32 to vector<32x8xf32>
    %190 = arith.select %188, %183, %189 : vector<32x8xi1>, vector<32x8xf32>
    %191 = tpu.concatenate %182, %169, %190 in 1 : vector<32x8xf32>, vector<32x8xf32>, vector<32x8xf32> -> vector<32x24xf32>
    %192 = arith.truncf %191 : vector<32x24xf32> to vector<32x24xbf16>
    %cst_82 = arith.constant dense<0.000000e+00> : vector<32x8xf32>
    %193 = tpu.matmul %192, %171, %cst_82 {dimension_numbers = #tpu.dot_dimension_numbers<[1], [0], [0], [1], [0, 0, 1, 1], [], []>} : vector<32x24xbf16>, vector<24x8xbf16>, vector<32x8xf32> -> vector<32x8xf32>
    %194 = vector.broadcast %173 : vector<1x8xf32> to vector<32x8xf32>
    %195 = arith.addf %193, %194 : vector<32x8xf32>
    %196 = arith.addf %195, %131 : vector<32x8xf32>
    %197 = arith.negf %196 : vector<32x8xf32>
    %198 = math.exp %197 : vector<32x8xf32>
    %cst_83 = arith.constant 1.000000e+00 : f32
    %199 = vector.broadcast %cst_83 : f32 to vector<32x8xf32>
    %200 = arith.addf %199, %198 : vector<32x8xf32>
    %201 = arith.divf %199, %200 : vector<32x8xf32>
    %202 = arith.mulf %196, %201 : vector<32x8xf32>
    %c0_84 = arith.constant 0 : index
    %c0_85 = arith.constant 0 : index
    %203 = vector.load %arg6[%c0_84, %c0_85] : memref<56x1xbf16, #tpu.memory_space<vmem>>, vector<56x1xbf16>
    %c0_86 = arith.constant 0 : index
    %c0_87 = arith.constant 0 : index
    %204 = vector.load %arg7[%c0_86, %c0_87] : memref<1x1xf32, #tpu.memory_space<vmem>>, vector<1x1xf32>
    %205 = tpu.iota {dimensions = array<i32: 0>} : vector<32x8xi32>
    %c3_i32_88 = arith.constant 3 : i32
    %206 = tpu.dynamic_rotate %202 by %c3_i32_88 dim 0 : vector<32x8xf32>, i32 -> vector<32x8xf32>
    %c3_i32_89 = arith.constant 3 : i32
    %207 = vector.broadcast %c3_i32_89 : i32 to vector<32x8xi32>
    %208 = arith.cmpi sge, %205, %207 : vector<32x8xi32>
    %c35_i32_90 = arith.constant 35 : i32
    %209 = vector.broadcast %c35_i32_90 : i32 to vector<32x8xi32>
    %210 = arith.cmpi slt, %205, %209 : vector<32x8xi32>
    %211 = arith.andi %208, %210 : vector<32x8xi1>
    %cst_91 = arith.constant 0.000000e+00 : f32
    %212 = vector.broadcast %cst_91 : f32 to vector<32x8xf32>
    %213 = arith.select %211, %206, %212 : vector<32x8xi1>, vector<32x8xf32>
    %c2_i32 = arith.constant 2 : i32
    %214 = tpu.dynamic_rotate %202 by %c2_i32 dim 0 : vector<32x8xf32>, i32 -> vector<32x8xf32>
    %c2_i32_92 = arith.constant 2 : i32
    %215 = vector.broadcast %c2_i32_92 : i32 to vector<32x8xi32>
    %216 = arith.cmpi sge, %205, %215 : vector<32x8xi32>
    %c34_i32 = arith.constant 34 : i32
    %217 = vector.broadcast %c34_i32 : i32 to vector<32x8xi32>
    %218 = arith.cmpi slt, %205, %217 : vector<32x8xi32>
    %219 = arith.andi %216, %218 : vector<32x8xi1>
    %cst_93 = arith.constant 0.000000e+00 : f32
    %220 = vector.broadcast %cst_93 : f32 to vector<32x8xf32>
    %221 = arith.select %219, %214, %220 : vector<32x8xi1>, vector<32x8xf32>
    %c1_i32_94 = arith.constant 1 : i32
    %222 = tpu.dynamic_rotate %202 by %c1_i32_94 dim 0 : vector<32x8xf32>, i32 -> vector<32x8xf32>
    %c1_i32_95 = arith.constant 1 : i32
    %223 = vector.broadcast %c1_i32_95 : i32 to vector<32x8xi32>
    %224 = arith.cmpi sge, %205, %223 : vector<32x8xi32>
    %c33_i32_96 = arith.constant 33 : i32
    %225 = vector.broadcast %c33_i32_96 : i32 to vector<32x8xi32>
    %226 = arith.cmpi slt, %205, %225 : vector<32x8xi32>
    %227 = arith.andi %224, %226 : vector<32x8xi1>
    %cst_97 = arith.constant 0.000000e+00 : f32
    %228 = vector.broadcast %cst_97 : f32 to vector<32x8xf32>
    %229 = arith.select %227, %222, %228 : vector<32x8xi1>, vector<32x8xf32>
    %c31_i32_98 = arith.constant 31 : i32
    %230 = tpu.dynamic_rotate %202 by %c31_i32_98 dim 0 : vector<32x8xf32>, i32 -> vector<32x8xf32>
    %c-1_i32_99 = arith.constant -1 : i32
    %231 = vector.broadcast %c-1_i32_99 : i32 to vector<32x8xi32>
    %232 = arith.cmpi sge, %205, %231 : vector<32x8xi32>
    %c31_i32_100 = arith.constant 31 : i32
    %233 = vector.broadcast %c31_i32_100 : i32 to vector<32x8xi32>
    %234 = arith.cmpi slt, %205, %233 : vector<32x8xi32>
    %235 = arith.andi %232, %234 : vector<32x8xi1>
    %cst_101 = arith.constant 0.000000e+00 : f32
    %236 = vector.broadcast %cst_101 : f32 to vector<32x8xf32>
    %237 = arith.select %235, %230, %236 : vector<32x8xi1>, vector<32x8xf32>
    %c30_i32 = arith.constant 30 : i32
    %238 = tpu.dynamic_rotate %202 by %c30_i32 dim 0 : vector<32x8xf32>, i32 -> vector<32x8xf32>
    %c-2_i32 = arith.constant -2 : i32
    %239 = vector.broadcast %c-2_i32 : i32 to vector<32x8xi32>
    %240 = arith.cmpi sge, %205, %239 : vector<32x8xi32>
    %c30_i32_102 = arith.constant 30 : i32
    %241 = vector.broadcast %c30_i32_102 : i32 to vector<32x8xi32>
    %242 = arith.cmpi slt, %205, %241 : vector<32x8xi32>
    %243 = arith.andi %240, %242 : vector<32x8xi1>
    %cst_103 = arith.constant 0.000000e+00 : f32
    %244 = vector.broadcast %cst_103 : f32 to vector<32x8xf32>
    %245 = arith.select %243, %238, %244 : vector<32x8xi1>, vector<32x8xf32>
    %c29_i32_104 = arith.constant 29 : i32
    %246 = tpu.dynamic_rotate %202 by %c29_i32_104 dim 0 : vector<32x8xf32>, i32 -> vector<32x8xf32>
    %c-3_i32_105 = arith.constant -3 : i32
    %247 = vector.broadcast %c-3_i32_105 : i32 to vector<32x8xi32>
    %248 = arith.cmpi sge, %205, %247 : vector<32x8xi32>
    %c29_i32_106 = arith.constant 29 : i32
    %249 = vector.broadcast %c29_i32_106 : i32 to vector<32x8xi32>
    %250 = arith.cmpi slt, %205, %249 : vector<32x8xi32>
    %251 = arith.andi %248, %250 : vector<32x8xi1>
    %cst_107 = arith.constant 0.000000e+00 : f32
    %252 = vector.broadcast %cst_107 : f32 to vector<32x8xf32>
    %253 = arith.select %251, %246, %252 : vector<32x8xi1>, vector<32x8xf32>
    %254 = tpu.concatenate %213, %221, %229, %202, %237, %245, %253 in 1 : vector<32x8xf32>, vector<32x8xf32>, vector<32x8xf32>, vector<32x8xf32>, vector<32x8xf32>, vector<32x8xf32>, vector<32x8xf32> -> vector<32x56xf32>
    %255 = arith.truncf %254 : vector<32x56xf32> to vector<32x56xbf16>
    %cst_108 = arith.constant dense<0.000000e+00> : vector<32x1xf32>
    %256 = tpu.matmul %255, %203, %cst_108 {dimension_numbers = #tpu.dot_dimension_numbers<[1], [0], [0], [1], [0, 0, 1, 1], [], []>} : vector<32x56xbf16>, vector<56x1xbf16>, vector<32x1xf32> -> vector<32x1xf32>
    %257 = vector.broadcast %204 : vector<1x1xf32> to vector<32x1xf32>
    %258 = arith.addf %256, %257 : vector<32x1xf32>
    %259 = math.tanh %258 : vector<32x1xf32>
    %c0_109 = arith.constant 0 : index
    %c0_110 = arith.constant 0 : index
    %c0_111 = arith.constant 0 : index
    %260 = vector.load %arg8[%c0_109, %c0_110, %c0_111] : memref<1x32x1xf32, #tpu.memory_space<vmem>>, vector<1x32x1xf32>
    %261 = vector.shape_cast %260 : vector<1x32x1xf32> to vector<32x1xf32>
    %262 = vector.shape_cast %259 : vector<32x1xf32> to vector<1x32x1xf32>
    tpu.vector_store %arg8[%c0_109, %c0_110, %c0_111], %262 {strides = array<i32>} : memref<1x32x1xf32, #tpu.memory_space<vmem>>, vector<1x32x1xf32>,
    return
  }
  func.func @transform_0(%arg0: i32) -> (i32, i32, i32) {
    %c0_i32 = arith.constant 0 : i32
    %c0_i32_0 = arith.constant 0 : i32
    %c0_i32_1 = arith.constant 0 : i32
    return %arg0, %c0_i32, %c0_i32_0 : i32, i32, i32
  }
  func.func @transform_1(%arg0: i32) -> (i32, i32, i32) {
    %c0_i32 = arith.constant 0 : i32
    %c0_i32_0 = arith.constant 0 : i32
    %c0_i32_1 = arith.constant 0 : i32
    %c0_i32_2 = arith.constant 0 : i32
    return %c0_i32, %c0_i32_0, %c0_i32_1 : i32, i32, i32
  }
  func.func @transform_2(%arg0: i32) -> (i32, i32, i32) {
    %c0_i32 = arith.constant 0 : i32
    %c0_i32_0 = arith.constant 0 : i32
    %c0_i32_1 = arith.constant 0 : i32
    %c0_i32_2 = arith.constant 0 : i32
    return %c0_i32, %c0_i32_0, %c0_i32_1 : i32, i32, i32
  }
  func.func @transform_3(%arg0: i32) -> (i32, i32, i32) {
    %c0_i32 = arith.constant 0 : i32
    %c0_i32_0 = arith.constant 0 : i32
    %c0_i32_1 = arith.constant 0 : i32
    %c0_i32_2 = arith.constant 0 : i32
    return %c0_i32, %c0_i32_0, %c0_i32_1 : i32, i32, i32
  }
  func.func @transform_4(%arg0: i32) -> (i32, i32, i32) {
    %c0_i32 = arith.constant 0 : i32
    %c0_i32_0 = arith.constant 0 : i32
    %c0_i32_1 = arith.constant 0 : i32
    %c0_i32_2 = arith.constant 0 : i32
    return %c0_i32, %c0_i32_0, %c0_i32_1 : i32, i32, i32
  }
  func.func @transform_5(%arg0: i32) -> (i32, i32) {
    %c0_i32 = arith.constant 0 : i32
    %c0_i32_0 = arith.constant 0 : i32
    %c0_i32_1 = arith.constant 0 : i32
    return %c0_i32, %c0_i32_0 : i32, i32
  }
  func.func @transform_6(%arg0: i32) -> (i32, i32) {
    %c0_i32 = arith.constant 0 : i32
    %c0_i32_0 = arith.constant 0 : i32
    %c0_i32_1 = arith.constant 0 : i32
    return %c0_i32, %c0_i32_0 : i32, i32
  }
  func.func @transform_7(%arg0: i32) -> (i32, i32, i32) {
    %c0_i32 = arith.constant 0 : i32
    %c0_i32_0 = arith.constant 0 : i32
    %c0_i32_1 = arith.constant 0 : i32
    return %arg0, %c0_i32, %c0_i32_0 : i32, i32, i32
  }
}

</mosaic_0001>

<llo_original>
// kernel: fwd.7
$region0: #{fwd.7}
  #allocation0 [shape = 'u32[]', space=smem, size = 0x4, offset = 0x4, fixed_abs, tag = 'smem constant byte address 0x4 - core index']
  #allocation1 [shape = 'u32[144,128]{1,0:T(1,128)}', space=vmem, size = 0x12000, scoped, tag = 'internal scratch']
  %s0 = inlined_call_operand.vmem [shape: f32[2,8,48], index: 0, kind: input, shape index: {}]
  %s1 = inlined_call_operand.vmem [shape: f32[1,48], index: 1, kind: input, shape index: {}]
  %s2 = inlined_call_operand.vmem [shape: f32[1,48], index: 2, kind: input, shape index: {}]
  %s3 = inlined_call_operand.vmem [shape: bf16[336,32], index: 3, kind: input, shape index: {}]
  %s4 = inlined_call_operand.vmem [shape: f32[1,32], index: 4, kind: input, shape index: {}]
  %s5 = inlined_call_operand.vmem [shape: bf16[96,32], index: 5, kind: input, shape index: {}]
  %s6 = inlined_call_operand.vmem [shape: f32[1,32], index: 6, kind: input, shape index: {}]
  %s7 = inlined_call_operand.vmem [shape: f32[2,8,32], index: 7, kind: output, shape index: {}]
  %s8 = sld [smem:[#allocation0]]
  $region61: #{fwd.7} parent=0
    _
  %s10 = ssub.s32 1, %s8
  %s11 = scalar_select 0, %s10, %s8
  loop: start=0, step=1, limit=4
  $region2: #{fwd.7} parent=0 // loop_pre_header
    _
  $region3: #{fwd.7} parent=0 // loop_header
    %s13 = sphi 0, %s17
    %p14 = scmp.ge.s32.totalorder %s13, 4
    %s23 = sphi 0, %s25
    %s26 = sphi 0, %s23
    %s27 = sphi 0, %s26
    %s43 = sphi 0, %s27
    %s47 = sphi 0, %s47
    %s49 = sphi 0, %s47
    %s50 = sphi 0, %s49
    %s64 = sphi 0, %s50
    %s68 = sphi 0, %s68
    %s70 = sphi 0, %s68
    %s71 = sphi 0, %s70
    %s85 = sphi 0, %s71
    %s89 = sphi 0, %s89
    %s91 = sphi 0, %s89
    %s92 = sphi 0, %s91
    %s106 = sphi 0, %s92
    %s110 = sphi 0, %s110
    %s112 = sphi 0, %s110
    %s113 = sphi 0, %s112
    %s127 = sphi 0, %s113
    %s131 = sphi 0, %s131
    %s133 = sphi 0, %s131
    %s134 = sphi 0, %s133
    %s148 = sphi 0, %s134
    %s152 = sphi 0, %s152
    %s154 = sphi 0, %s152
    %s155 = sphi 0, %s154
    %s169 = sphi 0, %s155
    %s175 = sphi 0, %s177
    %s178 = sphi 0, %s175
    %s179 = sphi 0, %s178
    %s195 = sphi 0, %s179
  $region4: #{fwd.7} parent=0 // loop_header_branch
    %16 = sbr.rel (%p14) target = $region8
  $region5: #{fwd.7} parent=0 // loop_body
    %s18 = ssub.s32 %s13, 1
    %s19 = ssub.s32 %s13, 2
    %s20 = sadd.s32 %s13, 1
    %s21 = ssub.s32 %s13, %s20
    %p22 = scmp.eq.s32.totalorder %s21, 0
    %s24 = sadd.s32 %s23, 1
    %s25 = scalar_select %p22, %s23, %s24
    %p28 = pneg %p22
    %p29 = scmp.eq.s32.totalorder %s13, 1
    %p30 = por %p28, %p29
    %p31 = scmp.ne.s32.totalorder %s23, %s26
    %p32 = scmp.eq.s32.totalorder %s13, 0
    %p33 = por %p31, %p32
    %p34 = scmp.ne.s32.totalorder %s23, %s26
    %p35 = scmp.eq.s32.totalorder %s18, 1
    %p36 = por %p34, %p35
    %p37 = scmp.ne.s32.totalorder %s26, %s27
    %p38 = scmp.eq.s32.totalorder %s18, 0
    %p39 = por %p37, %p38
    %p40 = scmp.ne.s32.totalorder %s26, %s27
    %p41 = scmp.eq.s32.totalorder %s19, 1
    %p42 = por %p40, %p41
    %p44 = scmp.ne.s32.totalorder %s27, %s43
    %p45 = scmp.eq.s32.totalorder %s19, 0
    %p46 = por %p44, %p45
    %s48 = sadd.s32 %s47, 1
    %p51 = scmp.eq.s32.totalorder %s13, 1
    %p52 = scmp.ne.s32.totalorder %s47, %s49
    %p53 = scmp.eq.s32.totalorder %s13, 0
    %p54 = por %p52, %p53
    %p55 = scmp.ne.s32.totalorder %s47, %s49
    %p56 = scmp.eq.s32.totalorder %s18, 1
    %p57 = por %p55, %p56
    %p58 = scmp.ne.s32.totalorder %s49, %s50
    %p59 = scmp.eq.s32.totalorder %s18, 0
    %p60 = por %p58, %p59
    %p61 = scmp.ne.s32.totalorder %s49, %s50
    %p62 = scmp.eq.s32.totalorder %s19, 1
    %p63 = por %p61, %p62
    %p65 = scmp.ne.s32.totalorder %s50, %s64
    %p66 = scmp.eq.s32.totalorder %s19, 0
    %p67 = por %p65, %p66
    %s69 = sadd.s32 %s68, 1
    %p72 = scmp.eq.s32.totalorder %s13, 1
    %p73 = scmp.ne.s32.totalorder %s68, %s70
    %p74 = scmp.eq.s32.totalorder %s13, 0
    %p75 = por %p73, %p74
    %p76 = scmp.ne.s32.totalorder %s68, %s70
    %p77 = scmp.eq.s32.totalorder %s18, 1
    %p78 = por %p76, %p77
    %p79 = scmp.ne.s32.totalorder %s70, %s71
    %p80 = scmp.eq.s32.totalorder %s18, 0
    %p81 = por %p79, %p80
    %p82 = scmp.ne.s32.totalorder %s70, %s71
    %p83 = scmp.eq.s32.totalorder %s19, 1
    %p84 = por %p82, %p83
    %p86 = scmp.ne.s32.totalorder %s71, %s85
    %p87 = scmp.eq.s32.totalorder %s19, 0
    %p88 = por %p86, %p87
    %s90 = sadd.s32 %s89, 1
    %p93 = scmp.eq.s32.totalorder %s13, 1
    %p94 = scmp.ne.s32.totalorder %s89, %s91
    %p95 = scmp.eq.s32.totalorder %s13, 0
    %p96 = por %p94, %p95
    %p97 = scmp.ne.s32.totalorder %s89, %s91
    %p98 = scmp.eq.s32.totalorder %s18, 1
    %p99 = por %p97, %p98
    %p100 = scmp.ne.s32.totalorder %s91, %s92
    %p101 = scmp.eq.s32.totalorder %s18, 0
    %p102 = por %p100, %p101
    %p103 = scmp.ne.s32.totalorder %s91, %s92
    %p104 = scmp.eq.s32.totalorder %s19, 1
    %p105 = por %p103, %p104
    %p107 = scmp.ne.s32.totalorder %s92, %s106
    %p108 = scmp.eq.s32.totalorder %s19, 0
    %p109 = por %p107, %p108
    %s111 = sadd.s32 %s110, 1
    %p114 = scmp.eq.s32.totalorder %s13, 1
    %p115 = scmp.ne.s32.totalorder %s110, %s112
    %p116 = scmp.eq.s32.totalorder %s13, 0
    %p117 = por %p115, %p116
    %p118 = scmp.ne.s32.totalorder %s110, %s112
    %p119 = scmp.eq.s32.totalorder %s18, 1
    %p120 = por %p118, %p119
    %p121 = scmp.ne.s32.totalorder %s112, %s113
    %p122 = scmp.eq.s32.totalorder %s18, 0
    %p123 = por %p121, %p122
    %p124 = scmp.ne.s32.totalorder %s112, %s113
    %p125 = scmp.eq.s32.totalorder %s19, 1
    %p126 = por %p124, %p125
    %p128 = scmp.ne.s32.totalorder %s113, %s127
    %p129 = scmp.eq.s32.totalorder %s19, 0
    %p130 = por %p128, %p129
    %s132 = sadd.s32 %s131, 1
    %p135 = scmp.eq.s32.totalorder %s13, 1
    %p136 = scmp.ne.s32.totalorder %s131, %s133
    %p137 = scmp.eq.s32.totalorder %s13, 0
    %p138 = por %p136, %p137
    %p139 = scmp.ne.s32.totalorder %s131, %s133
    %p140 = scmp.eq.s32.totalorder %s18, 1
    %p141 = por %p139, %p140
    %p142 = scmp.ne.s32.totalorder %s133, %s134
    %p143 = scmp.eq.s32.totalorder %s18, 0
    %p144 = por %p142, %p143
    %p145 = scmp.ne.s32.totalorder %s133, %s134
    %p146 = scmp.eq.s32.totalorder %s19, 1
    %p147 = por %p145, %p146
    %p149 = scmp.ne.s32.totalorder %s134, %s148
    %p150 = scmp.eq.s32.totalorder %s19, 0
    %p151 = por %p149, %p150
    %s153 = sadd.s32 %s152, 1
    %p156 = scmp.eq.s32.totalorder %s13, 1
    %p157 = scmp.ne.s32.totalorder %s152, %s154
    %p158 = scmp.eq.s32.totalorder %s13, 0
    %p159 = por %p157, %p158
    %p160 = scmp.ne.s32.totalorder %s152, %s154
    %p161 = scmp.eq.s32.totalorder %s18, 1
    %p162 = por %p160, %p161
    %p163 = scmp.ne.s32.totalorder %s154, %s155
    %p164 = scmp.eq.s32.totalorder %s18, 0
    %p165 = por %p163, %p164
    %p166 = scmp.ne.s32.totalorder %s154, %s155
    %p167 = scmp.eq.s32.totalorder %s19, 1
    %p168 = por %p166, %p167
    %p170 = scmp.ne.s32.totalorder %s155, %s169
    %p171 = scmp.eq.s32.totalorder %s19, 0
    %p172 = por %p170, %p171
    %s173 = ssub.s32 %s13, %s20
    %p174 = scmp.eq.s32.totalorder %s173, 0
    %s176 = sadd.s32 %s175, 1
    %s177 = scalar_select %p174, %s175, %s176
    %p180 = pneg %p174
    %p181 = scmp.eq.s32.totalorder %s13, 1
    %p182 = por %p180, %p181
    %p183 = scmp.ne.s32.totalorder %s175, %s178
    %p184 = scmp.eq.s32.totalorder %s13, 0
    %p185 = por %p183, %p184
    %p186 = scmp.ne.s32.totalorder %s175, %s178
    %p187 = scmp.eq.s32.totalorder %s18, 1
    %p188 = por %p186, %p187
    %p189 = scmp.ne.s32.totalorder %s178, %s179
    %p190 = scmp.eq.s32.totalorder %s18, 0
    %p191 = por %p189, %p190
    %p192 = scmp.ne.s32.totalorder %s178, %s179
    %p193 = scmp.eq.s32.totalorder %s19, 1
    %p194 = por %p192, %p193
    %p196 = scmp.ne.s32.totalorder %s179, %s195
    %p197 = scmp.eq.s32.totalorder %s19, 0
    %p198 = por %p196, %p197
    %p199 = scmp.le.s32.totalorder 1, %s13
    %p200 = scmp.lt.s32.totalorder %s13, 3
    %p201 = pnand %p199, %p200
    %p202 = pneg %p201
    // Predicated region
    $region9: #{fwd.7} parent=5 // pred_check
      _
    $region10: #{fwd.7} parent=5 // pred_check_branch
      %204 = sbr.rel (%p201) target = $region12
    $region11: #{fwd.7} parent=5 // pred_region
      %s205 = ssub.s32 %s13, 1
      // Predicated region
      $region13: #{fwd.7} parent=11 // pred_check
        %p206 = pneg %p60
      $region14: #{fwd.7} parent=11 // pred_check_branch
        %208 = sbr.rel (%p206) target = $region16
      $region15: #{fwd.7} parent=11 // pred_region
        _
      $region16: #{fwd.7} parent=11 // pred_fallthru
        _
      // Predicated region
      $region17: #{fwd.7} parent=11 // pred_check
        %p209 = pneg %p81
      $region18: #{fwd.7} parent=11 // pred_check_branch
        %211 = sbr.rel (%p209) target = $region20
      $region19: #{fwd.7} parent=11 // pred_region
        _
      $region20: #{fwd.7} parent=11 // pred_fallthru
        _
      // Predicated region
      $region21: #{fwd.7} parent=11 // pred_check
        %p212 = pneg %p102
      $region22: #{fwd.7} parent=11 // pred_check_branch
        %214 = sbr.rel (%p212) target = $region24
      $region23: #{fwd.7} parent=11 // pred_region
        _
      $region24: #{fwd.7} parent=11 // pred_fallthru
        _
      // Predicated region
      $region25: #{fwd.7} parent=11 // pred_check
        %p215 = pneg %p123
      $region26: #{fwd.7} parent=11 // pred_check_branch
        %217 = sbr.rel (%p215) target = $region28
      $region27: #{fwd.7} parent=11 // pred_region
        _
      $region28: #{fwd.7} parent=11 // pred_fallthru
        _
      // Predicated region
      $region29: #{fwd.7} parent=11 // pred_check
        %p218 = pneg %p144
      $region30: #{fwd.7} parent=11 // pred_check_branch
        %220 = sbr.rel (%p218) target = $region32
      $region31: #{fwd.7} parent=11 // pred_region
        _
      $region32: #{fwd.7} parent=11 // pred_fallthru
        _
      // Predicated region
      $region33: #{fwd.7} parent=11 // pred_check
        %p221 = pneg %p165
      $region34: #{fwd.7} parent=11 // pred_check_branch
        %223 = sbr.rel (%p221) target = $region36
      $region35: #{fwd.7} parent=11 // pred_region
        _
      $region36: #{fwd.7} parent=11 // pred_fallthru
        _
    $region12: #{fwd.7} parent=5 // pred_fallthru
      _
    %p224 = scmp.lt.s32.totalorder %s13, 2
    // Predicated region
    $region37: #{fwd.7} parent=5 // pred_check
      %p225 = pneg %p224
    $region38: #{fwd.7} parent=5 // pred_check_branch
      %227 = sbr.rel (%p225) target = $region40
    $region39: #{fwd.7} parent=5 // pred_region
      // Predicated region
      $region41: #{fwd.7} parent=39 // pred_check
        %p228 = pneg %p33
      $region42: #{fwd.7} parent=39 // pred_check_branch
        %230 = sbr.rel (%p228) target = $region44
      $region43: #{fwd.7} parent=39 // pred_region
        %p231 = scmp.lt.s32.totalorder %s13, 1
        %s232 = scalar_select %p231, %s13, 1
        %s233 = smul.addr %s232, 8
        %s234 = scalar_lea.vmem %s0, %s233
      $region44: #{fwd.7} parent=39 // pred_fallthru
        _
    $region40: #{fwd.7} parent=5 // pred_fallthru
      _
    %p235 = scmp.le.s32.totalorder 1, %s13
    %p236 = scmp.lt.s32.totalorder %s13, 3
    %p237 = pnand %p235, %p236
    %p238 = pneg %p237
    // Predicated region
    $region45: #{fwd.7} parent=5 // pred_check
      _
    $region46: #{fwd.7} parent=5 // pred_check_branch
      %240 = sbr.rel (%p237) target = $region48
    $region47: #{fwd.7} parent=5 // pred_region
      %s241 = ssub.s32 %s13, 1
      %p242 = scmp.lt.s32.totalorder %s18, 1
      %s243 = scalar_select %p242, %s18, 1
      %s244 = smul.addr %s243, 8
      %s245 = scalar_lea.vmem %s0, %s244
      %p246 = pneg %p39
      %p247 = pneg %p36
      %p248 = pneg %p60
      %p249 = pneg %p57
      %p250 = pneg %p81
      %p251 = pneg %p78
      %p252 = pneg %p102
      %p253 = pneg %p99
      %p254 = pneg %p123
      %p255 = pneg %p120
      %p256 = pneg %p144
      %p257 = pneg %p141
      %p258 = pneg %p165
      %p259 = pneg %p162
      %p260 = pneg %p191
      %p261 = pneg %p188
      %p262 = scmp.lt.s32.totalorder %s18, 1
      %s263 = scalar_select %p262, %s18, 1
      %s264 = smul.addr %s263, 8
      %s265 = scalar_lea.vmem %s7, %s264
      %p266 = scmp.lt.s32.totalorder %s18, 1
      %s267 = scalar_select %p266, %s18, 1
      %s268 = smul.addr %s267, 8
      %s269 = scalar_lea.vmem %s0, %s268
      %p270 = scmp.lt.s32.totalorder %s18, 1
      %s271 = scalar_select %p270, %s18, 1
      %s272 = smul.addr %s271, 8
      %s273 = scalar_lea.vmem %s7, %s272
      %v275 = vld [vmem:[%s269] sm:$0xff]
      %v276 = vld [vmem:[%s1] sm:$0x1]
      %v277 = vld [vmem:[%s2] sm:$0x1]
      %vm278 = vcmask 392192
      %v279 = vsel %vm278, %v275, 0.0
      %280 = vadd.xlane.f32.xlu0 %v279
      %v281 = vpop.xlane.xlu0 %280
      %v282 = vrcp.pop 48.0
      %v283 = vmul.f32 %v281, %v282
      %v284 = vsub.f32 %v275, %v283
      %v285 = vmul.f32 %v284, %v284
      %v286 = vsel %vm278, %v285, 0.0
      %287 = vadd.xlane.f32.xlu0 %v286
      %v288 = vpop.xlane.xlu0 %287
      %v289 = vmul.f32 %v288, %v282
      %v290 = vadd.f32 %v289, 1e-06
      %v291 = vrsqrt.pop %v290
      %v292 = vmul.f32 %v284, %v291
      %v294 = vlaneseq
      %v295 = vshrl.u32 %v294, 7
      %v296 = vsub.s32 0, %v295
      %v297 = vrot.slane %v276, %v296
      %v299 = vmul.f32 %v292, %v297
      %v301 = vlaneseq
      %v302 = vshrl.u32 %v301, 7
      %v303 = vsub.s32 0, %v302
      %v304 = vrot.slane %v277, %v303
      %v306 = vadd.f32 %v299, %v304
      %v307 = vld [vmem:[%s3] sm:$0xf]
      %v308 = vld [vmem:[%s3 + $0x4] sm:$0xf]
      %v309 = vld [vmem:[%s3 + $0x8] sm:$0xf]
      %v310 = vld [vmem:[%s3 + $0xc] sm:$0xf]
      %v311 = vld [vmem:[%s3 + $0x10] sm:$0xf]
      %v312 = vld [vmem:[%s3 + $0x14] sm:$0xf]
      %v313 = vld [vmem:[%s3 + $0x18] sm:$0xf]
      %v314 = vld [vmem:[%s3 + $0x1c] sm:$0xf]
      %v315 = vld [vmem:[%s3 + $0x20] sm:$0xf]
      %v316 = vld [vmem:[%s3 + $0x24] sm:$0xf]
      %v317 = vld [vmem:[%s3 + $0x28] sm:$0xf]
      %v318 = vld [vmem:[%s3 + $0x2c] sm:$0xf]
      %v319 = vld [vmem:[%s3 + $0x30] sm:$0xf]
      %v320 = vld [vmem:[%s3 + $0x34] sm:$0xf]
      %v321 = vld [vmem:[%s3 + $0x38] sm:$0xf]
      %v322 = vld [vmem:[%s3 + $0x3c] sm:$0xf]
      %v323 = vld [vmem:[%s3 + $0x40] sm:$0xf]
      %v324 = vld [vmem:[%s3 + $0x44] sm:$0xf]
      %v325 = vld [vmem:[%s3 + $0x48] sm:$0xf]
      %v326 = vld [vmem:[%s3 + $0x4c] sm:$0xf]
      %v327 = vld [vmem:[%s3 + $0x50] sm:$0xf]
      %v328 = vld [vmem:[%s3 + $0x54] sm:$0xf]
      %v329 = vld [vmem:[%s3 + $0x58] sm:$0xf]
      %v330 = vld [vmem:[%s3 + $0x5c] sm:$0xf]
      %v331 = vld [vmem:[%s3 + $0x60] sm:$0xf]
      %v332 = vld [vmem:[%s3 + $0x64] sm:$0xf]
      %v333 = vld [vmem:[%s3 + $0x68] sm:$0xf]
      %v334 = vld [vmem:[%s3 + $0x6c] sm:$0xf]
      %v335 = vld [vmem:[%s3 + $0x70] sm:$0xf]
      %v336 = vld [vmem:[%s3 + $0x74] sm:$0xf]
      %v337 = vld [vmem:[%s3 + $0x78] sm:$0xf]
      %v338 = vld [vmem:[%s3 + $0x7c] sm:$0xf]
      %v339 = vld [vmem:[%s3 + $0x80] sm:$0xf]
      %v340 = vld [vmem:[%s3 + $0x84] sm:$0xf]
      %v341 = vld [vmem:[%s3 + $0x88] sm:$0xf]
      %v342 = vld [vmem:[%s3 + $0x8c] sm:$0xf]
      %v343 = vld [vmem:[%s3 + $0x90] sm:$0xf]
      %v344 = vld [vmem:[%s3 + $0x94] sm:$0xf]
      %v345 = vld [vmem:[%s3 + $0x98] sm:$0xf]
      %v346 = vld [vmem:[%s3 + $0x9c] sm:$0xf]
      %v347 = vld [vmem:[%s3 + $0xa0] sm:$0xf]
      %v348 = vld [vmem:[%s3 + $0xa4] sm:$0xf]
      %v349 = vld [vmem:[%s4] sm:$0x1]
      %v350 = vlaneseq
      %v351 = vshrl.u32 %v350, 7
      %v352 = vrot.slane %v306, 5
      %vm353 = vcmp.ge.s32.totalorder %v351, 3
      %vm354 = vcmp.lt.s32.totalorder %v351, 11
      %vm355 = vmand %vm353, %vm354
      %v356 = vsel %vm355, %v352, 0.0
      %v357 = vrot.slane %v306, 6
      %vm358 = vcmp.ge.s32.totalorder %v351, 2
      %vm359 = vcmp.lt.s32.totalorder %v351, 10
      %vm360 = vmand %vm358, %vm359
      %v361 = vsel %vm360, %v357, 0.0
      %v362 = vrot.slane %v306, 7
      %vm363 = vcmp.ge.s32.totalorder %v351, 1
      %vm364 = vcmp.lt.s32.totalorder %v351, 9
      %vm365 = vmand %vm363, %vm364
      %v366 = vsel %vm365, %v362, 0.0
      %v367 = vrot.slane %v306, 1
      %vm368 = vcmp.ge.s32.totalorder %v351, 4294967295
      %vm369 = vcmp.lt.s32.totalorder %v351, 7
      %vm370 = vmand %vm368, %vm369
      %v371 = vsel %vm370, %v367, 0.0
      %v372 = vrot.slane %v306, 2
      %vm373 = vcmp.ge.s32.totalorder %v351, 4294967294
      %vm374 = vcmp.lt.s32.totalorder %v351, 6
      %vm375 = vmand %vm373, %vm374
      %v376 = vsel %vm375, %v372, 0.0
      %v377 = vrot.slane %v306, 3
      %vm378 = vcmp.ge.s32.totalorder %v351, 4294967293
      %vm379 = vcmp.lt.s32.totalorder %v351, 5
      %vm380 = vmand %vm378, %vm379
      %v381 = vsel %vm380, %v377, 0.0
      %383 = vrot.lane.b32.xlu0 %v361, 48
      %v384 = vpop.permute.xlu0 %383
      %387 = vrot.lane.b32.xlu0 %v366, 96
      %v388 = vpop.permute.xlu0 %387
      %391 = vrot.lane.b32.xlu0 %v306, 16
      %v392 = vpop.permute.xlu0 %391
      %395 = vrot.lane.b32.xlu0 %v371, 64
      %v396 = vpop.permute.xlu0 %395
      %399 = vrot.lane.b32.xlu0 %v376, 112
      %v400 = vpop.permute.xlu0 %399
      %403 = vrot.lane.b32.xlu0 %v381, 32
      %v404 = vpop.permute.xlu0 %403
      %v406 = vsel %vm278, %v356, %v384
      %vm407 = vcmask 785408
      %v408 = vsel %vm407, %v406, %v388
      %vm409 = vcmask 130048
      %v410 = vsel %vm409, %v388, %v392
      %vm411 = vcmask 523264
      %v412 = vsel %vm411, %v410, %v396
      %vm413 = vcmask 916480
      %v414 = vsel %vm413, %v412, %v400
      %vm415 = vcmask 261120
      %v416 = vsel %vm415, %v400, %v404
      %v417 = vpack.c.bf16 %v408, %v408
      %v418 = vpack.c.bf16 %v414, %v414
      %v419 = vpack.c.bf16 %v416, %v416
      %v421 = vlaneseq
      %v422 = vshrl.u32 %v421, 7
      %v423 = vsub.s32 0, %v422
      %v424 = vrot.slane %v349, %v423
      %v468 = vunpack.c.l.b16 %v307
      %v469 = vunpack.c.l.b16 %v308
      %v470 = vunpack.c.l.b16 %v309
      %v471 = vunpack.c.l.b16 %v310
      %v472 = vunpack.c.l.b16 %v311
      %v473 = vunpack.c.l.b16 %v312
      %v474 = vunpack.c.l.b16 %v313
      %v475 = vunpack.c.l.b16 %v314
      %v476 = vunpack.c.l.b16 %v315
      %v477 = vunpack.c.l.b16 %v316
      %v478 = vunpack.c.l.b16 %v317
      %v479 = vunpack.c.l.b16 %v318
      %v480 = vunpack.c.l.b16 %v319
      %v481 = vunpack.c.l.b16 %v320
      %v482 = vunpack.c.l.b16 %v321
      %v483 = vunpack.c.l.b16 %v322
      %v484 = vunpack.c.l.b16 %v323
      %v485 = vunpack.c.l.b16 %v324
      %v486 = vunpack.c.l.b16 %v325
      %v487 = vunpack.c.l.b16 %v326
      %v488 = vunpack.c.l.b16 %v327
      %v489 = vunpack.c.l.b16 %v328
      %v490 = vunpack.c.l.b16 %v329
      %v491 = vunpack.c.l.b16 %v330
      %v492 = vunpack.c.l.b16 %v331
      %v493 = vunpack.c.l.b16 %v332
      %v494 = vunpack.c.l.b16 %v333
      %v495 = vunpack.c.l.b16 %v334
      %v496 = vunpack.c.l.b16 %v335
      %v497 = vunpack.c.l.b16 %v336
      %v498 = vunpack.c.l.b16 %v337
      %v499 = vunpack.c.l.b16 %v338
      %v500 = vunpack.c.l.b16 %v339
      %v501 = vunpack.c.l.b16 %v340
      %v502 = vunpack.c.l.b16 %v341
      %v503 = vunpack.c.l.b16 %v342
      %v504 = vunpack.c.l.b16 %v343
      %v505 = vunpack.c.l.b16 %v344
      %v506 = vunpack.c.l.b16 %v345
      %v507 = vunpack.c.l.b16 %v346
      %v508 = vunpack.c.l.b16 %v347
      %v509 = vunpack.c.l.b16 %v348
      %v510 = vpack.c.b16 %v469, %v468
      %v511 = vpack.c.b16 %v471, %v470
      %v512 = vpack.c.b16 %v473, %v472
      %v513 = vpack.c.b16 %v475, %v474
      %v514 = vpack.c.b16 %v477, %v476
      %v515 = vpack.c.b16 %v479, %v478
      %v516 = vpack.c.b16 %v481, %v480
      %v517 = vpack.c.b16 %v483, %v482
      %v518 = vpack.c.b16 %v485, %v484
      %v519 = vpack.c.b16 %v487, %v486
      %v520 = vpack.c.b16 %v489, %v488
      %v521 = vpack.c.b16 %v491, %v490
      %v522 = vpack.c.b16 %v493, %v492
      %v523 = vpack.c.b16 %v495, %v494
      %v524 = vpack.c.b16 %v497, %v496
      %v525 = vpack.c.b16 %v499, %v498
      %v526 = vpack.c.b16 %v501, %v500
      %v527 = vpack.c.b16 %v503, %v502
      %v528 = vpack.c.b16 %v505, %v504
      %v529 = vpack.c.b16 %v507, %v506
      %v530 = vpack.c.b16 %v509, %v508
      %vm552 = vcmask 654336
      %v554 = vsel %vm552, %v419, 0
      %556 = vmatprep.subr.bf16.mxu0 0
      %557 = vmatpush1.bf16.msra.mxu0 %v510
      %558 = vmatprep.subr.bf16.mxu0 0
      %559 = vmatpush1.bf16.msra.mxu0 %v511
      %560 = vmatprep.subr.bf16.mxu0 0
      %561 = vmatpush1.bf16.msra.mxu0 %v512
      %562 = vmatprep.subr.bf16.mxu0 0
      %563 = vmatpush1.bf16.msra.mxu0 %v513
      %564 = vmatprep.subr.bf16.mxu0 0
      %565 = vmatpush1.bf16.msra.mxu0 %v514
      %566 = vmatprep.subr.bf16.mxu0 0
      %567 = vmatpush1.bf16.msra.mxu0 %v515
      %568 = vmatprep.subr.bf16.mxu0 0
      %569 = vmatpush1.bf16.msra.mxu0 %v516
      %570 = vmatprep.subr.bf16.mxu0 0
      %571 = vmatpush1.bf16.msra.mxu0 %v517
      %572 = vmatprep.subr.bf16.mxu0 0
      %573 = vmatpush1.bf16.msra.mxu0 %v518
      %574 = vmatprep.subr.bf16.mxu0 0
      %575 = vmatpush1.bf16.msra.mxu0 %v519
      %576 = vmatprep.subr.bf16.mxu0 0
      %577 = vmatpush1.bf16.msra.mxu0 %v520
      %578 = vmatprep.subr.bf16.mxu0 0
      %579 = vmatpush1.bf16.msra.mxu0 %v521
      %580 = vmatprep.subr.bf16.mxu0 0
      %581 = vmatpush1.bf16.msra.mxu0 %v522
      %582 = vmatprep.subr.bf16.mxu0 0
      %583 = vmatpush1.bf16.msra.mxu0 %v523
      %584 = vmatprep.subr.bf16.mxu0 0
      %585 = vmatpush1.bf16.msra.mxu0 %v524
      %586 = vmatprep.subr.bf16.mxu0 0
      %587 = vmatpush1.bf16.msra.mxu0 %v525
      %588 = vmatprep.mubr.bf16.mxu0 %v418
      %589 = vmatmul.mubr.bf16.gmra.mrb[0].mxu0 %v417
      %v590 = vpop.f32.mrb[0].mxu0
      %v591 = vadd.f32 %v424, %v590
      %v592 = vpop.f32.mrb[0].mxu0
      %v593 = vpop.f32.mrb[0].mxu0
      %v594 = vpop.f32.mrb[0].mxu0
      %595 = vdwg.mxu0
      %596 = vmatprep.subr.bf16.mxu0 0
      %597 = vmatpush1.bf16.msra.mxu0 %v526
      %598 = vmatprep.subr.bf16.mxu0 0
      %599 = vmatpush1.bf16.msra.mxu0 %v527
      %600 = vmatprep.subr.bf16.mxu0 0
      %601 = vmatpush1.bf16.msra.mxu0 %v528
      %602 = vmatprep.subr.bf16.mxu0 0
      %603 = vmatpush1.bf16.msra.mxu0 %v529
      %604 = vmatprep.subr.bf16.mxu0 0
      %605 = vmatpush1.bf16.msra.mxu0 %v530
      %606 = vmatprep.subr.bf16.mxu0 0
      %607 = vmatpush1.bf16.msra.mxu0 0
      %608 = vmatprep.subr.bf16.mxu0 0
      %609 = vmatpush1.bf16.msra.mxu0 0
      %610 = vmatprep.subr.bf16.mxu0 0
      %611 = vmatpush1.bf16.msra.mxu0 0
      %612 = vmatprep.subr.bf16.mxu0 0
      %613 = vmatpush1.bf16.msra.mxu0 0
      %614 = vmatprep.subr.bf16.mxu0 0
      %615 = vmatpush1.bf16.msra.mxu0 0
      %616 = vmatprep.subr.bf16.mxu0 0
      %617 = vmatpush1.bf16.msra.mxu0 0
      %618 = vmatprep.subr.bf16.mxu0 0
      %619 = vmatpush1.bf16.msra.mxu0 0
      %620 = vmatprep.subr.bf16.mxu0 0
      %621 = vmatpush1.bf16.msra.mxu0 0
      %622 = vmatprep.subr.bf16.mxu0 0
      %623 = vmatpush1.bf16.msra.mxu0 0
      %624 = vmatprep.subr.bf16.mxu0 0
      %625 = vmatpush1.bf16.msra.mxu0 0
      %626 = vmatprep.subr.bf16.mxu0 0
      %627 = vmatpush1.bf16.msra.mxu0 0
      %628 = vmatprep.mubr.bf16.mxu0 0
      %629 = vmatmul.mubr.bf16.gmra.mrb[0].mxu0 %v554
      %v630 = vpop.f32.mrb[0].mxu0
      %v631 = vadd.f32 %v591, %v630
      %v632 = vpop.f32.mrb[0].mxu0
      %v633 = vpop.f32.mrb[0].mxu0
      %v634 = vpop.f32.mrb[0].mxu0
      %635 = vdwg.mxu0
      %v636 = vxor.u32 %v631, 2147483648
      %v637 = vmul.f32 %v636, 1.442695
      %v638 = vpow.pop %v637
      %v639 = vadd.f32 %v638, 1.0
      %v640 = vrcp.pop %v639
      %v641 = vmul.f32 1.0, %v640
      %v642 = vmul.f32 %v631, %v641
      %v643 = vld [vmem:[%s5] sm:$0xf]
      %v644 = vld [vmem:[%s5 + $0x4] sm:$0xf]
      %v645 = vld [vmem:[%s5 + $0x8] sm:$0xf]
      %v646 = vld [vmem:[%s5 + $0xc] sm:$0xf]
      %v647 = vld [vmem:[%s5 + $0x10] sm:$0xf]
      %v648 = vld [vmem:[%s5 + $0x14] sm:$0xf]
      %v649 = vld [vmem:[%s5 + $0x18] sm:$0xf]
      %v650 = vld [vmem:[%s5 + $0x1c] sm:$0xf]
      %v651 = vld [vmem:[%s5 + $0x20] sm:$0xf]
      %v652 = vld [vmem:[%s5 + $0x24] sm:$0xf]
      %v653 = vld [vmem:[%s5 + $0x28] sm:$0xf]
      %v654 = vld [vmem:[%s5 + $0x2c] sm:$0xf]
      %v655 = vld [vmem:[%s6] sm:$0x1]
      %v656 = vrot.slane %v642, 7
      %v657 = vsel %vm365, %v656, 0.0
      %v658 = vrot.slane %v642, 1
      %v659 = vsel %vm370, %v658, 0.0
      %661 = vrot.lane.b32.xlu0 %v642, 32
      %v662 = vpop.permute.xlu0 %661
      %665 = vrot.lane.b32.xlu0 %v659, 64
      %v666 = vpop.permute.xlu0 %665
      %v668 = vsel %vm415, %v657, %v662
      %v669 = vsel %vm411, %v668, %v666
      %v670 = vpack.c.bf16 %v669, %v669
      %v672 = vlaneseq
      %v673 = vshrl.u32 %v672, 7
      %v674 = vsub.s32 0, %v673
      %v675 = vrot.slane %v655, %v674
      %v689 = vunpack.c.l.b16 %v643
      %v690 = vunpack.c.l.b16 %v644
      %v691 = vunpack.c.l.b16 %v645
      %v692 = vunpack.c.l.b16 %v646
      %v693 = vunpack.c.l.b16 %v647
      %v694 = vunpack.c.l.b16 %v648
      %v695 = vunpack.c.l.b16 %v649
      %v696 = vunpack.c.l.b16 %v650
      %v697 = vunpack.c.l.b16 %v651
      %v698 = vunpack.c.l.b16 %v652
      %v699 = vunpack.c.l.b16 %v653
      %v700 = vunpack.c.l.b16 %v654
      %v701 = vpack.c.b16 %v690, %v689
      %v702 = vpack.c.b16 %v692, %v691
      %v703 = vpack.c.b16 %v694, %v693
      %v704 = vpack.c.b16 %v696, %v695
      %v705 = vpack.c.b16 %v698, %v697
      %v706 = vpack.c.b16 %v700, %v699
      %v714 = vsel %vm407, %v670, 0
      %716 = vmatprep.subr.bf16.mxu0 0
      %717 = vmatpush1.bf16.msra.mxu0 %v701
      %718 = vmatprep.subr.bf16.mxu0 0
      %719 = vmatpush1.bf16.msra.mxu0 %v702
      %720 = vmatprep.subr.bf16.mxu0 0
      %721 = vmatpush1.bf16.msra.mxu0 %v703
      %722 = vmatprep.subr.bf16.mxu0 0
      %723 = vmatpush1.bf16.msra.mxu0 %v704
      %724 = vmatprep.subr.bf16.mxu0 0
      %725 = vmatpush1.bf16.msra.mxu0 %v705
      %726 = vmatprep.subr.bf16.mxu0 0
      %727 = vmatpush1.bf16.msra.mxu0 %v706
      %728 = vmatprep.subr.bf16.mxu0 0
      %729 = vmatpush1.bf16.msra.mxu0 0
      %730 = vmatprep.subr.bf16.mxu0 0
      %731 = vmatpush1.bf16.msra.mxu0 0
      %732 = vmatprep.subr.bf16.mxu0 0
      %733 = vmatpush1.bf16.msra.mxu0 0
      %734 = vmatprep.subr.bf16.mxu0 0
      %735 = vmatpush1.bf16.msra.mxu0 0
      %736 = vmatprep.subr.bf16.mxu0 0
      %737 = vmatpush1.bf16.msra.mxu0 0
      %738 = vmatprep.subr.bf16.mxu0 0
      %739 = vmatpush1.bf16.msra.mxu0 0
      %740 = vmatprep.subr.bf16.mxu0 0
      %741 = vmatpush1.bf16.msra.mxu0 0
      %742 = vmatprep.subr.bf16.mxu0 0
      %743 = vmatpush1.bf16.msra.mxu0 0
      %744 = vmatprep.subr.bf16.mxu0 0
      %745 = vmatpush1.bf16.msra.mxu0 0
      %746 = vmatprep.subr.bf16.mxu0 0
      %747 = vmatpush1.bf16.msra.mxu0 0
      %748 = vmatprep.mubr.bf16.mxu0 0
      %749 = vmatmul.mubr.bf16.gmra.mrb[0].mxu0 %v714
      %v750 = vpop.f32.mrb[0].mxu0
      %v751 = vadd.f32 %v675, %v750
      %v752 = vpop.f32.mrb[0].mxu0
      %v753 = vpop.f32.mrb[0].mxu0
      %v754 = vpop.f32.mrb[0].mxu0
      %755 = vdwg.mxu0
      %756 = vst.msk [vmem:[%s273] sm:$0xff] %vm415, %v751
      %p757 = scmp.lt.s32.totalorder %s18, 1
      %s758 = scalar_select %p757, %s18, 1
      %s759 = smul.addr %s758, 8
      %s760 = scalar_lea.vmem %s7, %s759
      // Predicated region
      $region49: #{fwd.7} parent=47 // pred_check
        %p761 = pneg %p188
      $region50: #{fwd.7} parent=47 // pred_check_branch
        %763 = sbr.rel (%p761) target = $region52
      $region51: #{fwd.7} parent=47 // pred_region
        _
      $region52: #{fwd.7} parent=47 // pred_fallthru
        _
    $region48: #{fwd.7} parent=5 // pred_fallthru
      _
    %p764 = scmp.le.s32.totalorder 2, %s13
    // Predicated region
    $region53: #{fwd.7} parent=5 // pred_check
      %p765 = pneg %p764
    $region54: #{fwd.7} parent=5 // pred_check_branch
      %767 = sbr.rel (%p765) target = $region56
    $region55: #{fwd.7} parent=5 // pred_region
      %s768 = ssub.s32 %s13, 2
      // Predicated region
      $region57: #{fwd.7} parent=55 // pred_check
        %p769 = pneg %p194
      $region58: #{fwd.7} parent=55 // pred_check_branch
        %771 = sbr.rel (%p769) target = $region60
      $region59: #{fwd.7} parent=55 // pred_region
        %p772 = scmp.lt.s32.totalorder %s19, 1
        %s773 = scalar_select %p772, %s19, 1
        %s774 = smul.addr %s773, 8
        %s775 = scalar_lea.vmem %s7, %s774
      $region60: #{fwd.7} parent=55 // pred_fallthru
        _
    $region56: #{fwd.7} parent=5 // pred_fallthru
      _
  $region6: #{fwd.7} parent=0 // loop_footer
    %s17 = sadd.s32 1, %s13
  $region7: #{fwd.7} parent=0 // loop_footer_branch
    %12 = sbr.rel target = $region3
  $region8: #{fwd.7} parent=0 // loop_exit
    _

// kernel: fwd.5
$region0: #{fwd.5}
  #allocation0 [shape = 'u32[]', space=smem, size = 0x4, offset = 0x4, fixed_abs, tag = 'smem constant byte address 0x4 - core index']
  #allocation1 [shape = 'u32[144,128]{1,0:T(1,128)}', space=vmem, size = 0x12000, scoped, tag = 'internal scratch']
  %s0 = inlined_call_operand.vmem [shape: f32[2,8,16], index: 0, kind: input, shape index: {}]
  %s1 = inlined_call_operand.vmem [shape: bf16[112,32], index: 1, kind: input, shape index: {}]
  %s2 = inlined_call_operand.vmem [shape: f32[1,32], index: 2, kind: input, shape index: {}]
  %s3 = inlined_call_operand.vmem [shape: f32[1,32], index: 3, kind: input, shape index: {}]
  %s4 = inlined_call_operand.vmem [shape: f32[1,32], index: 4, kind: input, shape index: {}]
  %s5 = inlined_call_operand.vmem [shape: f32[7,32], index: 5, kind: input, shape index: {}]
  %s6 = inlined_call_operand.vmem [shape: f32[1,32], index: 6, kind: input, shape index: {}]
  %s7 = inlined_call_operand.vmem [shape: f32[1,32], index: 7, kind: input, shape index: {}]
  %s8 = inlined_call_operand.vmem [shape: f32[1,32], index: 8, kind: input, shape index: {}]
  %s9 = inlined_call_operand.vmem [shape: bf16[32,128], index: 9, kind: input, shape index: {}]
  %s10 = inlined_call_operand.vmem [shape: f32[1,128], index: 10, kind: input, shape index: {}]
  %s11 = inlined_call_operand.vmem [shape: bf16[128,32], index: 11, kind: input, shape index: {}]
  %s12 = inlined_call_operand.vmem [shape: f32[1,32], index: 12, kind: input, shape index: {}]
  %s13 = inlined_call_operand.vmem [shape: f32[1,32], index: 13, kind: input, shape index: {}]
  %s14 = inlined_call_operand.vmem [shape: f32[2,8,32], index: 14, kind: output, shape index: {}]
  %s15 = sld [smem:[#allocation0]]
  $region89: #{fwd.5} parent=0
    _
  %s17 = ssub.s32 1, %s15
  %s18 = scalar_select 0, %s17, %s15
  loop: start=0, step=1, limit=4
  $region2: #{fwd.5} parent=0 // loop_pre_header
    _
  $region3: #{fwd.5} parent=0 // loop_header
    %s20 = sphi 0, %s24
    %p21 = scmp.ge.s32.totalorder %s20, 4
    %s30 = sphi 0, %s32
    %s33 = sphi 0, %s30
    %s34 = sphi 0, %s33
    %s50 = sphi 0, %s34
    %s54 = sphi 0, %s54
    %s56 = sphi 0, %s54
    %s57 = sphi 0, %s56
    %s71 = sphi 0, %s57
    %s75 = sphi 0, %s75
    %s77 = sphi 0, %s75
    %s78 = sphi 0, %s77
    %s92 = sphi 0, %s78
    %s96 = sphi 0, %s96
    %s98 = sphi 0, %s96
    %s99 = sphi 0, %s98
    %s113 = sphi 0, %s99
    %s117 = sphi 0, %s117
    %s119 = sphi 0, %s117
    %s120 = sphi 0, %s119
    %s134 = sphi 0, %s120
    %s138 = sphi 0, %s138
    %s140 = sphi 0, %s138
    %s141 = sphi 0, %s140
    %s155 = sphi 0, %s141
    %s159 = sphi 0, %s159
    %s161 = sphi 0, %s159
    %s162 = sphi 0, %s161
    %s176 = sphi 0, %s162
    %s180 = sphi 0, %s180
    %s182 = sphi 0, %s180
    %s183 = sphi 0, %s182
    %s197 = sphi 0, %s183
    %s201 = sphi 0, %s201
    %s203 = sphi 0, %s201
    %s204 = sphi 0, %s203
    %s218 = sphi 0, %s204
    %s222 = sphi 0, %s222
    %s224 = sphi 0, %s222
    %s225 = sphi 0, %s224
    %s239 = sphi 0, %s225
    %s243 = sphi 0, %s243
    %s245 = sphi 0, %s243
    %s246 = sphi 0, %s245
    %s260 = sphi 0, %s246
    %s264 = sphi 0, %s264
    %s266 = sphi 0, %s264
    %s267 = sphi 0, %s266
    %s281 = sphi 0, %s267
    %s285 = sphi 0, %s285
    %s287 = sphi 0, %s285
    %s288 = sphi 0, %s287
    %s302 = sphi 0, %s288
    %s306 = sphi 0, %s306
    %s308 = sphi 0, %s306
    %s309 = sphi 0, %s308
    %s323 = sphi 0, %s309
    %s329 = sphi 0, %s331
    %s332 = sphi 0, %s329
    %s333 = sphi 0, %s332
    %s349 = sphi 0, %s333
  $region4: #{fwd.5} parent=0 // loop_header_branch
    %23 = sbr.rel (%p21) target = $region8
  $region5: #{fwd.5} parent=0 // loop_body
    %s25 = ssub.s32 %s20, 1
    %s26 = ssub.s32 %s20, 2
    %s27 = sadd.s32 %s20, 1
    %s28 = ssub.s32 %s20, %s27
    %p29 = scmp.eq.s32.totalorder %s28, 0
    %s31 = sadd.s32 %s30, 1
    %s32 = scalar_select %p29, %s30, %s31
    %p35 = pneg %p29
    %p36 = scmp.eq.s32.totalorder %s20, 1
    %p37 = por %p35, %p36
    %p38 = scmp.ne.s32.totalorder %s30, %s33
    %p39 = scmp.eq.s32.totalorder %s20, 0
    %p40 = por %p38, %p39
    %p41 = scmp.ne.s32.totalorder %s30, %s33
    %p42 = scmp.eq.s32.totalorder %s25, 1
    %p43 = por %p41, %p42
    %p44 = scmp.ne.s32.totalorder %s33, %s34
    %p45 = scmp.eq.s32.totalorder %s25, 0
    %p46 = por %p44, %p45
    %p47 = scmp.ne.s32.totalorder %s33, %s34
    %p48 = scmp.eq.s32.totalorder %s26, 1
    %p49 = por %p47, %p48
    %p51 = scmp.ne.s32.totalorder %s34, %s50
    %p52 = scmp.eq.s32.totalorder %s26, 0
    %p53 = por %p51, %p52
    %s55 = sadd.s32 %s54, 1
    %p58 = scmp.eq.s32.totalorder %s20, 1
    %p59 = scmp.ne.s32.totalorder %s54, %s56
    %p60 = scmp.eq.s32.totalorder %s20, 0
    %p61 = por %p59, %p60
    %p62 = scmp.ne.s32.totalorder %s54, %s56
    %p63 = scmp.eq.s32.totalorder %s25, 1
    %p64 = por %p62, %p63
    %p65 = scmp.ne.s32.totalorder %s56, %s57
    %p66 = scmp.eq.s32.totalorder %s25, 0
    %p67 = por %p65, %p66
    %p68 = scmp.ne.s32.totalorder %s56, %s57
    %p69 = scmp.eq.s32.totalorder %s26, 1
    %p70 = por %p68, %p69
    %p72 = scmp.ne.s32.totalorder %s57, %s71
    %p73 = scmp.eq.s32.totalorder %s26, 0
    %p74 = por %p72, %p73
    %s76 = sadd.s32 %s75, 1
    %p79 = scmp.eq.s32.totalorder %s20, 1
    %p80 = scmp.ne.s32.totalorder %s75, %s77
    %p81 = scmp.eq.s32.totalorder %s20, 0
    %p82 = por %p80, %p81
    %p83 = scmp.ne.s32.totalorder %s75, %s77
    %p84 = scmp.eq.s32.totalorder %s25, 1
    %p85 = por %p83, %p84
    %p86 = scmp.ne.s32.totalorder %s77, %s78
    %p87 = scmp.eq.s32.totalorder %s25, 0
    %p88 = por %p86, %p87
    %p89 = scmp.ne.s32.totalorder %s77, %s78
    %p90 = scmp.eq.s32.totalorder %s26, 1
    %p91 = por %p89, %p90
    %p93 = scmp.ne.s32.totalorder %s78, %s92
    %p94 = scmp.eq.s32.totalorder %s26, 0
    %p95 = por %p93, %p94
    %s97 = sadd.s32 %s96, 1
    %p100 = scmp.eq.s32.totalorder %s20, 1
    %p101 = scmp.ne.s32.totalorder %s96, %s98
    %p102 = scmp.eq.s32.totalorder %s20, 0
    %p103 = por %p101, %p102
    %p104 = scmp.ne.s32.totalorder %s96, %s98
    %p105 = scmp.eq.s32.totalorder %s25, 1
    %p106 = por %p104, %p105
    %p107 = scmp.ne.s32.totalorder %s98, %s99
    %p108 = scmp.eq.s32.totalorder %s25, 0
    %p109 = por %p107, %p108
    %p110 = scmp.ne.s32.totalorder %s98, %s99
    %p111 = scmp.eq.s32.totalorder %s26, 1
    %p112 = por %p110, %p111
    %p114 = scmp.ne.s32.totalorder %s99, %s113
    %p115 = scmp.eq.s32.totalorder %s26, 0
    %p116 = por %p114, %p115
    %s118 = sadd.s32 %s117, 1
    %p121 = scmp.eq.s32.totalorder %s20, 1
    %p122 = scmp.ne.s32.totalorder %s117, %s119
    %p123 = scmp.eq.s32.totalorder %s20, 0
    %p124 = por %p122, %p123
    %p125 = scmp.ne.s32.totalorder %s117, %s119
    %p126 = scmp.eq.s32.totalorder %s25, 1
    %p127 = por %p125, %p126
    %p128 = scmp.ne.s32.totalorder %s119, %s120
    %p129 = scmp.eq.s32.totalorder %s25, 0
    %p130 = por %p128, %p129
    %p131 = scmp.ne.s32.totalorder %s119, %s120
    %p132 = scmp.eq.s32.totalorder %s26, 1
    %p133 = por %p131, %p132
    %p135 = scmp.ne.s32.totalorder %s120, %s134
    %p136 = scmp.eq.s32.totalorder %s26, 0
    %p137 = por %p135, %p136
    %s139 = sadd.s32 %s138, 1
    %p142 = scmp.eq.s32.totalorder %s20, 1
    %p143 = scmp.ne.s32.totalorder %s138, %s140
    %p144 = scmp.eq.s32.totalorder %s20, 0
    %p145 = por %p143, %p144
    %p146 = scmp.ne.s32.totalorder %s138, %s140
    %p147 = scmp.eq.s32.totalorder %s25, 1
    %p148 = por %p146, %p147
    %p149 = scmp.ne.s32.totalorder %s140, %s141
    %p150 = scmp.eq.s32.totalorder %s25, 0
    %p151 = por %p149, %p150
    %p152 = scmp.ne.s32.totalorder %s140, %s141
    %p153 = scmp.eq.s32.totalorder %s26, 1
    %p154 = por %p152, %p153
    %p156 = scmp.ne.s32.totalorder %s141, %s155
    %p157 = scmp.eq.s32.totalorder %s26, 0
    %p158 = por %p156, %p157
    %s160 = sadd.s32 %s159, 1
    %p163 = scmp.eq.s32.totalorder %s20, 1
    %p164 = scmp.ne.s32.totalorder %s159, %s161
    %p165 = scmp.eq.s32.totalorder %s20, 0
    %p166 = por %p164, %p165
    %p167 = scmp.ne.s32.totalorder %s159, %s161
    %p168 = scmp.eq.s32.totalorder %s25, 1
    %p169 = por %p167, %p168
    %p170 = scmp.ne.s32.totalorder %s161, %s162
    %p171 = scmp.eq.s32.totalorder %s25, 0
    %p172 = por %p170, %p171
    %p173 = scmp.ne.s32.totalorder %s161, %s162
    %p174 = scmp.eq.s32.totalorder %s26, 1
    %p175 = por %p173, %p174
    %p177 = scmp.ne.s32.totalorder %s162, %s176
    %p178 = scmp.eq.s32.totalorder %s26, 0
    %p179 = por %p177, %p178
    %s181 = sadd.s32 %s180, 1
    %p184 = scmp.eq.s32.totalorder %s20, 1
    %p185 = scmp.ne.s32.totalorder %s180, %s182
    %p186 = scmp.eq.s32.totalorder %s20, 0
    %p187 = por %p185, %p186
    %p188 = scmp.ne.s32.totalorder %s180, %s182
    %p189 = scmp.eq.s32.totalorder %s25, 1
    %p190 = por %p188, %p189
    %p191 = scmp.ne.s32.totalorder %s182, %s183
    %p192 = scmp.eq.s32.totalorder %s25, 0
    %p193 = por %p191, %p192
    %p194 = scmp.ne.s32.totalorder %s182, %s183
    %p195 = scmp.eq.s32.totalorder %s26, 1
    %p196 = por %p194, %p195
    %p198 = scmp.ne.s32.totalorder %s183, %s197
    %p199 = scmp.eq.s32.totalorder %s26, 0
    %p200 = por %p198, %p199
    %s202 = sadd.s32 %s201, 1
    %p205 = scmp.eq.s32.totalorder %s20, 1
    %p206 = scmp.ne.s32.totalorder %s201, %s203
    %p207 = scmp.eq.s32.totalorder %s20, 0
    %p208 = por %p206, %p207
    %p209 = scmp.ne.s32.totalorder %s201, %s203
    %p210 = scmp.eq.s32.totalorder %s25, 1
    %p211 = por %p209, %p210
    %p212 = scmp.ne.s32.totalorder %s203, %s204
    %p213 = scmp.eq.s32.totalorder %s25, 0
    %p214 = por %p212, %p213
    %p215 = scmp.ne.s32.totalorder %s203, %s204
    %p216 = scmp.eq.s32.totalorder %s26, 1
    %p217 = por %p215, %p216
    %p219 = scmp.ne.s32.totalorder %s204, %s218
    %p220 = scmp.eq.s32.totalorder %s26, 0
    %p221 = por %p219, %p220
    %s223 = sadd.s32 %s222, 1
    %p226 = scmp.eq.s32.totalorder %s20, 1
    %p227 = scmp.ne.s32.totalorder %s222, %s224
    %p228 = scmp.eq.s32.totalorder %s20, 0
    %p229 = por %p227, %p228
    %p230 = scmp.ne.s32.totalorder %s222, %s224
    %p231 = scmp.eq.s32.totalorder %s25, 1
    %p232 = por %p230, %p231
    %p233 = scmp.ne.s32.totalorder %s224, %s225
    %p234 = scmp.eq.s32.totalorder %s25, 0
    %p235 = por %p233, %p234
    %p236 = scmp.ne.s32.totalorder %s224, %s225
    %p237 = scmp.eq.s32.totalorder %s26, 1
    %p238 = por %p236, %p237
    %p240 = scmp.ne.s32.totalorder %s225, %s239
    %p241 = scmp.eq.s32.totalorder %s26, 0
    %p242 = por %p240, %p241
    %s244 = sadd.s32 %s243, 1
    %p247 = scmp.eq.s32.totalorder %s20, 1
    %p248 = scmp.ne.s32.totalorder %s243, %s245
    %p249 = scmp.eq.s32.totalorder %s20, 0
    %p250 = por %p248, %p249
    %p251 = scmp.ne.s32.totalorder %s243, %s245
    %p252 = scmp.eq.s32.totalorder %s25, 1
    %p253 = por %p251, %p252
    %p254 = scmp.ne.s32.totalorder %s245, %s246
    %p255 = scmp.eq.s32.totalorder %s25, 0
    %p256 = por %p254, %p255
    %p257 = scmp.ne.s32.totalorder %s245, %s246
    %p258 = scmp.eq.s32.totalorder %s26, 1
    %p259 = por %p257, %p258
    %p261 = scmp.ne.s32.totalorder %s246, %s260
    %p262 = scmp.eq.s32.totalorder %s26, 0
    %p263 = por %p261, %p262
    %s265 = sadd.s32 %s264, 1
    %p268 = scmp.eq.s32.totalorder %s20, 1
    %p269 = scmp.ne.s32.totalorder %s264, %s266
    %p270 = scmp.eq.s32.totalorder %s20, 0
    %p271 = por %p269, %p270
    %p272 = scmp.ne.s32.totalorder %s264, %s266
    %p273 = scmp.eq.s32.totalorder %s25, 1
    %p274 = por %p272, %p273
    %p275 = scmp.ne.s32.totalorder %s266, %s267
    %p276 = scmp.eq.s32.totalorder %s25, 0
    %p277 = por %p275, %p276
    %p278 = scmp.ne.s32.totalorder %s266, %s267
    %p279 = scmp.eq.s32.totalorder %s26, 1
    %p280 = por %p278, %p279
    %p282 = scmp.ne.s32.totalorder %s267, %s281
    %p283 = scmp.eq.s32.totalorder %s26, 0
    %p284 = por %p282, %p283
    %s286 = sadd.s32 %s285, 1
    %p289 = scmp.eq.s32.totalorder %s20, 1
    %p290 = scmp.ne.s32.totalorder %s285, %s287
    %p291 = scmp.eq.s32.totalorder %s20, 0
    %p292 = por %p290, %p291
    %p293 = scmp.ne.s32.totalorder %s285, %s287
    %p294 = scmp.eq.s32.totalorder %s25, 1
    %p295 = por %p293, %p294
    %p296 = scmp.ne.s32.totalorder %s287, %s288
    %p297 = scmp.eq.s32.totalorder %s25, 0
    %p298 = por %p296, %p297
    %p299 = scmp.ne.s32.totalorder %s287, %s288
    %p300 = scmp.eq.s32.totalorder %s26, 1
    %p301 = por %p299, %p300
    %p303 = scmp.ne.s32.totalorder %s288, %s302
    %p304 = scmp.eq.s32.totalorder %s26, 0
    %p305 = por %p303, %p304
    %s307 = sadd.s32 %s306, 1
    %p310 = scmp.eq.s32.totalorder %s20, 1
    %p311 = scmp.ne.s32.totalorder %s306, %s308
    %p312 = scmp.eq.s32.totalorder %s20, 0
    %p313 = por %p311, %p312
    %p314 = scmp.ne.s32.totalorder %s306, %s308
    %p315 = scmp.eq.s32.totalorder %s25, 1
    %p316 = por %p314, %p315
    %p317 = scmp.ne.s32.totalorder %s308, %s309
    %p318 = scmp.eq.s32.totalorder %s25, 0
    %p319 = por %p317, %p318
    %p320 = scmp.ne.s32.totalorder %s308, %s309
    %p321 = scmp.eq.s32.totalorder %s26, 1
    %p322 = por %p320, %p321
    %p324 = scmp.ne.s32.totalorder %s309, %s323
    %p325 = scmp.eq.s32.totalorder %s26, 0
    %p326 = por %p324, %p325
    %s327 = ssub.s32 %s20, %s27
    %p328 = scmp.eq.s32.totalorder %s327, 0
    %s330 = sadd.s32 %s329, 1
    %s331 = scalar_select %p328, %s329, %s330
    %p334 = pneg %p328
    %p335 = scmp.eq.s32.totalorder %s20, 1
    %p336 = por %p334, %p335
    %p337 = scmp.ne.s32.totalorder %s329, %s332
    %p338 = scmp.eq.s32.totalorder %s20, 0
    %p339 = por %p337, %p338
    %p340 = scmp.ne.s32.totalorder %s329, %s332
    %p341 = scmp.eq.s32.totalorder %s25, 1
    %p342 = por %p340, %p341
    %p343 = scmp.ne.s32.totalorder %s332, %s333
    %p344 = scmp.eq.s32.totalorder %s25, 0
    %p345 = por %p343, %p344
    %p346 = scmp.ne.s32.totalorder %s332, %s333
    %p347 = scmp.eq.s32.totalorder %s26, 1
    %p348 = por %p346, %p347
    %p350 = scmp.ne.s32.totalorder %s333, %s349
    %p351 = scmp.eq.s32.totalorder %s26, 0
    %p352 = por %p350, %p351
    %p353 = scmp.le.s32.totalorder 1, %s20
    %p354 = scmp.lt.s32.totalorder %s20, 3
    %p355 = pnand %p353, %p354
    %p356 = pneg %p355
    // Predicated region
    $region9: #{fwd.5} parent=5 // pred_check
      _
    $region10: #{fwd.5} parent=5 // pred_check_branch
      %358 = sbr.rel (%p355) target = $region12
    $region11: #{fwd.5} parent=5 // pred_region
      %s359 = ssub.s32 %s20, 1
      // Predicated region
      $region13: #{fwd.5} parent=11 // pred_check
        %p360 = pneg %p67
      $region14: #{fwd.5} parent=11 // pred_check_branch
        %362 = sbr.rel (%p360) target = $region16
      $region15: #{fwd.5} parent=11 // pred_region
        _
      $region16: #{fwd.5} parent=11 // pred_fallthru
        _
      // Predicated region
      $region17: #{fwd.5} parent=11 // pred_check
        %p363 = pneg %p88
      $region18: #{fwd.5} parent=11 // pred_check_branch
        %365 = sbr.rel (%p363) target = $region20
      $region19: #{fwd.5} parent=11 // pred_region
        _
      $region20: #{fwd.5} parent=11 // pred_fallthru
        _
      // Predicated region
      $region21: #{fwd.5} parent=11 // pred_check
        %p366 = pneg %p109
      $region22: #{fwd.5} parent=11 // pred_check_branch
        %368 = sbr.rel (%p366) target = $region24
      $region23: #{fwd.5} parent=11 // pred_region
        _
      $region24: #{fwd.5} parent=11 // pred_fallthru
        _
      // Predicated region
      $region25: #{fwd.5} parent=11 // pred_check
        %p369 = pneg %p130
      $region26: #{fwd.5} parent=11 // pred_check_branch
        %371 = sbr.rel (%p369) target = $region28
      $region27: #{fwd.5} parent=11 // pred_region
        _
      $region28: #{fwd.5} parent=11 // pred_fallthru
        _
      // Predicated region
      $region29: #{fwd.5} parent=11 // pred_check
        %p372 = pneg %p151
      $region30: #{fwd.5} parent=11 // pred_check_branch
        %374 = sbr.rel (%p372) target = $region32
      $region31: #{fwd.5} parent=11 // pred_region
        _
      $region32: #{fwd.5} parent=11 // pred_fallthru
        _
      // Predicated region
      $region33: #{fwd.5} parent=11 // pred_check
        %p375 = pneg %p172
      $region34: #{fwd.5} parent=11 // pred_check_branch
        %377 = sbr.rel (%p375) target = $region36
      $region35: #{fwd.5} parent=11 // pred_region
        _
      $region36: #{fwd.5} parent=11 // pred_fallthru
        _
      // Predicated region
      $region37: #{fwd.5} parent=11 // pred_check
        %p378 = pneg %p193
      $region38: #{fwd.5} parent=11 // pred_check_branch
        %380 = sbr.rel (%p378) target = $region40
      $region39: #{fwd.5} parent=11 // pred_region
        _
      $region40: #{fwd.5} parent=11 // pred_fallthru
        _
      // Predicated region
      $region41: #{fwd.5} parent=11 // pred_check
        %p381 = pneg %p214
      $region42: #{fwd.5} parent=11 // pred_check_branch
        %383 = sbr.rel (%p381) target = $region44
      $region43: #{fwd.5} parent=11 // pred_region
        _
      $region44: #{fwd.5} parent=11 // pred_fallthru
        _
      // Predicated region
      $region45: #{fwd.5} parent=11 // pred_check
        %p384 = pneg %p235
      $region46: #{fwd.5} parent=11 // pred_check_branch
        %386 = sbr.rel (%p384) target = $region48
      $region47: #{fwd.5} parent=11 // pred_region
        _
      $region48: #{fwd.5} parent=11 // pred_fallthru
        _
      // Predicated region
      $region49: #{fwd.5} parent=11 // pred_check
        %p387 = pneg %p256
      $region50: #{fwd.5} parent=11 // pred_check_branch
        %389 = sbr.rel (%p387) target = $region52
      $region51: #{fwd.5} parent=11 // pred_region
        _
      $region52: #{fwd.5} parent=11 // pred_fallthru
        _
      // Predicated region
      $region53: #{fwd.5} parent=11 // pred_check
        %p390 = pneg %p277
      $region54: #{fwd.5} parent=11 // pred_check_branch
        %392 = sbr.rel (%p390) target = $region56
      $region55: #{fwd.5} parent=11 // pred_region
        _
      $region56: #{fwd.5} parent=11 // pred_fallthru
        _
      // Predicated region
      $region57: #{fwd.5} parent=11 // pred_check
        %p393 = pneg %p298
      $region58: #{fwd.5} parent=11 // pred_check_branch
        %395 = sbr.rel (%p393) target = $region60
      $region59: #{fwd.5} parent=11 // pred_region
        _
      $region60: #{fwd.5} parent=11 // pred_fallthru
        _
      // Predicated region
      $region61: #{fwd.5} parent=11 // pred_check
        %p396 = pneg %p319
      $region62: #{fwd.5} parent=11 // pred_check_branch
        %398 = sbr.rel (%p396) target = $region64
      $region63: #{fwd.5} parent=11 // pred_region
        _
      $region64: #{fwd.5} parent=11 // pred_fallthru
        _
    $region12: #{fwd.5} parent=5 // pred_fallthru
      _
    %p399 = scmp.lt.s32.totalorder %s20, 2
    // Predicated region
    $region65: #{fwd.5} parent=5 // pred_check
      %p400 = pneg %p399
    $region66: #{fwd.5} parent=5 // pred_check_branch
      %402 = sbr.rel (%p400) target = $region68
    $region67: #{fwd.5} parent=5 // pred_region
      // Predicated region
      $region69: #{fwd.5} parent=67 // pred_check
        %p403 = pneg %p40
      $region70: #{fwd.5} parent=67 // pred_check_branch
        %405 = sbr.rel (%p403) target = $region72
      $region71: #{fwd.5} parent=67 // pred_region
        %p406 = scmp.lt.s32.totalorder %s20, 1
        %s407 = scalar_select %p406, %s20, 1
        %s408 = smul.addr %s407, 8
        %s409 = scalar_lea.vmem %s0, %s408
      $region72: #{fwd.5} parent=67 // pred_fallthru
        _
    $region68: #{fwd.5} parent=5 // pred_fallthru
      _
    %p410 = scmp.le.s32.totalorder 1, %s20
    %p411 = scmp.lt.s32.totalorder %s20, 3
    %p412 = pnand %p410, %p411
    %p413 = pneg %p412
    // Predicated region
    $region73: #{fwd.5} parent=5 // pred_check
      _
    $region74: #{fwd.5} parent=5 // pred_check_branch
      %415 = sbr.rel (%p412) target = $region76
    $region75: #{fwd.5} parent=5 // pred_region
      %s416 = ssub.s32 %s20, 1
      %p417 = scmp.lt.s32.totalorder %s25, 1
      %s418 = scalar_select %p417, %s25, 1
      %s419 = smul.addr %s418, 8
      %s420 = scalar_lea.vmem %s0, %s419
      %p421 = pneg %p46
      %p422 = pneg %p43
      %p423 = pneg %p67
      %p424 = pneg %p64
      %p425 = pneg %p88
      %p426 = pneg %p85
      %p427 = pneg %p109
      %p428 = pneg %p106
      %p429 = pneg %p130
      %p430 = pneg %p127
      %p431 = pneg %p151
      %p432 = pneg %p148
      %p433 = pneg %p172
      %p434 = pneg %p169
      %p435 = pneg %p193
      %p436 = pneg %p190
      %p437 = pneg %p214
      %p438 = pneg %p211
      %p439 = pneg %p235
      %p440 = pneg %p232
      %p441 = pneg %p256
      %p442 = pneg %p253
      %p443 = pneg %p277
      %p444 = pneg %p274
      %p445 = pneg %p298
      %p446 = pneg %p295
      %p447 = pneg %p319
      %p448 = pneg %p316
      %p449 = pneg %p345
      %p450 = pneg %p342
      %p451 = scmp.lt.s32.totalorder %s25, 1
      %s452 = scalar_select %p451, %s25, 1
      %s453 = smul.addr %s452, 8
      %s454 = scalar_lea.vmem %s14, %s453
      %p455 = scmp.lt.s32.totalorder %s25, 1
      %s456 = scalar_select %p455, %s25, 1
      %s457 = smul.addr %s456, 8
      %s458 = scalar_lea.vmem %s0, %s457
      %p459 = scmp.lt.s32.totalorder %s25, 1
      %s460 = scalar_select %p459, %s25, 1
      %s461 = smul.addr %s460, 8
      %s462 = scalar_lea.vmem %s14, %s461
      %v464 = vld [vmem:[%s458] sm:$0xff]
      %v465 = vld [vmem:[%s1] sm:$0xf]
      %v466 = vld [vmem:[%s1 + $0x4] sm:$0xf]
      %v467 = vld [vmem:[%s1 + $0x8] sm:$0xf]
      %v468 = vld [vmem:[%s1 + $0xc] sm:$0xf]
      %v469 = vld [vmem:[%s1 + $0x10] sm:$0xf]
      %v470 = vld [vmem:[%s1 + $0x14] sm:$0xf]
      %v471 = vld [vmem:[%s1 + $0x18] sm:$0xf]
      %v472 = vld [vmem:[%s1 + $0x1c] sm:$0xf]
      %v473 = vld [vmem:[%s1 + $0x20] sm:$0xf]
      %v474 = vld [vmem:[%s1 + $0x24] sm:$0xf]
      %v475 = vld [vmem:[%s1 + $0x28] sm:$0xf]
      %v476 = vld [vmem:[%s1 + $0x2c] sm:$0xf]
      %v477 = vld [vmem:[%s1 + $0x30] sm:$0xf]
      %v478 = vld [vmem:[%s1 + $0x34] sm:$0xf]
      %v479 = vld [vmem:[%s2] sm:$0x1]
      %v480 = vlaneseq
      %v481 = vshrl.u32 %v480, 7
      %v482 = vlaneseq
      %v483 = vshrl.u32 %v482, 7
      %v484 = vsub.s32 0, %v483
      %v485 = vrot.slane %v464, %v484
      %v486 = vlaneseq
      %v487 = vshrl.u32 %v486, 7
      %v488 = vsub.s32 7, %v487
      %v489 = vrot.slane %v464, %v488
      %v490 = vrot.slane %v464, 5
      %vm491 = vcmp.lt.s32.totalorder %v481, 3
      %vm492 = vcmp.ge.s32.totalorder %v481, 11
      %v493 = vsel %vm492, %v489, %v490
      %v494 = vsel %vm491, %v485, %v493
      %v495 = vrot.slane %v464, 6
      %vm496 = vcmp.lt.s32.totalorder %v481, 2
      %vm497 = vcmp.ge.s32.totalorder %v481, 10
      %v498 = vsel %vm497, %v489, %v495
      %v499 = vsel %vm496, %v485, %v498
      %v500 = vrot.slane %v464, 7
      %vm501 = vcmp.lt.s32.totalorder %v481, 1
      %vm502 = vcmp.ge.s32.totalorder %v481, 9
      %v503 = vsel %vm502, %v489, %v500
      %v504 = vsel %vm501, %v485, %v503
      %v505 = vrot.slane %v464, 1
      %vm506 = vcmp.lt.s32.totalorder %v481, 4294967295
      %vm507 = vcmp.ge.s32.totalorder %v481, 7
      %v508 = vsel %vm507, %v489, %v505
      %v509 = vsel %vm506, %v485, %v508
      %v510 = vrot.slane %v464, 2
      %vm511 = vcmp.lt.s32.totalorder %v481, 4294967294
      %vm512 = vcmp.ge.s32.totalorder %v481, 6
      %v513 = vsel %vm512, %v489, %v510
      %v514 = vsel %vm511, %v485, %v513
      %v515 = vrot.slane %v464, 3
      %vm516 = vcmp.lt.s32.totalorder %v481, 4294967293
      %vm517 = vcmp.ge.s32.totalorder %v481, 5
      %v518 = vsel %vm517, %v489, %v515
      %v519 = vsel %vm516, %v485, %v518
      %521 = vrot.lane.b32.xlu0 %v499, 16
      %v522 = vpop.permute.xlu0 %521
      %525 = vrot.lane.b32.xlu0 %v504, 32
      %v526 = vpop.permute.xlu0 %525
      %529 = vrot.lane.b32.xlu0 %v464, 48
      %v530 = vpop.permute.xlu0 %529
      %533 = vrot.lane.b32.xlu0 %v509, 64
      %v534 = vpop.permute.xlu0 %533
      %537 = vrot.lane.b32.xlu0 %v514, 80
      %v538 = vpop.permute.xlu0 %537
      %541 = vrot.lane.b32.xlu0 %v519, 96
      %v542 = vpop.permute.xlu0 %541
      %vm544 = vcmask 130048
      %v545 = vsel %vm544, %v494, %v522
      %vm546 = vcmask 261120
      %v547 = vsel %vm546, %v545, %v526
      %vm548 = vcmask 392192
      %v549 = vsel %vm548, %v547, %v530
      %vm550 = vcmask 523264
      %v551 = vsel %vm550, %v549, %v534
      %vm552 = vcmask 654336
      %v553 = vsel %vm552, %v551, %v538
      %vm554 = vcmask 785408
      %v555 = vsel %vm554, %v553, %v542
      %v556 = vpack.c.bf16 %v555, %v555
      %v558 = vlaneseq
      %v559 = vshrl.u32 %v558, 7
      %v560 = vsub.s32 0, %v559
      %v561 = vrot.slane %v479, %v560
      %v577 = vunpack.c.l.b16 %v465
      %v578 = vunpack.c.l.b16 %v466
      %v579 = vunpack.c.l.b16 %v467
      %v580 = vunpack.c.l.b16 %v468
      %v581 = vunpack.c.l.b16 %v469
      %v582 = vunpack.c.l.b16 %v470
      %v583 = vunpack.c.l.b16 %v471
      %v584 = vunpack.c.l.b16 %v472
      %v585 = vunpack.c.l.b16 %v473
      %v586 = vunpack.c.l.b16 %v474
      %v587 = vunpack.c.l.b16 %v475
      %v588 = vunpack.c.l.b16 %v476
      %v589 = vunpack.c.l.b16 %v477
      %v590 = vunpack.c.l.b16 %v478
      %v591 = vpack.c.b16 %v578, %v577
      %v592 = vpack.c.b16 %v580, %v579
      %v593 = vpack.c.b16 %v582, %v581
      %v594 = vpack.c.b16 %v584, %v583
      %v595 = vpack.c.b16 %v586, %v585
      %v596 = vpack.c.b16 %v588, %v587
      %v597 = vpack.c.b16 %v590, %v589
      %vm605 = vcmask 916480
      %v607 = vsel %vm605, %v556, 0
      %609 = vmatprep.subr.bf16.mxu0 0
      %610 = vmatpush1.bf16.msra.mxu0 %v591
      %611 = vmatprep.subr.bf16.mxu0 0
      %612 = vmatpush1.bf16.msra.mxu0 %v592
      %613 = vmatprep.subr.bf16.mxu0 0
      %614 = vmatpush1.bf16.msra.mxu0 %v593
      %615 = vmatprep.subr.bf16.mxu0 0
      %616 = vmatpush1.bf16.msra.mxu0 %v594
      %617 = vmatprep.subr.bf16.mxu0 0
      %618 = vmatpush1.bf16.msra.mxu0 %v595
      %619 = vmatprep.subr.bf16.mxu0 0
      %620 = vmatpush1.bf16.msra.mxu0 %v596
      %621 = vmatprep.subr.bf16.mxu0 0
      %622 = vmatpush1.bf16.msra.mxu0 %v597
      %623 = vmatprep.subr.bf16.mxu0 0
      %624 = vmatpush1.bf16.msra.mxu0 0
      %625 = vmatprep.subr.bf16.mxu0 0
      %626 = vmatpush1.bf16.msra.mxu0 0
      %627 = vmatprep.subr.bf16.mxu0 0
      %628 = vmatpush1.bf16.msra.mxu0 0
      %629 = vmatprep.subr.bf16.mxu0 0
      %630 = vmatpush1.bf16.msra.mxu0 0
      %631 = vmatprep.subr.bf16.mxu0 0
      %632 = vmatpush1.bf16.msra.mxu0 0
      %633 = vmatprep.subr.bf16.mxu0 0
      %634 = vmatpush1.bf16.msra.mxu0 0
      %635 = vmatprep.subr.bf16.mxu0 0
      %636 = vmatpush1.bf16.msra.mxu0 0
      %637 = vmatprep.subr.bf16.mxu0 0
      %638 = vmatpush1.bf16.msra.mxu0 0
      %639 = vmatprep.subr.bf16.mxu0 0
      %640 = vmatpush1.bf16.msra.mxu0 0
      %641 = vmatprep.mubr.bf16.mxu0 0
      %642 = vmatmul.mubr.bf16.gmra.mrb[0].mxu0 %v607
      %v643 = vpop.f32.mrb[0].mxu0
      %v644 = vadd.f32 %v561, %v643
      %v645 = vpop.f32.mrb[0].mxu0
      %v646 = vpop.f32.mrb[0].mxu0
      %v647 = vpop.f32.mrb[0].mxu0
      %648 = vdwg.mxu0
      %v649 = vld [vmem:[%s3] sm:$0x1]
      %v650 = vld [vmem:[%s4] sm:$0x1]
      %v651 = vsel %vm546, %v644, 0.0
      %652 = vadd.xlane.f32.xlu0 %v651
      %v653 = vpop.xlane.xlu0 %652
      %v654 = vrcp.pop 32.0
      %v655 = vmul.f32 %v653, %v654
      %v656 = vsub.f32 %v644, %v655
      %v657 = vmul.f32 %v656, %v656
      %v658 = vsel %vm546, %v657, 0.0
      %659 = vadd.xlane.f32.xlu0 %v658
      %v660 = vpop.xlane.xlu0 %659
      %v661 = vmul.f32 %v660, %v654
      %v662 = vadd.f32 %v661, 1e-06
      %v663 = vrsqrt.pop %v662
      %v664 = vmul.f32 %v656, %v663
      %v666 = vlaneseq
      %v667 = vshrl.u32 %v666, 7
      %v668 = vsub.s32 0, %v667
      %v669 = vrot.slane %v649, %v668
      %v671 = vmul.f32 %v664, %v669
      %v673 = vlaneseq
      %v674 = vshrl.u32 %v673, 7
      %v675 = vsub.s32 0, %v674
      %v676 = vrot.slane %v650, %v675
      %v678 = vadd.f32 %v671, %v676
      %v679 = vld [vmem:[%s5] sm:$0x7f]
      %v680 = vld [vmem:[%s6] sm:$0x1]
      %v681 = vld [vmem:[%s7] sm:$0x1]
      %v682 = vld [vmem:[%s8] sm:$0x1]
      %v683 = vld [vmem:[%s9] sm:$0xf]
      %v684 = vld [vmem:[%s9 + $0x4] sm:$0xf]
      %v685 = vld [vmem:[%s9 + $0x8] sm:$0xf]
      %v686 = vld [vmem:[%s9 + $0xc] sm:$0xf]
      %v687 = vld [vmem:[%s10] sm:$0x1]
      %v688 = vld [vmem:[%s11] sm:$0xf]
      %v689 = vld [vmem:[%s11 + $0x4] sm:$0xf]
      %v690 = vld [vmem:[%s11 + $0x8] sm:$0xf]
      %v691 = vld [vmem:[%s11 + $0xc] sm:$0xf]
      %v692 = vld [vmem:[%s11 + $0x10] sm:$0xf]
      %v693 = vld [vmem:[%s11 + $0x14] sm:$0xf]
      %v694 = vld [vmem:[%s11 + $0x18] sm:$0xf]
      %v695 = vld [vmem:[%s11 + $0x1c] sm:$0xf]
      %v696 = vld [vmem:[%s11 + $0x20] sm:$0xf]
      %v697 = vld [vmem:[%s11 + $0x24] sm:$0xf]
      %v698 = vld [vmem:[%s11 + $0x28] sm:$0xf]
      %v699 = vld [vmem:[%s11 + $0x2c] sm:$0xf]
      %v700 = vld [vmem:[%s11 + $0x30] sm:$0xf]
      %v701 = vld [vmem:[%s11 + $0x34] sm:$0xf]
      %v702 = vld [vmem:[%s11 + $0x38] sm:$0xf]
      %v703 = vld [vmem:[%s11 + $0x3c] sm:$0xf]
      %v704 = vld [vmem:[%s12] sm:$0x1]
      %v705 = vld [vmem:[%s13] sm:$0x1]
      %v706 = vlaneseq
      %v707 = vshrl.u32 %v706, 7
      %v708 = vsub.s32 3, %v707
      %v709 = vrot.slane %v679, %v708
      %v710 = vmul.f32 %v678, %v709
      %v711 = vrot.slane %v678, 5
      %vm712 = vcmp.ge.s32.totalorder %v481, 3
      %vm713 = vcmp.lt.s32.totalorder %v481, 11
      %vm714 = vmand %vm712, %vm713
      %v715 = vsel %vm714, %v711, 0.0
      %v716 = vlaneseq
      %v717 = vshrl.u32 %v716, 7
      %v718 = vsub.s32 0, %v717
      %v719 = vrot.slane %v679, %v718
      %v720 = vmul.f32 %v715, %v719
      %v721 = vadd.f32 %v710, %v720
      %v722 = vrot.slane %v678, 6
      %vm723 = vcmp.ge.s32.totalorder %v481, 2
      %vm724 = vcmp.lt.s32.totalorder %v481, 10
      %vm725 = vmand %vm723, %vm724
      %v726 = vsel %vm725, %v722, 0.0
      %v727 = vlaneseq
      %v728 = vshrl.u32 %v727, 7
      %v729 = vsub.s32 1, %v728
      %v730 = vrot.slane %v679, %v729
      %v731 = vmul.f32 %v726, %v730
      %v732 = vadd.f32 %v721, %v731
      %v733 = vrot.slane %v678, 7
      %vm734 = vcmp.ge.s32.totalorder %v481, 1
      %vm735 = vcmp.lt.s32.totalorder %v481, 9
      %vm736 = vmand %vm734, %vm735
      %v737 = vsel %vm736, %v733, 0.0
      %v738 = vlaneseq
      %v739 = vshrl.u32 %v738, 7
      %v740 = vsub.s32 2, %v739
      %v741 = vrot.slane %v679, %v740
      %v742 = vmul.f32 %v737, %v741
      %v743 = vadd.f32 %v732, %v742
      %v744 = vrot.slane %v678, 1
      %vm745 = vcmp.ge.s32.totalorder %v481, 4294967295
      %vm746 = vcmp.lt.s32.totalorder %v481, 7
      %vm747 = vmand %vm745, %vm746
      %v748 = vsel %vm747, %v744, 0.0
      %v749 = vlaneseq
      %v750 = vshrl.u32 %v749, 7
      %v751 = vsub.s32 4, %v750
      %v752 = vrot.slane %v679, %v751
      %v753 = vmul.f32 %v748, %v752
      %v754 = vadd.f32 %v743, %v753
      %v755 = vrot.slane %v678, 2
      %vm756 = vcmp.ge.s32.totalorder %v481, 4294967294
      %vm757 = vcmp.lt.s32.totalorder %v481, 6
      %vm758 = vmand %vm756, %vm757
      %v759 = vsel %vm758, %v755, 0.0
      %v760 = vlaneseq
      %v761 = vshrl.u32 %v760, 7
      %v762 = vsub.s32 5, %v761
      %v763 = vrot.slane %v679, %v762
      %v764 = vmul.f32 %v759, %v763
      %v765 = vadd.f32 %v754, %v764
      %v766 = vrot.slane %v678, 3
      %vm767 = vcmp.ge.s32.totalorder %v481, 4294967293
      %vm768 = vcmp.lt.s32.totalorder %v481, 5
      %vm769 = vmand %vm767, %vm768
      %v770 = vsel %vm769, %v766, 0.0
      %v771 = vlaneseq
      %v772 = vshrl.u32 %v771, 7
      %v773 = vsub.s32 6, %v772
      %v774 = vrot.slane %v679, %v773
      %v775 = vmul.f32 %v770, %v774
      %v776 = vadd.f32 %v765, %v775
      %v778 = vlaneseq
      %v779 = vshrl.u32 %v778, 7
      %v780 = vsub.s32 0, %v779
      %v781 = vrot.slane %v680, %v780
      %v783 = vadd.f32 %v776, %v781
      %v784 = vsel %vm546, %v783, 0.0
      %785 = vadd.xlane.f32.xlu0 %v784
      %v786 = vpop.xlane.xlu0 %785
      %v787 = vmul.f32 %v786, %v654
      %v788 = vsub.f32 %v783, %v787
      %v789 = vmul.f32 %v788, %v788
      %v790 = vsel %vm546, %v789, 0.0
      %791 = vadd.xlane.f32.xlu0 %v790
      %v792 = vpop.xlane.xlu0 %791
      %v793 = vmul.f32 %v792, %v654
      %v794 = vadd.f32 %v793, 1e-06
      %v795 = vrsqrt.pop %v794
      %v796 = vmul.f32 %v788, %v795
      %v798 = vlaneseq
      %v799 = vshrl.u32 %v798, 7
      %v800 = vsub.s32 0, %v799
      %v801 = vrot.slane %v681, %v800
      %v803 = vmul.f32 %v796, %v801
      %v805 = vlaneseq
      %v806 = vshrl.u32 %v805, 7
      %v807 = vsub.s32 0, %v806
      %v808 = vrot.slane %v682, %v807
      %v810 = vadd.f32 %v803, %v808
      %v811 = vpack.c.bf16 %v810, %v810
      %v813 = vlaneseq
      %v814 = vshrl.u32 %v813, 7
      %v815 = vsub.s32 0, %v814
      %v816 = vrot.slane %v687, %v815
      %v822 = vunpack.c.l.b16 %v683
      %v823 = vunpack.c.l.b16 %v684
      %v824 = vunpack.c.l.b16 %v685
      %v825 = vunpack.c.l.b16 %v686
      %v826 = vpack.c.b16 %v823, %v822
      %v827 = vpack.c.b16 %v825, %v824
      %v831 = vsel %vm546, %v811, 0
      %833 = vmatprep.subr.bf16.mxu0 0
      %834 = vmatpush1.bf16.msra.mxu0 %v826
      %835 = vmatprep.subr.bf16.mxu0 0
      %836 = vmatpush1.bf16.msra.mxu0 %v827
      %837 = vmatprep.subr.bf16.mxu0 0
      %838 = vmatpush1.bf16.msra.mxu0 0
      %839 = vmatprep.subr.bf16.mxu0 0
      %840 = vmatpush1.bf16.msra.mxu0 0
      %841 = vmatprep.subr.bf16.mxu0 0
      %842 = vmatpush1.bf16.msra.mxu0 0
      %843 = vmatprep.subr.bf16.mxu0 0
      %844 = vmatpush1.bf16.msra.mxu0 0
      %845 = vmatprep.subr.bf16.mxu0 0
      %846 = vmatpush1.bf16.msra.mxu0 0
      %847 = vmatprep.subr.bf16.mxu0 0
      %848 = vmatpush1.bf16.msra.mxu0 0
      %849 = vmatprep.subr.bf16.mxu0 0
      %850 = vmatpush1.bf16.msra.mxu0 0
      %851 = vmatprep.subr.bf16.mxu0 0
      %852 = vmatpush1.bf16.msra.mxu0 0
      %853 = vmatprep.subr.bf16.mxu0 0
      %854 = vmatpush1.bf16.msra.mxu0 0
      %855 = vmatprep.subr.bf16.mxu0 0
      %856 = vmatpush1.bf16.msra.mxu0 0
      %857 = vmatprep.subr.bf16.mxu0 0
      %858 = vmatpush1.bf16.msra.mxu0 0
      %859 = vmatprep.subr.bf16.mxu0 0
      %860 = vmatpush1.bf16.msra.mxu0 0
      %861 = vmatprep.subr.bf16.mxu0 0
      %862 = vmatpush1.bf16.msra.mxu0 0
      %863 = vmatprep.subr.bf16.mxu0 0
      %864 = vmatpush1.bf16.msra.mxu0 0
      %865 = vmatprep.mubr.bf16.mxu0 0
      %866 = vmatmul.mubr.bf16.gmra.mrb[0].mxu0 %v831
      %v867 = vpop.f32.mrb[0].mxu0
      %v868 = vadd.f32 %v816, %v867
      %v869 = vpop.f32.mrb[0].mxu0
      %v870 = vpop.f32.mrb[0].mxu0
      %v871 = vpop.f32.mrb[0].mxu0
      %872 = vdwg.mxu0
      %v873 = vmul.f32 %v868, 0.5
      %v874 = vmul.f32 %v868, 0.70710677
      %v875 = vand.u32 2147483647, %v874
      %v876 = vmul.f32 %v875, 0.3275911
      %v877 = vadd.f32 %v876, 1.0
      %v878 = vrcp.pop %v877
      %v879 = vmul.f32 %v878, 1.0614054
      %v880 = vadd.f32 %v879, -1.4531521
      %v881 = vmul.f32 %v878, %v880
      %v882 = vadd.f32 %v881, 1.4214138
      %v883 = vmul.f32 %v878, %v882
      %v884 = vadd.f32 %v883, -0.28449672
      %v885 = vmul.f32 %v878, %v884
      %v886 = vadd.f32 %v885, 0.2548296
      %v887 = vmul.f32 %v878, %v886
      %v888 = vsub.f32 0.0, %v875
      %v889 = vmul.f32 %v888, %v875
      %v890 = vmul.f32 %v889, 1.442695
      %v891 = vpow.pop %v890
      %v892 = vmul.f32 %v887, %v891
      %v893 = vsub.f32 1.0, %v892
      %vm894 = vcmp.ge.f32.partialorder %v874, 0.0
      %v895 = vsub.f32 0.0, %v893
      %v896 = vsel %vm894, %v893, %v895
      %v897 = vadd.f32 %v896, 1.0
      %v898 = vmul.f32 %v873, %v897
      %v899 = vpack.c.bf16 %v898, %v898
      %v901 = vlaneseq
      %v902 = vshrl.u32 %v901, 7
      %v903 = vsub.s32 0, %v902
      %v904 = vrot.slane %v704, %v903
      %v922 = vunpack.c.l.b16 %v688
      %v923 = vunpack.c.l.b16 %v689
      %v924 = vunpack.c.l.b16 %v690
      %v925 = vunpack.c.l.b16 %v691
      %v926 = vunpack.c.l.b16 %v692
      %v927 = vunpack.c.l.b16 %v693
      %v928 = vunpack.c.l.b16 %v694
      %v929 = vunpack.c.l.b16 %v695
      %v930 = vunpack.c.l.b16 %v696
      %v931 = vunpack.c.l.b16 %v697
      %v932 = vunpack.c.l.b16 %v698
      %v933 = vunpack.c.l.b16 %v699
      %v934 = vunpack.c.l.b16 %v700
      %v935 = vunpack.c.l.b16 %v701
      %v936 = vunpack.c.l.b16 %v702
      %v937 = vunpack.c.l.b16 %v703
      %v938 = vpack.c.b16 %v923, %v922
      %v939 = vpack.c.b16 %v925, %v924
      %v940 = vpack.c.b16 %v927, %v926
      %v941 = vpack.c.b16 %v929, %v928
      %v942 = vpack.c.b16 %v931, %v930
      %v943 = vpack.c.b16 %v933, %v932
      %v944 = vpack.c.b16 %v935, %v934
      %v945 = vpack.c.b16 %v937, %v936
      %954 = vmatprep.subr.bf16.mxu0 0
      %955 = vmatpush1.bf16.msra.mxu0 %v938
      %956 = vmatprep.subr.bf16.mxu0 0
      %957 = vmatpush1.bf16.msra.mxu0 %v939
      %958 = vmatprep.subr.bf16.mxu0 0
      %959 = vmatpush1.bf16.msra.mxu0 %v940
      %960 = vmatprep.subr.bf16.mxu0 0
      %961 = vmatpush1.bf16.msra.mxu0 %v941
      %962 = vmatprep.subr.bf16.mxu0 0
      %963 = vmatpush1.bf16.msra.mxu0 %v942
      %964 = vmatprep.subr.bf16.mxu0 0
      %965 = vmatpush1.bf16.msra.mxu0 %v943
      %966 = vmatprep.subr.bf16.mxu0 0
      %967 = vmatpush1.bf16.msra.mxu0 %v944
      %968 = vmatprep.subr.bf16.mxu0 0
      %969 = vmatpush1.bf16.msra.mxu0 %v945
      %970 = vmatprep.subr.bf16.mxu0 0
      %971 = vmatpush1.bf16.msra.mxu0 0
      %972 = vmatprep.subr.bf16.mxu0 0
      %973 = vmatpush1.bf16.msra.mxu0 0
      %974 = vmatprep.subr.bf16.mxu0 0
      %975 = vmatpush1.bf16.msra.mxu0 0
      %976 = vmatprep.subr.bf16.mxu0 0
      %977 = vmatpush1.bf16.msra.mxu0 0
      %978 = vmatprep.subr.bf16.mxu0 0
      %979 = vmatpush1.bf16.msra.mxu0 0
      %980 = vmatprep.subr.bf16.mxu0 0
      %981 = vmatpush1.bf16.msra.mxu0 0
      %982 = vmatprep.subr.bf16.mxu0 0
      %983 = vmatpush1.bf16.msra.mxu0 0
      %984 = vmatprep.subr.bf16.mxu0 0
      %985 = vmatpush1.bf16.msra.mxu0 0
      %986 = vmatprep.mubr.bf16.mxu0 0
      %987 = vmatmul.mubr.bf16.gmra.mrb[0].mxu0 %v899
      %v988 = vpop.f32.mrb[0].mxu0
      %v989 = vadd.f32 %v904, %v988
      %v990 = vpop.f32.mrb[0].mxu0
      %v991 = vpop.f32.mrb[0].mxu0
      %v992 = vpop.f32.mrb[0].mxu0
      %993 = vdwg.mxu0
      %v995 = vlaneseq
      %v996 = vshrl.u32 %v995, 7
      %v997 = vsub.s32 0, %v996
      %v998 = vrot.slane %v705, %v997
      %v1000 = vmul.f32 %v989, %v998
      %v1001 = vadd.f32 %v678, %v1000
      %1002 = vst.msk [vmem:[%s462] sm:$0xff] %vm546, %v1001
      %p1003 = scmp.lt.s32.totalorder %s25, 1
      %s1004 = scalar_select %p1003, %s25, 1
      %s1005 = smul.addr %s1004, 8
      %s1006 = scalar_lea.vmem %s14, %s1005
      // Predicated region
      $region77: #{fwd.5} parent=75 // pred_check
        %p1007 = pneg %p342
      $region78: #{fwd.5} parent=75 // pred_check_branch
        %1009 = sbr.rel (%p1007) target = $region80
      $region79: #{fwd.5} parent=75 // pred_region
        _
      $region80: #{fwd.5} parent=75 // pred_fallthru
        _
    $region76: #{fwd.5} parent=5 // pred_fallthru
      _
    %p1010 = scmp.le.s32.totalorder 2, %s20
    // Predicated region
    $region81: #{fwd.5} parent=5 // pred_check
      %p1011 = pneg %p1010
    $region82: #{fwd.5} parent=5 // pred_check_branch
      %1013 = sbr.rel (%p1011) target = $region84
    $region83: #{fwd.5} parent=5 // pred_region
      %s1014 = ssub.s32 %s20, 2
      // Predicated region
      $region85: #{fwd.5} parent=83 // pred_check
        %p1015 = pneg %p348
      $region86: #{fwd.5} parent=83 // pred_check_branch
        %1017 = sbr.rel (%p1015) target = $region88
      $region87: #{fwd.5} parent=83 // pred_region
        %p1018 = scmp.lt.s32.totalorder %s26, 1
        %s1019 = scalar_select %p1018, %s26, 1
        %s1020 = smul.addr %s1019, 8
        %s1021 = scalar_lea.vmem %s14, %s1020
      $region88: #{fwd.5} parent=83 // pred_fallthru
        _
    $region84: #{fwd.5} parent=5 // pred_fallthru
      _
  $region6: #{fwd.5} parent=0 // loop_footer
    %s24 = sadd.s32 1, %s20
  $region7: #{fwd.5} parent=0 // loop_footer_branch
    %19 = sbr.rel target = $region3
  $region8: #{fwd.5} parent=0 // loop_exit
    _

// kernel: fwd.6
$region0: #{fwd.6}
  #allocation0 [shape = 'u32[]', space=smem, size = 0x4, offset = 0x4, fixed_abs, tag = 'smem constant byte address 0x4 - core index']
  #allocation1 [shape = 'u32[144,128]{1,0:T(1,128)}', space=vmem, size = 0x12000, scoped, tag = 'internal scratch']
  %s0 = inlined_call_operand.vmem [shape: f32[2,8,32], index: 0, kind: input, shape index: {}]
  %s1 = inlined_call_operand.vmem [shape: f32[1,32], index: 1, kind: input, shape index: {}]
  %s2 = inlined_call_operand.vmem [shape: f32[1,32], index: 2, kind: input, shape index: {}]
  %s3 = inlined_call_operand.vmem [shape: bf16[32,48], index: 3, kind: input, shape index: {}]
  %s4 = inlined_call_operand.vmem [shape: f32[1,48], index: 4, kind: input, shape index: {}]
  %s5 = inlined_call_operand.vmem [shape: f32[7,48], index: 5, kind: input, shape index: {}]
  %s6 = inlined_call_operand.vmem [shape: f32[1,48], index: 6, kind: input, shape index: {}]
  %s7 = inlined_call_operand.vmem [shape: f32[1,48], index: 7, kind: input, shape index: {}]
  %s8 = inlined_call_operand.vmem [shape: f32[1,48], index: 8, kind: input, shape index: {}]
  %s9 = inlined_call_operand.vmem [shape: bf16[48,192], index: 9, kind: input, shape index: {}]
  %s10 = inlined_call_operand.vmem [shape: f32[1,192], index: 10, kind: input, shape index: {}]
  %s11 = inlined_call_operand.vmem [shape: bf16[192,48], index: 11, kind: input, shape index: {}]
  %s12 = inlined_call_operand.vmem [shape: f32[1,48], index: 12, kind: input, shape index: {}]
  %s13 = inlined_call_operand.vmem [shape: f32[1,48], index: 13, kind: input, shape index: {}]
  %s14 = inlined_call_operand.vmem [shape: f32[2,8,48], index: 14, kind: output, shape index: {}]
  %s15 = sld [smem:[#allocation0]]
  $region89: #{fwd.6} parent=0
    _
  %s17 = ssub.s32 1, %s15
  %s18 = scalar_select 0, %s17, %s15
  loop: start=0, step=1, limit=4
  $region2: #{fwd.6} parent=0 // loop_pre_header
    _
  $region3: #{fwd.6} parent=0 // loop_header
    %s20 = sphi 0, %s24
    %p21 = scmp.ge.s32.totalorder %s20, 4
    %s30 = sphi 0, %s32
    %s33 = sphi 0, %s30
    %s34 = sphi 0, %s33
    %s50 = sphi 0, %s34
    %s54 = sphi 0, %s54
    %s56 = sphi 0, %s54
    %s57 = sphi 0, %s56
    %s71 = sphi 0, %s57
    %s75 = sphi 0, %s75
    %s77 = sphi 0, %s75
    %s78 = sphi 0, %s77
    %s92 = sphi 0, %s78
    %s96 = sphi 0, %s96
    %s98 = sphi 0, %s96
    %s99 = sphi 0, %s98
    %s113 = sphi 0, %s99
    %s117 = sphi 0, %s117
    %s119 = sphi 0, %s117
    %s120 = sphi 0, %s119
    %s134 = sphi 0, %s120
    %s138 = sphi 0, %s138
    %s140 = sphi 0, %s138
    %s141 = sphi 0, %s140
    %s155 = sphi 0, %s141
    %s159 = sphi 0, %s159
    %s161 = sphi 0, %s159
    %s162 = sphi 0, %s161
    %s176 = sphi 0, %s162
    %s180 = sphi 0, %s180
    %s182 = sphi 0, %s180
    %s183 = sphi 0, %s182
    %s197 = sphi 0, %s183
    %s201 = sphi 0, %s201
    %s203 = sphi 0, %s201
    %s204 = sphi 0, %s203
    %s218 = sphi 0, %s204
    %s222 = sphi 0, %s222
    %s224 = sphi 0, %s222
    %s225 = sphi 0, %s224
    %s239 = sphi 0, %s225
    %s243 = sphi 0, %s243
    %s245 = sphi 0, %s243
    %s246 = sphi 0, %s245
    %s260 = sphi 0, %s246
    %s264 = sphi 0, %s264
    %s266 = sphi 0, %s264
    %s267 = sphi 0, %s266
    %s281 = sphi 0, %s267
    %s285 = sphi 0, %s285
    %s287 = sphi 0, %s285
    %s288 = sphi 0, %s287
    %s302 = sphi 0, %s288
    %s306 = sphi 0, %s306
    %s308 = sphi 0, %s306
    %s309 = sphi 0, %s308
    %s323 = sphi 0, %s309
    %s329 = sphi 0, %s331
    %s332 = sphi 0, %s329
    %s333 = sphi 0, %s332
    %s349 = sphi 0, %s333
  $region4: #{fwd.6} parent=0 // loop_header_branch
    %23 = sbr.rel (%p21) target = $region8
  $region5: #{fwd.6} parent=0 // loop_body
    %s25 = ssub.s32 %s20, 1
    %s26 = ssub.s32 %s20, 2
    %s27 = sadd.s32 %s20, 1
    %s28 = ssub.s32 %s20, %s27
    %p29 = scmp.eq.s32.totalorder %s28, 0
    %s31 = sadd.s32 %s30, 1
    %s32 = scalar_select %p29, %s30, %s31
    %p35 = pneg %p29
    %p36 = scmp.eq.s32.totalorder %s20, 1
    %p37 = por %p35, %p36
    %p38 = scmp.ne.s32.totalorder %s30, %s33
    %p39 = scmp.eq.s32.totalorder %s20, 0
    %p40 = por %p38, %p39
    %p41 = scmp.ne.s32.totalorder %s30, %s33
    %p42 = scmp.eq.s32.totalorder %s25, 1
    %p43 = por %p41, %p42
    %p44 = scmp.ne.s32.totalorder %s33, %s34
    %p45 = scmp.eq.s32.totalorder %s25, 0
    %p46 = por %p44, %p45
    %p47 = scmp.ne.s32.totalorder %s33, %s34
    %p48 = scmp.eq.s32.totalorder %s26, 1
    %p49 = por %p47, %p48
    %p51 = scmp.ne.s32.totalorder %s34, %s50
    %p52 = scmp.eq.s32.totalorder %s26, 0
    %p53 = por %p51, %p52
    %s55 = sadd.s32 %s54, 1
    %p58 = scmp.eq.s32.totalorder %s20, 1
    %p59 = scmp.ne.s32.totalorder %s54, %s56
    %p60 = scmp.eq.s32.totalorder %s20, 0
    %p61 = por %p59, %p60
    %p62 = scmp.ne.s32.totalorder %s54, %s56
    %p63 = scmp.eq.s32.totalorder %s25, 1
    %p64 = por %p62, %p63
    %p65 = scmp.ne.s32.totalorder %s56, %s57
    %p66 = scmp.eq.s32.totalorder %s25, 0
    %p67 = por %p65, %p66
    %p68 = scmp.ne.s32.totalorder %s56, %s57
    %p69 = scmp.eq.s32.totalorder %s26, 1
    %p70 = por %p68, %p69
    %p72 = scmp.ne.s32.totalorder %s57, %s71
    %p73 = scmp.eq.s32.totalorder %s26, 0
    %p74 = por %p72, %p73
    %s76 = sadd.s32 %s75, 1
    %p79 = scmp.eq.s32.totalorder %s20, 1
    %p80 = scmp.ne.s32.totalorder %s75, %s77
    %p81 = scmp.eq.s32.totalorder %s20, 0
    %p82 = por %p80, %p81
    %p83 = scmp.ne.s32.totalorder %s75, %s77
    %p84 = scmp.eq.s32.totalorder %s25, 1
    %p85 = por %p83, %p84
    %p86 = scmp.ne.s32.totalorder %s77, %s78
    %p87 = scmp.eq.s32.totalorder %s25, 0
    %p88 = por %p86, %p87
    %p89 = scmp.ne.s32.totalorder %s77, %s78
    %p90 = scmp.eq.s32.totalorder %s26, 1
    %p91 = por %p89, %p90
    %p93 = scmp.ne.s32.totalorder %s78, %s92
    %p94 = scmp.eq.s32.totalorder %s26, 0
    %p95 = por %p93, %p94
    %s97 = sadd.s32 %s96, 1
    %p100 = scmp.eq.s32.totalorder %s20, 1
    %p101 = scmp.ne.s32.totalorder %s96, %s98
    %p102 = scmp.eq.s32.totalorder %s20, 0
    %p103 = por %p101, %p102
    %p104 = scmp.ne.s32.totalorder %s96, %s98
    %p105 = scmp.eq.s32.totalorder %s25, 1
    %p106 = por %p104, %p105
    %p107 = scmp.ne.s32.totalorder %s98, %s99
    %p108 = scmp.eq.s32.totalorder %s25, 0
    %p109 = por %p107, %p108
    %p110 = scmp.ne.s32.totalorder %s98, %s99
    %p111 = scmp.eq.s32.totalorder %s26, 1
    %p112 = por %p110, %p111
    %p114 = scmp.ne.s32.totalorder %s99, %s113
    %p115 = scmp.eq.s32.totalorder %s26, 0
    %p116 = por %p114, %p115
    %s118 = sadd.s32 %s117, 1
    %p121 = scmp.eq.s32.totalorder %s20, 1
    %p122 = scmp.ne.s32.totalorder %s117, %s119
    %p123 = scmp.eq.s32.totalorder %s20, 0
    %p124 = por %p122, %p123
    %p125 = scmp.ne.s32.totalorder %s117, %s119
    %p126 = scmp.eq.s32.totalorder %s25, 1
    %p127 = por %p125, %p126
    %p128 = scmp.ne.s32.totalorder %s119, %s120
    %p129 = scmp.eq.s32.totalorder %s25, 0
    %p130 = por %p128, %p129
    %p131 = scmp.ne.s32.totalorder %s119, %s120
    %p132 = scmp.eq.s32.totalorder %s26, 1
    %p133 = por %p131, %p132
    %p135 = scmp.ne.s32.totalorder %s120, %s134
    %p136 = scmp.eq.s32.totalorder %s26, 0
    %p137 = por %p135, %p136
    %s139 = sadd.s32 %s138, 1
    %p142 = scmp.eq.s32.totalorder %s20, 1
    %p143 = scmp.ne.s32.totalorder %s138, %s140
    %p144 = scmp.eq.s32.totalorder %s20, 0
    %p145 = por %p143, %p144
    %p146 = scmp.ne.s32.totalorder %s138, %s140
    %p147 = scmp.eq.s32.totalorder %s25, 1
    %p148 = por %p146, %p147
    %p149 = scmp.ne.s32.totalorder %s140, %s141
    %p150 = scmp.eq.s32.totalorder %s25, 0
    %p151 = por %p149, %p150
    %p152 = scmp.ne.s32.totalorder %s140, %s141
    %p153 = scmp.eq.s32.totalorder %s26, 1
    %p154 = por %p152, %p153
    %p156 = scmp.ne.s32.totalorder %s141, %s155
    %p157 = scmp.eq.s32.totalorder %s26, 0
    %p158 = por %p156, %p157
    %s160 = sadd.s32 %s159, 1
    %p163 = scmp.eq.s32.totalorder %s20, 1
    %p164 = scmp.ne.s32.totalorder %s159, %s161
    %p165 = scmp.eq.s32.totalorder %s20, 0
    %p166 = por %p164, %p165
    %p167 = scmp.ne.s32.totalorder %s159, %s161
    %p168 = scmp.eq.s32.totalorder %s25, 1
    %p169 = por %p167, %p168
    %p170 = scmp.ne.s32.totalorder %s161, %s162
    %p171 = scmp.eq.s32.totalorder %s25, 0
    %p172 = por %p170, %p171
    %p173 = scmp.ne.s32.totalorder %s161, %s162
    %p174 = scmp.eq.s32.totalorder %s26, 1
    %p175 = por %p173, %p174
    %p177 = scmp.ne.s32.totalorder %s162, %s176
    %p178 = scmp.eq.s32.totalorder %s26, 0
    %p179 = por %p177, %p178
    %s181 = sadd.s32 %s180, 1
    %p184 = scmp.eq.s32.totalorder %s20, 1
    %p185 = scmp.ne.s32.totalorder %s180, %s182
    %p186 = scmp.eq.s32.totalorder %s20, 0
    %p187 = por %p185, %p186
    %p188 = scmp.ne.s32.totalorder %s180, %s182
    %p189 = scmp.eq.s32.totalorder %s25, 1
    %p190 = por %p188, %p189
    %p191 = scmp.ne.s32.totalorder %s182, %s183
    %p192 = scmp.eq.s32.totalorder %s25, 0
    %p193 = por %p191, %p192
    %p194 = scmp.ne.s32.totalorder %s182, %s183
    %p195 = scmp.eq.s32.totalorder %s26, 1
    %p196 = por %p194, %p195
    %p198 = scmp.ne.s32.totalorder %s183, %s197
    %p199 = scmp.eq.s32.totalorder %s26, 0
    %p200 = por %p198, %p199
    %s202 = sadd.s32 %s201, 1
    %p205 = scmp.eq.s32.totalorder %s20, 1
    %p206 = scmp.ne.s32.totalorder %s201, %s203
    %p207 = scmp.eq.s32.totalorder %s20, 0
    %p208 = por %p206, %p207
    %p209 = scmp.ne.s32.totalorder %s201, %s203
    %p210 = scmp.eq.s32.totalorder %s25, 1
    %p211 = por %p209, %p210
    %p212 = scmp.ne.s32.totalorder %s203, %s204
    %p213 = scmp.eq.s32.totalorder %s25, 0
    %p214 = por %p212, %p213
    %p215 = scmp.ne.s32.totalorder %s203, %s204
    %p216 = scmp.eq.s32.totalorder %s26, 1
    %p217 = por %p215, %p216
    %p219 = scmp.ne.s32.totalorder %s204, %s218
    %p220 = scmp.eq.s32.totalorder %s26, 0
    %p221 = por %p219, %p220
    %s223 = sadd.s32 %s222, 1
    %p226 = scmp.eq.s32.totalorder %s20, 1
    %p227 = scmp.ne.s32.totalorder %s222, %s224
    %p228 = scmp.eq.s32.totalorder %s20, 0
    %p229 = por %p227, %p228
    %p230 = scmp.ne.s32.totalorder %s222, %s224
    %p231 = scmp.eq.s32.totalorder %s25, 1
    %p232 = por %p230, %p231
    %p233 = scmp.ne.s32.totalorder %s224, %s225
    %p234 = scmp.eq.s32.totalorder %s25, 0
    %p235 = por %p233, %p234
    %p236 = scmp.ne.s32.totalorder %s224, %s225
    %p237 = scmp.eq.s32.totalorder %s26, 1
    %p238 = por %p236, %p237
    %p240 = scmp.ne.s32.totalorder %s225, %s239
    %p241 = scmp.eq.s32.totalorder %s26, 0
    %p242 = por %p240, %p241
    %s244 = sadd.s32 %s243, 1
    %p247 = scmp.eq.s32.totalorder %s20, 1
    %p248 = scmp.ne.s32.totalorder %s243, %s245
    %p249 = scmp.eq.s32.totalorder %s20, 0
    %p250 = por %p248, %p249
    %p251 = scmp.ne.s32.totalorder %s243, %s245
    %p252 = scmp.eq.s32.totalorder %s25, 1
    %p253 = por %p251, %p252
    %p254 = scmp.ne.s32.totalorder %s245, %s246
    %p255 = scmp.eq.s32.totalorder %s25, 0
    %p256 = por %p254, %p255
    %p257 = scmp.ne.s32.totalorder %s245, %s246
    %p258 = scmp.eq.s32.totalorder %s26, 1
    %p259 = por %p257, %p258
    %p261 = scmp.ne.s32.totalorder %s246, %s260
    %p262 = scmp.eq.s32.totalorder %s26, 0
    %p263 = por %p261, %p262
    %s265 = sadd.s32 %s264, 1
    %p268 = scmp.eq.s32.totalorder %s20, 1
    %p269 = scmp.ne.s32.totalorder %s264, %s266
    %p270 = scmp.eq.s32.totalorder %s20, 0
    %p271 = por %p269, %p270
    %p272 = scmp.ne.s32.totalorder %s264, %s266
    %p273 = scmp.eq.s32.totalorder %s25, 1
    %p274 = por %p272, %p273
    %p275 = scmp.ne.s32.totalorder %s266, %s267
    %p276 = scmp.eq.s32.totalorder %s25, 0
    %p277 = por %p275, %p276
    %p278 = scmp.ne.s32.totalorder %s266, %s267
    %p279 = scmp.eq.s32.totalorder %s26, 1
    %p280 = por %p278, %p279
    %p282 = scmp.ne.s32.totalorder %s267, %s281
    %p283 = scmp.eq.s32.totalorder %s26, 0
    %p284 = por %p282, %p283
    %s286 = sadd.s32 %s285, 1
    %p289 = scmp.eq.s32.totalorder %s20, 1
    %p290 = scmp.ne.s32.totalorder %s285, %s287
    %p291 = scmp.eq.s32.totalorder %s20, 0
    %p292 = por %p290, %p291
    %p293 = scmp.ne.s32.totalorder %s285, %s287
    %p294 = scmp.eq.s32.totalorder %s25, 1
    %p295 = por %p293, %p294
    %p296 = scmp.ne.s32.totalorder %s287, %s288
    %p297 = scmp.eq.s32.totalorder %s25, 0
    %p298 = por %p296, %p297
    %p299 = scmp.ne.s32.totalorder %s287, %s288
    %p300 = scmp.eq.s32.totalorder %s26, 1
    %p301 = por %p299, %p300
    %p303 = scmp.ne.s32.totalorder %s288, %s302
    %p304 = scmp.eq.s32.totalorder %s26, 0
    %p305 = por %p303, %p304
    %s307 = sadd.s32 %s306, 1
    %p310 = scmp.eq.s32.totalorder %s20, 1
    %p311 = scmp.ne.s32.totalorder %s306, %s308
    %p312 = scmp.eq.s32.totalorder %s20, 0
    %p313 = por %p311, %p312
    %p314 = scmp.ne.s32.totalorder %s306, %s308
    %p315 = scmp.eq.s32.totalorder %s25, 1
    %p316 = por %p314, %p315
    %p317 = scmp.ne.s32.totalorder %s308, %s309
    %p318 = scmp.eq.s32.totalorder %s25, 0
    %p319 = por %p317, %p318
    %p320 = scmp.ne.s32.totalorder %s308, %s309
    %p321 = scmp.eq.s32.totalorder %s26, 1
    %p322 = por %p320, %p321
    %p324 = scmp.ne.s32.totalorder %s309, %s323
    %p325 = scmp.eq.s32.totalorder %s26, 0
    %p326 = por %p324, %p325
    %s327 = ssub.s32 %s20, %s27
    %p328 = scmp.eq.s32.totalorder %s327, 0
    %s330 = sadd.s32 %s329, 1
    %s331 = scalar_select %p328, %s329, %s330
    %p334 = pneg %p328
    %p335 = scmp.eq.s32.totalorder %s20, 1
    %p336 = por %p334, %p335
    %p337 = scmp.ne.s32.totalorder %s329, %s332
    %p338 = scmp.eq.s32.totalorder %s20, 0
    %p339 = por %p337, %p338
    %p340 = scmp.ne.s32.totalorder %s329, %s332
    %p341 = scmp.eq.s32.totalorder %s25, 1
    %p342 = por %p340, %p341
    %p343 = scmp.ne.s32.totalorder %s332, %s333
    %p344 = scmp.eq.s32.totalorder %s25, 0
    %p345 = por %p343, %p344
    %p346 = scmp.ne.s32.totalorder %s332, %s333
    %p347 = scmp.eq.s32.totalorder %s26, 1
    %p348 = por %p346, %p347
    %p350 = scmp.ne.s32.totalorder %s333, %s349
    %p351 = scmp.eq.s32.totalorder %s26, 0
    %p352 = por %p350, %p351
    %p353 = scmp.le.s32.totalorder 1, %s20
    %p354 = scmp.lt.s32.totalorder %s20, 3
    %p355 = pnand %p353, %p354
    %p356 = pneg %p355
    // Predicated region
    $region9: #{fwd.6} parent=5 // pred_check
      _
    $region10: #{fwd.6} parent=5 // pred_check_branch
      %358 = sbr.rel (%p355) target = $region12
    $region11: #{fwd.6} parent=5 // pred_region
      %s359 = ssub.s32 %s20, 1
      // Predicated region
      $region13: #{fwd.6} parent=11 // pred_check
        %p360 = pneg %p67
      $region14: #{fwd.6} parent=11 // pred_check_branch
        %362 = sbr.rel (%p360) target = $region16
      $region15: #{fwd.6} parent=11 // pred_region
        _
      $region16: #{fwd.6} parent=11 // pred_fallthru
        _
      // Predicated region
      $region17: #{fwd.6} parent=11 // pred_check
        %p363 = pneg %p88
      $region18: #{fwd.6} parent=11 // pred_check_branch
        %365 = sbr.rel (%p363) target = $region20
      $region19: #{fwd.6} parent=11 // pred_region
        _
      $region20: #{fwd.6} parent=11 // pred_fallthru
        _
      // Predicated region
      $region21: #{fwd.6} parent=11 // pred_check
        %p366 = pneg %p109
      $region22: #{fwd.6} parent=11 // pred_check_branch
        %368 = sbr.rel (%p366) target = $region24
      $region23: #{fwd.6} parent=11 // pred_region
        _
      $region24: #{fwd.6} parent=11 // pred_fallthru
        _
      // Predicated region
      $region25: #{fwd.6} parent=11 // pred_check
        %p369 = pneg %p130
      $region26: #{fwd.6} parent=11 // pred_check_branch
        %371 = sbr.rel (%p369) target = $region28
      $region27: #{fwd.6} parent=11 // pred_region
        _
      $region28: #{fwd.6} parent=11 // pred_fallthru
        _
      // Predicated region
      $region29: #{fwd.6} parent=11 // pred_check
        %p372 = pneg %p151
      $region30: #{fwd.6} parent=11 // pred_check_branch
        %374 = sbr.rel (%p372) target = $region32
      $region31: #{fwd.6} parent=11 // pred_region
        _
      $region32: #{fwd.6} parent=11 // pred_fallthru
        _
      // Predicated region
      $region33: #{fwd.6} parent=11 // pred_check
        %p375 = pneg %p172
      $region34: #{fwd.6} parent=11 // pred_check_branch
        %377 = sbr.rel (%p375) target = $region36
      $region35: #{fwd.6} parent=11 // pred_region
        _
      $region36: #{fwd.6} parent=11 // pred_fallthru
        _
      // Predicated region
      $region37: #{fwd.6} parent=11 // pred_check
        %p378 = pneg %p193
      $region38: #{fwd.6} parent=11 // pred_check_branch
        %380 = sbr.rel (%p378) target = $region40
      $region39: #{fwd.6} parent=11 // pred_region
        _
      $region40: #{fwd.6} parent=11 // pred_fallthru
        _
      // Predicated region
      $region41: #{fwd.6} parent=11 // pred_check
        %p381 = pneg %p214
      $region42: #{fwd.6} parent=11 // pred_check_branch
        %383 = sbr.rel (%p381) target = $region44
      $region43: #{fwd.6} parent=11 // pred_region
        _
      $region44: #{fwd.6} parent=11 // pred_fallthru
        _
      // Predicated region
      $region45: #{fwd.6} parent=11 // pred_check
        %p384 = pneg %p235
      $region46: #{fwd.6} parent=11 // pred_check_branch
        %386 = sbr.rel (%p384) target = $region48
      $region47: #{fwd.6} parent=11 // pred_region
        _
      $region48: #{fwd.6} parent=11 // pred_fallthru
        _
      // Predicated region
      $region49: #{fwd.6} parent=11 // pred_check
        %p387 = pneg %p256
      $region50: #{fwd.6} parent=11 // pred_check_branch
        %389 = sbr.rel (%p387) target = $region52
      $region51: #{fwd.6} parent=11 // pred_region
        _
      $region52: #{fwd.6} parent=11 // pred_fallthru
        _
      // Predicated region
      $region53: #{fwd.6} parent=11 // pred_check
        %p390 = pneg %p277
      $region54: #{fwd.6} parent=11 // pred_check_branch
        %392 = sbr.rel (%p390) target = $region56
      $region55: #{fwd.6} parent=11 // pred_region
        _
      $region56: #{fwd.6} parent=11 // pred_fallthru
        _
      // Predicated region
      $region57: #{fwd.6} parent=11 // pred_check
        %p393 = pneg %p298
      $region58: #{fwd.6} parent=11 // pred_check_branch
        %395 = sbr.rel (%p393) target = $region60
      $region59: #{fwd.6} parent=11 // pred_region
        _
      $region60: #{fwd.6} parent=11 // pred_fallthru
        _
      // Predicated region
      $region61: #{fwd.6} parent=11 // pred_check
        %p396 = pneg %p319
      $region62: #{fwd.6} parent=11 // pred_check_branch
        %398 = sbr.rel (%p396) target = $region64
      $region63: #{fwd.6} parent=11 // pred_region
        _
      $region64: #{fwd.6} parent=11 // pred_fallthru
        _
    $region12: #{fwd.6} parent=5 // pred_fallthru
      _
    %p399 = scmp.lt.s32.totalorder %s20, 2
    // Predicated region
    $region65: #{fwd.6} parent=5 // pred_check
      %p400 = pneg %p399
    $region66: #{fwd.6} parent=5 // pred_check_branch
      %402 = sbr.rel (%p400) target = $region68
    $region67: #{fwd.6} parent=5 // pred_region
      // Predicated region
      $region69: #{fwd.6} parent=67 // pred_check
        %p403 = pneg %p40
      $region70: #{fwd.6} parent=67 // pred_check_branch
        %405 = sbr.rel (%p403) target = $region72
      $region71: #{fwd.6} parent=67 // pred_region
        %p406 = scmp.lt.s32.totalorder %s20, 1
        %s407 = scalar_select %p406, %s20, 1
        %s408 = smul.addr %s407, 8
        %s409 = scalar_lea.vmem %s0, %s408
      $region72: #{fwd.6} parent=67 // pred_fallthru
        _
    $region68: #{fwd.6} parent=5 // pred_fallthru
      _
    %p410 = scmp.le.s32.totalorder 1, %s20
    %p411 = scmp.lt.s32.totalorder %s20, 3
    %p412 = pnand %p410, %p411
    %p413 = pneg %p412
    // Predicated region
    $region73: #{fwd.6} parent=5 // pred_check
      _
    $region74: #{fwd.6} parent=5 // pred_check_branch
      %415 = sbr.rel (%p412) target = $region76
    $region75: #{fwd.6} parent=5 // pred_region
      %s416 = ssub.s32 %s20, 1
      %p417 = scmp.lt.s32.totalorder %s25, 1
      %s418 = scalar_select %p417, %s25, 1
      %s419 = smul.addr %s418, 8
      %s420 = scalar_lea.vmem %s0, %s419
      %p421 = pneg %p46
      %p422 = pneg %p43
      %p423 = pneg %p67
      %p424 = pneg %p64
      %p425 = pneg %p88
      %p426 = pneg %p85
      %p427 = pneg %p109
      %p428 = pneg %p106
      %p429 = pneg %p130
      %p430 = pneg %p127
      %p431 = pneg %p151
      %p432 = pneg %p148
      %p433 = pneg %p172
      %p434 = pneg %p169
      %p435 = pneg %p193
      %p436 = pneg %p190
      %p437 = pneg %p214
      %p438 = pneg %p211
      %p439 = pneg %p235
      %p440 = pneg %p232
      %p441 = pneg %p256
      %p442 = pneg %p253
      %p443 = pneg %p277
      %p444 = pneg %p274
      %p445 = pneg %p298
      %p446 = pneg %p295
      %p447 = pneg %p319
      %p448 = pneg %p316
      %p449 = pneg %p345
      %p450 = pneg %p342
      %p451 = scmp.lt.s32.totalorder %s25, 1
      %s452 = scalar_select %p451, %s25, 1
      %s453 = smul.addr %s452, 8
      %s454 = scalar_lea.vmem %s14, %s453
      %p455 = scmp.lt.s32.totalorder %s25, 1
      %s456 = scalar_select %p455, %s25, 1
      %s457 = smul.addr %s456, 8
      %s458 = scalar_lea.vmem %s0, %s457
      %p459 = scmp.lt.s32.totalorder %s25, 1
      %s460 = scalar_select %p459, %s25, 1
      %s461 = smul.addr %s460, 8
      %s462 = scalar_lea.vmem %s14, %s461
      %v464 = vld [vmem:[%s458] sm:$0xff]
      %v465 = vld [vmem:[%s1] sm:$0x1]
      %v466 = vld [vmem:[%s2] sm:$0x1]
      %vm467 = vcmask 261120
      %v468 = vsel %vm467, %v464, 0.0
      %469 = vadd.xlane.f32.xlu0 %v468
      %v470 = vpop.xlane.xlu0 %469
      %v471 = vrcp.pop 32.0
      %v472 = vmul.f32 %v470, %v471
      %v473 = vsub.f32 %v464, %v472
      %v474 = vmul.f32 %v473, %v473
      %v475 = vsel %vm467, %v474, 0.0
      %476 = vadd.xlane.f32.xlu0 %v475
      %v477 = vpop.xlane.xlu0 %476
      %v478 = vmul.f32 %v477, %v471
      %v479 = vadd.f32 %v478, 1e-06
      %v480 = vrsqrt.pop %v479
      %v481 = vmul.f32 %v473, %v480
      %v483 = vlaneseq
      %v484 = vshrl.u32 %v483, 7
      %v485 = vsub.s32 0, %v484
      %v486 = vrot.slane %v465, %v485
      %v488 = vmul.f32 %v481, %v486
      %v490 = vlaneseq
      %v491 = vshrl.u32 %v490, 7
      %v492 = vsub.s32 0, %v491
      %v493 = vrot.slane %v466, %v492
      %v495 = vadd.f32 %v488, %v493
      %v496 = vpack.c.bf16 %v495, %v495
      %v497 = vld [vmem:[%s3] sm:$0xf]
      %v498 = vld [vmem:[%s3 + $0x4] sm:$0xf]
      %v499 = vld [vmem:[%s3 + $0x8] sm:$0xf]
      %v500 = vld [vmem:[%s3 + $0xc] sm:$0xf]
      %v501 = vld [vmem:[%s4] sm:$0x1]
      %v503 = vlaneseq
      %v504 = vshrl.u32 %v503, 7
      %v505 = vsub.s32 0, %v504
      %v506 = vrot.slane %v501, %v505
      %v512 = vunpack.c.l.b16 %v497
      %v513 = vunpack.c.l.b16 %v498
      %v514 = vunpack.c.l.b16 %v499
      %v515 = vunpack.c.l.b16 %v500
      %v516 = vpack.c.b16 %v513, %v512
      %v517 = vpack.c.b16 %v515, %v514
      %v521 = vsel %vm467, %v496, 0
      %523 = vmatprep.subr.bf16.mxu0 0
      %524 = vmatpush1.bf16.msra.mxu0 %v516
      %525 = vmatprep.subr.bf16.mxu0 0
      %526 = vmatpush1.bf16.msra.mxu0 %v517
      %527 = vmatprep.subr.bf16.mxu0 0
      %528 = vmatpush1.bf16.msra.mxu0 0
      %529 = vmatprep.subr.bf16.mxu0 0
      %530 = vmatpush1.bf16.msra.mxu0 0
      %531 = vmatprep.subr.bf16.mxu0 0
      %532 = vmatpush1.bf16.msra.mxu0 0
      %533 = vmatprep.subr.bf16.mxu0 0
      %534 = vmatpush1.bf16.msra.mxu0 0
      %535 = vmatprep.subr.bf16.mxu0 0
      %536 = vmatpush1.bf16.msra.mxu0 0
      %537 = vmatprep.subr.bf16.mxu0 0
      %538 = vmatpush1.bf16.msra.mxu0 0
      %539 = vmatprep.subr.bf16.mxu0 0
      %540 = vmatpush1.bf16.msra.mxu0 0
      %541 = vmatprep.subr.bf16.mxu0 0
      %542 = vmatpush1.bf16.msra.mxu0 0
      %543 = vmatprep.subr.bf16.mxu0 0
      %544 = vmatpush1.bf16.msra.mxu0 0
      %545 = vmatprep.subr.bf16.mxu0 0
      %546 = vmatpush1.bf16.msra.mxu0 0
      %547 = vmatprep.subr.bf16.mxu0 0
      %548 = vmatpush1.bf16.msra.mxu0 0
      %549 = vmatprep.subr.bf16.mxu0 0
      %550 = vmatpush1.bf16.msra.mxu0 0
      %551 = vmatprep.subr.bf16.mxu0 0
      %552 = vmatpush1.bf16.msra.mxu0 0
      %553 = vmatprep.subr.bf16.mxu0 0
      %554 = vmatpush1.bf16.msra.mxu0 0
      %555 = vmatprep.mubr.bf16.mxu0 0
      %556 = vmatmul.mubr.bf16.gmra.mrb[0].mxu0 %v521
      %v557 = vpop.f32.mrb[0].mxu0
      %v558 = vadd.f32 %v506, %v557
      %v559 = vpop.f32.mrb[0].mxu0
      %v560 = vpop.f32.mrb[0].mxu0
      %v561 = vpop.f32.mrb[0].mxu0
      %562 = vdwg.mxu0
      %v563 = vld [vmem:[%s5] sm:$0x7f]
      %v564 = vld [vmem:[%s6] sm:$0x1]
      %v565 = vld [vmem:[%s7] sm:$0x1]
      %v566 = vld [vmem:[%s8] sm:$0x1]
      %v567 = vld [vmem:[%s9] sm:$0xff]
      %v568 = vld [vmem:[%s9 + $0x8] sm:$0xff]
      %v569 = vld [vmem:[%s9 + $0x10] sm:$0xff]
      %v570 = vld [vmem:[%s9 + $0x18] sm:$0xff]
      %v571 = vld [vmem:[%s9 + $0x20] sm:$0xff]
      %v572 = vld [vmem:[%s9 + $0x28] sm:$0xff]
      %v573 = vld [vmem:[%s10] sm:$0x3]
      %v574 = vld [vmem:[%s11] sm:$0xf]
      %v575 = vld [vmem:[%s11 + $0x4] sm:$0xf]
      %v576 = vld [vmem:[%s11 + $0x8] sm:$0xf]
      %v577 = vld [vmem:[%s11 + $0xc] sm:$0xf]
      %v578 = vld [vmem:[%s11 + $0x10] sm:$0xf]
      %v579 = vld [vmem:[%s11 + $0x14] sm:$0xf]
      %v580 = vld [vmem:[%s11 + $0x18] sm:$0xf]
      %v581 = vld [vmem:[%s11 + $0x1c] sm:$0xf]
      %v582 = vld [vmem:[%s11 + $0x20] sm:$0xf]
      %v583 = vld [vmem:[%s11 + $0x24] sm:$0xf]
      %v584 = vld [vmem:[%s11 + $0x28] sm:$0xf]
      %v585 = vld [vmem:[%s11 + $0x2c] sm:$0xf]
      %v586 = vld [vmem:[%s11 + $0x30] sm:$0xf]
      %v587 = vld [vmem:[%s11 + $0x34] sm:$0xf]
      %v588 = vld [vmem:[%s11 + $0x38] sm:$0xf]
      %v589 = vld [vmem:[%s11 + $0x3c] sm:$0xf]
      %v590 = vld [vmem:[%s11 + $0x40] sm:$0xf]
      %v591 = vld [vmem:[%s11 + $0x44] sm:$0xf]
      %v592 = vld [vmem:[%s11 + $0x48] sm:$0xf]
      %v593 = vld [vmem:[%s11 + $0x4c] sm:$0xf]
      %v594 = vld [vmem:[%s11 + $0x50] sm:$0xf]
      %v595 = vld [vmem:[%s11 + $0x54] sm:$0xf]
      %v596 = vld [vmem:[%s11 + $0x58] sm:$0xf]
      %v597 = vld [vmem:[%s11 + $0x5c] sm:$0xf]
      %v598 = vld [vmem:[%s12] sm:$0x1]
      %v599 = vld [vmem:[%s13] sm:$0x1]
      %v600 = vlaneseq
      %v601 = vshrl.u32 %v600, 7
      %v602 = vlaneseq
      %v603 = vshrl.u32 %v602, 7
      %v604 = vsub.s32 3, %v603
      %v605 = vrot.slane %v563, %v604
      %v606 = vmul.f32 %v558, %v605
      %v607 = vrot.slane %v558, 5
      %vm608 = vcmp.ge.s32.totalorder %v601, 3
      %vm609 = vcmp.lt.s32.totalorder %v601, 11
      %vm610 = vmand %vm608, %vm609
      %v611 = vsel %vm610, %v607, 0.0
      %v612 = vlaneseq
      %v613 = vshrl.u32 %v612, 7
      %v614 = vsub.s32 0, %v613
      %v615 = vrot.slane %v563, %v614
      %v616 = vmul.f32 %v611, %v615
      %v617 = vadd.f32 %v606, %v616
      %v618 = vrot.slane %v558, 6
      %vm619 = vcmp.ge.s32.totalorder %v601, 2
      %vm620 = vcmp.lt.s32.totalorder %v601, 10
      %vm621 = vmand %vm619, %vm620
      %v622 = vsel %vm621, %v618, 0.0
      %v623 = vlaneseq
      %v624 = vshrl.u32 %v623, 7
      %v625 = vsub.s32 1, %v624
      %v626 = vrot.slane %v563, %v625
      %v627 = vmul.f32 %v622, %v626
      %v628 = vadd.f32 %v617, %v627
      %v629 = vrot.slane %v558, 7
      %vm630 = vcmp.ge.s32.totalorder %v601, 1
      %vm631 = vcmp.lt.s32.totalorder %v601, 9
      %vm632 = vmand %vm630, %vm631
      %v633 = vsel %vm632, %v629, 0.0
      %v634 = vlaneseq
      %v635 = vshrl.u32 %v634, 7
      %v636 = vsub.s32 2, %v635
      %v637 = vrot.slane %v563, %v636
      %v638 = vmul.f32 %v633, %v637
      %v639 = vadd.f32 %v628, %v638
      %v640 = vrot.slane %v558, 1
      %vm641 = vcmp.ge.s32.totalorder %v601, 4294967295
      %vm642 = vcmp.lt.s32.totalorder %v601, 7
      %vm643 = vmand %vm641, %vm642
      %v644 = vsel %vm643, %v640, 0.0
      %v645 = vlaneseq
      %v646 = vshrl.u32 %v645, 7
      %v647 = vsub.s32 4, %v646
      %v648 = vrot.slane %v563, %v647
      %v649 = vmul.f32 %v644, %v648
      %v650 = vadd.f32 %v639, %v649
      %v651 = vrot.slane %v558, 2
      %vm652 = vcmp.ge.s32.totalorder %v601, 4294967294
      %vm653 = vcmp.lt.s32.totalorder %v601, 6
      %vm654 = vmand %vm652, %vm653
      %v655 = vsel %vm654, %v651, 0.0
      %v656 = vlaneseq
      %v657 = vshrl.u32 %v656, 7
      %v658 = vsub.s32 5, %v657
      %v659 = vrot.slane %v563, %v658
      %v660 = vmul.f32 %v655, %v659
      %v661 = vadd.f32 %v650, %v660
      %v662 = vrot.slane %v558, 3
      %vm663 = vcmp.ge.s32.totalorder %v601, 4294967293
      %vm664 = vcmp.lt.s32.totalorder %v601, 5
      %vm665 = vmand %vm663, %vm664
      %v666 = vsel %vm665, %v662, 0.0
      %v667 = vlaneseq
      %v668 = vshrl.u32 %v667, 7
      %v669 = vsub.s32 6, %v668
      %v670 = vrot.slane %v563, %v669
      %v671 = vmul.f32 %v666, %v670
      %v672 = vadd.f32 %v661, %v671
      %v674 = vlaneseq
      %v675 = vshrl.u32 %v674, 7
      %v676 = vsub.s32 0, %v675
      %v677 = vrot.slane %v564, %v676
      %v679 = vadd.f32 %v672, %v677
      %vm680 = vcmask 392192
      %v681 = vsel %vm680, %v679, 0.0
      %682 = vadd.xlane.f32.xlu0 %v681
      %v683 = vpop.xlane.xlu0 %682
      %v684 = vrcp.pop 48.0
      %v685 = vmul.f32 %v683, %v684
      %v686 = vsub.f32 %v679, %v685
      %v687 = vmul.f32 %v686, %v686
      %v688 = vsel %vm680, %v687, 0.0
      %689 = vadd.xlane.f32.xlu0 %v688
      %v690 = vpop.xlane.xlu0 %689
      %v691 = vmul.f32 %v690, %v684
      %v692 = vadd.f32 %v691, 1e-06
      %v693 = vrsqrt.pop %v692
      %v694 = vmul.f32 %v686, %v693
      %v696 = vlaneseq
      %v697 = vshrl.u32 %v696, 7
      %v698 = vsub.s32 0, %v697
      %v699 = vrot.slane %v565, %v698
      %v701 = vmul.f32 %v694, %v699
      %v703 = vlaneseq
      %v704 = vshrl.u32 %v703, 7
      %v705 = vsub.s32 0, %v704
      %v706 = vrot.slane %v566, %v705
      %v708 = vadd.f32 %v701, %v706
      %v709 = vpack.c.bf16 %v708, %v708
      %v711 = vlaneseq
      %v712 = vshrl.u32 %v711, 7
      %v713 = vsub.s32 0, %v712
      %v714 = vrot.slane %v573, %v713
      %v715 = vlaneseq
      %v716 = vshrl.u32 %v715, 7
      %v717 = vsub.s32 1, %v716
      %v718 = vrot.slane %v573, %v717
      %v727 = vunpack.c.l.b16 %v567
      %v728 = vunpack.c.h.b16 %v567
      %v729 = vunpack.c.l.b16 %v568
      %v730 = vunpack.c.h.b16 %v568
      %v731 = vunpack.c.l.b16 %v569
      %v732 = vunpack.c.h.b16 %v569
      %v733 = vunpack.c.l.b16 %v570
      %v734 = vunpack.c.h.b16 %v570
      %v735 = vunpack.c.l.b16 %v571
      %v736 = vunpack.c.h.b16 %v571
      %v737 = vunpack.c.l.b16 %v572
      %v738 = vunpack.c.h.b16 %v572
      %v739 = vpack.c.b16 %v729, %v727
      %v740 = vpack.c.b16 %v730, %v728
      %v741 = vpack.c.b16 %v733, %v731
      %v742 = vpack.c.b16 %v734, %v732
      %v743 = vpack.c.b16 %v737, %v735
      %v744 = vpack.c.b16 %v738, %v736
      %v752 = vsel %vm680, %v709, 0
      %754 = vmatprep.subr.bf16.mxu0 %v740
      %755 = vmatpush1.bf16.msra.mxu0 %v739
      %756 = vmatprep.subr.bf16.mxu0 %v742
      %757 = vmatpush1.bf16.msra.mxu0 %v741
      %758 = vmatprep.subr.bf16.mxu0 %v744
      %759 = vmatpush1.bf16.msra.mxu0 %v743
      %760 = vmatprep.subr.bf16.mxu0 0
      %761 = vmatpush1.bf16.msra.mxu0 0
      %762 = vmatprep.subr.bf16.mxu0 0
      %763 = vmatpush1.bf16.msra.mxu0 0
      %764 = vmatprep.subr.bf16.mxu0 0
      %765 = vmatpush1.bf16.msra.mxu0 0
      %766 = vmatprep.subr.bf16.mxu0 0
      %767 = vmatpush1.bf16.msra.mxu0 0
      %768 = vmatprep.subr.bf16.mxu0 0
      %769 = vmatpush1.bf16.msra.mxu0 0
      %770 = vmatprep.subr.bf16.mxu0 0
      %771 = vmatpush1.bf16.msra.mxu0 0
      %772 = vmatprep.subr.bf16.mxu0 0
      %773 = vmatpush1.bf16.msra.mxu0 0
      %774 = vmatprep.subr.bf16.mxu0 0
      %775 = vmatpush1.bf16.msra.mxu0 0
      %776 = vmatprep.subr.bf16.mxu0 0
      %777 = vmatpush1.bf16.msra.mxu0 0
      %778 = vmatprep.subr.bf16.mxu0 0
      %779 = vmatpush1.bf16.msra.mxu0 0
      %780 = vmatprep.subr.bf16.mxu0 0
      %781 = vmatpush1.bf16.msra.mxu0 0
      %782 = vmatprep.subr.bf16.mxu0 0
      %783 = vmatpush1.bf16.msra.mxu0 0
      %784 = vmatprep.subr.bf16.mxu0 0
      %785 = vmatpush1.bf16.msra.mxu0 0
      %786 = vmatprep.mubr.bf16.mxu0 0
      %787 = vmatmul.mubr.bf16.gmra.mrb[0].mxu0 %v752
      %v788 = vpop.f32.mrb[0].mxu0
      %v789 = vadd.f32 %v714, %v788
      %v790 = vpop.f32.mrb[0].mxu0
      %v791 = vadd.f32 %v718, %v790
      %v792 = vpop.f32.mrb[0].mxu0
      %v793 = vpop.f32.mrb[0].mxu0
      %794 = vdwg.mxu0
      %v795 = vmul.f32 %v789, 0.5
      %v796 = vmul.f32 %v791, 0.5
      %v797 = vmul.f32 %v789, 0.70710677
      %v798 = vmul.f32 %v791, 0.70710677
      %v799 = vand.u32 2147483647, %v797
      %v800 = vand.u32 2147483647, %v798
      %v801 = vmul.f32 %v799, 0.3275911
      %v802 = vmul.f32 %v800, 0.3275911
      %v803 = vadd.f32 %v801, 1.0
      %v804 = vadd.f32 %v802, 1.0
      %v805 = vrcp.pop %v803
      %v806 = vrcp.pop %v804
      %v807 = vmul.f32 %v805, 1.0614054
      %v808 = vmul.f32 %v806, 1.0614054
      %v809 = vadd.f32 %v807, -1.4531521
      %v810 = vadd.f32 %v808, -1.4531521
      %v811 = vmul.f32 %v805, %v809
      %v812 = vmul.f32 %v806, %v810
      %v813 = vadd.f32 %v811, 1.4214138
      %v814 = vadd.f32 %v812, 1.4214138
      %v815 = vmul.f32 %v805, %v813
      %v816 = vmul.f32 %v806, %v814
      %v817 = vadd.f32 %v815, -0.28449672
      %v818 = vadd.f32 %v816, -0.28449672
      %v819 = vmul.f32 %v805, %v817
      %v820 = vmul.f32 %v806, %v818
      %v821 = vadd.f32 %v819, 0.2548296
      %v822 = vadd.f32 %v820, 0.2548296
      %v823 = vmul.f32 %v805, %v821
      %v824 = vmul.f32 %v806, %v822
      %v825 = vsub.f32 0.0, %v799
      %v826 = vsub.f32 0.0, %v800
      %v827 = vmul.f32 %v825, %v799
      %v828 = vmul.f32 %v826, %v800
      %v829 = vmul.f32 %v827, 1.442695
      %v830 = vpow.pop %v829
      %v831 = vmul.f32 %v828, 1.442695
      %v832 = vpow.pop %v831
      %v833 = vmul.f32 %v823, %v830
      %v834 = vmul.f32 %v824, %v832
      %v835 = vsub.f32 1.0, %v833
      %v836 = vsub.f32 1.0, %v834
      %vm837 = vcmp.ge.f32.partialorder %v797, 0.0
      %vm838 = vcmp.ge.f32.partialorder %v798, 0.0
      %v839 = vsub.f32 0.0, %v835
      %v840 = vsub.f32 0.0, %v836
      %v841 = vsel %vm837, %v835, %v839
      %v842 = vsel %vm838, %v836, %v840
      %v843 = vadd.f32 %v841, 1.0
      %v844 = vadd.f32 %v842, 1.0
      %v845 = vmul.f32 %v795, %v843
      %v846 = vmul.f32 %v796, %v844
      %v847 = vpack.c.bf16 %v845, %v845
      %v848 = vpack.c.bf16 %v846, %v846
      %v850 = vlaneseq
      %v851 = vshrl.u32 %v850, 7
      %v852 = vsub.s32 0, %v851
      %v853 = vrot.slane %v598, %v852
      %v879 = vunpack.c.l.b16 %v574
      %v880 = vunpack.c.l.b16 %v575
      %v881 = vunpack.c.l.b16 %v576
      %v882 = vunpack.c.l.b16 %v577
      %v883 = vunpack.c.l.b16 %v578
      %v884 = vunpack.c.l.b16 %v579
      %v885 = vunpack.c.l.b16 %v580
      %v886 = vunpack.c.l.b16 %v581
      %v887 = vunpack.c.l.b16 %v582
      %v888 = vunpack.c.l.b16 %v583
      %v889 = vunpack.c.l.b16 %v584
      %v890 = vunpack.c.l.b16 %v585
      %v891 = vunpack.c.l.b16 %v586
      %v892 = vunpack.c.l.b16 %v587
      %v893 = vunpack.c.l.b16 %v588
      %v894 = vunpack.c.l.b16 %v589
      %v895 = vunpack.c.l.b16 %v590
      %v896 = vunpack.c.l.b16 %v591
      %v897 = vunpack.c.l.b16 %v592
      %v898 = vunpack.c.l.b16 %v593
      %v899 = vunpack.c.l.b16 %v594
      %v900 = vunpack.c.l.b16 %v595
      %v901 = vunpack.c.l.b16 %v596
      %v902 = vunpack.c.l.b16 %v597
      %v903 = vpack.c.b16 %v880, %v879
      %v904 = vpack.c.b16 %v882, %v881
      %v905 = vpack.c.b16 %v884, %v883
      %v906 = vpack.c.b16 %v886, %v885
      %v907 = vpack.c.b16 %v888, %v887
      %v908 = vpack.c.b16 %v890, %v889
      %v909 = vpack.c.b16 %v892, %v891
      %v910 = vpack.c.b16 %v894, %v893
      %v911 = vpack.c.b16 %v896, %v895
      %v912 = vpack.c.b16 %v898, %v897
      %v913 = vpack.c.b16 %v900, %v899
      %v914 = vpack.c.b16 %v902, %v901
      %vm927 = vcmask 523264
      %v929 = vsel %vm927, %v848, 0
      %931 = vmatprep.subr.bf16.mxu0 0
      %932 = vmatpush1.bf16.msra.mxu0 %v903
      %933 = vmatprep.subr.bf16.mxu0 0
      %934 = vmatpush1.bf16.msra.mxu0 %v904
      %935 = vmatprep.subr.bf16.mxu0 0
      %936 = vmatpush1.bf16.msra.mxu0 %v905
      %937 = vmatprep.subr.bf16.mxu0 0
      %938 = vmatpush1.bf16.msra.mxu0 %v906
      %939 = vmatprep.subr.bf16.mxu0 0
      %940 = vmatpush1.bf16.msra.mxu0 %v907
      %941 = vmatprep.subr.bf16.mxu0 0
      %942 = vmatpush1.bf16.msra.mxu0 %v908
      %943 = vmatprep.subr.bf16.mxu0 0
      %944 = vmatpush1.bf16.msra.mxu0 %v909
      %945 = vmatprep.subr.bf16.mxu0 0
      %946 = vmatpush1.bf16.msra.mxu0 %v910
      %947 = vmatprep.subr.bf16.mxu0 0
      %948 = vmatpush1.bf16.msra.mxu0 %v911
      %949 = vmatprep.subr.bf16.mxu0 0
      %950 = vmatpush1.bf16.msra.mxu0 %v912
      %951 = vmatprep.subr.bf16.mxu0 0
      %952 = vmatpush1.bf16.msra.mxu0 %v913
      %953 = vmatprep.subr.bf16.mxu0 0
      %954 = vmatpush1.bf16.msra.mxu0 %v914
      %955 = vmatprep.subr.bf16.mxu0 0
      %956 = vmatpush1.bf16.msra.mxu0 0
      %957 = vmatprep.subr.bf16.mxu0 0
      %958 = vmatpush1.bf16.msra.mxu0 0
      %959 = vmatprep.subr.bf16.mxu0 0
      %960 = vmatpush1.bf16.msra.mxu0 0
      %961 = vmatprep.subr.bf16.mxu0 0
      %962 = vmatpush1.bf16.msra.mxu0 0
      %963 = vmatprep.mubr.bf16.mxu0 %v929
      %964 = vmatmul.mubr.bf16.gmra.mrb[0].mxu0 %v847
      %v965 = vpop.f32.mrb[0].mxu0
      %v966 = vadd.f32 %v853, %v965
      %v967 = vpop.f32.mrb[0].mxu0
      %v968 = vpop.f32.mrb[0].mxu0
      %v969 = vpop.f32.mrb[0].mxu0
      %970 = vdwg.mxu0
      %v972 = vlaneseq
      %v973 = vshrl.u32 %v972, 7
      %v974 = vsub.s32 0, %v973
      %v975 = vrot.slane %v599, %v974
      %v977 = vmul.f32 %v966, %v975
      %v978 = vadd.f32 %v558, %v977
      %979 = vst.msk [vmem:[%s462] sm:$0xff] %vm680, %v978
      %p980 = scmp.lt.s32.totalorder %s25, 1
      %s981 = scalar_select %p980, %s25, 1
      %s982 = smul.addr %s981, 8
      %s983 = scalar_lea.vmem %s14, %s982
      // Predicated region
      $region77: #{fwd.6} parent=75 // pred_check
        %p984 = pneg %p342
      $region78: #{fwd.6} parent=75 // pred_check_branch
        %986 = sbr.rel (%p984) target = $region80
      $region79: #{fwd.6} parent=75 // pred_region
        _
      $region80: #{fwd.6} parent=75 // pred_fallthru
        _
    $region76: #{fwd.6} parent=5 // pred_fallthru
      _
    %p987 = scmp.le.s32.totalorder 2, %s20
    // Predicated region
    $region81: #{fwd.6} parent=5 // pred_check
      %p988 = pneg %p987
    $region82: #{fwd.6} parent=5 // pred_check_branch
      %990 = sbr.rel (%p988) target = $region84
    $region83: #{fwd.6} parent=5 // pred_region
      %s991 = ssub.s32 %s20, 2
      // Predicated region
      $region85: #{fwd.6} parent=83 // pred_check
        %p992 = pneg %p348
      $region86: #{fwd.6} parent=83 // pred_check_branch
        %994 = sbr.rel (%p992) target = $region88
      $region87: #{fwd.6} parent=83 // pred_region
        %p995 = scmp.lt.s32.totalorder %s26, 1
        %s996 = scalar_select %p995, %s26, 1
        %s997 = smul.addr %s996, 8
        %s998 = scalar_lea.vmem %s14, %s997
      $region88: #{fwd.6} parent=83 // pred_fallthru
        _
    $region84: #{fwd.6} parent=5 // pred_fallthru
      _
  $region6: #{fwd.6} parent=0 // loop_footer
    %s24 = sadd.s32 1, %s20
  $region7: #{fwd.6} parent=0 // loop_footer_branch
    %19 = sbr.rel target = $region3
  $region8: #{fwd.6} parent=0 // loop_exit
    _

// kernel: fwd.8
$region0: #{fwd.8}
  #allocation0 [shape = 'u32[]', space=smem, size = 0x4, offset = 0x4, fixed_abs, tag = 'smem constant byte address 0x4 - core index']
  #allocation1 [shape = 'u32[144,128]{1,0:T(1,128)}', space=vmem, size = 0x12000, scoped, tag = 'internal scratch']
  %s0 = inlined_call_operand.vmem [shape: f32[2,16,16], index: 0, kind: input, shape index: {}]
  %s1 = inlined_call_operand.vmem [shape: bf16[3,48,16], index: 1, kind: input, shape index: {}]
  %s2 = inlined_call_operand.vmem [shape: f32[3,1,16], index: 2, kind: input, shape index: {}]
  %s3 = inlined_call_operand.vmem [shape: bf16[3,48,16], index: 3, kind: input, shape index: {}]
  %s4 = inlined_call_operand.vmem [shape: f32[3,1,16], index: 4, kind: input, shape index: {}]
  %s5 = inlined_call_operand.vmem [shape: bf16[48,16], index: 5, kind: input, shape index: {}]
  %s6 = inlined_call_operand.vmem [shape: f32[1,16], index: 6, kind: input, shape index: {}]
  %s7 = inlined_call_operand.vmem [shape: f32[2,16,16], index: 7, kind: output, shape index: {}]
  %s8 = sld [smem:[#allocation0]]
  $region61: #{fwd.8} parent=0
    _
  %s10 = ssub.s32 1, %s8
  %s11 = scalar_select 0, %s10, %s8
  loop: start=0, step=1, limit=4
  $region2: #{fwd.8} parent=0 // loop_pre_header
    _
  $region3: #{fwd.8} parent=0 // loop_header
    %s13 = sphi 0, %s17
    %p14 = scmp.ge.s32.totalorder %s13, 4
    %s23 = sphi 0, %s25
    %s26 = sphi 0, %s23
    %s27 = sphi 0, %s26
    %s43 = sphi 0, %s27
    %s47 = sphi 0, %s47
    %s49 = sphi 0, %s47
    %s50 = sphi 0, %s49
    %s64 = sphi 0, %s50
    %s68 = sphi 0, %s68
    %s70 = sphi 0, %s68
    %s71 = sphi 0, %s70
    %s85 = sphi 0, %s71
    %s89 = sphi 0, %s89
    %s91 = sphi 0, %s89
    %s92 = sphi 0, %s91
    %s106 = sphi 0, %s92
    %s110 = sphi 0, %s110
    %s112 = sphi 0, %s110
    %s113 = sphi 0, %s112
    %s127 = sphi 0, %s113
    %s131 = sphi 0, %s131
    %s133 = sphi 0, %s131
    %s134 = sphi 0, %s133
    %s148 = sphi 0, %s134
    %s152 = sphi 0, %s152
    %s154 = sphi 0, %s152
    %s155 = sphi 0, %s154
    %s169 = sphi 0, %s155
    %s175 = sphi 0, %s177
    %s178 = sphi 0, %s175
    %s179 = sphi 0, %s178
    %s195 = sphi 0, %s179
  $region4: #{fwd.8} parent=0 // loop_header_branch
    %16 = sbr.rel (%p14) target = $region8
  $region5: #{fwd.8} parent=0 // loop_body
    %s18 = ssub.s32 %s13, 1
    %s19 = ssub.s32 %s13, 2
    %s20 = sadd.s32 %s13, 1
    %s21 = ssub.s32 %s13, %s20
    %p22 = scmp.eq.s32.totalorder %s21, 0
    %s24 = sadd.s32 %s23, 1
    %s25 = scalar_select %p22, %s23, %s24
    %p28 = pneg %p22
    %p29 = scmp.eq.s32.totalorder %s13, 1
    %p30 = por %p28, %p29
    %p31 = scmp.ne.s32.totalorder %s23, %s26
    %p32 = scmp.eq.s32.totalorder %s13, 0
    %p33 = por %p31, %p32
    %p34 = scmp.ne.s32.totalorder %s23, %s26
    %p35 = scmp.eq.s32.totalorder %s18, 1
    %p36 = por %p34, %p35
    %p37 = scmp.ne.s32.totalorder %s26, %s27
    %p38 = scmp.eq.s32.totalorder %s18, 0
    %p39 = por %p37, %p38
    %p40 = scmp.ne.s32.totalorder %s26, %s27
    %p41 = scmp.eq.s32.totalorder %s19, 1
    %p42 = por %p40, %p41
    %p44 = scmp.ne.s32.totalorder %s27, %s43
    %p45 = scmp.eq.s32.totalorder %s19, 0
    %p46 = por %p44, %p45
    %s48 = sadd.s32 %s47, 1
    %p51 = scmp.eq.s32.totalorder %s13, 1
    %p52 = scmp.ne.s32.totalorder %s47, %s49
    %p53 = scmp.eq.s32.totalorder %s13, 0
    %p54 = por %p52, %p53
    %p55 = scmp.ne.s32.totalorder %s47, %s49
    %p56 = scmp.eq.s32.totalorder %s18, 1
    %p57 = por %p55, %p56
    %p58 = scmp.ne.s32.totalorder %s49, %s50
    %p59 = scmp.eq.s32.totalorder %s18, 0
    %p60 = por %p58, %p59
    %p61 = scmp.ne.s32.totalorder %s49, %s50
    %p62 = scmp.eq.s32.totalorder %s19, 1
    %p63 = por %p61, %p62
    %p65 = scmp.ne.s32.totalorder %s50, %s64
    %p66 = scmp.eq.s32.totalorder %s19, 0
    %p67 = por %p65, %p66
    %s69 = sadd.s32 %s68, 1
    %p72 = scmp.eq.s32.totalorder %s13, 1
    %p73 = scmp.ne.s32.totalorder %s68, %s70
    %p74 = scmp.eq.s32.totalorder %s13, 0
    %p75 = por %p73, %p74
    %p76 = scmp.ne.s32.totalorder %s68, %s70
    %p77 = scmp.eq.s32.totalorder %s18, 1
    %p78 = por %p76, %p77
    %p79 = scmp.ne.s32.totalorder %s70, %s71
    %p80 = scmp.eq.s32.totalorder %s18, 0
    %p81 = por %p79, %p80
    %p82 = scmp.ne.s32.totalorder %s70, %s71
    %p83 = scmp.eq.s32.totalorder %s19, 1
    %p84 = por %p82, %p83
    %p86 = scmp.ne.s32.totalorder %s71, %s85
    %p87 = scmp.eq.s32.totalorder %s19, 0
    %p88 = por %p86, %p87
    %s90 = sadd.s32 %s89, 1
    %p93 = scmp.eq.s32.totalorder %s13, 1
    %p94 = scmp.ne.s32.totalorder %s89, %s91
    %p95 = scmp.eq.s32.totalorder %s13, 0
    %p96 = por %p94, %p95
    %p97 = scmp.ne.s32.totalorder %s89, %s91
    %p98 = scmp.eq.s32.totalorder %s18, 1
    %p99 = por %p97, %p98
    %p100 = scmp.ne.s32.totalorder %s91, %s92
    %p101 = scmp.eq.s32.totalorder %s18, 0
    %p102 = por %p100, %p101
    %p103 = scmp.ne.s32.totalorder %s91, %s92
    %p104 = scmp.eq.s32.totalorder %s19, 1
    %p105 = por %p103, %p104
    %p107 = scmp.ne.s32.totalorder %s92, %s106
    %p108 = scmp.eq.s32.totalorder %s19, 0
    %p109 = por %p107, %p108
    %s111 = sadd.s32 %s110, 1
    %p114 = scmp.eq.s32.totalorder %s13, 1
    %p115 = scmp.ne.s32.totalorder %s110, %s112
    %p116 = scmp.eq.s32.totalorder %s13, 0
    %p117 = por %p115, %p116
    %p118 = scmp.ne.s32.totalorder %s110, %s112
    %p119 = scmp.eq.s32.totalorder %s18, 1
    %p120 = por %p118, %p119
    %p121 = scmp.ne.s32.totalorder %s112, %s113
    %p122 = scmp.eq.s32.totalorder %s18, 0
    %p123 = por %p121, %p122
    %p124 = scmp.ne.s32.totalorder %s112, %s113
    %p125 = scmp.eq.s32.totalorder %s19, 1
    %p126 = por %p124, %p125
    %p128 = scmp.ne.s32.totalorder %s113, %s127
    %p129 = scmp.eq.s32.totalorder %s19, 0
    %p130 = por %p128, %p129
    %s132 = sadd.s32 %s131, 1
    %p135 = scmp.eq.s32.totalorder %s13, 1
    %p136 = scmp.ne.s32.totalorder %s131, %s133
    %p137 = scmp.eq.s32.totalorder %s13, 0
    %p138 = por %p136, %p137
    %p139 = scmp.ne.s32.totalorder %s131, %s133
    %p140 = scmp.eq.s32.totalorder %s18, 1
    %p141 = por %p139, %p140
    %p142 = scmp.ne.s32.totalorder %s133, %s134
    %p143 = scmp.eq.s32.totalorder %s18, 0
    %p144 = por %p142, %p143
    %p145 = scmp.ne.s32.totalorder %s133, %s134
    %p146 = scmp.eq.s32.totalorder %s19, 1
    %p147 = por %p145, %p146
    %p149 = scmp.ne.s32.totalorder %s134, %s148
    %p150 = scmp.eq.s32.totalorder %s19, 0
    %p151 = por %p149, %p150
    %s153 = sadd.s32 %s152, 1
    %p156 = scmp.eq.s32.totalorder %s13, 1
    %p157 = scmp.ne.s32.totalorder %s152, %s154
    %p158 = scmp.eq.s32.totalorder %s13, 0
    %p159 = por %p157, %p158
    %p160 = scmp.ne.s32.totalorder %s152, %s154
    %p161 = scmp.eq.s32.totalorder %s18, 1
    %p162 = por %p160, %p161
    %p163 = scmp.ne.s32.totalorder %s154, %s155
    %p164 = scmp.eq.s32.totalorder %s18, 0
    %p165 = por %p163, %p164
    %p166 = scmp.ne.s32.totalorder %s154, %s155
    %p167 = scmp.eq.s32.totalorder %s19, 1
    %p168 = por %p166, %p167
    %p170 = scmp.ne.s32.totalorder %s155, %s169
    %p171 = scmp.eq.s32.totalorder %s19, 0
    %p172 = por %p170, %p171
    %s173 = ssub.s32 %s13, %s20
    %p174 = scmp.eq.s32.totalorder %s173, 0
    %s176 = sadd.s32 %s175, 1
    %s177 = scalar_select %p174, %s175, %s176
    %p180 = pneg %p174
    %p181 = scmp.eq.s32.totalorder %s13, 1
    %p182 = por %p180, %p181
    %p183 = scmp.ne.s32.totalorder %s175, %s178
    %p184 = scmp.eq.s32.totalorder %s13, 0
    %p185 = por %p183, %p184
    %p186 = scmp.ne.s32.totalorder %s175, %s178
    %p187 = scmp.eq.s32.totalorder %s18, 1
    %p188 = por %p186, %p187
    %p189 = scmp.ne.s32.totalorder %s178, %s179
    %p190 = scmp.eq.s32.totalorder %s18, 0
    %p191 = por %p189, %p190
    %p192 = scmp.ne.s32.totalorder %s178, %s179
    %p193 = scmp.eq.s32.totalorder %s19, 1
    %p194 = por %p192, %p193
    %p196 = scmp.ne.s32.totalorder %s179, %s195
    %p197 = scmp.eq.s32.totalorder %s19, 0
    %p198 = por %p196, %p197
    %p199 = scmp.le.s32.totalorder 1, %s13
    %p200 = scmp.lt.s32.totalorder %s13, 3
    %p201 = pnand %p199, %p200
    %p202 = pneg %p201
    // Predicated region
    $region9: #{fwd.8} parent=5 // pred_check
      _
    $region10: #{fwd.8} parent=5 // pred_check_branch
      %204 = sbr.rel (%p201) target = $region12
    $region11: #{fwd.8} parent=5 // pred_region
      %s205 = ssub.s32 %s13, 1
      // Predicated region
      $region13: #{fwd.8} parent=11 // pred_check
        %p206 = pneg %p60
      $region14: #{fwd.8} parent=11 // pred_check_branch
        %208 = sbr.rel (%p206) target = $region16
      $region15: #{fwd.8} parent=11 // pred_region
        _
      $region16: #{fwd.8} parent=11 // pred_fallthru
        _
      // Predicated region
      $region17: #{fwd.8} parent=11 // pred_check
        %p209 = pneg %p81
      $region18: #{fwd.8} parent=11 // pred_check_branch
        %211 = sbr.rel (%p209) target = $region20
      $region19: #{fwd.8} parent=11 // pred_region
        _
      $region20: #{fwd.8} parent=11 // pred_fallthru
        _
      // Predicated region
      $region21: #{fwd.8} parent=11 // pred_check
        %p212 = pneg %p102
      $region22: #{fwd.8} parent=11 // pred_check_branch
        %214 = sbr.rel (%p212) target = $region24
      $region23: #{fwd.8} parent=11 // pred_region
        _
      $region24: #{fwd.8} parent=11 // pred_fallthru
        _
      // Predicated region
      $region25: #{fwd.8} parent=11 // pred_check
        %p215 = pneg %p123
      $region26: #{fwd.8} parent=11 // pred_check_branch
        %217 = sbr.rel (%p215) target = $region28
      $region27: #{fwd.8} parent=11 // pred_region
        _
      $region28: #{fwd.8} parent=11 // pred_fallthru
        _
      // Predicated region
      $region29: #{fwd.8} parent=11 // pred_check
        %p218 = pneg %p144
      $region30: #{fwd.8} parent=11 // pred_check_branch
        %220 = sbr.rel (%p218) target = $region32
      $region31: #{fwd.8} parent=11 // pred_region
        _
      $region32: #{fwd.8} parent=11 // pred_fallthru
        _
      // Predicated region
      $region33: #{fwd.8} parent=11 // pred_check
        %p221 = pneg %p165
      $region34: #{fwd.8} parent=11 // pred_check_branch
        %223 = sbr.rel (%p221) target = $region36
      $region35: #{fwd.8} parent=11 // pred_region
        _
      $region36: #{fwd.8} parent=11 // pred_fallthru
        _
    $region12: #{fwd.8} parent=5 // pred_fallthru
      _
    %p224 = scmp.lt.s32.totalorder %s13, 2
    // Predicated region
    $region37: #{fwd.8} parent=5 // pred_check
      %p225 = pneg %p224
    $region38: #{fwd.8} parent=5 // pred_check_branch
      %227 = sbr.rel (%p225) target = $region40
    $region39: #{fwd.8} parent=5 // pred_region
      // Predicated region
      $region41: #{fwd.8} parent=39 // pred_check
        %p228 = pneg %p33
      $region42: #{fwd.8} parent=39 // pred_check_branch
        %230 = sbr.rel (%p228) target = $region44
      $region43: #{fwd.8} parent=39 // pred_region
        %p231 = scmp.lt.s32.totalorder %s13, 1
        %s232 = scalar_select %p231, %s13, 1
        %s233 = smul.addr %s232, 2
        %s234 = smul.addr %s233, 8
        %s235 = scalar_lea.vmem %s0, %s234
      $region44: #{fwd.8} parent=39 // pred_fallthru
        _
    $region40: #{fwd.8} parent=5 // pred_fallthru
      _
    %p236 = scmp.le.s32.totalorder 1, %s13
    %p237 = scmp.lt.s32.totalorder %s13, 3
    %p238 = pnand %p236, %p237
    %p239 = pneg %p238
    // Predicated region
    $region45: #{fwd.8} parent=5 // pred_check
      _
    $region46: #{fwd.8} parent=5 // pred_check_branch
      %241 = sbr.rel (%p238) target = $region48
    $region47: #{fwd.8} parent=5 // pred_region
      %s242 = ssub.s32 %s13, 1
      %p243 = scmp.lt.s32.totalorder %s18, 1
      %s244 = scalar_select %p243, %s18, 1
      %s245 = smul.addr %s244, 2
      %s246 = smul.addr %s245, 8
      %s247 = scalar_lea.vmem %s0, %s246
      %p248 = pneg %p39
      %p249 = pneg %p36
      %p250 = pneg %p60
      %p251 = pneg %p57
      %p252 = pneg %p81
      %p253 = pneg %p78
      %p254 = pneg %p102
      %p255 = pneg %p99
      %p256 = pneg %p123
      %p257 = pneg %p120
      %p258 = pneg %p144
      %p259 = pneg %p141
      %p260 = pneg %p165
      %p261 = pneg %p162
      %p262 = pneg %p191
      %p263 = pneg %p188
      %p264 = scmp.lt.s32.totalorder %s18, 1
      %s265 = scalar_select %p264, %s18, 1
      %s266 = smul.addr %s265, 2
      %s267 = smul.addr %s266, 8
      %s268 = scalar_lea.vmem %s7, %s267
      %p269 = scmp.lt.s32.totalorder %s18, 1
      %s270 = scalar_select %p269, %s18, 1
      %s271 = smul.addr %s270, 2
      %s272 = smul.addr %s271, 8
      %s273 = scalar_lea.vmem %s0, %s272
      %p274 = scmp.lt.s32.totalorder %s18, 1
      %s275 = scalar_select %p274, %s18, 1
      %s276 = smul.addr %s275, 2
      %s277 = smul.addr %s276, 8
      %s278 = scalar_lea.vmem %s7, %s277
      %v280 = vld [vmem:[%s273] sm:$0xff]
      %v281 = vld [vmem:[%s273 + $0x8] sm:$0xff]
      %v282 = vxor.u32 %v280, 2147483648
      %v283 = vxor.u32 %v281, 2147483648
      %v284 = vmul.f32 %v282, 1.442695
      %v285 = vpow.pop %v284
      %v286 = vmul.f32 %v283, 1.442695
      %v287 = vpow.pop %v286
      %v288 = vadd.f32 %v285, 1.0
      %v289 = vadd.f32 %v287, 1.0
      %v290 = vrcp.pop %v288
      %v291 = vmul.f32 1.0, %v290
      %v292 = vrcp.pop %v289
      %v293 = vmul.f32 1.0, %v292
      %v294 = vmul.f32 %v280, %v291
      %v295 = vmul.f32 %v281, %v293
      %v296 = vld [vmem:[%s1] sm:$0xf]
      %v297 = vld [vmem:[%s1 + $0x4] sm:$0xf]
      %v298 = vld [vmem:[%s1 + $0x8] sm:$0xf]
      %v299 = vld [vmem:[%s1 + $0xc] sm:$0xf]
      %v300 = vld [vmem:[%s1 + $0x10] sm:$0xf]
      %v301 = vld [vmem:[%s1 + $0x14] sm:$0xf]
      %v302 = vld [vmem:[%s2] sm:$0x1]
      %v303 = vlaneseq
      %v304 = vshrl.u32 %v303, 7
      %v305 = vadd.s32 %v304, 8
      %v306 = vrot.slane %v294, 7
      %v307 = vrot.slane %v295, 7
      %vm308 = vcmp.lt.s32.totalorder %v304, 1
      %v309 = vsel %vm308, %v306, %v307
      %v310 = vsel %vm308, %v307, %v306
      %vm311 = vcmp.ge.s32.totalorder %v304, 1
      %vm312 = vcmp.ge.s32.totalorder %v305, 1
      %vm313 = vcmp.lt.s32.totalorder %v304, 17
      %vm314 = vcmp.lt.s32.totalorder %v305, 17
      %vm315 = vmand %vm311, %vm313
      %vm316 = vmand %vm312, %vm314
      %v317 = vsel %vm315, %v310, 0.0
      %v318 = vsel %vm316, %v309, 0.0
      %v319 = vrot.slane %v294, 1
      %v320 = vrot.slane %v295, 1
      %vm321 = vcmp.lt.s32.totalorder %v304, 7
      %v322 = vsel %vm321, %v319, %v320
      %v323 = vsel %vm321, %v320, %v319
      %vm324 = vcmp.ge.s32.totalorder %v304, 4294967295
      %vm325 = vcmp.ge.s32.totalorder %v305, 4294967295
      %vm326 = vcmp.lt.s32.totalorder %v304, 15
      %vm327 = vcmp.lt.s32.totalorder %v305, 15
      %vm328 = vmand %vm324, %vm326
      %vm329 = vmand %vm325, %vm327
      %v330 = vsel %vm328, %v322, 0.0
      %v331 = vsel %vm329, %v323, 0.0
      %334 = vrot.lane.b32.xlu0 %v294, 16
      %v335 = vpop.permute.xlu0 %334
      %336 = vrot.lane.b32.xlu0 %v295, 16
      %v337 = vpop.permute.xlu0 %336
      %342 = vrot.lane.b32.xlu0 %v330, 32
      %v343 = vpop.permute.xlu0 %342
      %344 = vrot.lane.b32.xlu0 %v331, 32
      %v345 = vpop.permute.xlu0 %344
      %vm348 = vcmask 130048
      %v349 = vsel %vm348, %v317, %v335
      %v350 = vsel %vm348, %v318, %v337
      %vm351 = vcmask 261120
      %v352 = vsel %vm351, %v349, %v343
      %v353 = vsel %vm351, %v350, %v345
      %v354 = vpack.c.bf16 %v353, %v352
      %v356 = vlaneseq
      %v357 = vshrl.u32 %v356, 7
      %v358 = vsub.s32 0, %v357
      %v359 = vrot.slane %v302, %v358
      %v367 = vunpack.c.l.b16 %v296
      %v368 = vunpack.c.l.b16 %v297
      %v369 = vunpack.c.l.b16 %v298
      %v370 = vunpack.c.l.b16 %v299
      %v371 = vunpack.c.l.b16 %v300
      %v372 = vunpack.c.l.b16 %v301
      %v373 = vpack.c.b16 %v368, %v367
      %v374 = vpack.c.b16 %v370, %v369
      %v375 = vpack.c.b16 %v372, %v371
      %vm379 = vcmask 392192
      %v381 = vsel %vm379, %v354, 0
      %383 = vmatprep.subr.bf16.mxu0 0
      %384 = vmatpush1.bf16.msra.mxu0 %v373
      %385 = vmatprep.subr.bf16.mxu0 0
      %386 = vmatpush1.bf16.msra.mxu0 %v374
      %387 = vmatprep.subr.bf16.mxu0 0
      %388 = vmatpush1.bf16.msra.mxu0 %v375
      %389 = vmatprep.subr.bf16.mxu0 0
      %390 = vmatpush1.bf16.msra.mxu0 0
      %391 = vmatprep.subr.bf16.mxu0 0
      %392 = vmatpush1.bf16.msra.mxu0 0
      %393 = vmatprep.subr.bf16.mxu0 0
      %394 = vmatpush1.bf16.msra.mxu0 0
      %395 = vmatprep.subr.bf16.mxu0 0
      %396 = vmatpush1.bf16.msra.mxu0 0
      %397 = vmatprep.subr.bf16.mxu0 0
      %398 = vmatpush1.bf16.msra.mxu0 0
      %399 = vmatprep.subr.bf16.mxu0 0
      %400 = vmatpush1.bf16.msra.mxu0 0
      %401 = vmatprep.subr.bf16.mxu0 0
      %402 = vmatpush1.bf16.msra.mxu0 0
      %403 = vmatprep.subr.bf16.mxu0 0
      %404 = vmatpush1.bf16.msra.mxu0 0
      %405 = vmatprep.subr.bf16.mxu0 0
      %406 = vmatpush1.bf16.msra.mxu0 0
      %407 = vmatprep.subr.bf16.mxu0 0
      %408 = vmatpush1.bf16.msra.mxu0 0
      %409 = vmatprep.subr.bf16.mxu0 0
      %410 = vmatpush1.bf16.msra.mxu0 0
      %411 = vmatprep.subr.bf16.mxu0 0
      %412 = vmatpush1.bf16.msra.mxu0 0
      %413 = vmatprep.subr.bf16.mxu0 0
      %414 = vmatpush1.bf16.msra.mxu0 0
      %415 = vmatprep.mubr.bf16.mxu0 0
      %416 = vmatmul.mubr.bf16.gmra.mrb[0].mxu0 %v381
      %v417 = vpop.f32.mrb[0].mxu0
      %v418 = vadd.f32 %v359, %v417
      %v419 = vpop.f32.mrb[0].mxu0
      %v420 = vpop.f32.mrb[0].mxu0
      %v421 = vadd.f32 %v359, %v420
      %v422 = vpop.f32.mrb[0].mxu0
      %423 = vdwg.mxu0
      %v424 = vxor.u32 %v418, 2147483648
      %v425 = vxor.u32 %v421, 2147483648
      %v426 = vmul.f32 %v424, 1.442695
      %v427 = vpow.pop %v426
      %v428 = vmul.f32 %v425, 1.442695
      %v429 = vpow.pop %v428
      %v430 = vadd.f32 %v427, 1.0
      %v431 = vadd.f32 %v429, 1.0
      %v432 = vrcp.pop %v430
      %v433 = vmul.f32 1.0, %v432
      %v434 = vrcp.pop %v431
      %v435 = vmul.f32 1.0, %v434
      %v436 = vmul.f32 %v418, %v433
      %v437 = vmul.f32 %v421, %v435
      %v438 = vld [vmem:[%s3] sm:$0xf]
      %v439 = vld [vmem:[%s3 + $0x4] sm:$0xf]
      %v440 = vld [vmem:[%s3 + $0x8] sm:$0xf]
      %v441 = vld [vmem:[%s3 + $0xc] sm:$0xf]
      %v442 = vld [vmem:[%s3 + $0x10] sm:$0xf]
      %v443 = vld [vmem:[%s3 + $0x14] sm:$0xf]
      %v444 = vld [vmem:[%s4] sm:$0x1]
      %v445 = vrot.slane %v436, 7
      %v446 = vrot.slane %v437, 7
      %v447 = vsel %vm308, %v445, %v446
      %v448 = vsel %vm308, %v446, %v445
      %v449 = vsel %vm315, %v448, 0.0
      %v450 = vsel %vm316, %v447, 0.0
      %v451 = vrot.slane %v436, 1
      %v452 = vrot.slane %v437, 1
      %v453 = vsel %vm321, %v451, %v452
      %v454 = vsel %vm321, %v452, %v451
      %v455 = vsel %vm328, %v453, 0.0
      %v456 = vsel %vm329, %v454, 0.0
      %459 = vrot.lane.b32.xlu0 %v436, 16
      %v460 = vpop.permute.xlu0 %459
      %461 = vrot.lane.b32.xlu0 %v437, 16
      %v462 = vpop.permute.xlu0 %461
      %467 = vrot.lane.b32.xlu0 %v455, 32
      %v468 = vpop.permute.xlu0 %467
      %469 = vrot.lane.b32.xlu0 %v456, 32
      %v470 = vpop.permute.xlu0 %469
      %v473 = vsel %vm348, %v449, %v460
      %v474 = vsel %vm348, %v450, %v462
      %v475 = vsel %vm351, %v473, %v468
      %v476 = vsel %vm351, %v474, %v470
      %v477 = vpack.c.bf16 %v476, %v475
      %v479 = vlaneseq
      %v480 = vshrl.u32 %v479, 7
      %v481 = vsub.s32 0, %v480
      %v482 = vrot.slane %v444, %v481
      %v490 = vunpack.c.l.b16 %v438
      %v491 = vunpack.c.l.b16 %v439
      %v492 = vunpack.c.l.b16 %v440
      %v493 = vunpack.c.l.b16 %v441
      %v494 = vunpack.c.l.b16 %v442
      %v495 = vunpack.c.l.b16 %v443
      %v496 = vpack.c.b16 %v491, %v490
      %v497 = vpack.c.b16 %v493, %v492
      %v498 = vpack.c.b16 %v495, %v494
      %v503 = vsel %vm379, %v477, 0
      %505 = vmatprep.subr.bf16.mxu0 0
      %506 = vmatpush1.bf16.msra.mxu0 %v496
      %507 = vmatprep.subr.bf16.mxu0 0
      %508 = vmatpush1.bf16.msra.mxu0 %v497
      %509 = vmatprep.subr.bf16.mxu0 0
      %510 = vmatpush1.bf16.msra.mxu0 %v498
      %511 = vmatprep.subr.bf16.mxu0 0
      %512 = vmatpush1.bf16.msra.mxu0 0
      %513 = vmatprep.subr.bf16.mxu0 0
      %514 = vmatpush1.bf16.msra.mxu0 0
      %515 = vmatprep.subr.bf16.mxu0 0
      %516 = vmatpush1.bf16.msra.mxu0 0
      %517 = vmatprep.subr.bf16.mxu0 0
      %518 = vmatpush1.bf16.msra.mxu0 0
      %519 = vmatprep.subr.bf16.mxu0 0
      %520 = vmatpush1.bf16.msra.mxu0 0
      %521 = vmatprep.subr.bf16.mxu0 0
      %522 = vmatpush1.bf16.msra.mxu0 0
      %523 = vmatprep.subr.bf16.mxu0 0
      %524 = vmatpush1.bf16.msra.mxu0 0
      %525 = vmatprep.subr.bf16.mxu0 0
      %526 = vmatpush1.bf16.msra.mxu0 0
      %527 = vmatprep.subr.bf16.mxu0 0
      %528 = vmatpush1.bf16.msra.mxu0 0
      %529 = vmatprep.subr.bf16.mxu0 0
      %530 = vmatpush1.bf16.msra.mxu0 0
      %531 = vmatprep.subr.bf16.mxu0 0
      %532 = vmatpush1.bf16.msra.mxu0 0
      %533 = vmatprep.subr.bf16.mxu0 0
      %534 = vmatpush1.bf16.msra.mxu0 0
      %535 = vmatprep.subr.bf16.mxu0 0
      %536 = vmatpush1.bf16.msra.mxu0 0
      %537 = vmatprep.mubr.bf16.mxu0 0
      %538 = vmatmul.mubr.bf16.gmra.mrb[0].mxu0 %v503
      %v539 = vpop.f32.mrb[0].mxu0
      %v540 = vadd.f32 %v482, %v539
      %v541 = vpop.f32.mrb[0].mxu0
      %v542 = vpop.f32.mrb[0].mxu0
      %v543 = vadd.f32 %v482, %v542
      %v544 = vpop.f32.mrb[0].mxu0
      %545 = vdwg.mxu0
      %v546 = vadd.f32 %v540, %v280
      %v547 = vadd.f32 %v543, %v281
      %v548 = vxor.u32 %v546, 2147483648
      %v549 = vxor.u32 %v547, 2147483648
      %v550 = vmul.f32 %v548, 1.442695
      %v551 = vpow.pop %v550
      %v552 = vmul.f32 %v549, 1.442695
      %v553 = vpow.pop %v552
      %v554 = vadd.f32 %v551, 1.0
      %v555 = vadd.f32 %v553, 1.0
      %v556 = vrcp.pop %v554
      %v557 = vmul.f32 1.0, %v556
      %v558 = vrcp.pop %v555
      %v559 = vmul.f32 1.0, %v558
      %v560 = vmul.f32 %v546, %v557
      %v561 = vmul.f32 %v547, %v559
      %s562 = scalar_lea.vmem %s1, 24
      %v563 = vld [vmem:[%s562] sm:$0xf]
      %v564 = vld [vmem:[%s562 + $0x4] sm:$0xf]
      %v565 = vld [vmem:[%s562 + $0x8] sm:$0xf]
      %v566 = vld [vmem:[%s562 + $0xc] sm:$0xf]
      %v567 = vld [vmem:[%s562 + $0x10] sm:$0xf]
      %v568 = vld [vmem:[%s562 + $0x14] sm:$0xf]
      %s569 = scalar_lea.vmem %s2, 1
      %v570 = vld [vmem:[%s569] sm:$0x1]
      %v571 = vrot.slane %v560, 5
      %v572 = vrot.slane %v561, 5
      %vm573 = vcmp.lt.s32.totalorder %v304, 3
      %v574 = vsel %vm573, %v571, %v572
      %v575 = vsel %vm573, %v572, %v571
      %vm576 = vcmp.ge.s32.totalorder %v304, 3
      %vm577 = vcmp.ge.s32.totalorder %v305, 3
      %vm578 = vcmp.lt.s32.totalorder %v304, 19
      %vm579 = vcmp.lt.s32.totalorder %v305, 19
      %vm580 = vmand %vm576, %vm578
      %vm581 = vmand %vm577, %vm579
      %v582 = vsel %vm580, %v575, 0.0
      %v583 = vsel %vm581, %v574, 0.0
      %v584 = vrot.slane %v560, 3
      %v585 = vrot.slane %v561, 3
      %vm586 = vcmp.lt.s32.totalorder %v304, 5
      %v587 = vsel %vm586, %v584, %v585
      %v588 = vsel %vm586, %v585, %v584
      %vm589 = vcmp.ge.s32.totalorder %v304, 4294967293
      %vm590 = vcmp.ge.s32.totalorder %v305, 4294967293
      %vm591 = vcmp.lt.s32.totalorder %v304, 13
      %vm592 = vcmp.lt.s32.totalorder %v305, 13
      %vm593 = vmand %vm589, %vm591
      %vm594 = vmand %vm590, %vm592
      %v595 = vsel %vm593, %v587, 0.0
      %v596 = vsel %vm594, %v588, 0.0
      %599 = vrot.lane.b32.xlu0 %v560, 16
      %v600 = vpop.permute.xlu0 %599
      %601 = vrot.lane.b32.xlu0 %v561, 16
      %v602 = vpop.permute.xlu0 %601
      %607 = vrot.lane.b32.xlu0 %v595, 32
      %v608 = vpop.permute.xlu0 %607
      %609 = vrot.lane.b32.xlu0 %v596, 32
      %v610 = vpop.permute.xlu0 %609
      %v613 = vsel %vm348, %v582, %v600
      %v614 = vsel %vm348, %v583, %v602
      %v615 = vsel %vm351, %v613, %v608
      %v616 = vsel %vm351, %v614, %v610
      %v617 = vpack.c.bf16 %v616, %v615
      %v619 = vlaneseq
      %v620 = vshrl.u32 %v619, 7
      %v621 = vsub.s32 0, %v620
      %v622 = vrot.slane %v570, %v621
      %v630 = vunpack.c.l.b16 %v563
      %v631 = vunpack.c.l.b16 %v564
      %v632 = vunpack.c.l.b16 %v565
      %v633 = vunpack.c.l.b16 %v566
      %v634 = vunpack.c.l.b16 %v567
      %v635 = vunpack.c.l.b16 %v568
      %v636 = vpack.c.b16 %v631, %v630
      %v637 = vpack.c.b16 %v633, %v632
      %v638 = vpack.c.b16 %v635, %v634
      %v643 = vsel %vm379, %v617, 0
      %645 = vmatprep.subr.bf16.mxu0 0
      %646 = vmatpush1.bf16.msra.mxu0 %v636
      %647 = vmatprep.subr.bf16.mxu0 0
      %648 = vmatpush1.bf16.msra.mxu0 %v637
      %649 = vmatprep.subr.bf16.mxu0 0
      %650 = vmatpush1.bf16.msra.mxu0 %v638
      %651 = vmatprep.subr.bf16.mxu0 0
      %652 = vmatpush1.bf16.msra.mxu0 0
      %653 = vmatprep.subr.bf16.mxu0 0
      %654 = vmatpush1.bf16.msra.mxu0 0
      %655 = vmatprep.subr.bf16.mxu0 0
      %656 = vmatpush1.bf16.msra.mxu0 0
      %657 = vmatprep.subr.bf16.mxu0 0
      %658 = vmatpush1.bf16.msra.mxu0 0
      %659 = vmatprep.subr.bf16.mxu0 0
      %660 = vmatpush1.bf16.msra.mxu0 0
      %661 = vmatprep.subr.bf16.mxu0 0
      %662 = vmatpush1.bf16.msra.mxu0 0
      %663 = vmatprep.subr.bf16.mxu0 0
      %664 = vmatpush1.bf16.msra.mxu0 0
      %665 = vmatprep.subr.bf16.mxu0 0
      %666 = vmatpush1.bf16.msra.mxu0 0
      %667 = vmatprep.subr.bf16.mxu0 0
      %668 = vmatpush1.bf16.msra.mxu0 0
      %669 = vmatprep.subr.bf16.mxu0 0
      %670 = vmatpush1.bf16.msra.mxu0 0
      %671 = vmatprep.subr.bf16.mxu0 0
      %672 = vmatpush1.bf16.msra.mxu0 0
      %673 = vmatprep.subr.bf16.mxu0 0
      %674 = vmatpush1.bf16.msra.mxu0 0
      %675 = vmatprep.subr.bf16.mxu0 0
      %676 = vmatpush1.bf16.msra.mxu0 0
      %677 = vmatprep.mubr.bf16.mxu0 0
      %678 = vmatmul.mubr.bf16.gmra.mrb[0].mxu0 %v643
      %v679 = vpop.f32.mrb[0].mxu0
      %v680 = vadd.f32 %v622, %v679
      %v681 = vpop.f32.mrb[0].mxu0
      %v682 = vpop.f32.mrb[0].mxu0
      %v683 = vadd.f32 %v622, %v682
      %v684 = vpop.f32.mrb[0].mxu0
      %685 = vdwg.mxu0
      %v686 = vxor.u32 %v680, 2147483648
      %v687 = vxor.u32 %v683, 2147483648
      %v688 = vmul.f32 %v686, 1.442695
      %v689 = vpow.pop %v688
      %v690 = vmul.f32 %v687, 1.442695
      %v691 = vpow.pop %v690
      %v692 = vadd.f32 %v689, 1.0
      %v693 = vadd.f32 %v691, 1.0
      %v694 = vrcp.pop %v692
      %v695 = vmul.f32 1.0, %v694
      %v696 = vrcp.pop %v693
      %v697 = vmul.f32 1.0, %v696
      %v698 = vmul.f32 %v680, %v695
      %v699 = vmul.f32 %v683, %v697
      %s700 = scalar_lea.vmem %s3, 24
      %v701 = vld [vmem:[%s700] sm:$0xf]
      %v702 = vld [vmem:[%s700 + $0x4] sm:$0xf]
      %v703 = vld [vmem:[%s700 + $0x8] sm:$0xf]
      %v704 = vld [vmem:[%s700 + $0xc] sm:$0xf]
      %v705 = vld [vmem:[%s700 + $0x10] sm:$0xf]
      %v706 = vld [vmem:[%s700 + $0x14] sm:$0xf]
      %s707 = scalar_lea.vmem %s4, 1
      %v708 = vld [vmem:[%s707] sm:$0x1]
      %v709 = vrot.slane %v698, 7
      %v710 = vrot.slane %v699, 7
      %v711 = vsel %vm308, %v709, %v710
      %v712 = vsel %vm308, %v710, %v709
      %v713 = vsel %vm315, %v712, 0.0
      %v714 = vsel %vm316, %v711, 0.0
      %v715 = vrot.slane %v698, 1
      %v716 = vrot.slane %v699, 1
      %v717 = vsel %vm321, %v715, %v716
      %v718 = vsel %vm321, %v716, %v715
      %v719 = vsel %vm328, %v717, 0.0
      %v720 = vsel %vm329, %v718, 0.0
      %723 = vrot.lane.b32.xlu0 %v698, 16
      %v724 = vpop.permute.xlu0 %723
      %725 = vrot.lane.b32.xlu0 %v699, 16
      %v726 = vpop.permute.xlu0 %725
      %731 = vrot.lane.b32.xlu0 %v719, 32
      %v732 = vpop.permute.xlu0 %731
      %733 = vrot.lane.b32.xlu0 %v720, 32
      %v734 = vpop.permute.xlu0 %733
      %v737 = vsel %vm348, %v713, %v724
      %v738 = vsel %vm348, %v714, %v726
      %v739 = vsel %vm351, %v737, %v732
      %v740 = vsel %vm351, %v738, %v734
      %v741 = vpack.c.bf16 %v740, %v739
      %v743 = vlaneseq
      %v744 = vshrl.u32 %v743, 7
      %v745 = vsub.s32 0, %v744
      %v746 = vrot.slane %v708, %v745
      %v754 = vunpack.c.l.b16 %v701
      %v755 = vunpack.c.l.b16 %v702
      %v756 = vunpack.c.l.b16 %v703
      %v757 = vunpack.c.l.b16 %v704
      %v758 = vunpack.c.l.b16 %v705
      %v759 = vunpack.c.l.b16 %v706
      %v760 = vpack.c.b16 %v755, %v754
      %v761 = vpack.c.b16 %v757, %v756
      %v762 = vpack.c.b16 %v759, %v758
      %v767 = vsel %vm379, %v741, 0
      %769 = vmatprep.subr.bf16.mxu0 0
      %770 = vmatpush1.bf16.msra.mxu0 %v760
      %771 = vmatprep.subr.bf16.mxu0 0
      %772 = vmatpush1.bf16.msra.mxu0 %v761
      %773 = vmatprep.subr.bf16.mxu0 0
      %774 = vmatpush1.bf16.msra.mxu0 %v762
      %775 = vmatprep.subr.bf16.mxu0 0
      %776 = vmatpush1.bf16.msra.mxu0 0
      %777 = vmatprep.subr.bf16.mxu0 0
      %778 = vmatpush1.bf16.msra.mxu0 0
      %779 = vmatprep.subr.bf16.mxu0 0
      %780 = vmatpush1.bf16.msra.mxu0 0
      %781 = vmatprep.subr.bf16.mxu0 0
      %782 = vmatpush1.bf16.msra.mxu0 0
      %783 = vmatprep.subr.bf16.mxu0 0
      %784 = vmatpush1.bf16.msra.mxu0 0
      %785 = vmatprep.subr.bf16.mxu0 0
      %786 = vmatpush1.bf16.msra.mxu0 0
      %787 = vmatprep.subr.bf16.mxu0 0
      %788 = vmatpush1.bf16.msra.mxu0 0
      %789 = vmatprep.subr.bf16.mxu0 0
      %790 = vmatpush1.bf16.msra.mxu0 0
      %791 = vmatprep.subr.bf16.mxu0 0
      %792 = vmatpush1.bf16.msra.mxu0 0
      %793 = vmatprep.subr.bf16.mxu0 0
      %794 = vmatpush1.bf16.msra.mxu0 0
      %795 = vmatprep.subr.bf16.mxu0 0
      %796 = vmatpush1.bf16.msra.mxu0 0
      %797 = vmatprep.subr.bf16.mxu0 0
      %798 = vmatpush1.bf16.msra.mxu0 0
      %799 = vmatprep.subr.bf16.mxu0 0
      %800 = vmatpush1.bf16.msra.mxu0 0
      %801 = vmatprep.mubr.bf16.mxu0 0
      %802 = vmatmul.mubr.bf16.gmra.mrb[0].mxu0 %v767
      %v803 = vpop.f32.mrb[0].mxu0
      %v804 = vadd.f32 %v746, %v803
      %v805 = vpop.f32.mrb[0].mxu0
      %v806 = vpop.f32.mrb[0].mxu0
      %v807 = vadd.f32 %v746, %v806
      %v808 = vpop.f32.mrb[0].mxu0
      %809 = vdwg.mxu0
      %v810 = vadd.f32 %v804, %v546
      %v811 = vadd.f32 %v807, %v547
      %v812 = vxor.u32 %v810, 2147483648
      %v813 = vxor.u32 %v811, 2147483648
      %v814 = vmul.f32 %v812, 1.442695
      %v815 = vpow.pop %v814
      %v816 = vmul.f32 %v813, 1.442695
      %v817 = vpow.pop %v816
      %v818 = vadd.f32 %v815, 1.0
      %v819 = vadd.f32 %v817, 1.0
      %v820 = vrcp.pop %v818
      %v821 = vmul.f32 1.0, %v820
      %v822 = vrcp.pop %v819
      %v823 = vmul.f32 1.0, %v822
      %v824 = vmul.f32 %v810, %v821
      %v825 = vmul.f32 %v811, %v823
      %s826 = scalar_lea.vmem %s1, 48
      %v827 = vld [vmem:[%s826] sm:$0xf]
      %v828 = vld [vmem:[%s826 + $0x4] sm:$0xf]
      %v829 = vld [vmem:[%s826 + $0x8] sm:$0xf]
      %v830 = vld [vmem:[%s826 + $0xc] sm:$0xf]
      %v831 = vld [vmem:[%s826 + $0x10] sm:$0xf]
      %v832 = vld [vmem:[%s826 + $0x14] sm:$0xf]
      %s833 = scalar_lea.vmem %s2, 2
      %v834 = vld [vmem:[%s833] sm:$0x1]
      %v835 = vrot.slane %v824, 3
      %v836 = vrot.slane %v825, 3
      %v837 = vsel %vm586, %v835, %v836
      %v838 = vsel %vm586, %v836, %v835
      %vm839 = vcmp.ge.s32.totalorder %v304, 5
      %vm840 = vcmp.ge.s32.totalorder %v305, 5
      %vm841 = vcmp.lt.s32.totalorder %v304, 21
      %vm842 = vcmp.lt.s32.totalorder %v305, 21
      %vm843 = vmand %vm839, %vm841
      %vm844 = vmand %vm840, %vm842
      %v845 = vsel %vm843, %v838, 0.0
      %v846 = vsel %vm844, %v837, 0.0
      %v847 = vrot.slane %v824, 5
      %v848 = vrot.slane %v825, 5
      %v849 = vsel %vm573, %v847, %v848
      %v850 = vsel %vm573, %v848, %v847
      %vm851 = vcmp.ge.s32.totalorder %v304, 4294967291
      %vm852 = vcmp.ge.s32.totalorder %v305, 4294967291
      %vm853 = vcmp.lt.s32.totalorder %v304, 11
      %vm854 = vcmp.lt.s32.totalorder %v305, 11
      %vm855 = vmand %vm851, %vm853
      %vm856 = vmand %vm852, %vm854
      %v857 = vsel %vm855, %v849, 0.0
      %v858 = vsel %vm856, %v850, 0.0
      %861 = vrot.lane.b32.xlu0 %v824, 16
      %v862 = vpop.permute.xlu0 %861
      %863 = vrot.lane.b32.xlu0 %v825, 16
      %v864 = vpop.permute.xlu0 %863
      %869 = vrot.lane.b32.xlu0 %v857, 32
      %v870 = vpop.permute.xlu0 %869
      %871 = vrot.lane.b32.xlu0 %v858, 32
      %v872 = vpop.permute.xlu0 %871
      %v875 = vsel %vm348, %v845, %v862
      %v876 = vsel %vm348, %v846, %v864
      %v877 = vsel %vm351, %v875, %v870
      %v878 = vsel %vm351, %v876, %v872
      %v879 = vpack.c.bf16 %v878, %v877
      %v881 = vlaneseq
      %v882 = vshrl.u32 %v881, 7
      %v883 = vsub.s32 0, %v882
      %v884 = vrot.slane %v834, %v883
      %v892 = vunpack.c.l.b16 %v827
      %v893 = vunpack.c.l.b16 %v828
      %v894 = vunpack.c.l.b16 %v829
      %v895 = vunpack.c.l.b16 %v830
      %v896 = vunpack.c.l.b16 %v831
      %v897 = vunpack.c.l.b16 %v832
      %v898 = vpack.c.b16 %v893, %v892
      %v899 = vpack.c.b16 %v895, %v894
      %v900 = vpack.c.b16 %v897, %v896
      %v905 = vsel %vm379, %v879, 0
      %907 = vmatprep.subr.bf16.mxu0 0
      %908 = vmatpush1.bf16.msra.mxu0 %v898
      %909 = vmatprep.subr.bf16.mxu0 0
      %910 = vmatpush1.bf16.msra.mxu0 %v899
      %911 = vmatprep.subr.bf16.mxu0 0
      %912 = vmatpush1.bf16.msra.mxu0 %v900
      %913 = vmatprep.subr.bf16.mxu0 0
      %914 = vmatpush1.bf16.msra.mxu0 0
      %915 = vmatprep.subr.bf16.mxu0 0
      %916 = vmatpush1.bf16.msra.mxu0 0
      %917 = vmatprep.subr.bf16.mxu0 0
      %918 = vmatpush1.bf16.msra.mxu0 0
      %919 = vmatprep.subr.bf16.mxu0 0
      %920 = vmatpush1.bf16.msra.mxu0 0
      %921 = vmatprep.subr.bf16.mxu0 0
      %922 = vmatpush1.bf16.msra.mxu0 0
      %923 = vmatprep.subr.bf16.mxu0 0
      %924 = vmatpush1.bf16.msra.mxu0 0
      %925 = vmatprep.subr.bf16.mxu0 0
      %926 = vmatpush1.bf16.msra.mxu0 0
      %927 = vmatprep.subr.bf16.mxu0 0
      %928 = vmatpush1.bf16.msra.mxu0 0
      %929 = vmatprep.subr.bf16.mxu0 0
      %930 = vmatpush1.bf16.msra.mxu0 0
      %931 = vmatprep.subr.bf16.mxu0 0
      %932 = vmatpush1.bf16.msra.mxu0 0
      %933 = vmatprep.subr.bf16.mxu0 0
      %934 = vmatpush1.bf16.msra.mxu0 0
      %935 = vmatprep.subr.bf16.mxu0 0
      %936 = vmatpush1.bf16.msra.mxu0 0
      %937 = vmatprep.subr.bf16.mxu0 0
      %938 = vmatpush1.bf16.msra.mxu0 0
      %939 = vmatprep.mubr.bf16.mxu0 0
      %940 = vmatmul.mubr.bf16.gmra.mrb[0].mxu0 %v905
      %v941 = vpop.f32.mrb[0].mxu0
      %v942 = vadd.f32 %v884, %v941
      %v943 = vpop.f32.mrb[0].mxu0
      %v944 = vpop.f32.mrb[0].mxu0
      %v945 = vadd.f32 %v884, %v944
      %v946 = vpop.f32.mrb[0].mxu0
      %947 = vdwg.mxu0
      %v948 = vxor.u32 %v942, 2147483648
      %v949 = vxor.u32 %v945, 2147483648
      %v950 = vmul.f32 %v948, 1.442695
      %v951 = vpow.pop %v950
      %v952 = vmul.f32 %v949, 1.442695
      %v953 = vpow.pop %v952
      %v954 = vadd.f32 %v951, 1.0
      %v955 = vadd.f32 %v953, 1.0
      %v956 = vrcp.pop %v954
      %v957 = vmul.f32 1.0, %v956
      %v958 = vrcp.pop %v955
      %v959 = vmul.f32 1.0, %v958
      %v960 = vmul.f32 %v942, %v957
      %v961 = vmul.f32 %v945, %v959
      %s962 = scalar_lea.vmem %s3, 48
      %v963 = vld [vmem:[%s962] sm:$0xf]
      %v964 = vld [vmem:[%s962 + $0x4] sm:$0xf]
      %v965 = vld [vmem:[%s962 + $0x8] sm:$0xf]
      %v966 = vld [vmem:[%s962 + $0xc] sm:$0xf]
      %v967 = vld [vmem:[%s962 + $0x10] sm:$0xf]
      %v968 = vld [vmem:[%s962 + $0x14] sm:$0xf]
      %s969 = scalar_lea.vmem %s4, 2
      %v970 = vld [vmem:[%s969] sm:$0x1]
      %v971 = vrot.slane %v960, 7
      %v972 = vrot.slane %v961, 7
      %v973 = vsel %vm308, %v971, %v972
      %v974 = vsel %vm308, %v972, %v971
      %v975 = vsel %vm315, %v974, 0.0
      %v976 = vsel %vm316, %v973, 0.0
      %v977 = vrot.slane %v960, 1
      %v978 = vrot.slane %v961, 1
      %v979 = vsel %vm321, %v977, %v978
      %v980 = vsel %vm321, %v978, %v977
      %v981 = vsel %vm328, %v979, 0.0
      %v982 = vsel %vm329, %v980, 0.0
      %985 = vrot.lane.b32.xlu0 %v960, 16
      %v986 = vpop.permute.xlu0 %985
      %987 = vrot.lane.b32.xlu0 %v961, 16
      %v988 = vpop.permute.xlu0 %987
      %993 = vrot.lane.b32.xlu0 %v981, 32
      %v994 = vpop.permute.xlu0 %993
      %995 = vrot.lane.b32.xlu0 %v982, 32
      %v996 = vpop.permute.xlu0 %995
      %v999 = vsel %vm348, %v975, %v986
      %v1000 = vsel %vm348, %v976, %v988
      %v1001 = vsel %vm351, %v999, %v994
      %v1002 = vsel %vm351, %v1000, %v996
      %v1003 = vpack.c.bf16 %v1002, %v1001
      %v1005 = vlaneseq
      %v1006 = vshrl.u32 %v1005, 7
      %v1007 = vsub.s32 0, %v1006
      %v1008 = vrot.slane %v970, %v1007
      %v1016 = vunpack.c.l.b16 %v963
      %v1017 = vunpack.c.l.b16 %v964
      %v1018 = vunpack.c.l.b16 %v965
      %v1019 = vunpack.c.l.b16 %v966
      %v1020 = vunpack.c.l.b16 %v967
      %v1021 = vunpack.c.l.b16 %v968
      %v1022 = vpack.c.b16 %v1017, %v1016
      %v1023 = vpack.c.b16 %v1019, %v1018
      %v1024 = vpack.c.b16 %v1021, %v1020
      %v1029 = vsel %vm379, %v1003, 0
      %1031 = vmatprep.subr.bf16.mxu0 0
      %1032 = vmatpush1.bf16.msra.mxu0 %v1022
      %1033 = vmatprep.subr.bf16.mxu0 0
      %1034 = vmatpush1.bf16.msra.mxu0 %v1023
      %1035 = vmatprep.subr.bf16.mxu0 0
      %1036 = vmatpush1.bf16.msra.mxu0 %v1024
      %1037 = vmatprep.subr.bf16.mxu0 0
      %1038 = vmatpush1.bf16.msra.mxu0 0
      %1039 = vmatprep.subr.bf16.mxu0 0
      %1040 = vmatpush1.bf16.msra.mxu0 0
      %1041 = vmatprep.subr.bf16.mxu0 0
      %1042 = vmatpush1.bf16.msra.mxu0 0
      %1043 = vmatprep.subr.bf16.mxu0 0
      %1044 = vmatpush1.bf16.msra.mxu0 0
      %1045 = vmatprep.subr.bf16.mxu0 0
      %1046 = vmatpush1.bf16.msra.mxu0 0
      %1047 = vmatprep.subr.bf16.mxu0 0
      %1048 = vmatpush1.bf16.msra.mxu0 0
      %1049 = vmatprep.subr.bf16.mxu0 0
      %1050 = vmatpush1.bf16.msra.mxu0 0
      %1051 = vmatprep.subr.bf16.mxu0 0
      %1052 = vmatpush1.bf16.msra.mxu0 0
      %1053 = vmatprep.subr.bf16.mxu0 0
      %1054 = vmatpush1.bf16.msra.mxu0 0
      %1055 = vmatprep.subr.bf16.mxu0 0
      %1056 = vmatpush1.bf16.msra.mxu0 0
      %1057 = vmatprep.subr.bf16.mxu0 0
      %1058 = vmatpush1.bf16.msra.mxu0 0
      %1059 = vmatprep.subr.bf16.mxu0 0
      %1060 = vmatpush1.bf16.msra.mxu0 0
      %1061 = vmatprep.subr.bf16.mxu0 0
      %1062 = vmatpush1.bf16.msra.mxu0 0
      %1063 = vmatprep.mubr.bf16.mxu0 0
      %1064 = vmatmul.mubr.bf16.gmra.mrb[0].mxu0 %v1029
      %v1065 = vpop.f32.mrb[0].mxu0
      %v1066 = vadd.f32 %v1008, %v1065
      %v1067 = vpop.f32.mrb[0].mxu0
      %v1068 = vpop.f32.mrb[0].mxu0
      %v1069 = vadd.f32 %v1008, %v1068
      %v1070 = vpop.f32.mrb[0].mxu0
      %1071 = vdwg.mxu0
      %v1072 = vadd.f32 %v1066, %v810
      %v1073 = vadd.f32 %v1069, %v811
      %v1074 = vxor.u32 %v1072, 2147483648
      %v1075 = vxor.u32 %v1073, 2147483648
      %v1076 = vmul.f32 %v1074, 1.442695
      %v1077 = vpow.pop %v1076
      %v1078 = vmul.f32 %v1075, 1.442695
      %v1079 = vpow.pop %v1078
      %v1080 = vadd.f32 %v1077, 1.0
      %v1081 = vadd.f32 %v1079, 1.0
      %v1082 = vrcp.pop %v1080
      %v1083 = vmul.f32 1.0, %v1082
      %v1084 = vrcp.pop %v1081
      %v1085 = vmul.f32 1.0, %v1084
      %v1086 = vmul.f32 %v1072, %v1083
      %v1087 = vmul.f32 %v1073, %v1085
      %v1088 = vld [vmem:[%s5] sm:$0xf]
      %v1089 = vld [vmem:[%s5 + $0x4] sm:$0xf]
      %v1090 = vld [vmem:[%s5 + $0x8] sm:$0xf]
      %v1091 = vld [vmem:[%s5 + $0xc] sm:$0xf]
      %v1092 = vld [vmem:[%s5 + $0x10] sm:$0xf]
      %v1093 = vld [vmem:[%s5 + $0x14] sm:$0xf]
      %v1094 = vld [vmem:[%s6] sm:$0x1]
      %v1095 = vrot.slane %v1086, 7
      %v1096 = vrot.slane %v1087, 7
      %v1097 = vsel %vm308, %v1095, %v1096
      %v1098 = vsel %vm308, %v1096, %v1095
      %v1099 = vsel %vm315, %v1098, 0.0
      %v1100 = vsel %vm316, %v1097, 0.0
      %v1101 = vrot.slane %v1086, 1
      %v1102 = vrot.slane %v1087, 1
      %v1103 = vsel %vm321, %v1101, %v1102
      %v1104 = vsel %vm321, %v1102, %v1101
      %v1105 = vsel %vm328, %v1103, 0.0
      %v1106 = vsel %vm329, %v1104, 0.0
      %1109 = vrot.lane.b32.xlu0 %v1086, 16
      %v1110 = vpop.permute.xlu0 %1109
      %1111 = vrot.lane.b32.xlu0 %v1087, 16
      %v1112 = vpop.permute.xlu0 %1111
      %1117 = vrot.lane.b32.xlu0 %v1105, 32
      %v1118 = vpop.permute.xlu0 %1117
      %1119 = vrot.lane.b32.xlu0 %v1106, 32
      %v1120 = vpop.permute.xlu0 %1119
      %v1123 = vsel %vm348, %v1099, %v1110
      %v1124 = vsel %vm348, %v1100, %v1112
      %v1125 = vsel %vm351, %v1123, %v1118
      %v1126 = vsel %vm351, %v1124, %v1120
      %v1127 = vpack.c.bf16 %v1126, %v1125
      %v1129 = vlaneseq
      %v1130 = vshrl.u32 %v1129, 7
      %v1131 = vsub.s32 0, %v1130
      %v1132 = vrot.slane %v1094, %v1131
      %v1140 = vunpack.c.l.b16 %v1088
      %v1141 = vunpack.c.l.b16 %v1089
      %v1142 = vunpack.c.l.b16 %v1090
      %v1143 = vunpack.c.l.b16 %v1091
      %v1144 = vunpack.c.l.b16 %v1092
      %v1145 = vunpack.c.l.b16 %v1093
      %v1146 = vpack.c.b16 %v1141, %v1140
      %v1147 = vpack.c.b16 %v1143, %v1142
      %v1148 = vpack.c.b16 %v1145, %v1144
      %v1153 = vsel %vm379, %v1127, 0
      %1155 = vmatprep.subr.bf16.mxu0 0
      %1156 = vmatpush1.bf16.msra.mxu0 %v1146
      %1157 = vmatprep.subr.bf16.mxu0 0
      %1158 = vmatpush1.bf16.msra.mxu0 %v1147
      %1159 = vmatprep.subr.bf16.mxu0 0
      %1160 = vmatpush1.bf16.msra.mxu0 %v1148
      %1161 = vmatprep.subr.bf16.mxu0 0
      %1162 = vmatpush1.bf16.msra.mxu0 0
      %1163 = vmatprep.subr.bf16.mxu0 0
      %1164 = vmatpush1.bf16.msra.mxu0 0
      %1165 = vmatprep.subr.bf16.mxu0 0
      %1166 = vmatpush1.bf16.msra.mxu0 0
      %1167 = vmatprep.subr.bf16.mxu0 0
      %1168 = vmatpush1.bf16.msra.mxu0 0
      %1169 = vmatprep.subr.bf16.mxu0 0
      %1170 = vmatpush1.bf16.msra.mxu0 0
      %1171 = vmatprep.subr.bf16.mxu0 0
      %1172 = vmatpush1.bf16.msra.mxu0 0
      %1173 = vmatprep.subr.bf16.mxu0 0
      %1174 = vmatpush1.bf16.msra.mxu0 0
      %1175 = vmatprep.subr.bf16.mxu0 0
      %1176 = vmatpush1.bf16.msra.mxu0 0
      %1177 = vmatprep.subr.bf16.mxu0 0
      %1178 = vmatpush1.bf16.msra.mxu0 0
      %1179 = vmatprep.subr.bf16.mxu0 0
      %1180 = vmatpush1.bf16.msra.mxu0 0
      %1181 = vmatprep.subr.bf16.mxu0 0
      %1182 = vmatpush1.bf16.msra.mxu0 0
      %1183 = vmatprep.subr.bf16.mxu0 0
      %1184 = vmatpush1.bf16.msra.mxu0 0
      %1185 = vmatprep.subr.bf16.mxu0 0
      %1186 = vmatpush1.bf16.msra.mxu0 0
      %1187 = vmatprep.mubr.bf16.mxu0 0
      %1188 = vmatmul.mubr.bf16.gmra.mrb[0].mxu0 %v1153
      %v1189 = vpop.f32.mrb[0].mxu0
      %v1190 = vadd.f32 %v1132, %v1189
      %v1191 = vpop.f32.mrb[0].mxu0
      %v1192 = vpop.f32.mrb[0].mxu0
      %v1193 = vadd.f32 %v1132, %v1192
      %v1194 = vpop.f32.mrb[0].mxu0
      %1195 = vdwg.mxu0
      %1196 = vst.msk [vmem:[%s278] sm:$0xff] %vm348, %v1190
      %1197 = vst.msk [vmem:[%s278 + $0x8] sm:$0xff] %vm348, %v1193
      %p1198 = scmp.lt.s32.totalorder %s18, 1
      %s1199 = scalar_select %p1198, %s18, 1
      %s1200 = smul.addr %s1199, 2
      %s1201 = smul.addr %s1200, 8
      %s1202 = scalar_lea.vmem %s7, %s1201
      // Predicated region
      $region49: #{fwd.8} parent=47 // pred_check
        %p1203 = pneg %p188
      $region50: #{fwd.8} parent=47 // pred_check_branch
        %1205 = sbr.rel (%p1203) target = $region52
      $region51: #{fwd.8} parent=47 // pred_region
        _
      $region52: #{fwd.8} parent=47 // pred_fallthru
        _
    $region48: #{fwd.8} parent=5 // pred_fallthru
      _
    %p1206 = scmp.le.s32.totalorder 2, %s13
    // Predicated region
    $region53: #{fwd.8} parent=5 // pred_check
      %p1207 = pneg %p1206
    $region54: #{fwd.8} parent=5 // pred_check_branch
      %1209 = sbr.rel (%p1207) target = $region56
    $region55: #{fwd.8} parent=5 // pred_region
      %s1210 = ssub.s32 %s13, 2
      // Predicated region
      $region57: #{fwd.8} parent=55 // pred_check
        %p1211 = pneg %p194
      $region58: #{fwd.8} parent=55 // pred_check_branch
        %1213 = sbr.rel (%p1211) target = $region60
      $region59: #{fwd.8} parent=55 // pred_region
        %p1214 = scmp.lt.s32.totalorder %s19, 1
        %s1215 = scalar_select %p1214, %s19, 1
        %s1216 = smul.addr %s1215, 2
        %s1217 = smul.addr %s1216, 8
        %s1218 = scalar_lea.vmem %s7, %s1217
      $region60: #{fwd.8} parent=55 // pred_fallthru
        _
    $region56: #{fwd.8} parent=5 // pred_fallthru
      _
  $region6: #{fwd.8} parent=0 // loop_footer
    %s17 = sadd.s32 1, %s13
  $region7: #{fwd.8} parent=0 // loop_footer_branch
    %12 = sbr.rel target = $region3
  $region8: #{fwd.8} parent=0 // loop_exit
    _

// kernel: fwd.9
$region0: #{fwd.9}
  #allocation0 [shape = 'u32[]', space=smem, size = 0x4, offset = 0x4, fixed_abs, tag = 'smem constant byte address 0x4 - core index']
  #allocation1 [shape = 'u32[144,128]{1,0:T(1,128)}', space=vmem, size = 0x12000, scoped, tag = 'internal scratch']
  #allocation2 [shape = 'f32[1,1]{1,0:T(1,128)S(1)}', space=vmem, size = 0x200, scoped, tag = 'scoped memory for fwd.9']
  %s0 = inlined_call_operand.vmem [shape: f32[2,32,8], index: 0, kind: input, shape index: {}]
  %s1 = inlined_call_operand.vmem [shape: bf16[3,24,8], index: 1, kind: input, shape index: {}]
  %s2 = inlined_call_operand.vmem [shape: f32[3,1,8], index: 2, kind: input, shape index: {}]
  %s3 = inlined_call_operand.vmem [shape: bf16[3,24,8], index: 3, kind: input, shape index: {}]
  %s4 = inlined_call_operand.vmem [shape: f32[3,1,8], index: 4, kind: input, shape index: {}]
  %s5 = inlined_call_operand.vmem [shape: bf16[56,1], index: 5, kind: input, shape index: {}]
  %s6 = inlined_call_operand.<no memory space> [shape: f32[1,1], index: 6, kind: input, shape index: {}]
  %s7 = inlined_call_operand.vmem [shape: f32[2,32,1], index: 7, kind: output, shape index: {}]
  %s8 = sld [smem:[#allocation0]]
  $region61: #{fwd.9} parent=0
    _
  %s10 = ssub.s32 1, %s8
  %s11 = scalar_select 0, %s10, %s8
  %v12 = vstv %s6
  %13 = vst [vmem:[#allocation2] sm:$0x1] %v12
  loop: start=0, step=1, limit=4
  $region2: #{fwd.9} parent=0 // loop_pre_header
    _
  $region3: #{fwd.9} parent=0 // loop_header
    %s15 = sphi 0, %s19
    %p16 = scmp.ge.s32.totalorder %s15, 4
    %s25 = sphi 0, %s27
    %s28 = sphi 0, %s25
    %s29 = sphi 0, %s28
    %s45 = sphi 0, %s29
    %s49 = sphi 0, %s49
    %s51 = sphi 0, %s49
    %s52 = sphi 0, %s51
    %s66 = sphi 0, %s52
    %s70 = sphi 0, %s70
    %s72 = sphi 0, %s70
    %s73 = sphi 0, %s72
    %s87 = sphi 0, %s73
    %s91 = sphi 0, %s91
    %s93 = sphi 0, %s91
    %s94 = sphi 0, %s93
    %s108 = sphi 0, %s94
    %s112 = sphi 0, %s112
    %s114 = sphi 0, %s112
    %s115 = sphi 0, %s114
    %s129 = sphi 0, %s115
    %s133 = sphi 0, %s133
    %s135 = sphi 0, %s133
    %s136 = sphi 0, %s135
    %s150 = sphi 0, %s136
    %s154 = sphi 0, %s154
    %s156 = sphi 0, %s154
    %s157 = sphi 0, %s156
    %s171 = sphi 0, %s157
    %s177 = sphi 0, %s179
    %s180 = sphi 0, %s177
    %s181 = sphi 0, %s180
    %s197 = sphi 0, %s181
  $region4: #{fwd.9} parent=0 // loop_header_branch
    %18 = sbr.rel (%p16) target = $region8
  $region5: #{fwd.9} parent=0 // loop_body
    %s20 = ssub.s32 %s15, 1
    %s21 = ssub.s32 %s15, 2
    %s22 = sadd.s32 %s15, 1
    %s23 = ssub.s32 %s15, %s22
    %p24 = scmp.eq.s32.totalorder %s23, 0
    %s26 = sadd.s32 %s25, 1
    %s27 = scalar_select %p24, %s25, %s26
    %p30 = pneg %p24
    %p31 = scmp.eq.s32.totalorder %s15, 1
    %p32 = por %p30, %p31
    %p33 = scmp.ne.s32.totalorder %s25, %s28
    %p34 = scmp.eq.s32.totalorder %s15, 0
    %p35 = por %p33, %p34
    %p36 = scmp.ne.s32.totalorder %s25, %s28
    %p37 = scmp.eq.s32.totalorder %s20, 1
    %p38 = por %p36, %p37
    %p39 = scmp.ne.s32.totalorder %s28, %s29
    %p40 = scmp.eq.s32.totalorder %s20, 0
    %p41 = por %p39, %p40
    %p42 = scmp.ne.s32.totalorder %s28, %s29
    %p43 = scmp.eq.s32.totalorder %s21, 1
    %p44 = por %p42, %p43
    %p46 = scmp.ne.s32.totalorder %s29, %s45
    %p47 = scmp.eq.s32.totalorder %s21, 0
    %p48 = por %p46, %p47
    %s50 = sadd.s32 %s49, 1
    %p53 = scmp.eq.s32.totalorder %s15, 1
    %p54 = scmp.ne.s32.totalorder %s49, %s51
    %p55 = scmp.eq.s32.totalorder %s15, 0
    %p56 = por %p54, %p55
    %p57 = scmp.ne.s32.totalorder %s49, %s51
    %p58 = scmp.eq.s32.totalorder %s20, 1
    %p59 = por %p57, %p58
    %p60 = scmp.ne.s32.totalorder %s51, %s52
    %p61 = scmp.eq.s32.totalorder %s20, 0
    %p62 = por %p60, %p61
    %p63 = scmp.ne.s32.totalorder %s51, %s52
    %p64 = scmp.eq.s32.totalorder %s21, 1
    %p65 = por %p63, %p64
    %p67 = scmp.ne.s32.totalorder %s52, %s66
    %p68 = scmp.eq.s32.totalorder %s21, 0
    %p69 = por %p67, %p68
    %s71 = sadd.s32 %s70, 1
    %p74 = scmp.eq.s32.totalorder %s15, 1
    %p75 = scmp.ne.s32.totalorder %s70, %s72
    %p76 = scmp.eq.s32.totalorder %s15, 0
    %p77 = por %p75, %p76
    %p78 = scmp.ne.s32.totalorder %s70, %s72
    %p79 = scmp.eq.s32.totalorder %s20, 1
    %p80 = por %p78, %p79
    %p81 = scmp.ne.s32.totalorder %s72, %s73
    %p82 = scmp.eq.s32.totalorder %s20, 0
    %p83 = por %p81, %p82
    %p84 = scmp.ne.s32.totalorder %s72, %s73
    %p85 = scmp.eq.s32.totalorder %s21, 1
    %p86 = por %p84, %p85
    %p88 = scmp.ne.s32.totalorder %s73, %s87
    %p89 = scmp.eq.s32.totalorder %s21, 0
    %p90 = por %p88, %p89
    %s92 = sadd.s32 %s91, 1
    %p95 = scmp.eq.s32.totalorder %s15, 1
    %p96 = scmp.ne.s32.totalorder %s91, %s93
    %p97 = scmp.eq.s32.totalorder %s15, 0
    %p98 = por %p96, %p97
    %p99 = scmp.ne.s32.totalorder %s91, %s93
    %p100 = scmp.eq.s32.totalorder %s20, 1
    %p101 = por %p99, %p100
    %p102 = scmp.ne.s32.totalorder %s93, %s94
    %p103 = scmp.eq.s32.totalorder %s20, 0
    %p104 = por %p102, %p103
    %p105 = scmp.ne.s32.totalorder %s93, %s94
    %p106 = scmp.eq.s32.totalorder %s21, 1
    %p107 = por %p105, %p106
    %p109 = scmp.ne.s32.totalorder %s94, %s108
    %p110 = scmp.eq.s32.totalorder %s21, 0
    %p111 = por %p109, %p110
    %s113 = sadd.s32 %s112, 1
    %p116 = scmp.eq.s32.totalorder %s15, 1
    %p117 = scmp.ne.s32.totalorder %s112, %s114
    %p118 = scmp.eq.s32.totalorder %s15, 0
    %p119 = por %p117, %p118
    %p120 = scmp.ne.s32.totalorder %s112, %s114
    %p121 = scmp.eq.s32.totalorder %s20, 1
    %p122 = por %p120, %p121
    %p123 = scmp.ne.s32.totalorder %s114, %s115
    %p124 = scmp.eq.s32.totalorder %s20, 0
    %p125 = por %p123, %p124
    %p126 = scmp.ne.s32.totalorder %s114, %s115
    %p127 = scmp.eq.s32.totalorder %s21, 1
    %p128 = por %p126, %p127
    %p130 = scmp.ne.s32.totalorder %s115, %s129
    %p131 = scmp.eq.s32.totalorder %s21, 0
    %p132 = por %p130, %p131
    %s134 = sadd.s32 %s133, 1
    %p137 = scmp.eq.s32.totalorder %s15, 1
    %p138 = scmp.ne.s32.totalorder %s133, %s135
    %p139 = scmp.eq.s32.totalorder %s15, 0
    %p140 = por %p138, %p139
    %p141 = scmp.ne.s32.totalorder %s133, %s135
    %p142 = scmp.eq.s32.totalorder %s20, 1
    %p143 = por %p141, %p142
    %p144 = scmp.ne.s32.totalorder %s135, %s136
    %p145 = scmp.eq.s32.totalorder %s20, 0
    %p146 = por %p144, %p145
    %p147 = scmp.ne.s32.totalorder %s135, %s136
    %p148 = scmp.eq.s32.totalorder %s21, 1
    %p149 = por %p147, %p148
    %p151 = scmp.ne.s32.totalorder %s136, %s150
    %p152 = scmp.eq.s32.totalorder %s21, 0
    %p153 = por %p151, %p152
    %s155 = sadd.s32 %s154, 1
    %p158 = scmp.eq.s32.totalorder %s15, 1
    %p159 = scmp.ne.s32.totalorder %s154, %s156
    %p160 = scmp.eq.s32.totalorder %s15, 0
    %p161 = por %p159, %p160
    %p162 = scmp.ne.s32.totalorder %s154, %s156
    %p163 = scmp.eq.s32.totalorder %s20, 1
    %p164 = por %p162, %p163
    %p165 = scmp.ne.s32.totalorder %s156, %s157
    %p166 = scmp.eq.s32.totalorder %s20, 0
    %p167 = por %p165, %p166
    %p168 = scmp.ne.s32.totalorder %s156, %s157
    %p169 = scmp.eq.s32.totalorder %s21, 1
    %p170 = por %p168, %p169
    %p172 = scmp.ne.s32.totalorder %s157, %s171
    %p173 = scmp.eq.s32.totalorder %s21, 0
    %p174 = por %p172, %p173
    %s175 = ssub.s32 %s15, %s22
    %p176 = scmp.eq.s32.totalorder %s175, 0
    %s178 = sadd.s32 %s177, 1
    %s179 = scalar_select %p176, %s177, %s178
    %p182 = pneg %p176
    %p183 = scmp.eq.s32.totalorder %s15, 1
    %p184 = por %p182, %p183
    %p185 = scmp.ne.s32.totalorder %s177, %s180
    %p186 = scmp.eq.s32.totalorder %s15, 0
    %p187 = por %p185, %p186
    %p188 = scmp.ne.s32.totalorder %s177, %s180
    %p189 = scmp.eq.s32.totalorder %s20, 1
    %p190 = por %p188, %p189
    %p191 = scmp.ne.s32.totalorder %s180, %s181
    %p192 = scmp.eq.s32.totalorder %s20, 0
    %p193 = por %p191, %p192
    %p194 = scmp.ne.s32.totalorder %s180, %s181
    %p195 = scmp.eq.s32.totalorder %s21, 1
    %p196 = por %p194, %p195
    %p198 = scmp.ne.s32.totalorder %s181, %s197
    %p199 = scmp.eq.s32.totalorder %s21, 0
    %p200 = por %p198, %p199
    %p201 = scmp.le.s32.totalorder 1, %s15
    %p202 = scmp.lt.s32.totalorder %s15, 3
    %p203 = pnand %p201, %p202
    %p204 = pneg %p203
    // Predicated region
    $region9: #{fwd.9} parent=5 // pred_check
      _
    $region10: #{fwd.9} parent=5 // pred_check_branch
      %206 = sbr.rel (%p203) target = $region12
    $region11: #{fwd.9} parent=5 // pred_region
      %s207 = ssub.s32 %s15, 1
      // Predicated region
      $region13: #{fwd.9} parent=11 // pred_check
        %p208 = pneg %p62
      $region14: #{fwd.9} parent=11 // pred_check_branch
        %210 = sbr.rel (%p208) target = $region16
      $region15: #{fwd.9} parent=11 // pred_region
        _
      $region16: #{fwd.9} parent=11 // pred_fallthru
        _
      // Predicated region
      $region17: #{fwd.9} parent=11 // pred_check
        %p211 = pneg %p83
      $region18: #{fwd.9} parent=11 // pred_check_branch
        %213 = sbr.rel (%p211) target = $region20
      $region19: #{fwd.9} parent=11 // pred_region
        _
      $region20: #{fwd.9} parent=11 // pred_fallthru
        _
      // Predicated region
      $region21: #{fwd.9} parent=11 // pred_check
        %p214 = pneg %p104
      $region22: #{fwd.9} parent=11 // pred_check_branch
        %216 = sbr.rel (%p214) target = $region24
      $region23: #{fwd.9} parent=11 // pred_region
        _
      $region24: #{fwd.9} parent=11 // pred_fallthru
        _
      // Predicated region
      $region25: #{fwd.9} parent=11 // pred_check
        %p217 = pneg %p125
      $region26: #{fwd.9} parent=11 // pred_check_branch
        %219 = sbr.rel (%p217) target = $region28
      $region27: #{fwd.9} parent=11 // pred_region
        _
      $region28: #{fwd.9} parent=11 // pred_fallthru
        _
      // Predicated region
      $region29: #{fwd.9} parent=11 // pred_check
        %p220 = pneg %p146
      $region30: #{fwd.9} parent=11 // pred_check_branch
        %222 = sbr.rel (%p220) target = $region32
      $region31: #{fwd.9} parent=11 // pred_region
        _
      $region32: #{fwd.9} parent=11 // pred_fallthru
        _
      // Predicated region
      $region33: #{fwd.9} parent=11 // pred_check
        %p223 = pneg %p167
      $region34: #{fwd.9} parent=11 // pred_check_branch
        %225 = sbr.rel (%p223) target = $region36
      $region35: #{fwd.9} parent=11 // pred_region
        _
      $region36: #{fwd.9} parent=11 // pred_fallthru
        _
    $region12: #{fwd.9} parent=5 // pred_fallthru
      _
    %p226 = scmp.lt.s32.totalorder %s15, 2
    // Predicated region
    $region37: #{fwd.9} parent=5 // pred_check
      %p227 = pneg %p226
    $region38: #{fwd.9} parent=5 // pred_check_branch
      %229 = sbr.rel (%p227) target = $region40
    $region39: #{fwd.9} parent=5 // pred_region
      // Predicated region
      $region41: #{fwd.9} parent=39 // pred_check
        %p230 = pneg %p35
      $region42: #{fwd.9} parent=39 // pred_check_branch
        %232 = sbr.rel (%p230) target = $region44
      $region43: #{fwd.9} parent=39 // pred_region
        %p233 = scmp.lt.s32.totalorder %s15, 1
        %s234 = scalar_select %p233, %s15, 1
        %s235 = smul.addr %s234, 4
        %s236 = smul.addr %s235, 8
        %s237 = scalar_lea.vmem %s0, %s236
      $region44: #{fwd.9} parent=39 // pred_fallthru
        _
    $region40: #{fwd.9} parent=5 // pred_fallthru
      _
    %p238 = scmp.le.s32.totalorder 1, %s15
    %p239 = scmp.lt.s32.totalorder %s15, 3
    %p240 = pnand %p238, %p239
    %p241 = pneg %p240
    // Predicated region
    $region45: #{fwd.9} parent=5 // pred_check
      _
    $region46: #{fwd.9} parent=5 // pred_check_branch
      %243 = sbr.rel (%p240) target = $region48
    $region47: #{fwd.9} parent=5 // pred_region
      %s244 = ssub.s32 %s15, 1
      %p245 = scmp.lt.s32.totalorder %s20, 1
      %s246 = scalar_select %p245, %s20, 1
      %s247 = smul.addr %s246, 4
      %s248 = smul.addr %s247, 8
      %s249 = scalar_lea.vmem %s0, %s248
      %p250 = pneg %p41
      %p251 = pneg %p38
      %p252 = pneg %p62
      %p253 = pneg %p59
      %p254 = pneg %p83
      %p255 = pneg %p80
      %p256 = pneg %p104
      %p257 = pneg %p101
      %p258 = pneg %p125
      %p259 = pneg %p122
      %p260 = pneg %p146
      %p261 = pneg %p143
      %p262 = pneg %p167
      %p263 = pneg %p164
      %p264 = pneg %p193
      %p265 = pneg %p190
      %p266 = scmp.lt.s32.totalorder %s20, 1
      %s267 = scalar_select %p266, %s20, 1
      %s268 = smul.addr %s267, 4
      %s269 = smul.addr %s268, 8
      %s270 = scalar_lea.vmem %s7, %s269
      %p271 = scmp.lt.s32.totalorder %s20, 1
      %s272 = scalar_select %p271, %s20, 1
      %s273 = smul.addr %s272, 4
      %s274 = smul.addr %s273, 8
      %s275 = scalar_lea.vmem %s0, %s274
      %p276 = scmp.lt.s32.totalorder %s20, 1
      %s277 = scalar_select %p276, %s20, 1
      %s278 = smul.addr %s277, 4
      %s279 = smul.addr %s278, 8
      %s280 = scalar_lea.vmem %s7, %s279
      %v282 = vld [vmem:[%s275] sm:$0xff]
      %v283 = vld [vmem:[%s275 + $0x8] sm:$0xff]
      %v284 = vld [vmem:[%s275 + $0x10] sm:$0xff]
      %v285 = vld [vmem:[%s275 + $0x18] sm:$0xff]
      %v286 = vxor.u32 %v282, 2147483648
      %v287 = vxor.u32 %v283, 2147483648
      %v288 = vxor.u32 %v284, 2147483648
      %v289 = vxor.u32 %v285, 2147483648
      %v290 = vmul.f32 %v286, 1.442695
      %v291 = vpow.pop %v290
      %v292 = vmul.f32 %v287, 1.442695
      %v293 = vpow.pop %v292
      %v294 = vmul.f32 %v288, 1.442695
      %v295 = vpow.pop %v294
      %v296 = vmul.f32 %v289, 1.442695
      %v297 = vpow.pop %v296
      %v298 = vadd.f32 %v291, 1.0
      %v299 = vadd.f32 %v293, 1.0
      %v300 = vadd.f32 %v295, 1.0
      %v301 = vadd.f32 %v297, 1.0
      %v302 = vrcp.pop %v298
      %v303 = vmul.f32 1.0, %v302
      %v304 = vrcp.pop %v299
      %v305 = vmul.f32 1.0, %v304
      %v306 = vrcp.pop %v300
      %v307 = vmul.f32 1.0, %v306
      %v308 = vrcp.pop %v301
      %v309 = vmul.f32 1.0, %v308
      %v310 = vmul.f32 %v282, %v303
      %v311 = vmul.f32 %v283, %v305
      %v312 = vmul.f32 %v284, %v307
      %v313 = vmul.f32 %v285, %v309
      %v314 = vld [vmem:[%s1] sm:$0xf]
      %v315 = vld [vmem:[%s1 + $0x4] sm:$0xf]
      %v316 = vld [vmem:[%s1 + $0x8] sm:$0xf]
      %v317 = vld [vmem:[%s2] sm:$0x1]
      %v318 = vlaneseq
      %v319 = vshrl.u32 %v318, 7
      %v320 = vadd.s32 %v319, 8
      %v321 = vadd.s32 %v319, 16
      %v322 = vadd.s32 %v319, 24
      %v323 = vrot.slane %v310, 7
      %v324 = vrot.slane %v311, 7
      %v325 = vrot.slane %v312, 7
      %v326 = vrot.slane %v313, 7
      %vm327 = vcmp.lt.s32.totalorder %v319, 1
      %v328 = vsel %vm327, %v325, %v326
      %v329 = vsel %vm327, %v324, %v325
      %v330 = vsel %vm327, %v323, %v324
      %v331 = vsel %vm327, %v326, %v323
      %vm332 = vcmp.ge.s32.totalorder %v319, 1
      %vm333 = vcmp.ge.s32.totalorder %v320, 1
      %vm334 = vcmp.ge.s32.totalorder %v321, 1
      %vm335 = vcmp.ge.s32.totalorder %v322, 1
      %vm336 = vcmp.lt.s32.totalorder %v319, 33
      %vm337 = vcmp.lt.s32.totalorder %v320, 33
      %vm338 = vcmp.lt.s32.totalorder %v321, 33
      %vm339 = vcmp.lt.s32.totalorder %v322, 33
      %vm340 = vmand %vm332, %vm336
      %vm341 = vmand %vm333, %vm337
      %vm342 = vmand %vm334, %vm338
      %vm343 = vmand %vm335, %vm339
      %v344 = vsel %vm340, %v331, 0.0
      %v345 = vsel %vm341, %v330, 0.0
      %v346 = vsel %vm342, %v329, 0.0
      %v347 = vsel %vm343, %v328, 0.0
      %v348 = vrot.slane %v310, 1
      %v349 = vrot.slane %v311, 1
      %v350 = vrot.slane %v312, 1
      %v351 = vrot.slane %v313, 1
      %vm352 = vcmp.lt.s32.totalorder %v319, 7
      %v353 = vsel %vm352, %v350, %v351
      %v354 = vsel %vm352, %v349, %v350
      %v355 = vsel %vm352, %v348, %v349
      %v356 = vsel %vm352, %v351, %v348
      %vm357 = vcmp.ge.s32.totalorder %v319, 4294967295
      %vm358 = vcmp.ge.s32.totalorder %v320, 4294967295
      %vm359 = vcmp.ge.s32.totalorder %v321, 4294967295
      %vm360 = vcmp.ge.s32.totalorder %v322, 4294967295
      %vm361 = vcmp.lt.s32.totalorder %v319, 31
      %vm362 = vcmp.lt.s32.totalorder %v320, 31
      %vm363 = vcmp.lt.s32.totalorder %v321, 31
      %vm364 = vcmp.lt.s32.totalorder %v322, 31
      %vm365 = vmand %vm357, %vm361
      %vm366 = vmand %vm358, %vm362
      %vm367 = vmand %vm359, %vm363
      %vm368 = vmand %vm360, %vm364
      %v369 = vsel %vm365, %v355, 0.0
      %v370 = vsel %vm366, %v354, 0.0
      %v371 = vsel %vm367, %v353, 0.0
      %v372 = vsel %vm368, %v356, 0.0
      %377 = vrot.lane.b32.xlu0 %v310, 8
      %v378 = vpop.permute.xlu0 %377
      %379 = vrot.lane.b32.xlu0 %v311, 8
      %v380 = vpop.permute.xlu0 %379
      %381 = vrot.lane.b32.xlu0 %v312, 8
      %v382 = vpop.permute.xlu0 %381
      %383 = vrot.lane.b32.xlu0 %v313, 8
      %v384 = vpop.permute.xlu0 %383
      %393 = vrot.lane.b32.xlu0 %v369, 16
      %v394 = vpop.permute.xlu0 %393
      %395 = vrot.lane.b32.xlu0 %v370, 16
      %v396 = vpop.permute.xlu0 %395
      %397 = vrot.lane.b32.xlu0 %v371, 16
      %v398 = vpop.permute.xlu0 %397
      %399 = vrot.lane.b32.xlu0 %v372, 16
      %v400 = vpop.permute.xlu0 %399
      %vm405 = vcmask 64512
      %v406 = vsel %vm405, %v344, %v378
      %v407 = vsel %vm405, %v345, %v380
      %v408 = vsel %vm405, %v346, %v382
      %v409 = vsel %vm405, %v347, %v384
      %vm410 = vcmask 130048
      %v411 = vsel %vm410, %v406, %v394
      %v412 = vsel %vm410, %v407, %v396
      %v413 = vsel %vm410, %v408, %v398
      %v414 = vsel %vm410, %v409, %v400
      %v415 = vpack.c.bf16 %v412, %v411
      %v416 = vpack.c.bf16 %v414, %v413
      %v418 = vlaneseq
      %v419 = vshrl.u32 %v418, 7
      %v420 = vsub.s32 0, %v419
      %v421 = vrot.slane %v317, %v420
      %v426 = vunpack.c.l.b16 %v314
      %v427 = vunpack.c.l.b16 %v315
      %v428 = vunpack.c.l.b16 %v316
      %v429 = vpack.c.b16 %v427, %v426
      %v430 = vpack.c.b16 %v428, %v428
      %vm432 = vcmask 195584
      %v434 = vsel %vm432, %v415, 0
      %v437 = vsel %vm432, %v416, 0
      %vm439 = vcmask 1043456
      %v441 = vsel %vm439, %v430, 0
      %443 = vmatprep.subr.bf16.mxu0 0
      %444 = vmatpush1.bf16.msra.mxu0 %v429
      %445 = vmatprep.subr.bf16.mxu0 0
      %446 = vmatpush1.bf16.msra.mxu0 %v441
      %447 = vmatprep.subr.bf16.mxu0 0
      %448 = vmatpush1.bf16.msra.mxu0 0
      %449 = vmatprep.subr.bf16.mxu0 0
      %450 = vmatpush1.bf16.msra.mxu0 0
      %451 = vmatprep.subr.bf16.mxu0 0
      %452 = vmatpush1.bf16.msra.mxu0 0
      %453 = vmatprep.subr.bf16.mxu0 0
      %454 = vmatpush1.bf16.msra.mxu0 0
      %455 = vmatprep.subr.bf16.mxu0 0
      %456 = vmatpush1.bf16.msra.mxu0 0
      %457 = vmatprep.subr.bf16.mxu0 0
      %458 = vmatpush1.bf16.msra.mxu0 0
      %459 = vmatprep.subr.bf16.mxu0 0
      %460 = vmatpush1.bf16.msra.mxu0 0
      %461 = vmatprep.subr.bf16.mxu0 0
      %462 = vmatpush1.bf16.msra.mxu0 0
      %463 = vmatprep.subr.bf16.mxu0 0
      %464 = vmatpush1.bf16.msra.mxu0 0
      %465 = vmatprep.subr.bf16.mxu0 0
      %466 = vmatpush1.bf16.msra.mxu0 0
      %467 = vmatprep.subr.bf16.mxu0 0
      %468 = vmatpush1.bf16.msra.mxu0 0
      %469 = vmatprep.subr.bf16.mxu0 0
      %470 = vmatpush1.bf16.msra.mxu0 0
      %471 = vmatprep.subr.bf16.mxu0 0
      %472 = vmatpush1.bf16.msra.mxu0 0
      %473 = vmatprep.subr.bf16.mxu0 0
      %474 = vmatpush1.bf16.msra.mxu0 0
      %475 = vmatprep.mubr.bf16.mxu0 0
      %476 = vmatmul.mubr.bf16.gmra.mrb[0].mxu0 %v434
      %v477 = vpop.f32.mrb[0].mxu0
      %v478 = vadd.f32 %v421, %v477
      %v479 = vpop.f32.mrb[0].mxu0
      %v480 = vpop.f32.mrb[0].mxu0
      %v481 = vadd.f32 %v421, %v480
      %v482 = vpop.f32.mrb[0].mxu0
      %483 = vmatprep.mubr.bf16.mxu0 0
      %484 = vmatmul.mubr.bf16.gmra.mrb[0].mxu0 %v437
      %v485 = vpop.f32.mrb[0].mxu0
      %v486 = vadd.f32 %v421, %v485
      %v487 = vpop.f32.mrb[0].mxu0
      %v488 = vpop.f32.mrb[0].mxu0
      %v489 = vadd.f32 %v421, %v488
      %v490 = vpop.f32.mrb[0].mxu0
      %491 = vdwg.mxu0
      %v492 = vxor.u32 %v478, 2147483648
      %v493 = vxor.u32 %v481, 2147483648
      %v494 = vxor.u32 %v486, 2147483648
      %v495 = vxor.u32 %v489, 2147483648
      %v496 = vmul.f32 %v492, 1.442695
      %v497 = vpow.pop %v496
      %v498 = vmul.f32 %v493, 1.442695
      %v499 = vpow.pop %v498
      %v500 = vmul.f32 %v494, 1.442695
      %v501 = vpow.pop %v500
      %v502 = vmul.f32 %v495, 1.442695
      %v503 = vpow.pop %v502
      %v504 = vadd.f32 %v497, 1.0
      %v505 = vadd.f32 %v499, 1.0
      %v506 = vadd.f32 %v501, 1.0
      %v507 = vadd.f32 %v503, 1.0
      %v508 = vrcp.pop %v504
      %v509 = vmul.f32 1.0, %v508
      %v510 = vrcp.pop %v505
      %v511 = vmul.f32 1.0, %v510
      %v512 = vrcp.pop %v506
      %v513 = vmul.f32 1.0, %v512
      %v514 = vrcp.pop %v507
      %v515 = vmul.f32 1.0, %v514
      %v516 = vmul.f32 %v478, %v509
      %v517 = vmul.f32 %v481, %v511
      %v518 = vmul.f32 %v486, %v513
      %v519 = vmul.f32 %v489, %v515
      %v520 = vld [vmem:[%s3] sm:$0xf]
      %v521 = vld [vmem:[%s3 + $0x4] sm:$0xf]
      %v522 = vld [vmem:[%s3 + $0x8] sm:$0xf]
      %v523 = vld [vmem:[%s4] sm:$0x1]
      %v524 = vrot.slane %v516, 7
      %v525 = vrot.slane %v517, 7
      %v526 = vrot.slane %v518, 7
      %v527 = vrot.slane %v519, 7
      %v528 = vsel %vm327, %v526, %v527
      %v529 = vsel %vm327, %v525, %v526
      %v530 = vsel %vm327, %v524, %v525
      %v531 = vsel %vm327, %v527, %v524
      %v532 = vsel %vm340, %v531, 0.0
      %v533 = vsel %vm341, %v530, 0.0
      %v534 = vsel %vm342, %v529, 0.0
      %v535 = vsel %vm343, %v528, 0.0
      %v536 = vrot.slane %v516, 1
      %v537 = vrot.slane %v517, 1
      %v538 = vrot.slane %v518, 1
      %v539 = vrot.slane %v519, 1
      %v540 = vsel %vm352, %v538, %v539
      %v541 = vsel %vm352, %v537, %v538
      %v542 = vsel %vm352, %v536, %v537
      %v543 = vsel %vm352, %v539, %v536
      %v544 = vsel %vm365, %v542, 0.0
      %v545 = vsel %vm366, %v541, 0.0
      %v546 = vsel %vm367, %v540, 0.0
      %v547 = vsel %vm368, %v543, 0.0
      %552 = vrot.lane.b32.xlu0 %v516, 8
      %v553 = vpop.permute.xlu0 %552
      %554 = vrot.lane.b32.xlu0 %v517, 8
      %v555 = vpop.permute.xlu0 %554
      %556 = vrot.lane.b32.xlu0 %v518, 8
      %v557 = vpop.permute.xlu0 %556
      %558 = vrot.lane.b32.xlu0 %v519, 8
      %v559 = vpop.permute.xlu0 %558
      %568 = vrot.lane.b32.xlu0 %v544, 16
      %v569 = vpop.permute.xlu0 %568
      %570 = vrot.lane.b32.xlu0 %v545, 16
      %v571 = vpop.permute.xlu0 %570
      %572 = vrot.lane.b32.xlu0 %v546, 16
      %v573 = vpop.permute.xlu0 %572
      %574 = vrot.lane.b32.xlu0 %v547, 16
      %v575 = vpop.permute.xlu0 %574
      %v580 = vsel %vm405, %v532, %v553
      %v581 = vsel %vm405, %v533, %v555
      %v582 = vsel %vm405, %v534, %v557
      %v583 = vsel %vm405, %v535, %v559
      %v584 = vsel %vm410, %v580, %v569
      %v585 = vsel %vm410, %v581, %v571
      %v586 = vsel %vm410, %v582, %v573
      %v587 = vsel %vm410, %v583, %v575
      %v588 = vpack.c.bf16 %v585, %v584
      %v589 = vpack.c.bf16 %v587, %v586
      %v591 = vlaneseq
      %v592 = vshrl.u32 %v591, 7
      %v593 = vsub.s32 0, %v592
      %v594 = vrot.slane %v523, %v593
      %v599 = vunpack.c.l.b16 %v520
      %v600 = vunpack.c.l.b16 %v521
      %v601 = vunpack.c.l.b16 %v522
      %v602 = vpack.c.b16 %v600, %v599
      %v603 = vpack.c.b16 %v601, %v601
      %v606 = vsel %vm432, %v588, 0
      %v609 = vsel %vm432, %v589, 0
      %v612 = vsel %vm439, %v603, 0
      %614 = vmatprep.subr.bf16.mxu0 0
      %615 = vmatpush1.bf16.msra.mxu0 %v602
      %616 = vmatprep.subr.bf16.mxu0 0
      %617 = vmatpush1.bf16.msra.mxu0 %v612
      %618 = vmatprep.subr.bf16.mxu0 0
      %619 = vmatpush1.bf16.msra.mxu0 0
      %620 = vmatprep.subr.bf16.mxu0 0
      %621 = vmatpush1.bf16.msra.mxu0 0
      %622 = vmatprep.subr.bf16.mxu0 0
      %623 = vmatpush1.bf16.msra.mxu0 0
      %624 = vmatprep.subr.bf16.mxu0 0
      %625 = vmatpush1.bf16.msra.mxu0 0
      %626 = vmatprep.subr.bf16.mxu0 0
      %627 = vmatpush1.bf16.msra.mxu0 0
      %628 = vmatprep.subr.bf16.mxu0 0
      %629 = vmatpush1.bf16.msra.mxu0 0
      %630 = vmatprep.subr.bf16.mxu0 0
      %631 = vmatpush1.bf16.msra.mxu0 0
      %632 = vmatprep.subr.bf16.mxu0 0
      %633 = vmatpush1.bf16.msra.mxu0 0
      %634 = vmatprep.subr.bf16.mxu0 0
      %635 = vmatpush1.bf16.msra.mxu0 0
      %636 = vmatprep.subr.bf16.mxu0 0
      %637 = vmatpush1.bf16.msra.mxu0 0
      %638 = vmatprep.subr.bf16.mxu0 0
      %639 = vmatpush1.bf16.msra.mxu0 0
      %640 = vmatprep.subr.bf16.mxu0 0
      %641 = vmatpush1.bf16.msra.mxu0 0
      %642 = vmatprep.subr.bf16.mxu0 0
      %643 = vmatpush1.bf16.msra.mxu0 0
      %644 = vmatprep.subr.bf16.mxu0 0
      %645 = vmatpush1.bf16.msra.mxu0 0
      %646 = vmatprep.mubr.bf16.mxu0 0
      %647 = vmatmul.mubr.bf16.gmra.mrb[0].mxu0 %v606
      %v648 = vpop.f32.mrb[0].mxu0
      %v649 = vadd.f32 %v594, %v648
      %v650 = vpop.f32.mrb[0].mxu0
      %v651 = vpop.f32.mrb[0].mxu0
      %v652 = vadd.f32 %v594, %v651
      %v653 = vpop.f32.mrb[0].mxu0
      %654 = vmatprep.mubr.bf16.mxu0 0
      %655 = vmatmul.mubr.bf16.gmra.mrb[0].mxu0 %v609
      %v656 = vpop.f32.mrb[0].mxu0
      %v657 = vadd.f32 %v594, %v656
      %v658 = vpop.f32.mrb[0].mxu0
      %v659 = vpop.f32.mrb[0].mxu0
      %v660 = vadd.f32 %v594, %v659
      %v661 = vpop.f32.mrb[0].mxu0
      %662 = vdwg.mxu0
      %v663 = vadd.f32 %v649, %v282
      %v664 = vadd.f32 %v652, %v283
      %v665 = vadd.f32 %v657, %v284
      %v666 = vadd.f32 %v660, %v285
      %v667 = vxor.u32 %v663, 2147483648
      %v668 = vxor.u32 %v664, 2147483648
      %v669 = vxor.u32 %v665, 2147483648
      %v670 = vxor.u32 %v666, 2147483648
      %v671 = vmul.f32 %v667, 1.442695
      %v672 = vpow.pop %v671
      %v673 = vmul.f32 %v668, 1.442695
      %v674 = vpow.pop %v673
      %v675 = vmul.f32 %v669, 1.442695
      %v676 = vpow.pop %v675
      %v677 = vmul.f32 %v670, 1.442695
      %v678 = vpow.pop %v677
      %v679 = vadd.f32 %v672, 1.0
      %v680 = vadd.f32 %v674, 1.0
      %v681 = vadd.f32 %v676, 1.0
      %v682 = vadd.f32 %v678, 1.0
      %v683 = vrcp.pop %v679
      %v684 = vmul.f32 1.0, %v683
      %v685 = vrcp.pop %v680
      %v686 = vmul.f32 1.0, %v685
      %v687 = vrcp.pop %v681
      %v688 = vmul.f32 1.0, %v687
      %v689 = vrcp.pop %v682
      %v690 = vmul.f32 1.0, %v689
      %v691 = vmul.f32 %v663, %v684
      %v692 = vmul.f32 %v664, %v686
      %v693 = vmul.f32 %v665, %v688
      %v694 = vmul.f32 %v666, %v690
      %s695 = scalar_lea.vmem %s1, 12
      %v696 = vld [vmem:[%s695] sm:$0xf]
      %v697 = vld [vmem:[%s695 + $0x4] sm:$0xf]
      %v698 = vld [vmem:[%s695 + $0x8] sm:$0xf]
      %s699 = scalar_lea.vmem %s2, 1
      %v700 = vld [vmem:[%s699] sm:$0x1]
      %v701 = vrot.slane %v691, 5
      %v702 = vrot.slane %v692, 5
      %v703 = vrot.slane %v693, 5
      %v704 = vrot.slane %v694, 5
      %vm705 = vcmp.lt.s32.totalorder %v319, 3
      %v706 = vsel %vm705, %v703, %v704
      %v707 = vsel %vm705, %v702, %v703
      %v708 = vsel %vm705, %v701, %v702
      %v709 = vsel %vm705, %v704, %v701
      %vm710 = vcmp.ge.s32.totalorder %v319, 3
      %vm711 = vcmp.ge.s32.totalorder %v320, 3
      %vm712 = vcmp.ge.s32.totalorder %v321, 3
      %vm713 = vcmp.ge.s32.totalorder %v322, 3
      %vm714 = vcmp.lt.s32.totalorder %v319, 35
      %vm715 = vcmp.lt.s32.totalorder %v320, 35
      %vm716 = vcmp.lt.s32.totalorder %v321, 35
      %vm717 = vcmp.lt.s32.totalorder %v322, 35
      %vm718 = vmand %vm710, %vm714
      %vm719 = vmand %vm711, %vm715
      %vm720 = vmand %vm712, %vm716
      %vm721 = vmand %vm713, %vm717
      %v722 = vsel %vm718, %v709, 0.0
      %v723 = vsel %vm719, %v708, 0.0
      %v724 = vsel %vm720, %v707, 0.0
      %v725 = vsel %vm721, %v706, 0.0
      %v726 = vrot.slane %v691, 3
      %v727 = vrot.slane %v692, 3
      %v728 = vrot.slane %v693, 3
      %v729 = vrot.slane %v694, 3
      %vm730 = vcmp.lt.s32.totalorder %v319, 5
      %v731 = vsel %vm730, %v728, %v729
      %v732 = vsel %vm730, %v727, %v728
      %v733 = vsel %vm730, %v726, %v727
      %v734 = vsel %vm730, %v729, %v726
      %vm735 = vcmp.ge.s32.totalorder %v319, 4294967293
      %vm736 = vcmp.ge.s32.totalorder %v320, 4294967293
      %vm737 = vcmp.ge.s32.totalorder %v321, 4294967293
      %vm738 = vcmp.ge.s32.totalorder %v322, 4294967293
      %vm739 = vcmp.lt.s32.totalorder %v319, 29
      %vm740 = vcmp.lt.s32.totalorder %v320, 29
      %vm741 = vcmp.lt.s32.totalorder %v321, 29
      %vm742 = vcmp.lt.s32.totalorder %v322, 29
      %vm743 = vmand %vm735, %vm739
      %vm744 = vmand %vm736, %vm740
      %vm745 = vmand %vm737, %vm741
      %vm746 = vmand %vm738, %vm742
      %v747 = vsel %vm743, %v733, 0.0
      %v748 = vsel %vm744, %v732, 0.0
      %v749 = vsel %vm745, %v731, 0.0
      %v750 = vsel %vm746, %v734, 0.0
      %755 = vrot.lane.b32.xlu0 %v691, 8
      %v756 = vpop.permute.xlu0 %755
      %757 = vrot.lane.b32.xlu0 %v692, 8
      %v758 = vpop.permute.xlu0 %757
      %759 = vrot.lane.b32.xlu0 %v693, 8
      %v760 = vpop.permute.xlu0 %759
      %761 = vrot.lane.b32.xlu0 %v694, 8
      %v762 = vpop.permute.xlu0 %761
      %771 = vrot.lane.b32.xlu0 %v747, 16
      %v772 = vpop.permute.xlu0 %771
      %773 = vrot.lane.b32.xlu0 %v748, 16
      %v774 = vpop.permute.xlu0 %773
      %775 = vrot.lane.b32.xlu0 %v749, 16
      %v776 = vpop.permute.xlu0 %775
      %777 = vrot.lane.b32.xlu0 %v750, 16
      %v778 = vpop.permute.xlu0 %777
      %v783 = vsel %vm405, %v722, %v756
      %v784 = vsel %vm405, %v723, %v758
      %v785 = vsel %vm405, %v724, %v760
      %v786 = vsel %vm405, %v725, %v762
      %v787 = vsel %vm410, %v783, %v772
      %v788 = vsel %vm410, %v784, %v774
      %v789 = vsel %vm410, %v785, %v776
      %v790 = vsel %vm410, %v786, %v778
      %v791 = vpack.c.bf16 %v788, %v787
      %v792 = vpack.c.bf16 %v790, %v789
      %v794 = vlaneseq
      %v795 = vshrl.u32 %v794, 7
      %v796 = vsub.s32 0, %v795
      %v797 = vrot.slane %v700, %v796
      %v802 = vunpack.c.l.b16 %v696
      %v803 = vunpack.c.l.b16 %v697
      %v804 = vunpack.c.l.b16 %v698
      %v805 = vpack.c.b16 %v803, %v802
      %v806 = vpack.c.b16 %v804, %v804
      %v809 = vsel %vm432, %v791, 0
      %v812 = vsel %vm432, %v792, 0
      %v815 = vsel %vm439, %v806, 0
      %817 = vmatprep.subr.bf16.mxu0 0
      %818 = vmatpush1.bf16.msra.mxu0 %v805
      %819 = vmatprep.subr.bf16.mxu0 0
      %820 = vmatpush1.bf16.msra.mxu0 %v815
      %821 = vmatprep.subr.bf16.mxu0 0
      %822 = vmatpush1.bf16.msra.mxu0 0
      %823 = vmatprep.subr.bf16.mxu0 0
      %824 = vmatpush1.bf16.msra.mxu0 0
      %825 = vmatprep.subr.bf16.mxu0 0
      %826 = vmatpush1.bf16.msra.mxu0 0
      %827 = vmatprep.subr.bf16.mxu0 0
      %828 = vmatpush1.bf16.msra.mxu0 0
      %829 = vmatprep.subr.bf16.mxu0 0
      %830 = vmatpush1.bf16.msra.mxu0 0
      %831 = vmatprep.subr.bf16.mxu0 0
      %832 = vmatpush1.bf16.msra.mxu0 0
      %833 = vmatprep.subr.bf16.mxu0 0
      %834 = vmatpush1.bf16.msra.mxu0 0
      %835 = vmatprep.subr.bf16.mxu0 0
      %836 = vmatpush1.bf16.msra.mxu0 0
      %837 = vmatprep.subr.bf16.mxu0 0
      %838 = vmatpush1.bf16.msra.mxu0 0
      %839 = vmatprep.subr.bf16.mxu0 0
      %840 = vmatpush1.bf16.msra.mxu0 0
      %841 = vmatprep.subr.bf16.mxu0 0
      %842 = vmatpush1.bf16.msra.mxu0 0
      %843 = vmatprep.subr.bf16.mxu0 0
      %844 = vmatpush1.bf16.msra.mxu0 0
      %845 = vmatprep.subr.bf16.mxu0 0
      %846 = vmatpush1.bf16.msra.mxu0 0
      %847 = vmatprep.subr.bf16.mxu0 0
      %848 = vmatpush1.bf16.msra.mxu0 0
      %849 = vmatprep.mubr.bf16.mxu0 0
      %850 = vmatmul.mubr.bf16.gmra.mrb[0].mxu0 %v809
      %v851 = vpop.f32.mrb[0].mxu0
      %v852 = vadd.f32 %v797, %v851
      %v853 = vpop.f32.mrb[0].mxu0
      %v854 = vpop.f32.mrb[0].mxu0
      %v855 = vadd.f32 %v797, %v854
      %v856 = vpop.f32.mrb[0].mxu0
      %857 = vmatprep.mubr.bf16.mxu0 0
      %858 = vmatmul.mubr.bf16.gmra.mrb[0].mxu0 %v812
      %v859 = vpop.f32.mrb[0].mxu0
      %v860 = vadd.f32 %v797, %v859
      %v861 = vpop.f32.mrb[0].mxu0
      %v862 = vpop.f32.mrb[0].mxu0
      %v863 = vadd.f32 %v797, %v862
      %v864 = vpop.f32.mrb[0].mxu0
      %865 = vdwg.mxu0
      %v866 = vxor.u32 %v852, 2147483648
      %v867 = vxor.u32 %v855, 2147483648
      %v868 = vxor.u32 %v860, 2147483648
      %v869 = vxor.u32 %v863, 2147483648
      %v870 = vmul.f32 %v866, 1.442695
      %v871 = vpow.pop %v870
      %v872 = vmul.f32 %v867, 1.442695
      %v873 = vpow.pop %v872
      %v874 = vmul.f32 %v868, 1.442695
      %v875 = vpow.pop %v874
      %v876 = vmul.f32 %v869, 1.442695
      %v877 = vpow.pop %v876
      %v878 = vadd.f32 %v871, 1.0
      %v879 = vadd.f32 %v873, 1.0
      %v880 = vadd.f32 %v875, 1.0
      %v881 = vadd.f32 %v877, 1.0
      %v882 = vrcp.pop %v878
      %v883 = vmul.f32 1.0, %v882
      %v884 = vrcp.pop %v879
      %v885 = vmul.f32 1.0, %v884
      %v886 = vrcp.pop %v880
      %v887 = vmul.f32 1.0, %v886
      %v888 = vrcp.pop %v881
      %v889 = vmul.f32 1.0, %v888
      %v890 = vmul.f32 %v852, %v883
      %v891 = vmul.f32 %v855, %v885
      %v892 = vmul.f32 %v860, %v887
      %v893 = vmul.f32 %v863, %v889
      %s894 = scalar_lea.vmem %s3, 12
      %v895 = vld [vmem:[%s894] sm:$0xf]
      %v896 = vld [vmem:[%s894 + $0x4] sm:$0xf]
      %v897 = vld [vmem:[%s894 + $0x8] sm:$0xf]
      %s898 = scalar_lea.vmem %s4, 1
      %v899 = vld [vmem:[%s898] sm:$0x1]
      %v900 = vrot.slane %v890, 7
      %v901 = vrot.slane %v891, 7
      %v902 = vrot.slane %v892, 7
      %v903 = vrot.slane %v893, 7
      %v904 = vsel %vm327, %v902, %v903
      %v905 = vsel %vm327, %v901, %v902
      %v906 = vsel %vm327, %v900, %v901
      %v907 = vsel %vm327, %v903, %v900
      %v908 = vsel %vm340, %v907, 0.0
      %v909 = vsel %vm341, %v906, 0.0
      %v910 = vsel %vm342, %v905, 0.0
      %v911 = vsel %vm343, %v904, 0.0
      %v912 = vrot.slane %v890, 1
      %v913 = vrot.slane %v891, 1
      %v914 = vrot.slane %v892, 1
      %v915 = vrot.slane %v893, 1
      %v916 = vsel %vm352, %v914, %v915
      %v917 = vsel %vm352, %v913, %v914
      %v918 = vsel %vm352, %v912, %v913
      %v919 = vsel %vm352, %v915, %v912
      %v920 = vsel %vm365, %v918, 0.0
      %v921 = vsel %vm366, %v917, 0.0
      %v922 = vsel %vm367, %v916, 0.0
      %v923 = vsel %vm368, %v919, 0.0
      %928 = vrot.lane.b32.xlu0 %v890, 8
      %v929 = vpop.permute.xlu0 %928
      %930 = vrot.lane.b32.xlu0 %v891, 8
      %v931 = vpop.permute.xlu0 %930
      %932 = vrot.lane.b32.xlu0 %v892, 8
      %v933 = vpop.permute.xlu0 %932
      %934 = vrot.lane.b32.xlu0 %v893, 8
      %v935 = vpop.permute.xlu0 %934
      %944 = vrot.lane.b32.xlu0 %v920, 16
      %v945 = vpop.permute.xlu0 %944
      %946 = vrot.lane.b32.xlu0 %v921, 16
      %v947 = vpop.permute.xlu0 %946
      %948 = vrot.lane.b32.xlu0 %v922, 16
      %v949 = vpop.permute.xlu0 %948
      %950 = vrot.lane.b32.xlu0 %v923, 16
      %v951 = vpop.permute.xlu0 %950
      %v956 = vsel %vm405, %v908, %v929
      %v957 = vsel %vm405, %v909, %v931
      %v958 = vsel %vm405, %v910, %v933
      %v959 = vsel %vm405, %v911, %v935
      %v960 = vsel %vm410, %v956, %v945
      %v961 = vsel %vm410, %v957, %v947
      %v962 = vsel %vm410, %v958, %v949
      %v963 = vsel %vm410, %v959, %v951
      %v964 = vpack.c.bf16 %v961, %v960
      %v965 = vpack.c.bf16 %v963, %v962
      %v967 = vlaneseq
      %v968 = vshrl.u32 %v967, 7
      %v969 = vsub.s32 0, %v968
      %v970 = vrot.slane %v899, %v969
      %v975 = vunpack.c.l.b16 %v895
      %v976 = vunpack.c.l.b16 %v896
      %v977 = vunpack.c.l.b16 %v897
      %v978 = vpack.c.b16 %v976, %v975
      %v979 = vpack.c.b16 %v977, %v977
      %v982 = vsel %vm432, %v964, 0
      %v985 = vsel %vm432, %v965, 0
      %v988 = vsel %vm439, %v979, 0
      %990 = vmatprep.subr.bf16.mxu0 0
      %991 = vmatpush1.bf16.msra.mxu0 %v978
      %992 = vmatprep.subr.bf16.mxu0 0
      %993 = vmatpush1.bf16.msra.mxu0 %v988
      %994 = vmatprep.subr.bf16.mxu0 0
      %995 = vmatpush1.bf16.msra.mxu0 0
      %996 = vmatprep.subr.bf16.mxu0 0
      %997 = vmatpush1.bf16.msra.mxu0 0
      %998 = vmatprep.subr.bf16.mxu0 0
      %999 = vmatpush1.bf16.msra.mxu0 0
      %1000 = vmatprep.subr.bf16.mxu0 0
      %1001 = vmatpush1.bf16.msra.mxu0 0
      %1002 = vmatprep.subr.bf16.mxu0 0
      %1003 = vmatpush1.bf16.msra.mxu0 0
      %1004 = vmatprep.subr.bf16.mxu0 0
      %1005 = vmatpush1.bf16.msra.mxu0 0
      %1006 = vmatprep.subr.bf16.mxu0 0
      %1007 = vmatpush1.bf16.msra.mxu0 0
      %1008 = vmatprep.subr.bf16.mxu0 0
      %1009 = vmatpush1.bf16.msra.mxu0 0
      %1010 = vmatprep.subr.bf16.mxu0 0
      %1011 = vmatpush1.bf16.msra.mxu0 0
      %1012 = vmatprep.subr.bf16.mxu0 0
      %1013 = vmatpush1.bf16.msra.mxu0 0
      %1014 = vmatprep.subr.bf16.mxu0 0
      %1015 = vmatpush1.bf16.msra.mxu0 0
      %1016 = vmatprep.subr.bf16.mxu0 0
      %1017 = vmatpush1.bf16.msra.mxu0 0
      %1018 = vmatprep.subr.bf16.mxu0 0
      %1019 = vmatpush1.bf16.msra.mxu0 0
      %1020 = vmatprep.subr.bf16.mxu0 0
      %1021 = vmatpush1.bf16.msra.mxu0 0
      %1022 = vmatprep.mubr.bf16.mxu0 0
      %1023 = vmatmul.mubr.bf16.gmra.mrb[0].mxu0 %v982
      %v1024 = vpop.f32.mrb[0].mxu0
      %v1025 = vadd.f32 %v970, %v1024
      %v1026 = vpop.f32.mrb[0].mxu0
      %v1027 = vpop.f32.mrb[0].mxu0
      %v1028 = vadd.f32 %v970, %v1027
      %v1029 = vpop.f32.mrb[0].mxu0
      %1030 = vmatprep.mubr.bf16.mxu0 0
      %1031 = vmatmul.mubr.bf16.gmra.mrb[0].mxu0 %v985
      %v1032 = vpop.f32.mrb[0].mxu0
      %v1033 = vadd.f32 %v970, %v1032
      %v1034 = vpop.f32.mrb[0].mxu0
      %v1035 = vpop.f32.mrb[0].mxu0
      %v1036 = vadd.f32 %v970, %v1035
      %v1037 = vpop.f32.mrb[0].mxu0
      %1038 = vdwg.mxu0
      %v1039 = vadd.f32 %v1025, %v663
      %v1040 = vadd.f32 %v1028, %v664
      %v1041 = vadd.f32 %v1033, %v665
      %v1042 = vadd.f32 %v1036, %v666
      %v1043 = vxor.u32 %v1039, 2147483648
      %v1044 = vxor.u32 %v1040, 2147483648
      %v1045 = vxor.u32 %v1041, 2147483648
      %v1046 = vxor.u32 %v1042, 2147483648
      %v1047 = vmul.f32 %v1043, 1.442695
      %v1048 = vpow.pop %v1047
      %v1049 = vmul.f32 %v1044, 1.442695
      %v1050 = vpow.pop %v1049
      %v1051 = vmul.f32 %v1045, 1.442695
      %v1052 = vpow.pop %v1051
      %v1053 = vmul.f32 %v1046, 1.442695
      %v1054 = vpow.pop %v1053
      %v1055 = vadd.f32 %v1048, 1.0
      %v1056 = vadd.f32 %v1050, 1.0
      %v1057 = vadd.f32 %v1052, 1.0
      %v1058 = vadd.f32 %v1054, 1.0
      %v1059 = vrcp.pop %v1055
      %v1060 = vmul.f32 1.0, %v1059
      %v1061 = vrcp.pop %v1056
      %v1062 = vmul.f32 1.0, %v1061
      %v1063 = vrcp.pop %v1057
      %v1064 = vmul.f32 1.0, %v1063
      %v1065 = vrcp.pop %v1058
      %v1066 = vmul.f32 1.0, %v1065
      %v1067 = vmul.f32 %v1039, %v1060
      %v1068 = vmul.f32 %v1040, %v1062
      %v1069 = vmul.f32 %v1041, %v1064
      %v1070 = vmul.f32 %v1042, %v1066
      %s1071 = scalar_lea.vmem %s1, 24
      %v1072 = vld [vmem:[%s1071] sm:$0xf]
      %v1073 = vld [vmem:[%s1071 + $0x4] sm:$0xf]
      %v1074 = vld [vmem:[%s1071 + $0x8] sm:$0xf]
      %s1075 = scalar_lea.vmem %s2, 2
      %v1076 = vld [vmem:[%s1075] sm:$0x1]
      %v1077 = vrot.slane %v1067, 3
      %v1078 = vrot.slane %v1068, 3
      %v1079 = vrot.slane %v1069, 3
      %v1080 = vrot.slane %v1070, 3
      %v1081 = vsel %vm730, %v1079, %v1080
      %v1082 = vsel %vm730, %v1078, %v1079
      %v1083 = vsel %vm730, %v1077, %v1078
      %v1084 = vsel %vm730, %v1080, %v1077
      %vm1085 = vcmp.ge.s32.totalorder %v319, 5
      %vm1086 = vcmp.ge.s32.totalorder %v320, 5
      %vm1087 = vcmp.ge.s32.totalorder %v321, 5
      %vm1088 = vcmp.ge.s32.totalorder %v322, 5
      %vm1089 = vcmp.lt.s32.totalorder %v319, 37
      %vm1090 = vcmp.lt.s32.totalorder %v320, 37
      %vm1091 = vcmp.lt.s32.totalorder %v321, 37
      %vm1092 = vcmp.lt.s32.totalorder %v322, 37
      %vm1093 = vmand %vm1085, %vm1089
      %vm1094 = vmand %vm1086, %vm1090
      %vm1095 = vmand %vm1087, %vm1091
      %vm1096 = vmand %vm1088, %vm1092
      %v1097 = vsel %vm1093, %v1084, 0.0
      %v1098 = vsel %vm1094, %v1083, 0.0
      %v1099 = vsel %vm1095, %v1082, 0.0
      %v1100 = vsel %vm1096, %v1081, 0.0
      %v1101 = vrot.slane %v1067, 5
      %v1102 = vrot.slane %v1068, 5
      %v1103 = vrot.slane %v1069, 5
      %v1104 = vrot.slane %v1070, 5
      %v1105 = vsel %vm705, %v1103, %v1104
      %v1106 = vsel %vm705, %v1102, %v1103
      %v1107 = vsel %vm705, %v1101, %v1102
      %v1108 = vsel %vm705, %v1104, %v1101
      %vm1109 = vcmp.ge.s32.totalorder %v319, 4294967291
      %vm1110 = vcmp.ge.s32.totalorder %v320, 4294967291
      %vm1111 = vcmp.ge.s32.totalorder %v321, 4294967291
      %vm1112 = vcmp.ge.s32.totalorder %v322, 4294967291
      %vm1113 = vcmp.lt.s32.totalorder %v319, 27
      %vm1114 = vcmp.lt.s32.totalorder %v320, 27
      %vm1115 = vcmp.lt.s32.totalorder %v321, 27
      %vm1116 = vcmp.lt.s32.totalorder %v322, 27
      %vm1117 = vmand %vm1109, %vm1113
      %vm1118 = vmand %vm1110, %vm1114
      %vm1119 = vmand %vm1111, %vm1115
      %vm1120 = vmand %vm1112, %vm1116
      %v1121 = vsel %vm1117, %v1107, 0.0
      %v1122 = vsel %vm1118, %v1106, 0.0
      %v1123 = vsel %vm1119, %v1105, 0.0
      %v1124 = vsel %vm1120, %v1108, 0.0
      %1129 = vrot.lane.b32.xlu0 %v1067, 8
      %v1130 = vpop.permute.xlu0 %1129
      %1131 = vrot.lane.b32.xlu0 %v1068, 8
      %v1132 = vpop.permute.xlu0 %1131
      %1133 = vrot.lane.b32.xlu0 %v1069, 8
      %v1134 = vpop.permute.xlu0 %1133
      %1135 = vrot.lane.b32.xlu0 %v1070, 8
      %v1136 = vpop.permute.xlu0 %1135
      %1145 = vrot.lane.b32.xlu0 %v1121, 16
      %v1146 = vpop.permute.xlu0 %1145
      %1147 = vrot.lane.b32.xlu0 %v1122, 16
      %v1148 = vpop.permute.xlu0 %1147
      %1149 = vrot.lane.b32.xlu0 %v1123, 16
      %v1150 = vpop.permute.xlu0 %1149
      %1151 = vrot.lane.b32.xlu0 %v1124, 16
      %v1152 = vpop.permute.xlu0 %1151
      %v1157 = vsel %vm405, %v1097, %v1130
      %v1158 = vsel %vm405, %v1098, %v1132
      %v1159 = vsel %vm405, %v1099, %v1134
      %v1160 = vsel %vm405, %v1100, %v1136
      %v1161 = vsel %vm410, %v1157, %v1146
      %v1162 = vsel %vm410, %v1158, %v1148
      %v1163 = vsel %vm410, %v1159, %v1150
      %v1164 = vsel %vm410, %v1160, %v1152
      %v1165 = vpack.c.bf16 %v1162, %v1161
      %v1166 = vpack.c.bf16 %v1164, %v1163
      %v1168 = vlaneseq
      %v1169 = vshrl.u32 %v1168, 7
      %v1170 = vsub.s32 0, %v1169
      %v1171 = vrot.slane %v1076, %v1170
      %v1176 = vunpack.c.l.b16 %v1072
      %v1177 = vunpack.c.l.b16 %v1073
      %v1178 = vunpack.c.l.b16 %v1074
      %v1179 = vpack.c.b16 %v1177, %v1176
      %v1180 = vpack.c.b16 %v1178, %v1178
      %v1183 = vsel %vm432, %v1165, 0
      %v1186 = vsel %vm432, %v1166, 0
      %v1189 = vsel %vm439, %v1180, 0
      %1191 = vmatprep.subr.bf16.mxu0 0
      %1192 = vmatpush1.bf16.msra.mxu0 %v1179
      %1193 = vmatprep.subr.bf16.mxu0 0
      %1194 = vmatpush1.bf16.msra.mxu0 %v1189
      %1195 = vmatprep.subr.bf16.mxu0 0
      %1196 = vmatpush1.bf16.msra.mxu0 0
      %1197 = vmatprep.subr.bf16.mxu0 0
      %1198 = vmatpush1.bf16.msra.mxu0 0
      %1199 = vmatprep.subr.bf16.mxu0 0
      %1200 = vmatpush1.bf16.msra.mxu0 0
      %1201 = vmatprep.subr.bf16.mxu0 0
      %1202 = vmatpush1.bf16.msra.mxu0 0
      %1203 = vmatprep.subr.bf16.mxu0 0
      %1204 = vmatpush1.bf16.msra.mxu0 0
      %1205 = vmatprep.subr.bf16.mxu0 0
      %1206 = vmatpush1.bf16.msra.mxu0 0
      %1207 = vmatprep.subr.bf16.mxu0 0
      %1208 = vmatpush1.bf16.msra.mxu0 0
      %1209 = vmatprep.subr.bf16.mxu0 0
      %1210 = vmatpush1.bf16.msra.mxu0 0
      %1211 = vmatprep.subr.bf16.mxu0 0
      %1212 = vmatpush1.bf16.msra.mxu0 0
      %1213 = vmatprep.subr.bf16.mxu0 0
      %1214 = vmatpush1.bf16.msra.mxu0 0
      %1215 = vmatprep.subr.bf16.mxu0 0
      %1216 = vmatpush1.bf16.msra.mxu0 0
      %1217 = vmatprep.subr.bf16.mxu0 0
      %1218 = vmatpush1.bf16.msra.mxu0 0
      %1219 = vmatprep.subr.bf16.mxu0 0
      %1220 = vmatpush1.bf16.msra.mxu0 0
      %1221 = vmatprep.subr.bf16.mxu0 0
      %1222 = vmatpush1.bf16.msra.mxu0 0
      %1223 = vmatprep.mubr.bf16.mxu0 0
      %1224 = vmatmul.mubr.bf16.gmra.mrb[0].mxu0 %v1183
      %v1225 = vpop.f32.mrb[0].mxu0
      %v1226 = vadd.f32 %v1171, %v1225
      %v1227 = vpop.f32.mrb[0].mxu0
      %v1228 = vpop.f32.mrb[0].mxu0
      %v1229 = vadd.f32 %v1171, %v1228
      %v1230 = vpop.f32.mrb[0].mxu0
      %1231 = vmatprep.mubr.bf16.mxu0 0
      %1232 = vmatmul.mubr.bf16.gmra.mrb[0].mxu0 %v1186
      %v1233 = vpop.f32.mrb[0].mxu0
      %v1234 = vadd.f32 %v1171, %v1233
      %v1235 = vpop.f32.mrb[0].mxu0
      %v1236 = vpop.f32.mrb[0].mxu0
      %v1237 = vadd.f32 %v1171, %v1236
      %v1238 = vpop.f32.mrb[0].mxu0
      %1239 = vdwg.mxu0
      %v1240 = vxor.u32 %v1226, 2147483648
      %v1241 = vxor.u32 %v1229, 2147483648
      %v1242 = vxor.u32 %v1234, 2147483648
      %v1243 = vxor.u32 %v1237, 2147483648
      %v1244 = vmul.f32 %v1240, 1.442695
      %v1245 = vpow.pop %v1244
      %v1246 = vmul.f32 %v1241, 1.442695
      %v1247 = vpow.pop %v1246
      %v1248 = vmul.f32 %v1242, 1.442695
      %v1249 = vpow.pop %v1248
      %v1250 = vmul.f32 %v1243, 1.442695
      %v1251 = vpow.pop %v1250
      %v1252 = vadd.f32 %v1245, 1.0
      %v1253 = vadd.f32 %v1247, 1.0
      %v1254 = vadd.f32 %v1249, 1.0
      %v1255 = vadd.f32 %v1251, 1.0
      %v1256 = vrcp.pop %v1252
      %v1257 = vmul.f32 1.0, %v1256
      %v1258 = vrcp.pop %v1253
      %v1259 = vmul.f32 1.0, %v1258
      %v1260 = vrcp.pop %v1254
      %v1261 = vmul.f32 1.0, %v1260
      %v1262 = vrcp.pop %v1255
      %v1263 = vmul.f32 1.0, %v1262
      %v1264 = vmul.f32 %v1226, %v1257
      %v1265 = vmul.f32 %v1229, %v1259
      %v1266 = vmul.f32 %v1234, %v1261
      %v1267 = vmul.f32 %v1237, %v1263
      %s1268 = scalar_lea.vmem %s3, 24
      %v1269 = vld [vmem:[%s1268] sm:$0xf]
      %v1270 = vld [vmem:[%s1268 + $0x4] sm:$0xf]
      %v1271 = vld [vmem:[%s1268 + $0x8] sm:$0xf]
      %s1272 = scalar_lea.vmem %s4, 2
      %v1273 = vld [vmem:[%s1272] sm:$0x1]
      %v1274 = vrot.slane %v1264, 7
      %v1275 = vrot.slane %v1265, 7
      %v1276 = vrot.slane %v1266, 7
      %v1277 = vrot.slane %v1267, 7
      %v1278 = vsel %vm327, %v1276, %v1277
      %v1279 = vsel %vm327, %v1275, %v1276
      %v1280 = vsel %vm327, %v1274, %v1275
      %v1281 = vsel %vm327, %v1277, %v1274
      %v1282 = vsel %vm340, %v1281, 0.0
      %v1283 = vsel %vm341, %v1280, 0.0
      %v1284 = vsel %vm342, %v1279, 0.0
      %v1285 = vsel %vm343, %v1278, 0.0
      %v1286 = vrot.slane %v1264, 1
      %v1287 = vrot.slane %v1265, 1
      %v1288 = vrot.slane %v1266, 1
      %v1289 = vrot.slane %v1267, 1
      %v1290 = vsel %vm352, %v1288, %v1289
      %v1291 = vsel %vm352, %v1287, %v1288
      %v1292 = vsel %vm352, %v1286, %v1287
      %v1293 = vsel %vm352, %v1289, %v1286
      %v1294 = vsel %vm365, %v1292, 0.0
      %v1295 = vsel %vm366, %v1291, 0.0
      %v1296 = vsel %vm367, %v1290, 0.0
      %v1297 = vsel %vm368, %v1293, 0.0
      %1302 = vrot.lane.b32.xlu0 %v1264, 8
      %v1303 = vpop.permute.xlu0 %1302
      %1304 = vrot.lane.b32.xlu0 %v1265, 8
      %v1305 = vpop.permute.xlu0 %1304
      %1306 = vrot.lane.b32.xlu0 %v1266, 8
      %v1307 = vpop.permute.xlu0 %1306
      %1308 = vrot.lane.b32.xlu0 %v1267, 8
      %v1309 = vpop.permute.xlu0 %1308
      %1318 = vrot.lane.b32.xlu0 %v1294, 16
      %v1319 = vpop.permute.xlu0 %1318
      %1320 = vrot.lane.b32.xlu0 %v1295, 16
      %v1321 = vpop.permute.xlu0 %1320
      %1322 = vrot.lane.b32.xlu0 %v1296, 16
      %v1323 = vpop.permute.xlu0 %1322
      %1324 = vrot.lane.b32.xlu0 %v1297, 16
      %v1325 = vpop.permute.xlu0 %1324
      %v1330 = vsel %vm405, %v1282, %v1303
      %v1331 = vsel %vm405, %v1283, %v1305
      %v1332 = vsel %vm405, %v1284, %v1307
      %v1333 = vsel %vm405, %v1285, %v1309
      %v1334 = vsel %vm410, %v1330, %v1319
      %v1335 = vsel %vm410, %v1331, %v1321
      %v1336 = vsel %vm410, %v1332, %v1323
      %v1337 = vsel %vm410, %v1333, %v1325
      %v1338 = vpack.c.bf16 %v1335, %v1334
      %v1339 = vpack.c.bf16 %v1337, %v1336
      %v1341 = vlaneseq
      %v1342 = vshrl.u32 %v1341, 7
      %v1343 = vsub.s32 0, %v1342
      %v1344 = vrot.slane %v1273, %v1343
      %v1349 = vunpack.c.l.b16 %v1269
      %v1350 = vunpack.c.l.b16 %v1270
      %v1351 = vunpack.c.l.b16 %v1271
      %v1352 = vpack.c.b16 %v1350, %v1349
      %v1353 = vpack.c.b16 %v1351, %v1351
      %v1356 = vsel %vm432, %v1338, 0
      %v1359 = vsel %vm432, %v1339, 0
      %v1362 = vsel %vm439, %v1353, 0
      %1364 = vmatprep.subr.bf16.mxu0 0
      %1365 = vmatpush1.bf16.msra.mxu0 %v1352
      %1366 = vmatprep.subr.bf16.mxu0 0
      %1367 = vmatpush1.bf16.msra.mxu0 %v1362
      %1368 = vmatprep.subr.bf16.mxu0 0
      %1369 = vmatpush1.bf16.msra.mxu0 0
      %1370 = vmatprep.subr.bf16.mxu0 0
      %1371 = vmatpush1.bf16.msra.mxu0 0
      %1372 = vmatprep.subr.bf16.mxu0 0
      %1373 = vmatpush1.bf16.msra.mxu0 0
      %1374 = vmatprep.subr.bf16.mxu0 0
      %1375 = vmatpush1.bf16.msra.mxu0 0
      %1376 = vmatprep.subr.bf16.mxu0 0
      %1377 = vmatpush1.bf16.msra.mxu0 0
      %1378 = vmatprep.subr.bf16.mxu0 0
      %1379 = vmatpush1.bf16.msra.mxu0 0
      %1380 = vmatprep.subr.bf16.mxu0 0
      %1381 = vmatpush1.bf16.msra.mxu0 0
      %1382 = vmatprep.subr.bf16.mxu0 0
      %1383 = vmatpush1.bf16.msra.mxu0 0
      %1384 = vmatprep.subr.bf16.mxu0 0
      %1385 = vmatpush1.bf16.msra.mxu0 0
      %1386 = vmatprep.subr.bf16.mxu0 0
      %1387 = vmatpush1.bf16.msra.mxu0 0
      %1388 = vmatprep.subr.bf16.mxu0 0
      %1389 = vmatpush1.bf16.msra.mxu0 0
      %1390 = vmatprep.subr.bf16.mxu0 0
      %1391 = vmatpush1.bf16.msra.mxu0 0
      %1392 = vmatprep.subr.bf16.mxu0 0
      %1393 = vmatpush1.bf16.msra.mxu0 0
      %1394 = vmatprep.subr.bf16.mxu0 0
      %1395 = vmatpush1.bf16.msra.mxu0 0
      %1396 = vmatprep.mubr.bf16.mxu0 0
      %1397 = vmatmul.mubr.bf16.gmra.mrb[0].mxu0 %v1356
      %v1398 = vpop.f32.mrb[0].mxu0
      %v1399 = vadd.f32 %v1344, %v1398
      %v1400 = vpop.f32.mrb[0].mxu0
      %v1401 = vpop.f32.mrb[0].mxu0
      %v1402 = vadd.f32 %v1344, %v1401
      %v1403 = vpop.f32.mrb[0].mxu0
      %1404 = vmatprep.mubr.bf16.mxu0 0
      %1405 = vmatmul.mubr.bf16.gmra.mrb[0].mxu0 %v1359
      %v1406 = vpop.f32.mrb[0].mxu0
      %v1407 = vadd.f32 %v1344, %v1406
      %v1408 = vpop.f32.mrb[0].mxu0
      %v1409 = vpop.f32.mrb[0].mxu0
      %v1410 = vadd.f32 %v1344, %v1409
      %v1411 = vpop.f32.mrb[0].mxu0
      %1412 = vdwg.mxu0
      %v1413 = vadd.f32 %v1399, %v1039
      %v1414 = vadd.f32 %v1402, %v1040
      %v1415 = vadd.f32 %v1407, %v1041
      %v1416 = vadd.f32 %v1410, %v1042
      %v1417 = vxor.u32 %v1413, 2147483648
      %v1418 = vxor.u32 %v1414, 2147483648
      %v1419 = vxor.u32 %v1415, 2147483648
      %v1420 = vxor.u32 %v1416, 2147483648
      %v1421 = vmul.f32 %v1417, 1.442695
      %v1422 = vpow.pop %v1421
      %v1423 = vmul.f32 %v1418, 1.442695
      %v1424 = vpow.pop %v1423
      %v1425 = vmul.f32 %v1419, 1.442695
      %v1426 = vpow.pop %v1425
      %v1427 = vmul.f32 %v1420, 1.442695
      %v1428 = vpow.pop %v1427
      %v1429 = vadd.f32 %v1422, 1.0
      %v1430 = vadd.f32 %v1424, 1.0
      %v1431 = vadd.f32 %v1426, 1.0
      %v1432 = vadd.f32 %v1428, 1.0
      %v1433 = vrcp.pop %v1429
      %v1434 = vmul.f32 1.0, %v1433
      %v1435 = vrcp.pop %v1430
      %v1436 = vmul.f32 1.0, %v1435
      %v1437 = vrcp.pop %v1431
      %v1438 = vmul.f32 1.0, %v1437
      %v1439 = vrcp.pop %v1432
      %v1440 = vmul.f32 1.0, %v1439
      %v1441 = vmul.f32 %v1413, %v1434
      %v1442 = vmul.f32 %v1414, %v1436
      %v1443 = vmul.f32 %v1415, %v1438
      %v1444 = vmul.f32 %v1416, %v1440
      %v1445 = vld [vmem:[%s5] sm:$0xf]
      %v1446 = vld [vmem:[%s5 + $0x4] sm:$0xf]
      %v1447 = vld [vmem:[%s5 + $0x8] sm:$0xf]
      %v1448 = vld [vmem:[%s5 + $0xc] sm:$0xf]
      %v1449 = vld [vmem:[%s5 + $0x10] sm:$0xf]
      %v1450 = vld [vmem:[%s5 + $0x14] sm:$0xf]
      %v1451 = vld [vmem:[%s5 + $0x18] sm:$0xf]
      %v1452 = vld [vmem:[#allocation2] sm:$0x1]
      %v1453 = vrot.slane %v1441, 5
      %v1454 = vrot.slane %v1442, 5
      %v1455 = vrot.slane %v1443, 5
      %v1456 = vrot.slane %v1444, 5
      %v1457 = vsel %vm705, %v1455, %v1456
      %v1458 = vsel %vm705, %v1454, %v1455
      %v1459 = vsel %vm705, %v1453, %v1454
      %v1460 = vsel %vm705, %v1456, %v1453
      %v1461 = vsel %vm718, %v1460, 0.0
      %v1462 = vsel %vm719, %v1459, 0.0
      %v1463 = vsel %vm720, %v1458, 0.0
      %v1464 = vsel %vm721, %v1457, 0.0
      %v1465 = vrot.slane %v1441, 6
      %v1466 = vrot.slane %v1442, 6
      %v1467 = vrot.slane %v1443, 6
      %v1468 = vrot.slane %v1444, 6
      %vm1469 = vcmp.lt.s32.totalorder %v319, 2
      %v1470 = vsel %vm1469, %v1467, %v1468
      %v1471 = vsel %vm1469, %v1466, %v1467
      %v1472 = vsel %vm1469, %v1465, %v1466
      %v1473 = vsel %vm1469, %v1468, %v1465
      %vm1474 = vcmp.ge.s32.totalorder %v319, 2
      %vm1475 = vcmp.ge.s32.totalorder %v320, 2
      %vm1476 = vcmp.ge.s32.totalorder %v321, 2
      %vm1477 = vcmp.ge.s32.totalorder %v322, 2
      %vm1478 = vcmp.lt.s32.totalorder %v319, 34
      %vm1479 = vcmp.lt.s32.totalorder %v320, 34
      %vm1480 = vcmp.lt.s32.totalorder %v321, 34
      %vm1481 = vcmp.lt.s32.totalorder %v322, 34
      %vm1482 = vmand %vm1474, %vm1478
      %vm1483 = vmand %vm1475, %vm1479
      %vm1484 = vmand %vm1476, %vm1480
      %vm1485 = vmand %vm1477, %vm1481
      %v1486 = vsel %vm1482, %v1473, 0.0
      %v1487 = vsel %vm1483, %v1472, 0.0
      %v1488 = vsel %vm1484, %v1471, 0.0
      %v1489 = vsel %vm1485, %v1470, 0.0
      %v1490 = vrot.slane %v1441, 7
      %v1491 = vrot.slane %v1442, 7
      %v1492 = vrot.slane %v1443, 7
      %v1493 = vrot.slane %v1444, 7
      %v1494 = vsel %vm327, %v1492, %v1493
      %v1495 = vsel %vm327, %v1491, %v1492
      %v1496 = vsel %vm327, %v1490, %v1491
      %v1497 = vsel %vm327, %v1493, %v1490
      %v1498 = vsel %vm340, %v1497, 0.0
      %v1499 = vsel %vm341, %v1496, 0.0
      %v1500 = vsel %vm342, %v1495, 0.0
      %v1501 = vsel %vm343, %v1494, 0.0
      %v1502 = vrot.slane %v1441, 1
      %v1503 = vrot.slane %v1442, 1
      %v1504 = vrot.slane %v1443, 1
      %v1505 = vrot.slane %v1444, 1
      %v1506 = vsel %vm352, %v1504, %v1505
      %v1507 = vsel %vm352, %v1503, %v1504
      %v1508 = vsel %vm352, %v1502, %v1503
      %v1509 = vsel %vm352, %v1505, %v1502
      %v1510 = vsel %vm365, %v1508, 0.0
      %v1511 = vsel %vm366, %v1507, 0.0
      %v1512 = vsel %vm367, %v1506, 0.0
      %v1513 = vsel %vm368, %v1509, 0.0
      %v1514 = vrot.slane %v1441, 2
      %v1515 = vrot.slane %v1442, 2
      %v1516 = vrot.slane %v1443, 2
      %v1517 = vrot.slane %v1444, 2
      %vm1518 = vcmp.lt.s32.totalorder %v319, 6
      %v1519 = vsel %vm1518, %v1516, %v1517
      %v1520 = vsel %vm1518, %v1515, %v1516
      %v1521 = vsel %vm1518, %v1514, %v1515
      %v1522 = vsel %vm1518, %v1517, %v1514
      %vm1523 = vcmp.ge.s32.totalorder %v319, 4294967294
      %vm1524 = vcmp.ge.s32.totalorder %v320, 4294967294
      %vm1525 = vcmp.ge.s32.totalorder %v321, 4294967294
      %vm1526 = vcmp.ge.s32.totalorder %v322, 4294967294
      %vm1527 = vcmp.lt.s32.totalorder %v319, 30
      %vm1528 = vcmp.lt.s32.totalorder %v320, 30
      %vm1529 = vcmp.lt.s32.totalorder %v321, 30
      %vm1530 = vcmp.lt.s32.totalorder %v322, 30
      %vm1531 = vmand %vm1523, %vm1527
      %vm1532 = vmand %vm1524, %vm1528
      %vm1533 = vmand %vm1525, %vm1529
      %vm1534 = vmand %vm1526, %vm1530
      %v1535 = vsel %vm1531, %v1521, 0.0
      %v1536 = vsel %vm1532, %v1520, 0.0
      %v1537 = vsel %vm1533, %v1519, 0.0
      %v1538 = vsel %vm1534, %v1522, 0.0
      %v1539 = vrot.slane %v1441, 3
      %v1540 = vrot.slane %v1442, 3
      %v1541 = vrot.slane %v1443, 3
      %v1542 = vrot.slane %v1444, 3
      %v1543 = vsel %vm730, %v1541, %v1542
      %v1544 = vsel %vm730, %v1540, %v1541
      %v1545 = vsel %vm730, %v1539, %v1540
      %v1546 = vsel %vm730, %v1542, %v1539
      %v1547 = vsel %vm743, %v1545, 0.0
      %v1548 = vsel %vm744, %v1544, 0.0
      %v1549 = vsel %vm745, %v1543, 0.0
      %v1550 = vsel %vm746, %v1546, 0.0
      %1555 = vrot.lane.b32.xlu0 %v1486, 8
      %v1556 = vpop.permute.xlu0 %1555
      %1557 = vrot.lane.b32.xlu0 %v1487, 8
      %v1558 = vpop.permute.xlu0 %1557
      %1559 = vrot.lane.b32.xlu0 %v1488, 8
      %v1560 = vpop.permute.xlu0 %1559
      %1561 = vrot.lane.b32.xlu0 %v1489, 8
      %v1562 = vpop.permute.xlu0 %1561
      %1571 = vrot.lane.b32.xlu0 %v1498, 16
      %v1572 = vpop.permute.xlu0 %1571
      %1573 = vrot.lane.b32.xlu0 %v1499, 16
      %v1574 = vpop.permute.xlu0 %1573
      %1575 = vrot.lane.b32.xlu0 %v1500, 16
      %v1576 = vpop.permute.xlu0 %1575
      %1577 = vrot.lane.b32.xlu0 %v1501, 16
      %v1578 = vpop.permute.xlu0 %1577
      %1587 = vrot.lane.b32.xlu0 %v1441, 24
      %v1588 = vpop.permute.xlu0 %1587
      %1589 = vrot.lane.b32.xlu0 %v1442, 24
      %v1590 = vpop.permute.xlu0 %1589
      %1591 = vrot.lane.b32.xlu0 %v1443, 24
      %v1592 = vpop.permute.xlu0 %1591
      %1593 = vrot.lane.b32.xlu0 %v1444, 24
      %v1594 = vpop.permute.xlu0 %1593
      %1603 = vrot.lane.b32.xlu0 %v1510, 32
      %v1604 = vpop.permute.xlu0 %1603
      %1605 = vrot.lane.b32.xlu0 %v1511, 32
      %v1606 = vpop.permute.xlu0 %1605
      %1607 = vrot.lane.b32.xlu0 %v1512, 32
      %v1608 = vpop.permute.xlu0 %1607
      %1609 = vrot.lane.b32.xlu0 %v1513, 32
      %v1610 = vpop.permute.xlu0 %1609
      %1619 = vrot.lane.b32.xlu0 %v1535, 40
      %v1620 = vpop.permute.xlu0 %1619
      %1621 = vrot.lane.b32.xlu0 %v1536, 40
      %v1622 = vpop.permute.xlu0 %1621
      %1623 = vrot.lane.b32.xlu0 %v1537, 40
      %v1624 = vpop.permute.xlu0 %1623
      %1625 = vrot.lane.b32.xlu0 %v1538, 40
      %v1626 = vpop.permute.xlu0 %1625
      %1635 = vrot.lane.b32.xlu0 %v1547, 48
      %v1636 = vpop.permute.xlu0 %1635
      %1637 = vrot.lane.b32.xlu0 %v1548, 48
      %v1638 = vpop.permute.xlu0 %1637
      %1639 = vrot.lane.b32.xlu0 %v1549, 48
      %v1640 = vpop.permute.xlu0 %1639
      %1641 = vrot.lane.b32.xlu0 %v1550, 48
      %v1642 = vpop.permute.xlu0 %1641
      %v1647 = vsel %vm405, %v1461, %v1556
      %v1648 = vsel %vm405, %v1462, %v1558
      %v1649 = vsel %vm405, %v1463, %v1560
      %v1650 = vsel %vm405, %v1464, %v1562
      %v1651 = vsel %vm410, %v1647, %v1572
      %v1652 = vsel %vm410, %v1648, %v1574
      %v1653 = vsel %vm410, %v1649, %v1576
      %v1654 = vsel %vm410, %v1650, %v1578
      %v1655 = vsel %vm432, %v1651, %v1588
      %v1656 = vsel %vm432, %v1652, %v1590
      %v1657 = vsel %vm432, %v1653, %v1592
      %v1658 = vsel %vm432, %v1654, %v1594
      %vm1659 = vcmask 261120
      %v1660 = vsel %vm1659, %v1655, %v1604
      %v1661 = vsel %vm1659, %v1656, %v1606
      %v1662 = vsel %vm1659, %v1657, %v1608
      %v1663 = vsel %vm1659, %v1658, %v1610
      %vm1664 = vcmask 326656
      %v1665 = vsel %vm1664, %v1660, %v1620
      %v1666 = vsel %vm1664, %v1661, %v1622
      %v1667 = vsel %vm1664, %v1662, %v1624
      %v1668 = vsel %vm1664, %v1663, %v1626
      %vm1669 = vcmask 392192
      %v1670 = vsel %vm1669, %v1665, %v1636
      %v1671 = vsel %vm1669, %v1666, %v1638
      %v1672 = vsel %vm1669, %v1667, %v1640
      %v1673 = vsel %vm1669, %v1668, %v1642
      %v1674 = vpack.c.bf16 %v1671, %v1670
      %v1675 = vpack.c.bf16 %v1673, %v1672
      %v1677 = vlaneseq
      %v1678 = vshrl.u32 %v1677, 7
      %v1679 = vsub.s32 0, %v1678
      %v1680 = vrot.slane %v1452, %v1679
      %v1689 = vunpack.c.l.b16 %v1445
      %v1690 = vunpack.c.l.b16 %v1446
      %v1691 = vunpack.c.l.b16 %v1447
      %v1692 = vunpack.c.l.b16 %v1448
      %v1693 = vunpack.c.l.b16 %v1449
      %v1694 = vunpack.c.l.b16 %v1450
      %v1695 = vunpack.c.l.b16 %v1451
      %v1696 = vpack.c.b16 %v1690, %v1689
      %v1697 = vpack.c.b16 %v1692, %v1691
      %v1698 = vpack.c.b16 %v1694, %v1693
      %v1699 = vpack.c.b16 %v1695, %v1695
      %vm1703 = vcmask 457728
      %v1705 = vsel %vm1703, %v1674, 0
      %v1708 = vsel %vm1703, %v1675, 0
      %v1711 = vsel %vm439, %v1699, 0
      %1713 = vmatprep.subr.bf16.mxu0 0
      %1714 = vmatpush1.bf16.msra.mxu0 %v1696
      %1715 = vmatprep.subr.bf16.mxu0 0
      %1716 = vmatpush1.bf16.msra.mxu0 %v1697
      %1717 = vmatprep.subr.bf16.mxu0 0
      %1718 = vmatpush1.bf16.msra.mxu0 %v1698
      %1719 = vmatprep.subr.bf16.mxu0 0
      %1720 = vmatpush1.bf16.msra.mxu0 %v1711
      %1721 = vmatprep.subr.bf16.mxu0 0
      %1722 = vmatpush1.bf16.msra.mxu0 0
      %1723 = vmatprep.subr.bf16.mxu0 0
      %1724 = vmatpush1.bf16.msra.mxu0 0
      %1725 = vmatprep.subr.bf16.mxu0 0
      %1726 = vmatpush1.bf16.msra.mxu0 0
      %1727 = vmatprep.subr.bf16.mxu0 0
      %1728 = vmatpush1.bf16.msra.mxu0 0
      %1729 = vmatprep.subr.bf16.mxu0 0
      %1730 = vmatpush1.bf16.msra.mxu0 0
      %1731 = vmatprep.subr.bf16.mxu0 0
      %1732 = vmatpush1.bf16.msra.mxu0 0
      %1733 = vmatprep.subr.bf16.mxu0 0
      %1734 = vmatpush1.bf16.msra.mxu0 0
      %1735 = vmatprep.subr.bf16.mxu0 0
      %1736 = vmatpush1.bf16.msra.mxu0 0
      %1737 = vmatprep.subr.bf16.mxu0 0
      %1738 = vmatpush1.bf16.msra.mxu0 0
      %1739 = vmatprep.subr.bf16.mxu0 0
      %1740 = vmatpush1.bf16.msra.mxu0 0
      %1741 = vmatprep.subr.bf16.mxu0 0
      %1742 = vmatpush1.bf16.msra.mxu0 0
      %1743 = vmatprep.subr.bf16.mxu0 0
      %1744 = vmatpush1.bf16.msra.mxu0 0
      %1745 = vmatprep.mubr.bf16.mxu0 0
      %1746 = vmatmul.mubr.bf16.gmra.mrb[0].mxu0 %v1705
      %v1747 = vpop.f32.mrb[0].mxu0
      %v1748 = vadd.f32 %v1680, %v1747
      %v1749 = vpop.f32.mrb[0].mxu0
      %v1750 = vpop.f32.mrb[0].mxu0
      %v1751 = vadd.f32 %v1680, %v1750
      %v1752 = vpop.f32.mrb[0].mxu0
      %1753 = vmatprep.mubr.bf16.mxu0 0
      %1754 = vmatmul.mubr.bf16.gmra.mrb[0].mxu0 %v1708
      %v1755 = vpop.f32.mrb[0].mxu0
      %v1756 = vadd.f32 %v1680, %v1755
      %v1757 = vpop.f32.mrb[0].mxu0
      %v1758 = vpop.f32.mrb[0].mxu0
      %v1759 = vadd.f32 %v1680, %v1758
      %v1760 = vpop.f32.mrb[0].mxu0
      %1761 = vdwg.mxu0
      %v1762 = vtanh.pop %v1748
      %v1763 = vtanh.pop %v1751
      %v1764 = vtanh.pop %v1756
      %v1765 = vtanh.pop %v1759
      %vm1766 = vcmask 7168
      %1767 = vst.msk [vmem:[%s280] sm:$0xff] %vm1766, %v1762
      %1768 = vst.msk [vmem:[%s280 + $0x8] sm:$0xff] %vm1766, %v1763
      %1769 = vst.msk [vmem:[%s280 + $0x10] sm:$0xff] %vm1766, %v1764
      %1770 = vst.msk [vmem:[%s280 + $0x18] sm:$0xff] %vm1766, %v1765
      %p1771 = scmp.lt.s32.totalorder %s20, 1
      %s1772 = scalar_select %p1771, %s20, 1
      %s1773 = smul.addr %s1772, 4
      %s1774 = smul.addr %s1773, 8
      %s1775 = scalar_lea.vmem %s7, %s1774
      // Predicated region
      $region49: #{fwd.9} parent=47 // pred_check
        %p1776 = pneg %p190
      $region50: #{fwd.9} parent=47 // pred_check_branch
        %1778 = sbr.rel (%p1776) target = $region52
      $region51: #{fwd.9} parent=47 // pred_region
        _
      $region52: #{fwd.9} parent=47 // pred_fallthru
        _
    $region48: #{fwd.9} parent=5 // pred_fallthru
      _
    %p1779 = scmp.le.s32.totalorder 2, %s15
    // Predicated region
    $region53: #{fwd.9} parent=5 // pred_check
      %p1780 = pneg %p1779
    $region54: #{fwd.9} parent=5 // pred_check_branch
      %1782 = sbr.rel (%p1780) target = $region56
    $region55: #{fwd.9} parent=5 // pred_region
      %s1783 = ssub.s32 %s15, 2
      // Predicated region
      $region57: #{fwd.9} parent=55 // pred_check
        %p1784 = pneg %p196
      $region58: #{fwd.9} parent=55 // pred_check_branch
        %1786 = sbr.rel (%p1784) target = $region60
      $region59: #{fwd.9} parent=55 // pred_region
        %p1787 = scmp.lt.s32.totalorder %s21, 1
        %s1788 = scalar_select %p1787, %s21, 1
        %s1789 = smul.addr %s1788, 4
        %s1790 = smul.addr %s1789, 8
        %s1791 = scalar_lea.vmem %s7, %s1790
      $region60: #{fwd.9} parent=55 // pred_fallthru
        _
    $region56: #{fwd.9} parent=5 // pred_fallthru
      _
  $region6: #{fwd.9} parent=0 // loop_footer
    %s19 = sadd.s32 1, %s15
  $region7: #{fwd.9} parent=0 // loop_footer_branch
    %14 = sbr.rel target = $region3
  $region8: #{fwd.9} parent=0 // loop_exit
    _

</llo_original>
